<compile_context>
chip_gen: v7x
topology: tpu7x:2x2x1
jax: 0.10.0
libtpu: 0.0.40
codegen_flags: <defaults>
</compile_context>

<pallas_src>
import functools

import jax
import jax.numpy as jnp
import numpy as np
from jax.experimental import pallas as pl
from jax.experimental.pallas import tpu as pltpu

# Fixed DQN conv architecture (kernel, stride) -- part of the module spec.
_CONV1_K, _CONV1_S = 8, 4
_CONV2_K, _CONV2_S = 4, 2
_CONV3_K, _CONV3_S = 3, 1


def _conv_out(size, k, s):
    return (size - k) // s + 1


# ---------------------------------------------------------------------------
# Fused forward kernel: conv1 GEMM -> conv2 -> conv3 -> fc1 -> fc2 (all VMEM)
# ---------------------------------------------------------------------------
def _dqn_kernel(xp_ref, w1_ref, b1_ref, w2_ref, b2_ref, w3_ref, b3_ref,
                fw1_ref, fb1_ref, fw2_ref, fb2_ref,
                out_ref, a1_ref, a2_ref, a3_ref, *, batch, geom2, geom3):
    """All refs are VMEM-resident. a1/a2/a3 are f32 activation scratch."""
    f32 = jnp.float32
    bf16 = jnp.bfloat16

    def conv_layer(src_ref, w_ref, b_ref, dst_ref, H, W, K, S, OC):
        # src_ref: (batch*H*W, C) NHWC activations, rows ordered (n, y, x).
        # w_ref:   (K*K, C, OC) -- one (C, OC) slab per kernel offset (i, j).
        # dst_ref: (batch*OH*OW, OC)
        OH = _conv_out(H, K, S)
        OW = _conv_out(W, K, S)
        # Hoisted once per layer: weight slabs (stay resident in vregs --
        # <= 18 vregs even for conv3) and the bias broadcast.
        w_slabs = [w_ref[k] for k in range(K * K)]          # each (C, OC) bf16
        bias = b_ref[...]                                    # (1, OC) f32
        for n in range(batch):
            for oy in range(OH):
                acc = jnp.zeros((OW, OC), f32)
                for i in range(K):
                    for j in range(K):
                        base = n * H * W + (oy * S + i) * W + j
                        # rows x = j, j+S, ..., i.e. ox*S + j for ox in [0, OW)
                        rows = (pl.ds(base, OW) if S == 1
                                else pl.ds(base, OW, stride=S))
                        lhs = src_ref[rows, :].astype(bf16)          # (OW, C)
                        acc = acc + jnp.dot(lhs, w_slabs[i * K + j],
                                            preferred_element_type=f32)
                # bias + ReLU in f32 on the VPU, store one (OW, OC) row block.
                dst_ref[pl.ds((n * OH + oy) * OW, OW), :] = (
                    jnp.maximum(acc + bias, 0.0))

    # --- conv1: im2col patches (built outside) @ w1, bias, ReLU ------------
    a1 = jnp.dot(xp_ref[...], w1_ref[...], preferred_element_type=f32)
    a1_ref[...] = jnp.maximum(a1 + b1_ref[...], 0.0)

    # --- conv2 / conv3: VMEM-resident, strided in-kernel patch reads -------
    h2, w2, k2, s2, oc2 = geom2
    conv_layer(a1_ref, w2_ref, b2_ref, a2_ref, h2, w2, k2, s2, oc2)
    h3, w3, k3, s3, oc3 = geom3
    conv_layer(a2_ref, w3_ref, b3_ref, a3_ref, h3, w3, k3, s3, oc3)

    # --- fc1 / fc2 (conv3 output is 1x1 spatial -> rows are the channels) --
    a3 = a3_ref[...].astype(bf16)                                  # (batch, 64)
    h = jnp.dot(a3, fw1_ref[...], preferred_element_type=f32) + fb1_ref[...]
    h = jnp.maximum(h, 0.0).astype(bf16)                           # (batch, 512)
    out = jnp.dot(h, fw2_ref[...], preferred_element_type=f32) + fb2_ref[...]
    out_ref[...] = out                           # (batch, 128) -- lane-dense


# ---------------------------------------------------------------------------
# Glue: conv1 im2col on the (HBM) input, NHWC, columns ordered (ky, kx, c)
# ---------------------------------------------------------------------------
def _im2col_nhwc(x_nhwc, k, s):
    n, h, w, c = x_nhwc.shape
    oh = _conv_out(h, k, s)
    ow = _conv_out(w, k, s)
    iy = (jnp.arange(oh) * s)[:, None] + jnp.arange(k)[None, :]        # (oh, k)
    ix = (jnp.arange(ow) * s)[:, None] + jnp.arange(k)[None, :]        # (ow, k)
    p = x_nhwc[:, iy[:, None, :, None], ix[None, :, None, :], :]       # (n,oh,ow,k,k,c)
    return p.reshape(n * oh * ow, k * k * c)


# ---------------------------------------------------------------------------
# One-time parameter prep: transposes, bf16 casts, lane-dense fc2 padding
# ---------------------------------------------------------------------------
def prep_params(params, n_actions):
    bf16, f32 = jnp.bfloat16, jnp.float32

    def conv_w(w):  # torch (OC, IC, K, K) -> (K*K, IC, OC), one slab per offset
        oc, ic, kh, kw = w.shape
        return w.transpose(2, 3, 1, 0).reshape(kh * kw, ic, oc).astype(bf16)

    w1 = params["w1"]
    oc1, ic1, k1, _ = w1.shape
    n_pad = ((n_actions + 127) // 128) * 128
    fc2_wt = params["fc2_w"].T.astype(f32)                       # (512, n_actions)
    return {
        # conv1 is a plain GEMM on im2col patches: (K*K*IC, OC), rows (ky, kx, c)
        "w1": w1.transpose(2, 3, 1, 0).reshape(k1 * k1 * ic1, oc1).astype(bf16),
        "b1": params["b1"].reshape(1, -1).astype(f32),
        "w2": conv_w(params["w2"]),
        "b2": params["b2"].reshape(1, -1).astype(f32),
        "w3": conv_w(params["w3"]),
        "b3": params["b3"].reshape(1, -1).astype(f32),
        # fc weights stored pre-transposed (K, N); conv3 output is 1x1 spatial,
        # so torch's NCHW flatten order is just the channel order.
        "fc1_w": params["fc1_w"].T.astype(bf16),                 # (64, 512)
        "fc1_b": params["fc1_b"].reshape(1, -1).astype(f32),
        "fc2_w": jnp.pad(fc2_wt, ((0, 0), (0, n_pad - n_actions))).astype(bf16),
        "fc2_b": jnp.pad(params["fc2_b"],
                         (0, n_pad - n_actions)).reshape(1, -1).astype(f32),
    }


# ---------------------------------------------------------------------------
# Forward wrapper: one fused pallas_call
# ---------------------------------------------------------------------------
@functools.partial(jax.jit, static_argnames=("n_actions",))
def dqn_forward(prepped, x, *, n_actions):
    """x: (N, C, H, W) float32 (PyTorch NCHW) -> (N, n_actions) float32."""
    n, c0, h0, w0 = x.shape
    a1h, a1w = _conv_out(h0, _CONV1_K, _CONV1_S), _conv_out(w0, _CONV1_K, _CONV1_S)
    a2h, a2w = _conv_out(a1h, _CONV2_K, _CONV2_S), _conv_out(a1w, _CONV2_K, _CONV2_S)
    a3h, a3w = _conv_out(a2h, _CONV3_K, _CONV3_S), _conv_out(a2w, _CONV3_K, _CONV3_S)
    # The fused kernel hooks conv3 straight into fc1, which assumes a 1x1
    # conv3 output (true for the 36x36 test frames).
    # TODO(synk): for larger frames, fold the NHWC flatten permutation into
    # fc1_w at prep time and drop this assert.
    assert a3h == 1 and a3w == 1, (a3h, a3w)

    oc1 = prepped["b1"].shape[1]
    oc2 = prepped["b2"].shape[1]
    oc3 = prepped["b3"].shape[1]
    n_pad = prepped["fc2_b"].shape[1]

    # conv1 im2col (glue on the HBM input); MXU inputs are bf16.
    x_nhwc = x.transpose(0, 2, 3, 1)
    patches = _im2col_nhwc(x_nhwc, _CONV1_K, _CONV1_S).astype(jnp.bfloat16)

    vmem = pl.BlockSpec(memory_space=pltpu.MemorySpace.VMEM)
    kernel = functools.partial(
        _dqn_kernel,
        batch=n,
        geom2=(a1h, a1w, _CONV2_K, _CONV2_S, oc2),
        geom3=(a2h, a2w, _CONV3_K, _CONV3_S, oc3),
    )
    out = pl.pallas_call(
        kernel,
        out_shape=jax.ShapeDtypeStruct((n, n_pad), jnp.float32),
        in_specs=[vmem] * 11,
        out_specs=vmem,
        scratch_shapes=[
            pltpu.VMEM((n * a1h * a1w, oc1), jnp.float32),   # conv1 activations
            pltpu.VMEM((n * a2h * a2w, oc2), jnp.float32),   # conv2 activations
            pltpu.VMEM((n * a3h * a3w, oc3), jnp.float32),   # conv3 activations
        ],
    )(patches,
      prepped["w1"], prepped["b1"],
      prepped["w2"], prepped["b2"],
      prepped["w3"], prepped["b3"],
      prepped["fc1_w"], prepped["fc1_b"],
      prepped["fc2_w"], prepped["fc2_b"])
    return out[:, :n_actions]


# ---------------------------------------------------------------------------
# Deterministic PyTorch-default-style init + pure-JAX (XLA conv) reference
# ---------------------------------------------------------------------------
def init_dqn_params(key, in_channels, feature_size, n_actions):
    def uni(k, shape, fan_in):
        bound = 1.0 / np.sqrt(fan_in)
        return jax.random.uniform(k, shape, jnp.float32, -bound, bound)

    ks = jax.random.split(key, 10)
    return {
        "w1": uni(ks[0], (32, in_channels, 8, 8), in_channels * 64),
        "b1": uni(ks[1], (32,), in_channels * 64),
        "w2": uni(ks[2], (64, 32, 4, 4), 32 * 16),
        "b2": uni(ks[3], (64,), 32 * 16),
        "w3": uni(ks[4], (64, 64, 3, 3), 64 * 9),
        "b3": uni(ks[5], (64,), 64 * 9),
        "fc1_w": uni(ks[6], (512, feature_size), feature_size),   # (out, in) like torch
        "fc1_b": uni(ks[7], (512,), feature_size),
        "fc2_w": uni(ks[8], (n_actions, 512), 512),
        "fc2_b": uni(ks[9], (n_actions,), 512),
    }


def dqn_forward_ref(params, x):
    dn = ("NCHW", "OIHW", "NCHW")

    def conv(x, w, b, s):
        y = jax.lax.conv_general_dilated(x, w, (s, s), "VALID", dimension_numbers=dn)
        return jax.nn.relu(y + b[None, :, None, None])

    x = conv(x, params["w1"], params["b1"], 4)
    x = conv(x, params["w2"], params["b2"], 2)
    x = conv(x, params["w3"], params["b3"], 1)
    x = x.reshape(x.shape[0], -1)
    x = jax.nn.relu(x @ params["fc1_w"].T + params["fc1_b"])
    return x @ params["fc2_w"].T + params["fc2_b"]


if __name__ == "__main__":
    # Smallest spatial size the conv stack accepts: 36 -> 8 -> 3 -> 1.
    H, W, C = 36, 36, 4
    n_actions = 18          # Riverraid action-space size
    batch = 2

    oh = _conv_out(_conv_out(_conv_out(H, 8, 4), 4, 2), 3, 1)
    ow = _conv_out(_conv_out(_conv_out(W, 8, 4), 4, 2), 3, 1)
    feature_size = 64 * oh * ow     # = 64

    key = jax.random.PRNGKey(0)
    k_params, k_x = jax.random.split(key)
    params = init_dqn_params(k_params, C, feature_size, n_actions)
    x = jax.random.uniform(k_x, (batch, C, H, W), jnp.float32)   # NCHW like PyTorch

    prepped = prep_params(params, n_actions)
    out = jax.block_until_ready(dqn_forward(prepped, x, n_actions=n_actions))

    ref = jax.block_until_ready(dqn_forward_ref(params, x))
    assert out.shape == (batch, n_actions), out.shape
    # bf16 MXU inputs with f32 accumulation -> compare at bf16-level tolerance.
    np.testing.assert_allclose(np.asarray(out), np.asarray(ref), rtol=2e-2, atol=2e-2)

    print("KERNEL_OK")
</pallas_src>

<mosaic_0001>
module attributes {stable_mosaic.version = 11 : i64} {
  func.func @_dqn_kernel(%arg0: memref<128x256xbf16, #tpu.memory_space<vmem>>, %arg1: memref<256x32xbf16, #tpu.memory_space<vmem>>, %arg2: memref<1x32xf32, #tpu.memory_space<vmem>>, %arg3: memref<16x32x64xbf16, #tpu.memory_space<vmem>>, %arg4: memref<1x64xf32, #tpu.memory_space<vmem>>, %arg5: memref<9x64x64xbf16, #tpu.memory_space<vmem>>, %arg6: memref<1x64xf32, #tpu.memory_space<vmem>>, %arg7: memref<64x512xbf16, #tpu.memory_space<vmem>>, %arg8: memref<1x512xf32, #tpu.memory_space<vmem>>, %arg9: memref<512x128xbf16, #tpu.memory_space<vmem>>, %arg10: memref<1x128xf32, #tpu.memory_space<vmem>>, %arg11: memref<2x128xf32, #tpu.memory_space<vmem>>, %arg12: memref<128x32xf32, #tpu.memory_space<vmem>>, %arg13: memref<18x64xf32, #tpu.memory_space<vmem>>, %arg14: memref<2x64xf32, #tpu.memory_space<vmem>>) attributes {dimension_semantics = [], scalar_prefetch = 0 : i64, scratch_operands = 3 : i64, tpu.core_type = #tpu.core_type<tc>} {
    %c0 = arith.constant 0 : index
    %c0_0 = arith.constant 0 : index
    %0 = vector.load %arg0[%c0, %c0_0] : memref<128x256xbf16, #tpu.memory_space<vmem>>, vector<128x256xbf16>
    %c0_1 = arith.constant 0 : index
    %c0_2 = arith.constant 0 : index
    %1 = vector.load %arg1[%c0_1, %c0_2] : memref<256x32xbf16, #tpu.memory_space<vmem>>, vector<256x32xbf16>
    %cst = arith.constant dense<0.000000e+00> : vector<128x32xf32>
    %2 = tpu.matmul %0, %1, %cst {dimension_numbers = #tpu.dot_dimension_numbers<[1], [0], [0], [1], [0, 0, 1, 1], [], []>} : vector<128x256xbf16>, vector<256x32xbf16>, vector<128x32xf32> -> vector<128x32xf32>
    %c0_3 = arith.constant 0 : index
    %c0_4 = arith.constant 0 : index
    %3 = vector.load %arg2[%c0_3, %c0_4] : memref<1x32xf32, #tpu.memory_space<vmem>>, vector<1x32xf32>
    %4 = vector.broadcast %3 : vector<1x32xf32> to vector<128x32xf32>
    %5 = arith.addf %2, %4 : vector<128x32xf32>
    %cst_5 = arith.constant 0.000000e+00 : f32
    %6 = vector.broadcast %cst_5 : f32 to vector<128x32xf32>
    %7 = arith.maximumf %5, %6 : vector<128x32xf32>
    %c0_6 = arith.constant 0 : index
    %c0_7 = arith.constant 0 : index
    %8 = vector.load %arg12[%c0_6, %c0_7] : memref<128x32xf32, #tpu.memory_space<vmem>>, vector<128x32xf32>
    tpu.vector_store %arg12[%c0_6, %c0_7], %7 {strides = array<i32>} : memref<128x32xf32, #tpu.memory_space<vmem>>, vector<128x32xf32>,
    %c0_8 = arith.constant 0 : index
    %c0_9 = arith.constant 0 : index
    %c0_10 = arith.constant 0 : index
    %9 = vector.load %arg3[%c0_8, %c0_9, %c0_10] : memref<16x32x64xbf16, #tpu.memory_space<vmem>>, vector<1x32x64xbf16>
    %10 = vector.shape_cast %9 : vector<1x32x64xbf16> to vector<32x64xbf16>
    %c1 = arith.constant 1 : index
    %c0_11 = arith.constant 0 : index
    %c0_12 = arith.constant 0 : index
    %11 = vector.load %arg3[%c1, %c0_11, %c0_12] : memref<16x32x64xbf16, #tpu.memory_space<vmem>>, vector<1x32x64xbf16>
    %12 = vector.shape_cast %11 : vector<1x32x64xbf16> to vector<32x64xbf16>
    %c2 = arith.constant 2 : index
    %c0_13 = arith.constant 0 : index
    %c0_14 = arith.constant 0 : index
    %13 = vector.load %arg3[%c2, %c0_13, %c0_14] : memref<16x32x64xbf16, #tpu.memory_space<vmem>>, vector<1x32x64xbf16>
    %14 = vector.shape_cast %13 : vector<1x32x64xbf16> to vector<32x64xbf16>
    %c3 = arith.constant 3 : index
    %c0_15 = arith.constant 0 : index
    %c0_16 = arith.constant 0 : index
    %15 = vector.load %arg3[%c3, %c0_15, %c0_16] : memref<16x32x64xbf16, #tpu.memory_space<vmem>>, vector<1x32x64xbf16>
    %16 = vector.shape_cast %15 : vector<1x32x64xbf16> to vector<32x64xbf16>
    %c4 = arith.constant 4 : index
    %c0_17 = arith.constant 0 : index
    %c0_18 = arith.constant 0 : index
    %17 = vector.load %arg3[%c4, %c0_17, %c0_18] : memref<16x32x64xbf16, #tpu.memory_space<vmem>>, vector<1x32x64xbf16>
    %18 = vector.shape_cast %17 : vector<1x32x64xbf16> to vector<32x64xbf16>
    %c5 = arith.constant 5 : index
    %c0_19 = arith.constant 0 : index
    %c0_20 = arith.constant 0 : index
    %19 = vector.load %arg3[%c5, %c0_19, %c0_20] : memref<16x32x64xbf16, #tpu.memory_space<vmem>>, vector<1x32x64xbf16>
    %20 = vector.shape_cast %19 : vector<1x32x64xbf16> to vector<32x64xbf16>
    %c6 = arith.constant 6 : index
    %c0_21 = arith.constant 0 : index
    %c0_22 = arith.constant 0 : index
    %21 = vector.load %arg3[%c6, %c0_21, %c0_22] : memref<16x32x64xbf16, #tpu.memory_space<vmem>>, vector<1x32x64xbf16>
    %22 = vector.shape_cast %21 : vector<1x32x64xbf16> to vector<32x64xbf16>
    %c7 = arith.constant 7 : index
    %c0_23 = arith.constant 0 : index
    %c0_24 = arith.constant 0 : index
    %23 = vector.load %arg3[%c7, %c0_23, %c0_24] : memref<16x32x64xbf16, #tpu.memory_space<vmem>>, vector<1x32x64xbf16>
    %24 = vector.shape_cast %23 : vector<1x32x64xbf16> to vector<32x64xbf16>
    %c8 = arith.constant 8 : index
    %c0_25 = arith.constant 0 : index
    %c0_26 = arith.constant 0 : index
    %25 = vector.load %arg3[%c8, %c0_25, %c0_26] : memref<16x32x64xbf16, #tpu.memory_space<vmem>>, vector<1x32x64xbf16>
    %26 = vector.shape_cast %25 : vector<1x32x64xbf16> to vector<32x64xbf16>
    %c9 = arith.constant 9 : index
    %c0_27 = arith.constant 0 : index
    %c0_28 = arith.constant 0 : index
    %27 = vector.load %arg3[%c9, %c0_27, %c0_28] : memref<16x32x64xbf16, #tpu.memory_space<vmem>>, vector<1x32x64xbf16>
    %28 = vector.shape_cast %27 : vector<1x32x64xbf16> to vector<32x64xbf16>
    %c10 = arith.constant 10 : index
    %c0_29 = arith.constant 0 : index
    %c0_30 = arith.constant 0 : index
    %29 = vector.load %arg3[%c10, %c0_29, %c0_30] : memref<16x32x64xbf16, #tpu.memory_space<vmem>>, vector<1x32x64xbf16>
    %30 = vector.shape_cast %29 : vector<1x32x64xbf16> to vector<32x64xbf16>
    %c11 = arith.constant 11 : index
    %c0_31 = arith.constant 0 : index
    %c0_32 = arith.constant 0 : index
    %31 = vector.load %arg3[%c11, %c0_31, %c0_32] : memref<16x32x64xbf16, #tpu.memory_space<vmem>>, vector<1x32x64xbf16>
    %32 = vector.shape_cast %31 : vector<1x32x64xbf16> to vector<32x64xbf16>
    %c12 = arith.constant 12 : index
    %c0_33 = arith.constant 0 : index
    %c0_34 = arith.constant 0 : index
    %33 = vector.load %arg3[%c12, %c0_33, %c0_34] : memref<16x32x64xbf16, #tpu.memory_space<vmem>>, vector<1x32x64xbf16>
    %34 = vector.shape_cast %33 : vector<1x32x64xbf16> to vector<32x64xbf16>
    %c13 = arith.constant 13 : index
    %c0_35 = arith.constant 0 : index
    %c0_36 = arith.constant 0 : index
    %35 = vector.load %arg3[%c13, %c0_35, %c0_36] : memref<16x32x64xbf16, #tpu.memory_space<vmem>>, vector<1x32x64xbf16>
    %36 = vector.shape_cast %35 : vector<1x32x64xbf16> to vector<32x64xbf16>
    %c14 = arith.constant 14 : index
    %c0_37 = arith.constant 0 : index
    %c0_38 = arith.constant 0 : index
    %37 = vector.load %arg3[%c14, %c0_37, %c0_38] : memref<16x32x64xbf16, #tpu.memory_space<vmem>>, vector<1x32x64xbf16>
    %38 = vector.shape_cast %37 : vector<1x32x64xbf16> to vector<32x64xbf16>
    %c15 = arith.constant 15 : index
    %c0_39 = arith.constant 0 : index
    %c0_40 = arith.constant 0 : index
    %39 = vector.load %arg3[%c15, %c0_39, %c0_40] : memref<16x32x64xbf16, #tpu.memory_space<vmem>>, vector<1x32x64xbf16>
    %40 = vector.shape_cast %39 : vector<1x32x64xbf16> to vector<32x64xbf16>
    %c0_41 = arith.constant 0 : index
    %c0_42 = arith.constant 0 : index
    %41 = vector.load %arg4[%c0_41, %c0_42] : memref<1x64xf32, #tpu.memory_space<vmem>>, vector<1x64xf32>
    %cst_43 = arith.constant 0.000000e+00 : f32
    %42 = vector.broadcast %cst_43 : f32 to vector<3x64xf32>
    %c0_44 = arith.constant 0 : index
    %c0_45 = arith.constant 0 : index
    %43 = tpu.strided_load %arg12[%c0_44, %c0_45] {strides = array<i32: 2, 1>} : memref<128x32xf32, #tpu.memory_space<vmem>>, vector<3x32xf32>
    %44 = arith.truncf %43 : vector<3x32xf32> to vector<3x32xbf16>
    %cst_46 = arith.constant dense<0.000000e+00> : vector<3x64xf32>
    %45 = tpu.matmul %44, %10, %cst_46 {dimension_numbers = #tpu.dot_dimension_numbers<[1], [0], [0], [1], [0, 0, 1, 1], [], []>} : vector<3x32xbf16>, vector<32x64xbf16>, vector<3x64xf32> -> vector<3x64xf32>
    %46 = arith.addf %42, %45 : vector<3x64xf32>
    %c1_47 = arith.constant 1 : index
    %c0_48 = arith.constant 0 : index
    %47 = tpu.strided_load %arg12[%c1_47, %c0_48] {strides = array<i32: 2, 1>} : memref<128x32xf32, #tpu.memory_space<vmem>>, vector<3x32xf32>
    %48 = arith.truncf %47 : vector<3x32xf32> to vector<3x32xbf16>
    %cst_49 = arith.constant dense<0.000000e+00> : vector<3x64xf32>
    %49 = tpu.matmul %48, %12, %cst_49 {dimension_numbers = #tpu.dot_dimension_numbers<[1], [0], [0], [1], [0, 0, 1, 1], [], []>} : vector<3x32xbf16>, vector<32x64xbf16>, vector<3x64xf32> -> vector<3x64xf32>
    %50 = arith.addf %46, %49 : vector<3x64xf32>
    %c2_50 = arith.constant 2 : index
    %c0_51 = arith.constant 0 : index
    %51 = tpu.strided_load %arg12[%c2_50, %c0_51] {strides = array<i32: 2, 1>} : memref<128x32xf32, #tpu.memory_space<vmem>>, vector<3x32xf32>
    %52 = arith.truncf %51 : vector<3x32xf32> to vector<3x32xbf16>
    %cst_52 = arith.constant dense<0.000000e+00> : vector<3x64xf32>
    %53 = tpu.matmul %52, %14, %cst_52 {dimension_numbers = #tpu.dot_dimension_numbers<[1], [0], [0], [1], [0, 0, 1, 1], [], []>} : vector<3x32xbf16>, vector<32x64xbf16>, vector<3x64xf32> -> vector<3x64xf32>
    %54 = arith.addf %50, %53 : vector<3x64xf32>
    %c3_53 = arith.constant 3 : index
    %c0_54 = arith.constant 0 : index
    %55 = tpu.strided_load %arg12[%c3_53, %c0_54] {strides = array<i32: 2, 1>} : memref<128x32xf32, #tpu.memory_space<vmem>>, vector<3x32xf32>
    %56 = arith.truncf %55 : vector<3x32xf32> to vector<3x32xbf16>
    %cst_55 = arith.constant dense<0.000000e+00> : vector<3x64xf32>
    %57 = tpu.matmul %56, %16, %cst_55 {dimension_numbers = #tpu.dot_dimension_numbers<[1], [0], [0], [1], [0, 0, 1, 1], [], []>} : vector<3x32xbf16>, vector<32x64xbf16>, vector<3x64xf32> -> vector<3x64xf32>
    %58 = arith.addf %54, %57 : vector<3x64xf32>
    %c8_56 = arith.constant 8 : index
    %c0_57 = arith.constant 0 : index
    %59 = tpu.strided_load %arg12[%c8_56, %c0_57] {strides = array<i32: 2, 1>} : memref<128x32xf32, #tpu.memory_space<vmem>>, vector<3x32xf32>
    %60 = arith.truncf %59 : vector<3x32xf32> to vector<3x32xbf16>
    %cst_58 = arith.constant dense<0.000000e+00> : vector<3x64xf32>
    %61 = tpu.matmul %60, %18, %cst_58 {dimension_numbers = #tpu.dot_dimension_numbers<[1], [0], [0], [1], [0, 0, 1, 1], [], []>} : vector<3x32xbf16>, vector<32x64xbf16>, vector<3x64xf32> -> vector<3x64xf32>
    %62 = arith.addf %58, %61 : vector<3x64xf32>
    %c9_59 = arith.constant 9 : index
    %c0_60 = arith.constant 0 : index
    %63 = tpu.strided_load %arg12[%c9_59, %c0_60] {strides = array<i32: 2, 1>} : memref<128x32xf32, #tpu.memory_space<vmem>>, vector<3x32xf32>
    %64 = arith.truncf %63 : vector<3x32xf32> to vector<3x32xbf16>
    %cst_61 = arith.constant dense<0.000000e+00> : vector<3x64xf32>
    %65 = tpu.matmul %64, %20, %cst_61 {dimension_numbers = #tpu.dot_dimension_numbers<[1], [0], [0], [1], [0, 0, 1, 1], [], []>} : vector<3x32xbf16>, vector<32x64xbf16>, vector<3x64xf32> -> vector<3x64xf32>
    %66 = arith.addf %62, %65 : vector<3x64xf32>
    %c10_62 = arith.constant 10 : index
    %c0_63 = arith.constant 0 : index
    %67 = tpu.strided_load %arg12[%c10_62, %c0_63] {strides = array<i32: 2, 1>} : memref<128x32xf32, #tpu.memory_space<vmem>>, vector<3x32xf32>
    %68 = arith.truncf %67 : vector<3x32xf32> to vector<3x32xbf16>
    %cst_64 = arith.constant dense<0.000000e+00> : vector<3x64xf32>
    %69 = tpu.matmul %68, %22, %cst_64 {dimension_numbers = #tpu.dot_dimension_numbers<[1], [0], [0], [1], [0, 0, 1, 1], [], []>} : vector<3x32xbf16>, vector<32x64xbf16>, vector<3x64xf32> -> vector<3x64xf32>
    %70 = arith.addf %66, %69 : vector<3x64xf32>
    %c11_65 = arith.constant 11 : index
    %c0_66 = arith.constant 0 : index
    %71 = tpu.strided_load %arg12[%c11_65, %c0_66] {strides = array<i32: 2, 1>} : memref<128x32xf32, #tpu.memory_space<vmem>>, vector<3x32xf32>
    %72 = arith.truncf %71 : vector<3x32xf32> to vector<3x32xbf16>
    %cst_67 = arith.constant dense<0.000000e+00> : vector<3x64xf32>
    %73 = tpu.matmul %72, %24, %cst_67 {dimension_numbers = #tpu.dot_dimension_numbers<[1], [0], [0], [1], [0, 0, 1, 1], [], []>} : vector<3x32xbf16>, vector<32x64xbf16>, vector<3x64xf32> -> vector<3x64xf32>
    %74 = arith.addf %70, %73 : vector<3x64xf32>
    %c16 = arith.constant 16 : index
    %c0_68 = arith.constant 0 : index
    %75 = tpu.strided_load %arg12[%c16, %c0_68] {strides = array<i32: 2, 1>} : memref<128x32xf32, #tpu.memory_space<vmem>>, vector<3x32xf32>
    %76 = arith.truncf %75 : vector<3x32xf32> to vector<3x32xbf16>
    %cst_69 = arith.constant dense<0.000000e+00> : vector<3x64xf32>
    %77 = tpu.matmul %76, %26, %cst_69 {dimension_numbers = #tpu.dot_dimension_numbers<[1], [0], [0], [1], [0, 0, 1, 1], [], []>} : vector<3x32xbf16>, vector<32x64xbf16>, vector<3x64xf32> -> vector<3x64xf32>
    %78 = arith.addf %74, %77 : vector<3x64xf32>
    %c17 = arith.constant 17 : index
    %c0_70 = arith.constant 0 : index
    %79 = tpu.strided_load %arg12[%c17, %c0_70] {strides = array<i32: 2, 1>} : memref<128x32xf32, #tpu.memory_space<vmem>>, vector<3x32xf32>
    %80 = arith.truncf %79 : vector<3x32xf32> to vector<3x32xbf16>
    %cst_71 = arith.constant dense<0.000000e+00> : vector<3x64xf32>
    %81 = tpu.matmul %80, %28, %cst_71 {dimension_numbers = #tpu.dot_dimension_numbers<[1], [0], [0], [1], [0, 0, 1, 1], [], []>} : vector<3x32xbf16>, vector<32x64xbf16>, vector<3x64xf32> -> vector<3x64xf32>
    %82 = arith.addf %78, %81 : vector<3x64xf32>
    %c18 = arith.constant 18 : index
    %c0_72 = arith.constant 0 : index
    %83 = tpu.strided_load %arg12[%c18, %c0_72] {strides = array<i32: 2, 1>} : memref<128x32xf32, #tpu.memory_space<vmem>>, vector<3x32xf32>
    %84 = arith.truncf %83 : vector<3x32xf32> to vector<3x32xbf16>
    %cst_73 = arith.constant dense<0.000000e+00> : vector<3x64xf32>
    %85 = tpu.matmul %84, %30, %cst_73 {dimension_numbers = #tpu.dot_dimension_numbers<[1], [0], [0], [1], [0, 0, 1, 1], [], []>} : vector<3x32xbf16>, vector<32x64xbf16>, vector<3x64xf32> -> vector<3x64xf32>
    %86 = arith.addf %82, %85 : vector<3x64xf32>
    %c19 = arith.constant 19 : index
    %c0_74 = arith.constant 0 : index
    %87 = tpu.strided_load %arg12[%c19, %c0_74] {strides = array<i32: 2, 1>} : memref<128x32xf32, #tpu.memory_space<vmem>>, vector<3x32xf32>
    %88 = arith.truncf %87 : vector<3x32xf32> to vector<3x32xbf16>
    %cst_75 = arith.constant dense<0.000000e+00> : vector<3x64xf32>
    %89 = tpu.matmul %88, %32, %cst_75 {dimension_numbers = #tpu.dot_dimension_numbers<[1], [0], [0], [1], [0, 0, 1, 1], [], []>} : vector<3x32xbf16>, vector<32x64xbf16>, vector<3x64xf32> -> vector<3x64xf32>
    %90 = arith.addf %86, %89 : vector<3x64xf32>
    %c24 = arith.constant 24 : index
    %c0_76 = arith.constant 0 : index
    %91 = tpu.strided_load %arg12[%c24, %c0_76] {strides = array<i32: 2, 1>} : memref<128x32xf32, #tpu.memory_space<vmem>>, vector<3x32xf32>
    %92 = arith.truncf %91 : vector<3x32xf32> to vector<3x32xbf16>
    %cst_77 = arith.constant dense<0.000000e+00> : vector<3x64xf32>
    %93 = tpu.matmul %92, %34, %cst_77 {dimension_numbers = #tpu.dot_dimension_numbers<[1], [0], [0], [1], [0, 0, 1, 1], [], []>} : vector<3x32xbf16>, vector<32x64xbf16>, vector<3x64xf32> -> vector<3x64xf32>
    %94 = arith.addf %90, %93 : vector<3x64xf32>
    %c25 = arith.constant 25 : index
    %c0_78 = arith.constant 0 : index
    %95 = tpu.strided_load %arg12[%c25, %c0_78] {strides = array<i32: 2, 1>} : memref<128x32xf32, #tpu.memory_space<vmem>>, vector<3x32xf32>
    %96 = arith.truncf %95 : vector<3x32xf32> to vector<3x32xbf16>
    %cst_79 = arith.constant dense<0.000000e+00> : vector<3x64xf32>
    %97 = tpu.matmul %96, %36, %cst_79 {dimension_numbers = #tpu.dot_dimension_numbers<[1], [0], [0], [1], [0, 0, 1, 1], [], []>} : vector<3x32xbf16>, vector<32x64xbf16>, vector<3x64xf32> -> vector<3x64xf32>
    %98 = arith.addf %94, %97 : vector<3x64xf32>
    %c26 = arith.constant 26 : index
    %c0_80 = arith.constant 0 : index
    %99 = tpu.strided_load %arg12[%c26, %c0_80] {strides = array<i32: 2, 1>} : memref<128x32xf32, #tpu.memory_space<vmem>>, vector<3x32xf32>
    %100 = arith.truncf %99 : vector<3x32xf32> to vector<3x32xbf16>
    %cst_81 = arith.constant dense<0.000000e+00> : vector<3x64xf32>
    %101 = tpu.matmul %100, %38, %cst_81 {dimension_numbers = #tpu.dot_dimension_numbers<[1], [0], [0], [1], [0, 0, 1, 1], [], []>} : vector<3x32xbf16>, vector<32x64xbf16>, vector<3x64xf32> -> vector<3x64xf32>
    %102 = arith.addf %98, %101 : vector<3x64xf32>
    %c27 = arith.constant 27 : index
    %c0_82 = arith.constant 0 : index
    %103 = tpu.strided_load %arg12[%c27, %c0_82] {strides = array<i32: 2, 1>} : memref<128x32xf32, #tpu.memory_space<vmem>>, vector<3x32xf32>
    %104 = arith.truncf %103 : vector<3x32xf32> to vector<3x32xbf16>
    %cst_83 = arith.constant dense<0.000000e+00> : vector<3x64xf32>
    %105 = tpu.matmul %104, %40, %cst_83 {dimension_numbers = #tpu.dot_dimension_numbers<[1], [0], [0], [1], [0, 0, 1, 1], [], []>} : vector<3x32xbf16>, vector<32x64xbf16>, vector<3x64xf32> -> vector<3x64xf32>
    %106 = arith.addf %102, %105 : vector<3x64xf32>
    %107 = vector.broadcast %41 : vector<1x64xf32> to vector<3x64xf32>
    %108 = arith.addf %106, %107 : vector<3x64xf32>
    %cst_84 = arith.constant 0.000000e+00 : f32
    %109 = vector.broadcast %cst_84 : f32 to vector<3x64xf32>
    %110 = arith.maximumf %108, %109 : vector<3x64xf32>
    %c0_85 = arith.constant 0 : index
    %c0_86 = arith.constant 0 : index
    %111 = vector.load %arg13[%c0_85, %c0_86] : memref<18x64xf32, #tpu.memory_space<vmem>>, vector<3x64xf32>
    tpu.vector_store %arg13[%c0_85, %c0_86], %110 {strides = array<i32>} : memref<18x64xf32, #tpu.memory_space<vmem>>, vector<3x64xf32>,
    %cst_87 = arith.constant 0.000000e+00 : f32
    %112 = vector.broadcast %cst_87 : f32 to vector<3x64xf32>
    %c16_88 = arith.constant 16 : index
    %c0_89 = arith.constant 0 : index
    %113 = tpu.strided_load %arg12[%c16_88, %c0_89] {strides = array<i32: 2, 1>} : memref<128x32xf32, #tpu.memory_space<vmem>>, vector<3x32xf32>
    %114 = arith.truncf %113 : vector<3x32xf32> to vector<3x32xbf16>
    %cst_90 = arith.constant dense<0.000000e+00> : vector<3x64xf32>
    %115 = tpu.matmul %114, %10, %cst_90 {dimension_numbers = #tpu.dot_dimension_numbers<[1], [0], [0], [1], [0, 0, 1, 1], [], []>} : vector<3x32xbf16>, vector<32x64xbf16>, vector<3x64xf32> -> vector<3x64xf32>
    %116 = arith.addf %112, %115 : vector<3x64xf32>
    %c17_91 = arith.constant 17 : index
    %c0_92 = arith.constant 0 : index
    %117 = tpu.strided_load %arg12[%c17_91, %c0_92] {strides = array<i32: 2, 1>} : memref<128x32xf32, #tpu.memory_space<vmem>>, vector<3x32xf32>
    %118 = arith.truncf %117 : vector<3x32xf32> to vector<3x32xbf16>
    %cst_93 = arith.constant dense<0.000000e+00> : vector<3x64xf32>
    %119 = tpu.matmul %118, %12, %cst_93 {dimension_numbers = #tpu.dot_dimension_numbers<[1], [0], [0], [1], [0, 0, 1, 1], [], []>} : vector<3x32xbf16>, vector<32x64xbf16>, vector<3x64xf32> -> vector<3x64xf32>
    %120 = arith.addf %116, %119 : vector<3x64xf32>
    %c18_94 = arith.constant 18 : index
    %c0_95 = arith.constant 0 : index
    %121 = tpu.strided_load %arg12[%c18_94, %c0_95] {strides = array<i32: 2, 1>} : memref<128x32xf32, #tpu.memory_space<vmem>>, vector<3x32xf32>
    %122 = arith.truncf %121 : vector<3x32xf32> to vector<3x32xbf16>
    %cst_96 = arith.constant dense<0.000000e+00> : vector<3x64xf32>
    %123 = tpu.matmul %122, %14, %cst_96 {dimension_numbers = #tpu.dot_dimension_numbers<[1], [0], [0], [1], [0, 0, 1, 1], [], []>} : vector<3x32xbf16>, vector<32x64xbf16>, vector<3x64xf32> -> vector<3x64xf32>
    %124 = arith.addf %120, %123 : vector<3x64xf32>
    %c19_97 = arith.constant 19 : index
    %c0_98 = arith.constant 0 : index
    %125 = tpu.strided_load %arg12[%c19_97, %c0_98] {strides = array<i32: 2, 1>} : memref<128x32xf32, #tpu.memory_space<vmem>>, vector<3x32xf32>
    %126 = arith.truncf %125 : vector<3x32xf32> to vector<3x32xbf16>
    %cst_99 = arith.constant dense<0.000000e+00> : vector<3x64xf32>
    %127 = tpu.matmul %126, %16, %cst_99 {dimension_numbers = #tpu.dot_dimension_numbers<[1], [0], [0], [1], [0, 0, 1, 1], [], []>} : vector<3x32xbf16>, vector<32x64xbf16>, vector<3x64xf32> -> vector<3x64xf32>
    %128 = arith.addf %124, %127 : vector<3x64xf32>
    %c24_100 = arith.constant 24 : index
    %c0_101 = arith.constant 0 : index
    %129 = tpu.strided_load %arg12[%c24_100, %c0_101] {strides = array<i32: 2, 1>} : memref<128x32xf32, #tpu.memory_space<vmem>>, vector<3x32xf32>
    %130 = arith.truncf %129 : vector<3x32xf32> to vector<3x32xbf16>
    %cst_102 = arith.constant dense<0.000000e+00> : vector<3x64xf32>
    %131 = tpu.matmul %130, %18, %cst_102 {dimension_numbers = #tpu.dot_dimension_numbers<[1], [0], [0], [1], [0, 0, 1, 1], [], []>} : vector<3x32xbf16>, vector<32x64xbf16>, vector<3x64xf32> -> vector<3x64xf32>
    %132 = arith.addf %128, %131 : vector<3x64xf32>
    %c25_103 = arith.constant 25 : index
    %c0_104 = arith.constant 0 : index
    %133 = tpu.strided_load %arg12[%c25_103, %c0_104] {strides = array<i32: 2, 1>} : memref<128x32xf32, #tpu.memory_space<vmem>>, vector<3x32xf32>
    %134 = arith.truncf %133 : vector<3x32xf32> to vector<3x32xbf16>
    %cst_105 = arith.constant dense<0.000000e+00> : vector<3x64xf32>
    %135 = tpu.matmul %134, %20, %cst_105 {dimension_numbers = #tpu.dot_dimension_numbers<[1], [0], [0], [1], [0, 0, 1, 1], [], []>} : vector<3x32xbf16>, vector<32x64xbf16>, vector<3x64xf32> -> vector<3x64xf32>
    %136 = arith.addf %132, %135 : vector<3x64xf32>
    %c26_106 = arith.constant 26 : index
    %c0_107 = arith.constant 0 : index
    %137 = tpu.strided_load %arg12[%c26_106, %c0_107] {strides = array<i32: 2, 1>} : memref<128x32xf32, #tpu.memory_space<vmem>>, vector<3x32xf32>
    %138 = arith.truncf %137 : vector<3x32xf32> to vector<3x32xbf16>
    %cst_108 = arith.constant dense<0.000000e+00> : vector<3x64xf32>
    %139 = tpu.matmul %138, %22, %cst_108 {dimension_numbers = #tpu.dot_dimension_numbers<[1], [0], [0], [1], [0, 0, 1, 1], [], []>} : vector<3x32xbf16>, vector<32x64xbf16>, vector<3x64xf32> -> vector<3x64xf32>
    %140 = arith.addf %136, %139 : vector<3x64xf32>
    %c27_109 = arith.constant 27 : index
    %c0_110 = arith.constant 0 : index
    %141 = tpu.strided_load %arg12[%c27_109, %c0_110] {strides = array<i32: 2, 1>} : memref<128x32xf32, #tpu.memory_space<vmem>>, vector<3x32xf32>
    %142 = arith.truncf %141 : vector<3x32xf32> to vector<3x32xbf16>
    %cst_111 = arith.constant dense<0.000000e+00> : vector<3x64xf32>
    %143 = tpu.matmul %142, %24, %cst_111 {dimension_numbers = #tpu.dot_dimension_numbers<[1], [0], [0], [1], [0, 0, 1, 1], [], []>} : vector<3x32xbf16>, vector<32x64xbf16>, vector<3x64xf32> -> vector<3x64xf32>
    %144 = arith.addf %140, %143 : vector<3x64xf32>
    %c32 = arith.constant 32 : index
    %c0_112 = arith.constant 0 : index
    %145 = tpu.strided_load %arg12[%c32, %c0_112] {strides = array<i32: 2, 1>} : memref<128x32xf32, #tpu.memory_space<vmem>>, vector<3x32xf32>
    %146 = arith.truncf %145 : vector<3x32xf32> to vector<3x32xbf16>
    %cst_113 = arith.constant dense<0.000000e+00> : vector<3x64xf32>
    %147 = tpu.matmul %146, %26, %cst_113 {dimension_numbers = #tpu.dot_dimension_numbers<[1], [0], [0], [1], [0, 0, 1, 1], [], []>} : vector<3x32xbf16>, vector<32x64xbf16>, vector<3x64xf32> -> vector<3x64xf32>
    %148 = arith.addf %144, %147 : vector<3x64xf32>
    %c33 = arith.constant 33 : index
    %c0_114 = arith.constant 0 : index
    %149 = tpu.strided_load %arg12[%c33, %c0_114] {strides = array<i32: 2, 1>} : memref<128x32xf32, #tpu.memory_space<vmem>>, vector<3x32xf32>
    %150 = arith.truncf %149 : vector<3x32xf32> to vector<3x32xbf16>
    %cst_115 = arith.constant dense<0.000000e+00> : vector<3x64xf32>
    %151 = tpu.matmul %150, %28, %cst_115 {dimension_numbers = #tpu.dot_dimension_numbers<[1], [0], [0], [1], [0, 0, 1, 1], [], []>} : vector<3x32xbf16>, vector<32x64xbf16>, vector<3x64xf32> -> vector<3x64xf32>
    %152 = arith.addf %148, %151 : vector<3x64xf32>
    %c34 = arith.constant 34 : index
    %c0_116 = arith.constant 0 : index
    %153 = tpu.strided_load %arg12[%c34, %c0_116] {strides = array<i32: 2, 1>} : memref<128x32xf32, #tpu.memory_space<vmem>>, vector<3x32xf32>
    %154 = arith.truncf %153 : vector<3x32xf32> to vector<3x32xbf16>
    %cst_117 = arith.constant dense<0.000000e+00> : vector<3x64xf32>
    %155 = tpu.matmul %154, %30, %cst_117 {dimension_numbers = #tpu.dot_dimension_numbers<[1], [0], [0], [1], [0, 0, 1, 1], [], []>} : vector<3x32xbf16>, vector<32x64xbf16>, vector<3x64xf32> -> vector<3x64xf32>
    %156 = arith.addf %152, %155 : vector<3x64xf32>
    %c35 = arith.constant 35 : index
    %c0_118 = arith.constant 0 : index
    %157 = tpu.strided_load %arg12[%c35, %c0_118] {strides = array<i32: 2, 1>} : memref<128x32xf32, #tpu.memory_space<vmem>>, vector<3x32xf32>
    %158 = arith.truncf %157 : vector<3x32xf32> to vector<3x32xbf16>
    %cst_119 = arith.constant dense<0.000000e+00> : vector<3x64xf32>
    %159 = tpu.matmul %158, %32, %cst_119 {dimension_numbers = #tpu.dot_dimension_numbers<[1], [0], [0], [1], [0, 0, 1, 1], [], []>} : vector<3x32xbf16>, vector<32x64xbf16>, vector<3x64xf32> -> vector<3x64xf32>
    %160 = arith.addf %156, %159 : vector<3x64xf32>
    %c40 = arith.constant 40 : index
    %c0_120 = arith.constant 0 : index
    %161 = tpu.strided_load %arg12[%c40, %c0_120] {strides = array<i32: 2, 1>} : memref<128x32xf32, #tpu.memory_space<vmem>>, vector<3x32xf32>
    %162 = arith.truncf %161 : vector<3x32xf32> to vector<3x32xbf16>
    %cst_121 = arith.constant dense<0.000000e+00> : vector<3x64xf32>
    %163 = tpu.matmul %162, %34, %cst_121 {dimension_numbers = #tpu.dot_dimension_numbers<[1], [0], [0], [1], [0, 0, 1, 1], [], []>} : vector<3x32xbf16>, vector<32x64xbf16>, vector<3x64xf32> -> vector<3x64xf32>
    %164 = arith.addf %160, %163 : vector<3x64xf32>
    %c41 = arith.constant 41 : index
    %c0_122 = arith.constant 0 : index
    %165 = tpu.strided_load %arg12[%c41, %c0_122] {strides = array<i32: 2, 1>} : memref<128x32xf32, #tpu.memory_space<vmem>>, vector<3x32xf32>
    %166 = arith.truncf %165 : vector<3x32xf32> to vector<3x32xbf16>
    %cst_123 = arith.constant dense<0.000000e+00> : vector<3x64xf32>
    %167 = tpu.matmul %166, %36, %cst_123 {dimension_numbers = #tpu.dot_dimension_numbers<[1], [0], [0], [1], [0, 0, 1, 1], [], []>} : vector<3x32xbf16>, vector<32x64xbf16>, vector<3x64xf32> -> vector<3x64xf32>
    %168 = arith.addf %164, %167 : vector<3x64xf32>
    %c42 = arith.constant 42 : index
    %c0_124 = arith.constant 0 : index
    %169 = tpu.strided_load %arg12[%c42, %c0_124] {strides = array<i32: 2, 1>} : memref<128x32xf32, #tpu.memory_space<vmem>>, vector<3x32xf32>
    %170 = arith.truncf %169 : vector<3x32xf32> to vector<3x32xbf16>
    %cst_125 = arith.constant dense<0.000000e+00> : vector<3x64xf32>
    %171 = tpu.matmul %170, %38, %cst_125 {dimension_numbers = #tpu.dot_dimension_numbers<[1], [0], [0], [1], [0, 0, 1, 1], [], []>} : vector<3x32xbf16>, vector<32x64xbf16>, vector<3x64xf32> -> vector<3x64xf32>
    %172 = arith.addf %168, %171 : vector<3x64xf32>
    %c43 = arith.constant 43 : index
    %c0_126 = arith.constant 0 : index
    %173 = tpu.strided_load %arg12[%c43, %c0_126] {strides = array<i32: 2, 1>} : memref<128x32xf32, #tpu.memory_space<vmem>>, vector<3x32xf32>
    %174 = arith.truncf %173 : vector<3x32xf32> to vector<3x32xbf16>
    %cst_127 = arith.constant dense<0.000000e+00> : vector<3x64xf32>
    %175 = tpu.matmul %174, %40, %cst_127 {dimension_numbers = #tpu.dot_dimension_numbers<[1], [0], [0], [1], [0, 0, 1, 1], [], []>} : vector<3x32xbf16>, vector<32x64xbf16>, vector<3x64xf32> -> vector<3x64xf32>
    %176 = arith.addf %172, %175 : vector<3x64xf32>
    %177 = vector.broadcast %41 : vector<1x64xf32> to vector<3x64xf32>
    %178 = arith.addf %176, %177 : vector<3x64xf32>
    %cst_128 = arith.constant 0.000000e+00 : f32
    %179 = vector.broadcast %cst_128 : f32 to vector<3x64xf32>
    %180 = arith.maximumf %178, %179 : vector<3x64xf32>
    %c3_129 = arith.constant 3 : index
    %c0_130 = arith.constant 0 : index
    %181 = vector.load %arg13[%c3_129, %c0_130] : memref<18x64xf32, #tpu.memory_space<vmem>>, vector<3x64xf32>
    tpu.vector_store %arg13[%c3_129, %c0_130], %180 {strides = array<i32>} : memref<18x64xf32, #tpu.memory_space<vmem>>, vector<3x64xf32>,
    %cst_131 = arith.constant 0.000000e+00 : f32
    %182 = vector.broadcast %cst_131 : f32 to vector<3x64xf32>
    %c32_132 = arith.constant 32 : index
    %c0_133 = arith.constant 0 : index
    %183 = tpu.strided_load %arg12[%c32_132, %c0_133] {strides = array<i32: 2, 1>} : memref<128x32xf32, #tpu.memory_space<vmem>>, vector<3x32xf32>
    %184 = arith.truncf %183 : vector<3x32xf32> to vector<3x32xbf16>
    %cst_134 = arith.constant dense<0.000000e+00> : vector<3x64xf32>
    %185 = tpu.matmul %184, %10, %cst_134 {dimension_numbers = #tpu.dot_dimension_numbers<[1], [0], [0], [1], [0, 0, 1, 1], [], []>} : vector<3x32xbf16>, vector<32x64xbf16>, vector<3x64xf32> -> vector<3x64xf32>
    %186 = arith.addf %182, %185 : vector<3x64xf32>
    %c33_135 = arith.constant 33 : index
    %c0_136 = arith.constant 0 : index
    %187 = tpu.strided_load %arg12[%c33_135, %c0_136] {strides = array<i32: 2, 1>} : memref<128x32xf32, #tpu.memory_space<vmem>>, vector<3x32xf32>
    %188 = arith.truncf %187 : vector<3x32xf32> to vector<3x32xbf16>
    %cst_137 = arith.constant dense<0.000000e+00> : vector<3x64xf32>
    %189 = tpu.matmul %188, %12, %cst_137 {dimension_numbers = #tpu.dot_dimension_numbers<[1], [0], [0], [1], [0, 0, 1, 1], [], []>} : vector<3x32xbf16>, vector<32x64xbf16>, vector<3x64xf32> -> vector<3x64xf32>
    %190 = arith.addf %186, %189 : vector<3x64xf32>
    %c34_138 = arith.constant 34 : index
    %c0_139 = arith.constant 0 : index
    %191 = tpu.strided_load %arg12[%c34_138, %c0_139] {strides = array<i32: 2, 1>} : memref<128x32xf32, #tpu.memory_space<vmem>>, vector<3x32xf32>
    %192 = arith.truncf %191 : vector<3x32xf32> to vector<3x32xbf16>
    %cst_140 = arith.constant dense<0.000000e+00> : vector<3x64xf32>
    %193 = tpu.matmul %192, %14, %cst_140 {dimension_numbers = #tpu.dot_dimension_numbers<[1], [0], [0], [1], [0, 0, 1, 1], [], []>} : vector<3x32xbf16>, vector<32x64xbf16>, vector<3x64xf32> -> vector<3x64xf32>
    %194 = arith.addf %190, %193 : vector<3x64xf32>
    %c35_141 = arith.constant 35 : index
    %c0_142 = arith.constant 0 : index
    %195 = tpu.strided_load %arg12[%c35_141, %c0_142] {strides = array<i32: 2, 1>} : memref<128x32xf32, #tpu.memory_space<vmem>>, vector<3x32xf32>
    %196 = arith.truncf %195 : vector<3x32xf32> to vector<3x32xbf16>
    %cst_143 = arith.constant dense<0.000000e+00> : vector<3x64xf32>
    %197 = tpu.matmul %196, %16, %cst_143 {dimension_numbers = #tpu.dot_dimension_numbers<[1], [0], [0], [1], [0, 0, 1, 1], [], []>} : vector<3x32xbf16>, vector<32x64xbf16>, vector<3x64xf32> -> vector<3x64xf32>
    %198 = arith.addf %194, %197 : vector<3x64xf32>
    %c40_144 = arith.constant 40 : index
    %c0_145 = arith.constant 0 : index
    %199 = tpu.strided_load %arg12[%c40_144, %c0_145] {strides = array<i32: 2, 1>} : memref<128x32xf32, #tpu.memory_space<vmem>>, vector<3x32xf32>
    %200 = arith.truncf %199 : vector<3x32xf32> to vector<3x32xbf16>
    %cst_146 = arith.constant dense<0.000000e+00> : vector<3x64xf32>
    %201 = tpu.matmul %200, %18, %cst_146 {dimension_numbers = #tpu.dot_dimension_numbers<[1], [0], [0], [1], [0, 0, 1, 1], [], []>} : vector<3x32xbf16>, vector<32x64xbf16>, vector<3x64xf32> -> vector<3x64xf32>
    %202 = arith.addf %198, %201 : vector<3x64xf32>
    %c41_147 = arith.constant 41 : index
    %c0_148 = arith.constant 0 : index
    %203 = tpu.strided_load %arg12[%c41_147, %c0_148] {strides = array<i32: 2, 1>} : memref<128x32xf32, #tpu.memory_space<vmem>>, vector<3x32xf32>
    %204 = arith.truncf %203 : vector<3x32xf32> to vector<3x32xbf16>
    %cst_149 = arith.constant dense<0.000000e+00> : vector<3x64xf32>
    %205 = tpu.matmul %204, %20, %cst_149 {dimension_numbers = #tpu.dot_dimension_numbers<[1], [0], [0], [1], [0, 0, 1, 1], [], []>} : vector<3x32xbf16>, vector<32x64xbf16>, vector<3x64xf32> -> vector<3x64xf32>
    %206 = arith.addf %202, %205 : vector<3x64xf32>
    %c42_150 = arith.constant 42 : index
    %c0_151 = arith.constant 0 : index
    %207 = tpu.strided_load %arg12[%c42_150, %c0_151] {strides = array<i32: 2, 1>} : memref<128x32xf32, #tpu.memory_space<vmem>>, vector<3x32xf32>
    %208 = arith.truncf %207 : vector<3x32xf32> to vector<3x32xbf16>
    %cst_152 = arith.constant dense<0.000000e+00> : vector<3x64xf32>
    %209 = tpu.matmul %208, %22, %cst_152 {dimension_numbers = #tpu.dot_dimension_numbers<[1], [0], [0], [1], [0, 0, 1, 1], [], []>} : vector<3x32xbf16>, vector<32x64xbf16>, vector<3x64xf32> -> vector<3x64xf32>
    %210 = arith.addf %206, %209 : vector<3x64xf32>
    %c43_153 = arith.constant 43 : index
    %c0_154 = arith.constant 0 : index
    %211 = tpu.strided_load %arg12[%c43_153, %c0_154] {strides = array<i32: 2, 1>} : memref<128x32xf32, #tpu.memory_space<vmem>>, vector<3x32xf32>
    %212 = arith.truncf %211 : vector<3x32xf32> to vector<3x32xbf16>
    %cst_155 = arith.constant dense<0.000000e+00> : vector<3x64xf32>
    %213 = tpu.matmul %212, %24, %cst_155 {dimension_numbers = #tpu.dot_dimension_numbers<[1], [0], [0], [1], [0, 0, 1, 1], [], []>} : vector<3x32xbf16>, vector<32x64xbf16>, vector<3x64xf32> -> vector<3x64xf32>
    %214 = arith.addf %210, %213 : vector<3x64xf32>
    %c48 = arith.constant 48 : index
    %c0_156 = arith.constant 0 : index
    %215 = tpu.strided_load %arg12[%c48, %c0_156] {strides = array<i32: 2, 1>} : memref<128x32xf32, #tpu.memory_space<vmem>>, vector<3x32xf32>
    %216 = arith.truncf %215 : vector<3x32xf32> to vector<3x32xbf16>
    %cst_157 = arith.constant dense<0.000000e+00> : vector<3x64xf32>
    %217 = tpu.matmul %216, %26, %cst_157 {dimension_numbers = #tpu.dot_dimension_numbers<[1], [0], [0], [1], [0, 0, 1, 1], [], []>} : vector<3x32xbf16>, vector<32x64xbf16>, vector<3x64xf32> -> vector<3x64xf32>
    %218 = arith.addf %214, %217 : vector<3x64xf32>
    %c49 = arith.constant 49 : index
    %c0_158 = arith.constant 0 : index
    %219 = tpu.strided_load %arg12[%c49, %c0_158] {strides = array<i32: 2, 1>} : memref<128x32xf32, #tpu.memory_space<vmem>>, vector<3x32xf32>
    %220 = arith.truncf %219 : vector<3x32xf32> to vector<3x32xbf16>
    %cst_159 = arith.constant dense<0.000000e+00> : vector<3x64xf32>
    %221 = tpu.matmul %220, %28, %cst_159 {dimension_numbers = #tpu.dot_dimension_numbers<[1], [0], [0], [1], [0, 0, 1, 1], [], []>} : vector<3x32xbf16>, vector<32x64xbf16>, vector<3x64xf32> -> vector<3x64xf32>
    %222 = arith.addf %218, %221 : vector<3x64xf32>
    %c50 = arith.constant 50 : index
    %c0_160 = arith.constant 0 : index
    %223 = tpu.strided_load %arg12[%c50, %c0_160] {strides = array<i32: 2, 1>} : memref<128x32xf32, #tpu.memory_space<vmem>>, vector<3x32xf32>
    %224 = arith.truncf %223 : vector<3x32xf32> to vector<3x32xbf16>
    %cst_161 = arith.constant dense<0.000000e+00> : vector<3x64xf32>
    %225 = tpu.matmul %224, %30, %cst_161 {dimension_numbers = #tpu.dot_dimension_numbers<[1], [0], [0], [1], [0, 0, 1, 1], [], []>} : vector<3x32xbf16>, vector<32x64xbf16>, vector<3x64xf32> -> vector<3x64xf32>
    %226 = arith.addf %222, %225 : vector<3x64xf32>
    %c51 = arith.constant 51 : index
    %c0_162 = arith.constant 0 : index
    %227 = tpu.strided_load %arg12[%c51, %c0_162] {strides = array<i32: 2, 1>} : memref<128x32xf32, #tpu.memory_space<vmem>>, vector<3x32xf32>
    %228 = arith.truncf %227 : vector<3x32xf32> to vector<3x32xbf16>
    %cst_163 = arith.constant dense<0.000000e+00> : vector<3x64xf32>
    %229 = tpu.matmul %228, %32, %cst_163 {dimension_numbers = #tpu.dot_dimension_numbers<[1], [0], [0], [1], [0, 0, 1, 1], [], []>} : vector<3x32xbf16>, vector<32x64xbf16>, vector<3x64xf32> -> vector<3x64xf32>
    %230 = arith.addf %226, %229 : vector<3x64xf32>
    %c56 = arith.constant 56 : index
    %c0_164 = arith.constant 0 : index
    %231 = tpu.strided_load %arg12[%c56, %c0_164] {strides = array<i32: 2, 1>} : memref<128x32xf32, #tpu.memory_space<vmem>>, vector<3x32xf32>
    %232 = arith.truncf %231 : vector<3x32xf32> to vector<3x32xbf16>
    %cst_165 = arith.constant dense<0.000000e+00> : vector<3x64xf32>
    %233 = tpu.matmul %232, %34, %cst_165 {dimension_numbers = #tpu.dot_dimension_numbers<[1], [0], [0], [1], [0, 0, 1, 1], [], []>} : vector<3x32xbf16>, vector<32x64xbf16>, vector<3x64xf32> -> vector<3x64xf32>
    %234 = arith.addf %230, %233 : vector<3x64xf32>
    %c57 = arith.constant 57 : index
    %c0_166 = arith.constant 0 : index
    %235 = tpu.strided_load %arg12[%c57, %c0_166] {strides = array<i32: 2, 1>} : memref<128x32xf32, #tpu.memory_space<vmem>>, vector<3x32xf32>
    %236 = arith.truncf %235 : vector<3x32xf32> to vector<3x32xbf16>
    %cst_167 = arith.constant dense<0.000000e+00> : vector<3x64xf32>
    %237 = tpu.matmul %236, %36, %cst_167 {dimension_numbers = #tpu.dot_dimension_numbers<[1], [0], [0], [1], [0, 0, 1, 1], [], []>} : vector<3x32xbf16>, vector<32x64xbf16>, vector<3x64xf32> -> vector<3x64xf32>
    %238 = arith.addf %234, %237 : vector<3x64xf32>
    %c58 = arith.constant 58 : index
    %c0_168 = arith.constant 0 : index
    %239 = tpu.strided_load %arg12[%c58, %c0_168] {strides = array<i32: 2, 1>} : memref<128x32xf32, #tpu.memory_space<vmem>>, vector<3x32xf32>
    %240 = arith.truncf %239 : vector<3x32xf32> to vector<3x32xbf16>
    %cst_169 = arith.constant dense<0.000000e+00> : vector<3x64xf32>
    %241 = tpu.matmul %240, %38, %cst_169 {dimension_numbers = #tpu.dot_dimension_numbers<[1], [0], [0], [1], [0, 0, 1, 1], [], []>} : vector<3x32xbf16>, vector<32x64xbf16>, vector<3x64xf32> -> vector<3x64xf32>
    %242 = arith.addf %238, %241 : vector<3x64xf32>
    %c59 = arith.constant 59 : index
    %c0_170 = arith.constant 0 : index
    %243 = tpu.strided_load %arg12[%c59, %c0_170] {strides = array<i32: 2, 1>} : memref<128x32xf32, #tpu.memory_space<vmem>>, vector<3x32xf32>
    %244 = arith.truncf %243 : vector<3x32xf32> to vector<3x32xbf16>
    %cst_171 = arith.constant dense<0.000000e+00> : vector<3x64xf32>
    %245 = tpu.matmul %244, %40, %cst_171 {dimension_numbers = #tpu.dot_dimension_numbers<[1], [0], [0], [1], [0, 0, 1, 1], [], []>} : vector<3x32xbf16>, vector<32x64xbf16>, vector<3x64xf32> -> vector<3x64xf32>
    %246 = arith.addf %242, %245 : vector<3x64xf32>
    %247 = vector.broadcast %41 : vector<1x64xf32> to vector<3x64xf32>
    %248 = arith.addf %246, %247 : vector<3x64xf32>
    %cst_172 = arith.constant 0.000000e+00 : f32
    %249 = vector.broadcast %cst_172 : f32 to vector<3x64xf32>
    %250 = arith.maximumf %248, %249 : vector<3x64xf32>
    %c6_173 = arith.constant 6 : index
    %c0_174 = arith.constant 0 : index
    %251 = vector.load %arg13[%c6_173, %c0_174] : memref<18x64xf32, #tpu.memory_space<vmem>>, vector<3x64xf32>
    tpu.vector_store %arg13[%c6_173, %c0_174], %250 {strides = array<i32>} : memref<18x64xf32, #tpu.memory_space<vmem>>, vector<3x64xf32>,
    %cst_175 = arith.constant 0.000000e+00 : f32
    %252 = vector.broadcast %cst_175 : f32 to vector<3x64xf32>
    %c64 = arith.constant 64 : index
    %c0_176 = arith.constant 0 : index
    %253 = tpu.strided_load %arg12[%c64, %c0_176] {strides = array<i32: 2, 1>} : memref<128x32xf32, #tpu.memory_space<vmem>>, vector<3x32xf32>
    %254 = arith.truncf %253 : vector<3x32xf32> to vector<3x32xbf16>
    %cst_177 = arith.constant dense<0.000000e+00> : vector<3x64xf32>
    %255 = tpu.matmul %254, %10, %cst_177 {dimension_numbers = #tpu.dot_dimension_numbers<[1], [0], [0], [1], [0, 0, 1, 1], [], []>} : vector<3x32xbf16>, vector<32x64xbf16>, vector<3x64xf32> -> vector<3x64xf32>
    %256 = arith.addf %252, %255 : vector<3x64xf32>
    %c65 = arith.constant 65 : index
    %c0_178 = arith.constant 0 : index
    %257 = tpu.strided_load %arg12[%c65, %c0_178] {strides = array<i32: 2, 1>} : memref<128x32xf32, #tpu.memory_space<vmem>>, vector<3x32xf32>
    %258 = arith.truncf %257 : vector<3x32xf32> to vector<3x32xbf16>
    %cst_179 = arith.constant dense<0.000000e+00> : vector<3x64xf32>
    %259 = tpu.matmul %258, %12, %cst_179 {dimension_numbers = #tpu.dot_dimension_numbers<[1], [0], [0], [1], [0, 0, 1, 1], [], []>} : vector<3x32xbf16>, vector<32x64xbf16>, vector<3x64xf32> -> vector<3x64xf32>
    %260 = arith.addf %256, %259 : vector<3x64xf32>
    %c66 = arith.constant 66 : index
    %c0_180 = arith.constant 0 : index
    %261 = tpu.strided_load %arg12[%c66, %c0_180] {strides = array<i32: 2, 1>} : memref<128x32xf32, #tpu.memory_space<vmem>>, vector<3x32xf32>
    %262 = arith.truncf %261 : vector<3x32xf32> to vector<3x32xbf16>
    %cst_181 = arith.constant dense<0.000000e+00> : vector<3x64xf32>
    %263 = tpu.matmul %262, %14, %cst_181 {dimension_numbers = #tpu.dot_dimension_numbers<[1], [0], [0], [1], [0, 0, 1, 1], [], []>} : vector<3x32xbf16>, vector<32x64xbf16>, vector<3x64xf32> -> vector<3x64xf32>
    %264 = arith.addf %260, %263 : vector<3x64xf32>
    %c67 = arith.constant 67 : index
    %c0_182 = arith.constant 0 : index
    %265 = tpu.strided_load %arg12[%c67, %c0_182] {strides = array<i32: 2, 1>} : memref<128x32xf32, #tpu.memory_space<vmem>>, vector<3x32xf32>
    %266 = arith.truncf %265 : vector<3x32xf32> to vector<3x32xbf16>
    %cst_183 = arith.constant dense<0.000000e+00> : vector<3x64xf32>
    %267 = tpu.matmul %266, %16, %cst_183 {dimension_numbers = #tpu.dot_dimension_numbers<[1], [0], [0], [1], [0, 0, 1, 1], [], []>} : vector<3x32xbf16>, vector<32x64xbf16>, vector<3x64xf32> -> vector<3x64xf32>
    %268 = arith.addf %264, %267 : vector<3x64xf32>
    %c72 = arith.constant 72 : index
    %c0_184 = arith.constant 0 : index
    %269 = tpu.strided_load %arg12[%c72, %c0_184] {strides = array<i32: 2, 1>} : memref<128x32xf32, #tpu.memory_space<vmem>>, vector<3x32xf32>
    %270 = arith.truncf %269 : vector<3x32xf32> to vector<3x32xbf16>
    %cst_185 = arith.constant dense<0.000000e+00> : vector<3x64xf32>
    %271 = tpu.matmul %270, %18, %cst_185 {dimension_numbers = #tpu.dot_dimension_numbers<[1], [0], [0], [1], [0, 0, 1, 1], [], []>} : vector<3x32xbf16>, vector<32x64xbf16>, vector<3x64xf32> -> vector<3x64xf32>
    %272 = arith.addf %268, %271 : vector<3x64xf32>
    %c73 = arith.constant 73 : index
    %c0_186 = arith.constant 0 : index
    %273 = tpu.strided_load %arg12[%c73, %c0_186] {strides = array<i32: 2, 1>} : memref<128x32xf32, #tpu.memory_space<vmem>>, vector<3x32xf32>
    %274 = arith.truncf %273 : vector<3x32xf32> to vector<3x32xbf16>
    %cst_187 = arith.constant dense<0.000000e+00> : vector<3x64xf32>
    %275 = tpu.matmul %274, %20, %cst_187 {dimension_numbers = #tpu.dot_dimension_numbers<[1], [0], [0], [1], [0, 0, 1, 1], [], []>} : vector<3x32xbf16>, vector<32x64xbf16>, vector<3x64xf32> -> vector<3x64xf32>
    %276 = arith.addf %272, %275 : vector<3x64xf32>
    %c74 = arith.constant 74 : index
    %c0_188 = arith.constant 0 : index
    %277 = tpu.strided_load %arg12[%c74, %c0_188] {strides = array<i32: 2, 1>} : memref<128x32xf32, #tpu.memory_space<vmem>>, vector<3x32xf32>
    %278 = arith.truncf %277 : vector<3x32xf32> to vector<3x32xbf16>
    %cst_189 = arith.constant dense<0.000000e+00> : vector<3x64xf32>
    %279 = tpu.matmul %278, %22, %cst_189 {dimension_numbers = #tpu.dot_dimension_numbers<[1], [0], [0], [1], [0, 0, 1, 1], [], []>} : vector<3x32xbf16>, vector<32x64xbf16>, vector<3x64xf32> -> vector<3x64xf32>
    %280 = arith.addf %276, %279 : vector<3x64xf32>
    %c75 = arith.constant 75 : index
    %c0_190 = arith.constant 0 : index
    %281 = tpu.strided_load %arg12[%c75, %c0_190] {strides = array<i32: 2, 1>} : memref<128x32xf32, #tpu.memory_space<vmem>>, vector<3x32xf32>
    %282 = arith.truncf %281 : vector<3x32xf32> to vector<3x32xbf16>
    %cst_191 = arith.constant dense<0.000000e+00> : vector<3x64xf32>
    %283 = tpu.matmul %282, %24, %cst_191 {dimension_numbers = #tpu.dot_dimension_numbers<[1], [0], [0], [1], [0, 0, 1, 1], [], []>} : vector<3x32xbf16>, vector<32x64xbf16>, vector<3x64xf32> -> vector<3x64xf32>
    %284 = arith.addf %280, %283 : vector<3x64xf32>
    %c80 = arith.constant 80 : index
    %c0_192 = arith.constant 0 : index
    %285 = tpu.strided_load %arg12[%c80, %c0_192] {strides = array<i32: 2, 1>} : memref<128x32xf32, #tpu.memory_space<vmem>>, vector<3x32xf32>
    %286 = arith.truncf %285 : vector<3x32xf32> to vector<3x32xbf16>
    %cst_193 = arith.constant dense<0.000000e+00> : vector<3x64xf32>
    %287 = tpu.matmul %286, %26, %cst_193 {dimension_numbers = #tpu.dot_dimension_numbers<[1], [0], [0], [1], [0, 0, 1, 1], [], []>} : vector<3x32xbf16>, vector<32x64xbf16>, vector<3x64xf32> -> vector<3x64xf32>
    %288 = arith.addf %284, %287 : vector<3x64xf32>
    %c81 = arith.constant 81 : index
    %c0_194 = arith.constant 0 : index
    %289 = tpu.strided_load %arg12[%c81, %c0_194] {strides = array<i32: 2, 1>} : memref<128x32xf32, #tpu.memory_space<vmem>>, vector<3x32xf32>
    %290 = arith.truncf %289 : vector<3x32xf32> to vector<3x32xbf16>
    %cst_195 = arith.constant dense<0.000000e+00> : vector<3x64xf32>
    %291 = tpu.matmul %290, %28, %cst_195 {dimension_numbers = #tpu.dot_dimension_numbers<[1], [0], [0], [1], [0, 0, 1, 1], [], []>} : vector<3x32xbf16>, vector<32x64xbf16>, vector<3x64xf32> -> vector<3x64xf32>
    %292 = arith.addf %288, %291 : vector<3x64xf32>
    %c82 = arith.constant 82 : index
    %c0_196 = arith.constant 0 : index
    %293 = tpu.strided_load %arg12[%c82, %c0_196] {strides = array<i32: 2, 1>} : memref<128x32xf32, #tpu.memory_space<vmem>>, vector<3x32xf32>
    %294 = arith.truncf %293 : vector<3x32xf32> to vector<3x32xbf16>
    %cst_197 = arith.constant dense<0.000000e+00> : vector<3x64xf32>
    %295 = tpu.matmul %294, %30, %cst_197 {dimension_numbers = #tpu.dot_dimension_numbers<[1], [0], [0], [1], [0, 0, 1, 1], [], []>} : vector<3x32xbf16>, vector<32x64xbf16>, vector<3x64xf32> -> vector<3x64xf32>
    %296 = arith.addf %292, %295 : vector<3x64xf32>
    %c83 = arith.constant 83 : index
    %c0_198 = arith.constant 0 : index
    %297 = tpu.strided_load %arg12[%c83, %c0_198] {strides = array<i32: 2, 1>} : memref<128x32xf32, #tpu.memory_space<vmem>>, vector<3x32xf32>
    %298 = arith.truncf %297 : vector<3x32xf32> to vector<3x32xbf16>
    %cst_199 = arith.constant dense<0.000000e+00> : vector<3x64xf32>
    %299 = tpu.matmul %298, %32, %cst_199 {dimension_numbers = #tpu.dot_dimension_numbers<[1], [0], [0], [1], [0, 0, 1, 1], [], []>} : vector<3x32xbf16>, vector<32x64xbf16>, vector<3x64xf32> -> vector<3x64xf32>
    %300 = arith.addf %296, %299 : vector<3x64xf32>
    %c88 = arith.constant 88 : index
    %c0_200 = arith.constant 0 : index
    %301 = tpu.strided_load %arg12[%c88, %c0_200] {strides = array<i32: 2, 1>} : memref<128x32xf32, #tpu.memory_space<vmem>>, vector<3x32xf32>
    %302 = arith.truncf %301 : vector<3x32xf32> to vector<3x32xbf16>
    %cst_201 = arith.constant dense<0.000000e+00> : vector<3x64xf32>
    %303 = tpu.matmul %302, %34, %cst_201 {dimension_numbers = #tpu.dot_dimension_numbers<[1], [0], [0], [1], [0, 0, 1, 1], [], []>} : vector<3x32xbf16>, vector<32x64xbf16>, vector<3x64xf32> -> vector<3x64xf32>
    %304 = arith.addf %300, %303 : vector<3x64xf32>
    %c89 = arith.constant 89 : index
    %c0_202 = arith.constant 0 : index
    %305 = tpu.strided_load %arg12[%c89, %c0_202] {strides = array<i32: 2, 1>} : memref<128x32xf32, #tpu.memory_space<vmem>>, vector<3x32xf32>
    %306 = arith.truncf %305 : vector<3x32xf32> to vector<3x32xbf16>
    %cst_203 = arith.constant dense<0.000000e+00> : vector<3x64xf32>
    %307 = tpu.matmul %306, %36, %cst_203 {dimension_numbers = #tpu.dot_dimension_numbers<[1], [0], [0], [1], [0, 0, 1, 1], [], []>} : vector<3x32xbf16>, vector<32x64xbf16>, vector<3x64xf32> -> vector<3x64xf32>
    %308 = arith.addf %304, %307 : vector<3x64xf32>
    %c90 = arith.constant 90 : index
    %c0_204 = arith.constant 0 : index
    %309 = tpu.strided_load %arg12[%c90, %c0_204] {strides = array<i32: 2, 1>} : memref<128x32xf32, #tpu.memory_space<vmem>>, vector<3x32xf32>
    %310 = arith.truncf %309 : vector<3x32xf32> to vector<3x32xbf16>
    %cst_205 = arith.constant dense<0.000000e+00> : vector<3x64xf32>
    %311 = tpu.matmul %310, %38, %cst_205 {dimension_numbers = #tpu.dot_dimension_numbers<[1], [0], [0], [1], [0, 0, 1, 1], [], []>} : vector<3x32xbf16>, vector<32x64xbf16>, vector<3x64xf32> -> vector<3x64xf32>
    %312 = arith.addf %308, %311 : vector<3x64xf32>
    %c91 = arith.constant 91 : index
    %c0_206 = arith.constant 0 : index
    %313 = tpu.strided_load %arg12[%c91, %c0_206] {strides = array<i32: 2, 1>} : memref<128x32xf32, #tpu.memory_space<vmem>>, vector<3x32xf32>
    %314 = arith.truncf %313 : vector<3x32xf32> to vector<3x32xbf16>
    %cst_207 = arith.constant dense<0.000000e+00> : vector<3x64xf32>
    %315 = tpu.matmul %314, %40, %cst_207 {dimension_numbers = #tpu.dot_dimension_numbers<[1], [0], [0], [1], [0, 0, 1, 1], [], []>} : vector<3x32xbf16>, vector<32x64xbf16>, vector<3x64xf32> -> vector<3x64xf32>
    %316 = arith.addf %312, %315 : vector<3x64xf32>
    %317 = vector.broadcast %41 : vector<1x64xf32> to vector<3x64xf32>
    %318 = arith.addf %316, %317 : vector<3x64xf32>
    %cst_208 = arith.constant 0.000000e+00 : f32
    %319 = vector.broadcast %cst_208 : f32 to vector<3x64xf32>
    %320 = arith.maximumf %318, %319 : vector<3x64xf32>
    %c9_209 = arith.constant 9 : index
    %c0_210 = arith.constant 0 : index
    %321 = vector.load %arg13[%c9_209, %c0_210] : memref<18x64xf32, #tpu.memory_space<vmem>>, vector<3x64xf32>
    tpu.vector_store %arg13[%c9_209, %c0_210], %320 {strides = array<i32>} : memref<18x64xf32, #tpu.memory_space<vmem>>, vector<3x64xf32>,
    %cst_211 = arith.constant 0.000000e+00 : f32
    %322 = vector.broadcast %cst_211 : f32 to vector<3x64xf32>
    %c80_212 = arith.constant 80 : index
    %c0_213 = arith.constant 0 : index
    %323 = tpu.strided_load %arg12[%c80_212, %c0_213] {strides = array<i32: 2, 1>} : memref<128x32xf32, #tpu.memory_space<vmem>>, vector<3x32xf32>
    %324 = arith.truncf %323 : vector<3x32xf32> to vector<3x32xbf16>
    %cst_214 = arith.constant dense<0.000000e+00> : vector<3x64xf32>
    %325 = tpu.matmul %324, %10, %cst_214 {dimension_numbers = #tpu.dot_dimension_numbers<[1], [0], [0], [1], [0, 0, 1, 1], [], []>} : vector<3x32xbf16>, vector<32x64xbf16>, vector<3x64xf32> -> vector<3x64xf32>
    %326 = arith.addf %322, %325 : vector<3x64xf32>
    %c81_215 = arith.constant 81 : index
    %c0_216 = arith.constant 0 : index
    %327 = tpu.strided_load %arg12[%c81_215, %c0_216] {strides = array<i32: 2, 1>} : memref<128x32xf32, #tpu.memory_space<vmem>>, vector<3x32xf32>
    %328 = arith.truncf %327 : vector<3x32xf32> to vector<3x32xbf16>
    %cst_217 = arith.constant dense<0.000000e+00> : vector<3x64xf32>
    %329 = tpu.matmul %328, %12, %cst_217 {dimension_numbers = #tpu.dot_dimension_numbers<[1], [0], [0], [1], [0, 0, 1, 1], [], []>} : vector<3x32xbf16>, vector<32x64xbf16>, vector<3x64xf32> -> vector<3x64xf32>
    %330 = arith.addf %326, %329 : vector<3x64xf32>
    %c82_218 = arith.constant 82 : index
    %c0_219 = arith.constant 0 : index
    %331 = tpu.strided_load %arg12[%c82_218, %c0_219] {strides = array<i32: 2, 1>} : memref<128x32xf32, #tpu.memory_space<vmem>>, vector<3x32xf32>
    %332 = arith.truncf %331 : vector<3x32xf32> to vector<3x32xbf16>
    %cst_220 = arith.constant dense<0.000000e+00> : vector<3x64xf32>
    %333 = tpu.matmul %332, %14, %cst_220 {dimension_numbers = #tpu.dot_dimension_numbers<[1], [0], [0], [1], [0, 0, 1, 1], [], []>} : vector<3x32xbf16>, vector<32x64xbf16>, vector<3x64xf32> -> vector<3x64xf32>
    %334 = arith.addf %330, %333 : vector<3x64xf32>
    %c83_221 = arith.constant 83 : index
    %c0_222 = arith.constant 0 : index
    %335 = tpu.strided_load %arg12[%c83_221, %c0_222] {strides = array<i32: 2, 1>} : memref<128x32xf32, #tpu.memory_space<vmem>>, vector<3x32xf32>
    %336 = arith.truncf %335 : vector<3x32xf32> to vector<3x32xbf16>
    %cst_223 = arith.constant dense<0.000000e+00> : vector<3x64xf32>
    %337 = tpu.matmul %336, %16, %cst_223 {dimension_numbers = #tpu.dot_dimension_numbers<[1], [0], [0], [1], [0, 0, 1, 1], [], []>} : vector<3x32xbf16>, vector<32x64xbf16>, vector<3x64xf32> -> vector<3x64xf32>
    %338 = arith.addf %334, %337 : vector<3x64xf32>
    %c88_224 = arith.constant 88 : index
    %c0_225 = arith.constant 0 : index
    %339 = tpu.strided_load %arg12[%c88_224, %c0_225] {strides = array<i32: 2, 1>} : memref<128x32xf32, #tpu.memory_space<vmem>>, vector<3x32xf32>
    %340 = arith.truncf %339 : vector<3x32xf32> to vector<3x32xbf16>
    %cst_226 = arith.constant dense<0.000000e+00> : vector<3x64xf32>
    %341 = tpu.matmul %340, %18, %cst_226 {dimension_numbers = #tpu.dot_dimension_numbers<[1], [0], [0], [1], [0, 0, 1, 1], [], []>} : vector<3x32xbf16>, vector<32x64xbf16>, vector<3x64xf32> -> vector<3x64xf32>
    %342 = arith.addf %338, %341 : vector<3x64xf32>
    %c89_227 = arith.constant 89 : index
    %c0_228 = arith.constant 0 : index
    %343 = tpu.strided_load %arg12[%c89_227, %c0_228] {strides = array<i32: 2, 1>} : memref<128x32xf32, #tpu.memory_space<vmem>>, vector<3x32xf32>
    %344 = arith.truncf %343 : vector<3x32xf32> to vector<3x32xbf16>
    %cst_229 = arith.constant dense<0.000000e+00> : vector<3x64xf32>
    %345 = tpu.matmul %344, %20, %cst_229 {dimension_numbers = #tpu.dot_dimension_numbers<[1], [0], [0], [1], [0, 0, 1, 1], [], []>} : vector<3x32xbf16>, vector<32x64xbf16>, vector<3x64xf32> -> vector<3x64xf32>
    %346 = arith.addf %342, %345 : vector<3x64xf32>
    %c90_230 = arith.constant 90 : index
    %c0_231 = arith.constant 0 : index
    %347 = tpu.strided_load %arg12[%c90_230, %c0_231] {strides = array<i32: 2, 1>} : memref<128x32xf32, #tpu.memory_space<vmem>>, vector<3x32xf32>
    %348 = arith.truncf %347 : vector<3x32xf32> to vector<3x32xbf16>
    %cst_232 = arith.constant dense<0.000000e+00> : vector<3x64xf32>
    %349 = tpu.matmul %348, %22, %cst_232 {dimension_numbers = #tpu.dot_dimension_numbers<[1], [0], [0], [1], [0, 0, 1, 1], [], []>} : vector<3x32xbf16>, vector<32x64xbf16>, vector<3x64xf32> -> vector<3x64xf32>
    %350 = arith.addf %346, %349 : vector<3x64xf32>
    %c91_233 = arith.constant 91 : index
    %c0_234 = arith.constant 0 : index
    %351 = tpu.strided_load %arg12[%c91_233, %c0_234] {strides = array<i32: 2, 1>} : memref<128x32xf32, #tpu.memory_space<vmem>>, vector<3x32xf32>
    %352 = arith.truncf %351 : vector<3x32xf32> to vector<3x32xbf16>
    %cst_235 = arith.constant dense<0.000000e+00> : vector<3x64xf32>
    %353 = tpu.matmul %352, %24, %cst_235 {dimension_numbers = #tpu.dot_dimension_numbers<[1], [0], [0], [1], [0, 0, 1, 1], [], []>} : vector<3x32xbf16>, vector<32x64xbf16>, vector<3x64xf32> -> vector<3x64xf32>
    %354 = arith.addf %350, %353 : vector<3x64xf32>
    %c96 = arith.constant 96 : index
    %c0_236 = arith.constant 0 : index
    %355 = tpu.strided_load %arg12[%c96, %c0_236] {strides = array<i32: 2, 1>} : memref<128x32xf32, #tpu.memory_space<vmem>>, vector<3x32xf32>
    %356 = arith.truncf %355 : vector<3x32xf32> to vector<3x32xbf16>
    %cst_237 = arith.constant dense<0.000000e+00> : vector<3x64xf32>
    %357 = tpu.matmul %356, %26, %cst_237 {dimension_numbers = #tpu.dot_dimension_numbers<[1], [0], [0], [1], [0, 0, 1, 1], [], []>} : vector<3x32xbf16>, vector<32x64xbf16>, vector<3x64xf32> -> vector<3x64xf32>
    %358 = arith.addf %354, %357 : vector<3x64xf32>
    %c97 = arith.constant 97 : index
    %c0_238 = arith.constant 0 : index
    %359 = tpu.strided_load %arg12[%c97, %c0_238] {strides = array<i32: 2, 1>} : memref<128x32xf32, #tpu.memory_space<vmem>>, vector<3x32xf32>
    %360 = arith.truncf %359 : vector<3x32xf32> to vector<3x32xbf16>
    %cst_239 = arith.constant dense<0.000000e+00> : vector<3x64xf32>
    %361 = tpu.matmul %360, %28, %cst_239 {dimension_numbers = #tpu.dot_dimension_numbers<[1], [0], [0], [1], [0, 0, 1, 1], [], []>} : vector<3x32xbf16>, vector<32x64xbf16>, vector<3x64xf32> -> vector<3x64xf32>
    %362 = arith.addf %358, %361 : vector<3x64xf32>
    %c98 = arith.constant 98 : index
    %c0_240 = arith.constant 0 : index
    %363 = tpu.strided_load %arg12[%c98, %c0_240] {strides = array<i32: 2, 1>} : memref<128x32xf32, #tpu.memory_space<vmem>>, vector<3x32xf32>
    %364 = arith.truncf %363 : vector<3x32xf32> to vector<3x32xbf16>
    %cst_241 = arith.constant dense<0.000000e+00> : vector<3x64xf32>
    %365 = tpu.matmul %364, %30, %cst_241 {dimension_numbers = #tpu.dot_dimension_numbers<[1], [0], [0], [1], [0, 0, 1, 1], [], []>} : vector<3x32xbf16>, vector<32x64xbf16>, vector<3x64xf32> -> vector<3x64xf32>
    %366 = arith.addf %362, %365 : vector<3x64xf32>
    %c99 = arith.constant 99 : index
    %c0_242 = arith.constant 0 : index
    %367 = tpu.strided_load %arg12[%c99, %c0_242] {strides = array<i32: 2, 1>} : memref<128x32xf32, #tpu.memory_space<vmem>>, vector<3x32xf32>
    %368 = arith.truncf %367 : vector<3x32xf32> to vector<3x32xbf16>
    %cst_243 = arith.constant dense<0.000000e+00> : vector<3x64xf32>
    %369 = tpu.matmul %368, %32, %cst_243 {dimension_numbers = #tpu.dot_dimension_numbers<[1], [0], [0], [1], [0, 0, 1, 1], [], []>} : vector<3x32xbf16>, vector<32x64xbf16>, vector<3x64xf32> -> vector<3x64xf32>
    %370 = arith.addf %366, %369 : vector<3x64xf32>
    %c104 = arith.constant 104 : index
    %c0_244 = arith.constant 0 : index
    %371 = tpu.strided_load %arg12[%c104, %c0_244] {strides = array<i32: 2, 1>} : memref<128x32xf32, #tpu.memory_space<vmem>>, vector<3x32xf32>
    %372 = arith.truncf %371 : vector<3x32xf32> to vector<3x32xbf16>
    %cst_245 = arith.constant dense<0.000000e+00> : vector<3x64xf32>
    %373 = tpu.matmul %372, %34, %cst_245 {dimension_numbers = #tpu.dot_dimension_numbers<[1], [0], [0], [1], [0, 0, 1, 1], [], []>} : vector<3x32xbf16>, vector<32x64xbf16>, vector<3x64xf32> -> vector<3x64xf32>
    %374 = arith.addf %370, %373 : vector<3x64xf32>
    %c105 = arith.constant 105 : index
    %c0_246 = arith.constant 0 : index
    %375 = tpu.strided_load %arg12[%c105, %c0_246] {strides = array<i32: 2, 1>} : memref<128x32xf32, #tpu.memory_space<vmem>>, vector<3x32xf32>
    %376 = arith.truncf %375 : vector<3x32xf32> to vector<3x32xbf16>
    %cst_247 = arith.constant dense<0.000000e+00> : vector<3x64xf32>
    %377 = tpu.matmul %376, %36, %cst_247 {dimension_numbers = #tpu.dot_dimension_numbers<[1], [0], [0], [1], [0, 0, 1, 1], [], []>} : vector<3x32xbf16>, vector<32x64xbf16>, vector<3x64xf32> -> vector<3x64xf32>
    %378 = arith.addf %374, %377 : vector<3x64xf32>
    %c106 = arith.constant 106 : index
    %c0_248 = arith.constant 0 : index
    %379 = tpu.strided_load %arg12[%c106, %c0_248] {strides = array<i32: 2, 1>} : memref<128x32xf32, #tpu.memory_space<vmem>>, vector<3x32xf32>
    %380 = arith.truncf %379 : vector<3x32xf32> to vector<3x32xbf16>
    %cst_249 = arith.constant dense<0.000000e+00> : vector<3x64xf32>
    %381 = tpu.matmul %380, %38, %cst_249 {dimension_numbers = #tpu.dot_dimension_numbers<[1], [0], [0], [1], [0, 0, 1, 1], [], []>} : vector<3x32xbf16>, vector<32x64xbf16>, vector<3x64xf32> -> vector<3x64xf32>
    %382 = arith.addf %378, %381 : vector<3x64xf32>
    %c107 = arith.constant 107 : index
    %c0_250 = arith.constant 0 : index
    %383 = tpu.strided_load %arg12[%c107, %c0_250] {strides = array<i32: 2, 1>} : memref<128x32xf32, #tpu.memory_space<vmem>>, vector<3x32xf32>
    %384 = arith.truncf %383 : vector<3x32xf32> to vector<3x32xbf16>
    %cst_251 = arith.constant dense<0.000000e+00> : vector<3x64xf32>
    %385 = tpu.matmul %384, %40, %cst_251 {dimension_numbers = #tpu.dot_dimension_numbers<[1], [0], [0], [1], [0, 0, 1, 1], [], []>} : vector<3x32xbf16>, vector<32x64xbf16>, vector<3x64xf32> -> vector<3x64xf32>
    %386 = arith.addf %382, %385 : vector<3x64xf32>
    %387 = vector.broadcast %41 : vector<1x64xf32> to vector<3x64xf32>
    %388 = arith.addf %386, %387 : vector<3x64xf32>
    %cst_252 = arith.constant 0.000000e+00 : f32
    %389 = vector.broadcast %cst_252 : f32 to vector<3x64xf32>
    %390 = arith.maximumf %388, %389 : vector<3x64xf32>
    %c12_253 = arith.constant 12 : index
    %c0_254 = arith.constant 0 : index
    %391 = vector.load %arg13[%c12_253, %c0_254] : memref<18x64xf32, #tpu.memory_space<vmem>>, vector<3x64xf32>
    tpu.vector_store %arg13[%c12_253, %c0_254], %390 {strides = array<i32>} : memref<18x64xf32, #tpu.memory_space<vmem>>, vector<3x64xf32>,
    %cst_255 = arith.constant 0.000000e+00 : f32
    %392 = vector.broadcast %cst_255 : f32 to vector<3x64xf32>
    %c96_256 = arith.constant 96 : index
    %c0_257 = arith.constant 0 : index
    %393 = tpu.strided_load %arg12[%c96_256, %c0_257] {strides = array<i32: 2, 1>} : memref<128x32xf32, #tpu.memory_space<vmem>>, vector<3x32xf32>
    %394 = arith.truncf %393 : vector<3x32xf32> to vector<3x32xbf16>
    %cst_258 = arith.constant dense<0.000000e+00> : vector<3x64xf32>
    %395 = tpu.matmul %394, %10, %cst_258 {dimension_numbers = #tpu.dot_dimension_numbers<[1], [0], [0], [1], [0, 0, 1, 1], [], []>} : vector<3x32xbf16>, vector<32x64xbf16>, vector<3x64xf32> -> vector<3x64xf32>
    %396 = arith.addf %392, %395 : vector<3x64xf32>
    %c97_259 = arith.constant 97 : index
    %c0_260 = arith.constant 0 : index
    %397 = tpu.strided_load %arg12[%c97_259, %c0_260] {strides = array<i32: 2, 1>} : memref<128x32xf32, #tpu.memory_space<vmem>>, vector<3x32xf32>
    %398 = arith.truncf %397 : vector<3x32xf32> to vector<3x32xbf16>
    %cst_261 = arith.constant dense<0.000000e+00> : vector<3x64xf32>
    %399 = tpu.matmul %398, %12, %cst_261 {dimension_numbers = #tpu.dot_dimension_numbers<[1], [0], [0], [1], [0, 0, 1, 1], [], []>} : vector<3x32xbf16>, vector<32x64xbf16>, vector<3x64xf32> -> vector<3x64xf32>
    %400 = arith.addf %396, %399 : vector<3x64xf32>
    %c98_262 = arith.constant 98 : index
    %c0_263 = arith.constant 0 : index
    %401 = tpu.strided_load %arg12[%c98_262, %c0_263] {strides = array<i32: 2, 1>} : memref<128x32xf32, #tpu.memory_space<vmem>>, vector<3x32xf32>
    %402 = arith.truncf %401 : vector<3x32xf32> to vector<3x32xbf16>
    %cst_264 = arith.constant dense<0.000000e+00> : vector<3x64xf32>
    %403 = tpu.matmul %402, %14, %cst_264 {dimension_numbers = #tpu.dot_dimension_numbers<[1], [0], [0], [1], [0, 0, 1, 1], [], []>} : vector<3x32xbf16>, vector<32x64xbf16>, vector<3x64xf32> -> vector<3x64xf32>
    %404 = arith.addf %400, %403 : vector<3x64xf32>
    %c99_265 = arith.constant 99 : index
    %c0_266 = arith.constant 0 : index
    %405 = tpu.strided_load %arg12[%c99_265, %c0_266] {strides = array<i32: 2, 1>} : memref<128x32xf32, #tpu.memory_space<vmem>>, vector<3x32xf32>
    %406 = arith.truncf %405 : vector<3x32xf32> to vector<3x32xbf16>
    %cst_267 = arith.constant dense<0.000000e+00> : vector<3x64xf32>
    %407 = tpu.matmul %406, %16, %cst_267 {dimension_numbers = #tpu.dot_dimension_numbers<[1], [0], [0], [1], [0, 0, 1, 1], [], []>} : vector<3x32xbf16>, vector<32x64xbf16>, vector<3x64xf32> -> vector<3x64xf32>
    %408 = arith.addf %404, %407 : vector<3x64xf32>
    %c104_268 = arith.constant 104 : index
    %c0_269 = arith.constant 0 : index
    %409 = tpu.strided_load %arg12[%c104_268, %c0_269] {strides = array<i32: 2, 1>} : memref<128x32xf32, #tpu.memory_space<vmem>>, vector<3x32xf32>
    %410 = arith.truncf %409 : vector<3x32xf32> to vector<3x32xbf16>
    %cst_270 = arith.constant dense<0.000000e+00> : vector<3x64xf32>
    %411 = tpu.matmul %410, %18, %cst_270 {dimension_numbers = #tpu.dot_dimension_numbers<[1], [0], [0], [1], [0, 0, 1, 1], [], []>} : vector<3x32xbf16>, vector<32x64xbf16>, vector<3x64xf32> -> vector<3x64xf32>
    %412 = arith.addf %408, %411 : vector<3x64xf32>
    %c105_271 = arith.constant 105 : index
    %c0_272 = arith.constant 0 : index
    %413 = tpu.strided_load %arg12[%c105_271, %c0_272] {strides = array<i32: 2, 1>} : memref<128x32xf32, #tpu.memory_space<vmem>>, vector<3x32xf32>
    %414 = arith.truncf %413 : vector<3x32xf32> to vector<3x32xbf16>
    %cst_273 = arith.constant dense<0.000000e+00> : vector<3x64xf32>
    %415 = tpu.matmul %414, %20, %cst_273 {dimension_numbers = #tpu.dot_dimension_numbers<[1], [0], [0], [1], [0, 0, 1, 1], [], []>} : vector<3x32xbf16>, vector<32x64xbf16>, vector<3x64xf32> -> vector<3x64xf32>
    %416 = arith.addf %412, %415 : vector<3x64xf32>
    %c106_274 = arith.constant 106 : index
    %c0_275 = arith.constant 0 : index
    %417 = tpu.strided_load %arg12[%c106_274, %c0_275] {strides = array<i32: 2, 1>} : memref<128x32xf32, #tpu.memory_space<vmem>>, vector<3x32xf32>
    %418 = arith.truncf %417 : vector<3x32xf32> to vector<3x32xbf16>
    %cst_276 = arith.constant dense<0.000000e+00> : vector<3x64xf32>
    %419 = tpu.matmul %418, %22, %cst_276 {dimension_numbers = #tpu.dot_dimension_numbers<[1], [0], [0], [1], [0, 0, 1, 1], [], []>} : vector<3x32xbf16>, vector<32x64xbf16>, vector<3x64xf32> -> vector<3x64xf32>
    %420 = arith.addf %416, %419 : vector<3x64xf32>
    %c107_277 = arith.constant 107 : index
    %c0_278 = arith.constant 0 : index
    %421 = tpu.strided_load %arg12[%c107_277, %c0_278] {strides = array<i32: 2, 1>} : memref<128x32xf32, #tpu.memory_space<vmem>>, vector<3x32xf32>
    %422 = arith.truncf %421 : vector<3x32xf32> to vector<3x32xbf16>
    %cst_279 = arith.constant dense<0.000000e+00> : vector<3x64xf32>
    %423 = tpu.matmul %422, %24, %cst_279 {dimension_numbers = #tpu.dot_dimension_numbers<[1], [0], [0], [1], [0, 0, 1, 1], [], []>} : vector<3x32xbf16>, vector<32x64xbf16>, vector<3x64xf32> -> vector<3x64xf32>
    %424 = arith.addf %420, %423 : vector<3x64xf32>
    %c112 = arith.constant 112 : index
    %c0_280 = arith.constant 0 : index
    %425 = tpu.strided_load %arg12[%c112, %c0_280] {strides = array<i32: 2, 1>} : memref<128x32xf32, #tpu.memory_space<vmem>>, vector<3x32xf32>
    %426 = arith.truncf %425 : vector<3x32xf32> to vector<3x32xbf16>
    %cst_281 = arith.constant dense<0.000000e+00> : vector<3x64xf32>
    %427 = tpu.matmul %426, %26, %cst_281 {dimension_numbers = #tpu.dot_dimension_numbers<[1], [0], [0], [1], [0, 0, 1, 1], [], []>} : vector<3x32xbf16>, vector<32x64xbf16>, vector<3x64xf32> -> vector<3x64xf32>
    %428 = arith.addf %424, %427 : vector<3x64xf32>
    %c113 = arith.constant 113 : index
    %c0_282 = arith.constant 0 : index
    %429 = tpu.strided_load %arg12[%c113, %c0_282] {strides = array<i32: 2, 1>} : memref<128x32xf32, #tpu.memory_space<vmem>>, vector<3x32xf32>
    %430 = arith.truncf %429 : vector<3x32xf32> to vector<3x32xbf16>
    %cst_283 = arith.constant dense<0.000000e+00> : vector<3x64xf32>
    %431 = tpu.matmul %430, %28, %cst_283 {dimension_numbers = #tpu.dot_dimension_numbers<[1], [0], [0], [1], [0, 0, 1, 1], [], []>} : vector<3x32xbf16>, vector<32x64xbf16>, vector<3x64xf32> -> vector<3x64xf32>
    %432 = arith.addf %428, %431 : vector<3x64xf32>
    %c114 = arith.constant 114 : index
    %c0_284 = arith.constant 0 : index
    %433 = tpu.strided_load %arg12[%c114, %c0_284] {strides = array<i32: 2, 1>} : memref<128x32xf32, #tpu.memory_space<vmem>>, vector<3x32xf32>
    %434 = arith.truncf %433 : vector<3x32xf32> to vector<3x32xbf16>
    %cst_285 = arith.constant dense<0.000000e+00> : vector<3x64xf32>
    %435 = tpu.matmul %434, %30, %cst_285 {dimension_numbers = #tpu.dot_dimension_numbers<[1], [0], [0], [1], [0, 0, 1, 1], [], []>} : vector<3x32xbf16>, vector<32x64xbf16>, vector<3x64xf32> -> vector<3x64xf32>
    %436 = arith.addf %432, %435 : vector<3x64xf32>
    %c115 = arith.constant 115 : index
    %c0_286 = arith.constant 0 : index
    %437 = tpu.strided_load %arg12[%c115, %c0_286] {strides = array<i32: 2, 1>} : memref<128x32xf32, #tpu.memory_space<vmem>>, vector<3x32xf32>
    %438 = arith.truncf %437 : vector<3x32xf32> to vector<3x32xbf16>
    %cst_287 = arith.constant dense<0.000000e+00> : vector<3x64xf32>
    %439 = tpu.matmul %438, %32, %cst_287 {dimension_numbers = #tpu.dot_dimension_numbers<[1], [0], [0], [1], [0, 0, 1, 1], [], []>} : vector<3x32xbf16>, vector<32x64xbf16>, vector<3x64xf32> -> vector<3x64xf32>
    %440 = arith.addf %436, %439 : vector<3x64xf32>
    %c120 = arith.constant 120 : index
    %c0_288 = arith.constant 0 : index
    %441 = tpu.strided_load %arg12[%c120, %c0_288] {strides = array<i32: 2, 1>} : memref<128x32xf32, #tpu.memory_space<vmem>>, vector<3x32xf32>
    %442 = arith.truncf %441 : vector<3x32xf32> to vector<3x32xbf16>
    %cst_289 = arith.constant dense<0.000000e+00> : vector<3x64xf32>
    %443 = tpu.matmul %442, %34, %cst_289 {dimension_numbers = #tpu.dot_dimension_numbers<[1], [0], [0], [1], [0, 0, 1, 1], [], []>} : vector<3x32xbf16>, vector<32x64xbf16>, vector<3x64xf32> -> vector<3x64xf32>
    %444 = arith.addf %440, %443 : vector<3x64xf32>
    %c121 = arith.constant 121 : index
    %c0_290 = arith.constant 0 : index
    %445 = tpu.strided_load %arg12[%c121, %c0_290] {strides = array<i32: 2, 1>} : memref<128x32xf32, #tpu.memory_space<vmem>>, vector<3x32xf32>
    %446 = arith.truncf %445 : vector<3x32xf32> to vector<3x32xbf16>
    %cst_291 = arith.constant dense<0.000000e+00> : vector<3x64xf32>
    %447 = tpu.matmul %446, %36, %cst_291 {dimension_numbers = #tpu.dot_dimension_numbers<[1], [0], [0], [1], [0, 0, 1, 1], [], []>} : vector<3x32xbf16>, vector<32x64xbf16>, vector<3x64xf32> -> vector<3x64xf32>
    %448 = arith.addf %444, %447 : vector<3x64xf32>
    %c122 = arith.constant 122 : index
    %c0_292 = arith.constant 0 : index
    %449 = tpu.strided_load %arg12[%c122, %c0_292] {strides = array<i32: 2, 1>} : memref<128x32xf32, #tpu.memory_space<vmem>>, vector<3x32xf32>
    %450 = arith.truncf %449 : vector<3x32xf32> to vector<3x32xbf16>
    %cst_293 = arith.constant dense<0.000000e+00> : vector<3x64xf32>
    %451 = tpu.matmul %450, %38, %cst_293 {dimension_numbers = #tpu.dot_dimension_numbers<[1], [0], [0], [1], [0, 0, 1, 1], [], []>} : vector<3x32xbf16>, vector<32x64xbf16>, vector<3x64xf32> -> vector<3x64xf32>
    %452 = arith.addf %448, %451 : vector<3x64xf32>
    %c123 = arith.constant 123 : index
    %c0_294 = arith.constant 0 : index
    %453 = tpu.strided_load %arg12[%c123, %c0_294] {strides = array<i32: 2, 1>} : memref<128x32xf32, #tpu.memory_space<vmem>>, vector<3x32xf32>
    %454 = arith.truncf %453 : vector<3x32xf32> to vector<3x32xbf16>
    %cst_295 = arith.constant dense<0.000000e+00> : vector<3x64xf32>
    %455 = tpu.matmul %454, %40, %cst_295 {dimension_numbers = #tpu.dot_dimension_numbers<[1], [0], [0], [1], [0, 0, 1, 1], [], []>} : vector<3x32xbf16>, vector<32x64xbf16>, vector<3x64xf32> -> vector<3x64xf32>
    %456 = arith.addf %452, %455 : vector<3x64xf32>
    %457 = vector.broadcast %41 : vector<1x64xf32> to vector<3x64xf32>
    %458 = arith.addf %456, %457 : vector<3x64xf32>
    %cst_296 = arith.constant 0.000000e+00 : f32
    %459 = vector.broadcast %cst_296 : f32 to vector<3x64xf32>
    %460 = arith.maximumf %458, %459 : vector<3x64xf32>
    %c15_297 = arith.constant 15 : index
    %c0_298 = arith.constant 0 : index
    %461 = vector.load %arg13[%c15_297, %c0_298] : memref<18x64xf32, #tpu.memory_space<vmem>>, vector<3x64xf32>
    tpu.vector_store %arg13[%c15_297, %c0_298], %460 {strides = array<i32>} : memref<18x64xf32, #tpu.memory_space<vmem>>, vector<3x64xf32>,
    %c0_299 = arith.constant 0 : index
    %c0_300 = arith.constant 0 : index
    %c0_301 = arith.constant 0 : index
    %462 = vector.load %arg5[%c0_299, %c0_300, %c0_301] : memref<9x64x64xbf16, #tpu.memory_space<vmem>>, vector<1x64x64xbf16>
    %463 = vector.shape_cast %462 : vector<1x64x64xbf16> to vector<64x64xbf16>
    %c1_302 = arith.constant 1 : index
    %c0_303 = arith.constant 0 : index
    %c0_304 = arith.constant 0 : index
    %464 = vector.load %arg5[%c1_302, %c0_303, %c0_304] : memref<9x64x64xbf16, #tpu.memory_space<vmem>>, vector<1x64x64xbf16>
    %465 = vector.shape_cast %464 : vector<1x64x64xbf16> to vector<64x64xbf16>
    %c2_305 = arith.constant 2 : index
    %c0_306 = arith.constant 0 : index
    %c0_307 = arith.constant 0 : index
    %466 = vector.load %arg5[%c2_305, %c0_306, %c0_307] : memref<9x64x64xbf16, #tpu.memory_space<vmem>>, vector<1x64x64xbf16>
    %467 = vector.shape_cast %466 : vector<1x64x64xbf16> to vector<64x64xbf16>
    %c3_308 = arith.constant 3 : index
    %c0_309 = arith.constant 0 : index
    %c0_310 = arith.constant 0 : index
    %468 = vector.load %arg5[%c3_308, %c0_309, %c0_310] : memref<9x64x64xbf16, #tpu.memory_space<vmem>>, vector<1x64x64xbf16>
    %469 = vector.shape_cast %468 : vector<1x64x64xbf16> to vector<64x64xbf16>
    %c4_311 = arith.constant 4 : index
    %c0_312 = arith.constant 0 : index
    %c0_313 = arith.constant 0 : index
    %470 = vector.load %arg5[%c4_311, %c0_312, %c0_313] : memref<9x64x64xbf16, #tpu.memory_space<vmem>>, vector<1x64x64xbf16>
    %471 = vector.shape_cast %470 : vector<1x64x64xbf16> to vector<64x64xbf16>
    %c5_314 = arith.constant 5 : index
    %c0_315 = arith.constant 0 : index
    %c0_316 = arith.constant 0 : index
    %472 = vector.load %arg5[%c5_314, %c0_315, %c0_316] : memref<9x64x64xbf16, #tpu.memory_space<vmem>>, vector<1x64x64xbf16>
    %473 = vector.shape_cast %472 : vector<1x64x64xbf16> to vector<64x64xbf16>
    %c6_317 = arith.constant 6 : index
    %c0_318 = arith.constant 0 : index
    %c0_319 = arith.constant 0 : index
    %474 = vector.load %arg5[%c6_317, %c0_318, %c0_319] : memref<9x64x64xbf16, #tpu.memory_space<vmem>>, vector<1x64x64xbf16>
    %475 = vector.shape_cast %474 : vector<1x64x64xbf16> to vector<64x64xbf16>
    %c7_320 = arith.constant 7 : index
    %c0_321 = arith.constant 0 : index
    %c0_322 = arith.constant 0 : index
    %476 = vector.load %arg5[%c7_320, %c0_321, %c0_322] : memref<9x64x64xbf16, #tpu.memory_space<vmem>>, vector<1x64x64xbf16>
    %477 = vector.shape_cast %476 : vector<1x64x64xbf16> to vector<64x64xbf16>
    %c8_323 = arith.constant 8 : index
    %c0_324 = arith.constant 0 : index
    %c0_325 = arith.constant 0 : index
    %478 = vector.load %arg5[%c8_323, %c0_324, %c0_325] : memref<9x64x64xbf16, #tpu.memory_space<vmem>>, vector<1x64x64xbf16>
    %479 = vector.shape_cast %478 : vector<1x64x64xbf16> to vector<64x64xbf16>
    %c0_326 = arith.constant 0 : index
    %c0_327 = arith.constant 0 : index
    %480 = vector.load %arg6[%c0_326, %c0_327] : memref<1x64xf32, #tpu.memory_space<vmem>>, vector<1x64xf32>
    %cst_328 = arith.constant 0.000000e+00 : f32
    %481 = vector.broadcast %cst_328 : f32 to vector<1x64xf32>
    %c0_329 = arith.constant 0 : index
    %c0_330 = arith.constant 0 : index
    %482 = vector.load %arg13[%c0_329, %c0_330] : memref<18x64xf32, #tpu.memory_space<vmem>>, vector<1x64xf32>
    %483 = arith.truncf %482 : vector<1x64xf32> to vector<1x64xbf16>
    %cst_331 = arith.constant dense<0.000000e+00> : vector<1x64xf32>
    %484 = tpu.matmul %483, %463, %cst_331 {dimension_numbers = #tpu.dot_dimension_numbers<[1], [0], [0], [1], [0, 0, 1, 1], [], []>} : vector<1x64xbf16>, vector<64x64xbf16>, vector<1x64xf32> -> vector<1x64xf32>
    %485 = arith.addf %481, %484 : vector<1x64xf32>
    %c1_332 = arith.constant 1 : index
    %c0_333 = arith.constant 0 : index
    %486 = vector.load %arg13[%c1_332, %c0_333] : memref<18x64xf32, #tpu.memory_space<vmem>>, vector<1x64xf32>
    %487 = arith.truncf %486 : vector<1x64xf32> to vector<1x64xbf16>
    %cst_334 = arith.constant dense<0.000000e+00> : vector<1x64xf32>
    %488 = tpu.matmul %487, %465, %cst_334 {dimension_numbers = #tpu.dot_dimension_numbers<[1], [0], [0], [1], [0, 0, 1, 1], [], []>} : vector<1x64xbf16>, vector<64x64xbf16>, vector<1x64xf32> -> vector<1x64xf32>
    %489 = arith.addf %485, %488 : vector<1x64xf32>
    %c2_335 = arith.constant 2 : index
    %c0_336 = arith.constant 0 : index
    %490 = vector.load %arg13[%c2_335, %c0_336] : memref<18x64xf32, #tpu.memory_space<vmem>>, vector<1x64xf32>
    %491 = arith.truncf %490 : vector<1x64xf32> to vector<1x64xbf16>
    %cst_337 = arith.constant dense<0.000000e+00> : vector<1x64xf32>
    %492 = tpu.matmul %491, %467, %cst_337 {dimension_numbers = #tpu.dot_dimension_numbers<[1], [0], [0], [1], [0, 0, 1, 1], [], []>} : vector<1x64xbf16>, vector<64x64xbf16>, vector<1x64xf32> -> vector<1x64xf32>
    %493 = arith.addf %489, %492 : vector<1x64xf32>
    %c3_338 = arith.constant 3 : index
    %c0_339 = arith.constant 0 : index
    %494 = vector.load %arg13[%c3_338, %c0_339] : memref<18x64xf32, #tpu.memory_space<vmem>>, vector<1x64xf32>
    %495 = arith.truncf %494 : vector<1x64xf32> to vector<1x64xbf16>
    %cst_340 = arith.constant dense<0.000000e+00> : vector<1x64xf32>
    %496 = tpu.matmul %495, %469, %cst_340 {dimension_numbers = #tpu.dot_dimension_numbers<[1], [0], [0], [1], [0, 0, 1, 1], [], []>} : vector<1x64xbf16>, vector<64x64xbf16>, vector<1x64xf32> -> vector<1x64xf32>
    %497 = arith.addf %493, %496 : vector<1x64xf32>
    %c4_341 = arith.constant 4 : index
    %c0_342 = arith.constant 0 : index
    %498 = vector.load %arg13[%c4_341, %c0_342] : memref<18x64xf32, #tpu.memory_space<vmem>>, vector<1x64xf32>
    %499 = arith.truncf %498 : vector<1x64xf32> to vector<1x64xbf16>
    %cst_343 = arith.constant dense<0.000000e+00> : vector<1x64xf32>
    %500 = tpu.matmul %499, %471, %cst_343 {dimension_numbers = #tpu.dot_dimension_numbers<[1], [0], [0], [1], [0, 0, 1, 1], [], []>} : vector<1x64xbf16>, vector<64x64xbf16>, vector<1x64xf32> -> vector<1x64xf32>
    %501 = arith.addf %497, %500 : vector<1x64xf32>
    %c5_344 = arith.constant 5 : index
    %c0_345 = arith.constant 0 : index
    %502 = vector.load %arg13[%c5_344, %c0_345] : memref<18x64xf32, #tpu.memory_space<vmem>>, vector<1x64xf32>
    %503 = arith.truncf %502 : vector<1x64xf32> to vector<1x64xbf16>
    %cst_346 = arith.constant dense<0.000000e+00> : vector<1x64xf32>
    %504 = tpu.matmul %503, %473, %cst_346 {dimension_numbers = #tpu.dot_dimension_numbers<[1], [0], [0], [1], [0, 0, 1, 1], [], []>} : vector<1x64xbf16>, vector<64x64xbf16>, vector<1x64xf32> -> vector<1x64xf32>
    %505 = arith.addf %501, %504 : vector<1x64xf32>
    %c6_347 = arith.constant 6 : index
    %c0_348 = arith.constant 0 : index
    %506 = vector.load %arg13[%c6_347, %c0_348] : memref<18x64xf32, #tpu.memory_space<vmem>>, vector<1x64xf32>
    %507 = arith.truncf %506 : vector<1x64xf32> to vector<1x64xbf16>
    %cst_349 = arith.constant dense<0.000000e+00> : vector<1x64xf32>
    %508 = tpu.matmul %507, %475, %cst_349 {dimension_numbers = #tpu.dot_dimension_numbers<[1], [0], [0], [1], [0, 0, 1, 1], [], []>} : vector<1x64xbf16>, vector<64x64xbf16>, vector<1x64xf32> -> vector<1x64xf32>
    %509 = arith.addf %505, %508 : vector<1x64xf32>
    %c7_350 = arith.constant 7 : index
    %c0_351 = arith.constant 0 : index
    %510 = vector.load %arg13[%c7_350, %c0_351] : memref<18x64xf32, #tpu.memory_space<vmem>>, vector<1x64xf32>
    %511 = arith.truncf %510 : vector<1x64xf32> to vector<1x64xbf16>
    %cst_352 = arith.constant dense<0.000000e+00> : vector<1x64xf32>
    %512 = tpu.matmul %511, %477, %cst_352 {dimension_numbers = #tpu.dot_dimension_numbers<[1], [0], [0], [1], [0, 0, 1, 1], [], []>} : vector<1x64xbf16>, vector<64x64xbf16>, vector<1x64xf32> -> vector<1x64xf32>
    %513 = arith.addf %509, %512 : vector<1x64xf32>
    %c8_353 = arith.constant 8 : index
    %c0_354 = arith.constant 0 : index
    %514 = vector.load %arg13[%c8_353, %c0_354] : memref<18x64xf32, #tpu.memory_space<vmem>>, vector<1x64xf32>
    %515 = arith.truncf %514 : vector<1x64xf32> to vector<1x64xbf16>
    %cst_355 = arith.constant dense<0.000000e+00> : vector<1x64xf32>
    %516 = tpu.matmul %515, %479, %cst_355 {dimension_numbers = #tpu.dot_dimension_numbers<[1], [0], [0], [1], [0, 0, 1, 1], [], []>} : vector<1x64xbf16>, vector<64x64xbf16>, vector<1x64xf32> -> vector<1x64xf32>
    %517 = arith.addf %513, %516 : vector<1x64xf32>
    %518 = arith.addf %517, %480 : vector<1x64xf32>
    %cst_356 = arith.constant 0.000000e+00 : f32
    %519 = vector.broadcast %cst_356 : f32 to vector<1x64xf32>
    %520 = arith.maximumf %518, %519 : vector<1x64xf32>
    %c0_357 = arith.constant 0 : index
    %c0_358 = arith.constant 0 : index
    %521 = vector.load %arg14[%c0_357, %c0_358] : memref<2x64xf32, #tpu.memory_space<vmem>>, vector<1x64xf32>
    tpu.vector_store %arg14[%c0_357, %c0_358], %520 {strides = array<i32>} : memref<2x64xf32, #tpu.memory_space<vmem>>, vector<1x64xf32>,
    %cst_359 = arith.constant 0.000000e+00 : f32
    %522 = vector.broadcast %cst_359 : f32 to vector<1x64xf32>
    %c9_360 = arith.constant 9 : index
    %c0_361 = arith.constant 0 : index
    %523 = vector.load %arg13[%c9_360, %c0_361] : memref<18x64xf32, #tpu.memory_space<vmem>>, vector<1x64xf32>
    %524 = arith.truncf %523 : vector<1x64xf32> to vector<1x64xbf16>
    %cst_362 = arith.constant dense<0.000000e+00> : vector<1x64xf32>
    %525 = tpu.matmul %524, %463, %cst_362 {dimension_numbers = #tpu.dot_dimension_numbers<[1], [0], [0], [1], [0, 0, 1, 1], [], []>} : vector<1x64xbf16>, vector<64x64xbf16>, vector<1x64xf32> -> vector<1x64xf32>
    %526 = arith.addf %522, %525 : vector<1x64xf32>
    %c10_363 = arith.constant 10 : index
    %c0_364 = arith.constant 0 : index
    %527 = vector.load %arg13[%c10_363, %c0_364] : memref<18x64xf32, #tpu.memory_space<vmem>>, vector<1x64xf32>
    %528 = arith.truncf %527 : vector<1x64xf32> to vector<1x64xbf16>
    %cst_365 = arith.constant dense<0.000000e+00> : vector<1x64xf32>
    %529 = tpu.matmul %528, %465, %cst_365 {dimension_numbers = #tpu.dot_dimension_numbers<[1], [0], [0], [1], [0, 0, 1, 1], [], []>} : vector<1x64xbf16>, vector<64x64xbf16>, vector<1x64xf32> -> vector<1x64xf32>
    %530 = arith.addf %526, %529 : vector<1x64xf32>
    %c11_366 = arith.constant 11 : index
    %c0_367 = arith.constant 0 : index
    %531 = vector.load %arg13[%c11_366, %c0_367] : memref<18x64xf32, #tpu.memory_space<vmem>>, vector<1x64xf32>
    %532 = arith.truncf %531 : vector<1x64xf32> to vector<1x64xbf16>
    %cst_368 = arith.constant dense<0.000000e+00> : vector<1x64xf32>
    %533 = tpu.matmul %532, %467, %cst_368 {dimension_numbers = #tpu.dot_dimension_numbers<[1], [0], [0], [1], [0, 0, 1, 1], [], []>} : vector<1x64xbf16>, vector<64x64xbf16>, vector<1x64xf32> -> vector<1x64xf32>
    %534 = arith.addf %530, %533 : vector<1x64xf32>
    %c12_369 = arith.constant 12 : index
    %c0_370 = arith.constant 0 : index
    %535 = vector.load %arg13[%c12_369, %c0_370] : memref<18x64xf32, #tpu.memory_space<vmem>>, vector<1x64xf32>
    %536 = arith.truncf %535 : vector<1x64xf32> to vector<1x64xbf16>
    %cst_371 = arith.constant dense<0.000000e+00> : vector<1x64xf32>
    %537 = tpu.matmul %536, %469, %cst_371 {dimension_numbers = #tpu.dot_dimension_numbers<[1], [0], [0], [1], [0, 0, 1, 1], [], []>} : vector<1x64xbf16>, vector<64x64xbf16>, vector<1x64xf32> -> vector<1x64xf32>
    %538 = arith.addf %534, %537 : vector<1x64xf32>
    %c13_372 = arith.constant 13 : index
    %c0_373 = arith.constant 0 : index
    %539 = vector.load %arg13[%c13_372, %c0_373] : memref<18x64xf32, #tpu.memory_space<vmem>>, vector<1x64xf32>
    %540 = arith.truncf %539 : vector<1x64xf32> to vector<1x64xbf16>
    %cst_374 = arith.constant dense<0.000000e+00> : vector<1x64xf32>
    %541 = tpu.matmul %540, %471, %cst_374 {dimension_numbers = #tpu.dot_dimension_numbers<[1], [0], [0], [1], [0, 0, 1, 1], [], []>} : vector<1x64xbf16>, vector<64x64xbf16>, vector<1x64xf32> -> vector<1x64xf32>
    %542 = arith.addf %538, %541 : vector<1x64xf32>
    %c14_375 = arith.constant 14 : index
    %c0_376 = arith.constant 0 : index
    %543 = vector.load %arg13[%c14_375, %c0_376] : memref<18x64xf32, #tpu.memory_space<vmem>>, vector<1x64xf32>
    %544 = arith.truncf %543 : vector<1x64xf32> to vector<1x64xbf16>
    %cst_377 = arith.constant dense<0.000000e+00> : vector<1x64xf32>
    %545 = tpu.matmul %544, %473, %cst_377 {dimension_numbers = #tpu.dot_dimension_numbers<[1], [0], [0], [1], [0, 0, 1, 1], [], []>} : vector<1x64xbf16>, vector<64x64xbf16>, vector<1x64xf32> -> vector<1x64xf32>
    %546 = arith.addf %542, %545 : vector<1x64xf32>
    %c15_378 = arith.constant 15 : index
    %c0_379 = arith.constant 0 : index
    %547 = vector.load %arg13[%c15_378, %c0_379] : memref<18x64xf32, #tpu.memory_space<vmem>>, vector<1x64xf32>
    %548 = arith.truncf %547 : vector<1x64xf32> to vector<1x64xbf16>
    %cst_380 = arith.constant dense<0.000000e+00> : vector<1x64xf32>
    %549 = tpu.matmul %548, %475, %cst_380 {dimension_numbers = #tpu.dot_dimension_numbers<[1], [0], [0], [1], [0, 0, 1, 1], [], []>} : vector<1x64xbf16>, vector<64x64xbf16>, vector<1x64xf32> -> vector<1x64xf32>
    %550 = arith.addf %546, %549 : vector<1x64xf32>
    %c16_381 = arith.constant 16 : index
    %c0_382 = arith.constant 0 : index
    %551 = vector.load %arg13[%c16_381, %c0_382] : memref<18x64xf32, #tpu.memory_space<vmem>>, vector<1x64xf32>
    %552 = arith.truncf %551 : vector<1x64xf32> to vector<1x64xbf16>
    %cst_383 = arith.constant dense<0.000000e+00> : vector<1x64xf32>
    %553 = tpu.matmul %552, %477, %cst_383 {dimension_numbers = #tpu.dot_dimension_numbers<[1], [0], [0], [1], [0, 0, 1, 1], [], []>} : vector<1x64xbf16>, vector<64x64xbf16>, vector<1x64xf32> -> vector<1x64xf32>
    %554 = arith.addf %550, %553 : vector<1x64xf32>
    %c17_384 = arith.constant 17 : index
    %c0_385 = arith.constant 0 : index
    %555 = vector.load %arg13[%c17_384, %c0_385] : memref<18x64xf32, #tpu.memory_space<vmem>>, vector<1x64xf32>
    %556 = arith.truncf %555 : vector<1x64xf32> to vector<1x64xbf16>
    %cst_386 = arith.constant dense<0.000000e+00> : vector<1x64xf32>
    %557 = tpu.matmul %556, %479, %cst_386 {dimension_numbers = #tpu.dot_dimension_numbers<[1], [0], [0], [1], [0, 0, 1, 1], [], []>} : vector<1x64xbf16>, vector<64x64xbf16>, vector<1x64xf32> -> vector<1x64xf32>
    %558 = arith.addf %554, %557 : vector<1x64xf32>
    %559 = arith.addf %558, %480 : vector<1x64xf32>
    %cst_387 = arith.constant 0.000000e+00 : f32
    %560 = vector.broadcast %cst_387 : f32 to vector<1x64xf32>
    %561 = arith.maximumf %559, %560 : vector<1x64xf32>
    %c1_388 = arith.constant 1 : index
    %c0_389 = arith.constant 0 : index
    %562 = vector.load %arg14[%c1_388, %c0_389] : memref<2x64xf32, #tpu.memory_space<vmem>>, vector<1x64xf32>
    tpu.vector_store %arg14[%c1_388, %c0_389], %561 {strides = array<i32>} : memref<2x64xf32, #tpu.memory_space<vmem>>, vector<1x64xf32>,
    %c0_390 = arith.constant 0 : index
    %c0_391 = arith.constant 0 : index
    %563 = vector.load %arg14[%c0_390, %c0_391] : memref<2x64xf32, #tpu.memory_space<vmem>>, vector<2x64xf32>
    %564 = arith.truncf %563 : vector<2x64xf32> to vector<2x64xbf16>
    %c0_392 = arith.constant 0 : index
    %c0_393 = arith.constant 0 : index
    %565 = vector.load %arg7[%c0_392, %c0_393] : memref<64x512xbf16, #tpu.memory_space<vmem>>, vector<64x512xbf16>
    %cst_394 = arith.constant dense<0.000000e+00> : vector<2x512xf32>
    %566 = tpu.matmul %564, %565, %cst_394 {dimension_numbers = #tpu.dot_dimension_numbers<[1], [0], [0], [1], [0, 0, 1, 1], [], []>} : vector<2x64xbf16>, vector<64x512xbf16>, vector<2x512xf32> -> vector<2x512xf32>
    %c0_395 = arith.constant 0 : index
    %c0_396 = arith.constant 0 : index
    %567 = vector.load %arg8[%c0_395, %c0_396] : memref<1x512xf32, #tpu.memory_space<vmem>>, vector<1x512xf32>
    %568 = vector.broadcast %567 : vector<1x512xf32> to vector<2x512xf32>
    %569 = arith.addf %566, %568 : vector<2x512xf32>
    %cst_397 = arith.constant 0.000000e+00 : f32
    %570 = vector.broadcast %cst_397 : f32 to vector<2x512xf32>
    %571 = arith.maximumf %569, %570 : vector<2x512xf32>
    %572 = arith.truncf %571 : vector<2x512xf32> to vector<2x512xbf16>
    %c0_398 = arith.constant 0 : index
    %c0_399 = arith.constant 0 : index
    %573 = vector.load %arg9[%c0_398, %c0_399] : memref<512x128xbf16, #tpu.memory_space<vmem>>, vector<512x128xbf16>
    %cst_400 = arith.constant dense<0.000000e+00> : vector<2x128xf32>
    %574 = tpu.matmul %572, %573, %cst_400 {dimension_numbers = #tpu.dot_dimension_numbers<[1], [0], [0], [1], [0, 0, 1, 1], [], []>} : vector<2x512xbf16>, vector<512x128xbf16>, vector<2x128xf32> -> vector<2x128xf32>
    %c0_401 = arith.constant 0 : index
    %c0_402 = arith.constant 0 : index
    %575 = vector.load %arg10[%c0_401, %c0_402] : memref<1x128xf32, #tpu.memory_space<vmem>>, vector<1x128xf32>
    %576 = vector.broadcast %575 : vector<1x128xf32> to vector<2x128xf32>
    %577 = arith.addf %574, %576 : vector<2x128xf32>
    %c0_403 = arith.constant 0 : index
    %c0_404 = arith.constant 0 : index
    %578 = vector.load %arg11[%c0_403, %c0_404] : memref<2x128xf32, #tpu.memory_space<vmem>>, vector<2x128xf32>
    tpu.vector_store %arg11[%c0_403, %c0_404], %577 {strides = array<i32>} : memref<2x128xf32, #tpu.memory_space<vmem>>, vector<2x128xf32>,
    return
  }
}

</mosaic_0001>

<llo_original>
// kernel: dqn_forward.1
$region0: #{dqn_forward.1}
  #allocation0 [shape = 'u32[]', space=smem, size = 0x4, offset = 0x4, fixed_abs, tag = 'smem constant byte address 0x4 - core index']
  #allocation1 [shape = 'u32[144,128]{1,0:T(1,128)}', space=vmem, size = 0x12000, scoped, tag = 'internal scratch']
  #allocation2 [shape = 'f32[128,32]{1,0:T(8,128)}', space=vmem, size = 0x10000, scoped, tag = 'scratch operand']
  #allocation3 [shape = 'f32[18,64]{1,0:T(8,128)}', space=vmem, size = 0x3000, scoped, tag = 'scratch operand']
  #allocation4 [shape = 'f32[2,64]{1,0:T(2,128)}', space=vmem, size = 0x400, scoped, tag = 'scratch operand']
  %s0 = inlined_call_operand.vmem [shape: bf16[128,256], index: 0, kind: input, shape index: {}]
  %s1 = inlined_call_operand.vmem [shape: bf16[256,32], index: 1, kind: input, shape index: {}]
  %s2 = inlined_call_operand.vmem [shape: f32[1,32], index: 2, kind: input, shape index: {}]
  %s3 = inlined_call_operand.vmem [shape: bf16[16,32,64], index: 3, kind: input, shape index: {}]
  %s4 = inlined_call_operand.vmem [shape: f32[1,64], index: 4, kind: input, shape index: {}]
  %s5 = inlined_call_operand.vmem [shape: bf16[9,64,64], index: 5, kind: input, shape index: {}]
  %s6 = inlined_call_operand.vmem [shape: f32[1,64], index: 6, kind: input, shape index: {}]
  %s7 = inlined_call_operand.vmem [shape: bf16[64,512], index: 7, kind: input, shape index: {}]
  %s8 = inlined_call_operand.vmem [shape: f32[1,512], index: 8, kind: input, shape index: {}]
  %s9 = inlined_call_operand.vmem [shape: bf16[512,128], index: 9, kind: input, shape index: {}]
  %s10 = inlined_call_operand.vmem [shape: f32[1,128], index: 10, kind: input, shape index: {}]
  %s11 = inlined_call_operand.hbm [shape: f32[2,128], index: 11, kind: output, shape index: {}]
  %s12 = sld [smem:[#allocation0]]
  $region54: #{dqn_forward.1} parent=0
    _
  %s14 = ssub.s32 1, %s12
  %s15 = scalar_select 0, %s14, %s12
  $region1: #{dqn_forward.1} parent=0
    #allocation5 [shape = 'u8[1024]{0}', space=vmem, size = 0x400, scoped, tag = 'output window, operand 0, single buffered']
    #allocation6 [shape = 's32[1]{0}', space=sflag, size = 0x4, scoped, tag = 'scoped memory for dqn_forward.1']
    %16 = vsyncpa [#allocation6], 0
    // Predicated region
    $region2: #{dqn_forward.1} parent=1 // pred_check
      _
    $region3: #{dqn_forward.1} parent=1 // pred_check_branch
      %18 = sbr.rel (0) target = $region5
    $region4: #{dqn_forward.1} parent=1 // pred_region
      _
    $region5: #{dqn_forward.1} parent=1 // pred_fallthru
      _
    // Predicated region
    $region6: #{dqn_forward.1} parent=1 // pred_check
      _
    $region7: #{dqn_forward.1} parent=1 // pred_check_branch
      %20 = sbr.rel (0) target = $region9
    $region8: #{dqn_forward.1} parent=1 // pred_region
      _
    $region9: #{dqn_forward.1} parent=1 // pred_fallthru
      _
    // Predicated region
    $region10: #{dqn_forward.1} parent=1 // pred_check
      _
    $region11: #{dqn_forward.1} parent=1 // pred_check_branch
      %22 = sbr.rel (0) target = $region13
    $region12: #{dqn_forward.1} parent=1 // pred_region
      _
    $region13: #{dqn_forward.1} parent=1 // pred_fallthru
      _
    // Predicated region
    $region14: #{dqn_forward.1} parent=1 // pred_check
      _
    $region15: #{dqn_forward.1} parent=1 // pred_check_branch
      %24 = sbr.rel (0) target = $region17
    $region16: #{dqn_forward.1} parent=1 // pred_region
      _
    $region17: #{dqn_forward.1} parent=1 // pred_fallthru
      _
    // Predicated region
    $region18: #{dqn_forward.1} parent=1 // pred_check
      _
    $region19: #{dqn_forward.1} parent=1 // pred_check_branch
      %26 = sbr.rel (0) target = $region21
    $region20: #{dqn_forward.1} parent=1 // pred_region
      _
    $region21: #{dqn_forward.1} parent=1 // pred_fallthru
      _
    // Predicated region
    $region22: #{dqn_forward.1} parent=1 // pred_check
      _
    $region23: #{dqn_forward.1} parent=1 // pred_check_branch
      %28 = sbr.rel (0) target = $region25
    $region24: #{dqn_forward.1} parent=1 // pred_region
      _
    $region25: #{dqn_forward.1} parent=1 // pred_fallthru
      _
    // Predicated region
    $region26: #{dqn_forward.1} parent=1 // pred_check
      _
    $region27: #{dqn_forward.1} parent=1 // pred_check_branch
      %30 = sbr.rel (0) target = $region29
    $region28: #{dqn_forward.1} parent=1 // pred_region
      _
    $region29: #{dqn_forward.1} parent=1 // pred_fallthru
      _
    // Predicated region
    $region30: #{dqn_forward.1} parent=1 // pred_check
      _
    $region31: #{dqn_forward.1} parent=1 // pred_check_branch
      %32 = sbr.rel (0) target = $region33
    $region32: #{dqn_forward.1} parent=1 // pred_region
      _
    $region33: #{dqn_forward.1} parent=1 // pred_fallthru
      _
    // Predicated region
    $region34: #{dqn_forward.1} parent=1 // pred_check
      _
    $region35: #{dqn_forward.1} parent=1 // pred_check_branch
      %34 = sbr.rel (0) target = $region37
    $region36: #{dqn_forward.1} parent=1 // pred_region
      _
    $region37: #{dqn_forward.1} parent=1 // pred_fallthru
      _
    // Predicated region
    $region38: #{dqn_forward.1} parent=1 // pred_check
      _
    $region39: #{dqn_forward.1} parent=1 // pred_check_branch
      %36 = sbr.rel (0) target = $region41
    $region40: #{dqn_forward.1} parent=1 // pred_region
      _
    $region41: #{dqn_forward.1} parent=1 // pred_fallthru
      _
    // Predicated region
    $region42: #{dqn_forward.1} parent=1 // pred_check
      _
    $region43: #{dqn_forward.1} parent=1 // pred_check_branch
      %38 = sbr.rel (0) target = $region45
    $region44: #{dqn_forward.1} parent=1 // pred_region
      _
    $region45: #{dqn_forward.1} parent=1 // pred_fallthru
      _
    %v40 = vld [vmem:[%s0] sm:$0xff]
    %v41 = vld [vmem:[%s0 + $0x8] sm:$0xff]
    %v42 = vld [vmem:[%s0 + $0x10] sm:$0xff]
    %v43 = vld [vmem:[%s0 + $0x18] sm:$0xff]
    %v44 = vld [vmem:[%s0 + $0x20] sm:$0xff]
    %v45 = vld [vmem:[%s0 + $0x28] sm:$0xff]
    %v46 = vld [vmem:[%s0 + $0x30] sm:$0xff]
    %v47 = vld [vmem:[%s0 + $0x38] sm:$0xff]
    %v48 = vld [vmem:[%s0 + $0x40] sm:$0xff]
    %v49 = vld [vmem:[%s0 + $0x48] sm:$0xff]
    %v50 = vld [vmem:[%s0 + $0x50] sm:$0xff]
    %v51 = vld [vmem:[%s0 + $0x58] sm:$0xff]
    %v52 = vld [vmem:[%s0 + $0x60] sm:$0xff]
    %v53 = vld [vmem:[%s0 + $0x68] sm:$0xff]
    %v54 = vld [vmem:[%s0 + $0x70] sm:$0xff]
    %v55 = vld [vmem:[%s0 + $0x78] sm:$0xff]
    %v56 = vld [vmem:[%s1] sm:$0xf]
    %v57 = vld [vmem:[%s1 + $0x4] sm:$0xf]
    %v58 = vld [vmem:[%s1 + $0x8] sm:$0xf]
    %v59 = vld [vmem:[%s1 + $0xc] sm:$0xf]
    %v60 = vld [vmem:[%s1 + $0x10] sm:$0xf]
    %v61 = vld [vmem:[%s1 + $0x14] sm:$0xf]
    %v62 = vld [vmem:[%s1 + $0x18] sm:$0xf]
    %v63 = vld [vmem:[%s1 + $0x1c] sm:$0xf]
    %v64 = vld [vmem:[%s1 + $0x20] sm:$0xf]
    %v65 = vld [vmem:[%s1 + $0x24] sm:$0xf]
    %v66 = vld [vmem:[%s1 + $0x28] sm:$0xf]
    %v67 = vld [vmem:[%s1 + $0x2c] sm:$0xf]
    %v68 = vld [vmem:[%s1 + $0x30] sm:$0xf]
    %v69 = vld [vmem:[%s1 + $0x34] sm:$0xf]
    %v70 = vld [vmem:[%s1 + $0x38] sm:$0xf]
    %v71 = vld [vmem:[%s1 + $0x3c] sm:$0xf]
    %v72 = vld [vmem:[%s1 + $0x40] sm:$0xf]
    %v73 = vld [vmem:[%s1 + $0x44] sm:$0xf]
    %v74 = vld [vmem:[%s1 + $0x48] sm:$0xf]
    %v75 = vld [vmem:[%s1 + $0x4c] sm:$0xf]
    %v76 = vld [vmem:[%s1 + $0x50] sm:$0xf]
    %v77 = vld [vmem:[%s1 + $0x54] sm:$0xf]
    %v78 = vld [vmem:[%s1 + $0x58] sm:$0xf]
    %v79 = vld [vmem:[%s1 + $0x5c] sm:$0xf]
    %v80 = vld [vmem:[%s1 + $0x60] sm:$0xf]
    %v81 = vld [vmem:[%s1 + $0x64] sm:$0xf]
    %v82 = vld [vmem:[%s1 + $0x68] sm:$0xf]
    %v83 = vld [vmem:[%s1 + $0x6c] sm:$0xf]
    %v84 = vld [vmem:[%s1 + $0x70] sm:$0xf]
    %v85 = vld [vmem:[%s1 + $0x74] sm:$0xf]
    %v86 = vld [vmem:[%s1 + $0x78] sm:$0xf]
    %v87 = vld [vmem:[%s1 + $0x7c] sm:$0xf]
    %v88 = vld [vmem:[%s2] sm:$0x1]
    %v90 = vlaneseq
    %v91 = vshrl.u32 %v90, 7
    %v92 = vsub.s32 0, %v91
    %v93 = vrot.slane %v88, %v92
    %v111 = vunpack.c.l.b16 %v40
    %v112 = vunpack.c.h.b16 %v40
    %v113 = vunpack.c.l.b16 %v41
    %v114 = vunpack.c.h.b16 %v41
    %v115 = vunpack.c.l.b16 %v42
    %v116 = vunpack.c.h.b16 %v42
    %v117 = vunpack.c.l.b16 %v43
    %v118 = vunpack.c.h.b16 %v43
    %v119 = vunpack.c.l.b16 %v44
    %v120 = vunpack.c.h.b16 %v44
    %v121 = vunpack.c.l.b16 %v45
    %v122 = vunpack.c.h.b16 %v45
    %v123 = vunpack.c.l.b16 %v46
    %v124 = vunpack.c.h.b16 %v46
    %v125 = vunpack.c.l.b16 %v47
    %v126 = vunpack.c.h.b16 %v47
    %v127 = vunpack.c.l.b16 %v48
    %v128 = vunpack.c.h.b16 %v48
    %v129 = vunpack.c.l.b16 %v49
    %v130 = vunpack.c.h.b16 %v49
    %v131 = vunpack.c.l.b16 %v50
    %v132 = vunpack.c.h.b16 %v50
    %v133 = vunpack.c.l.b16 %v51
    %v134 = vunpack.c.h.b16 %v51
    %v135 = vunpack.c.l.b16 %v52
    %v136 = vunpack.c.h.b16 %v52
    %v137 = vunpack.c.l.b16 %v53
    %v138 = vunpack.c.h.b16 %v53
    %v139 = vunpack.c.l.b16 %v54
    %v140 = vunpack.c.h.b16 %v54
    %v141 = vunpack.c.l.b16 %v55
    %v142 = vunpack.c.h.b16 %v55
    %v143 = vpack.c.b16 %v113, %v111
    %v144 = vpack.c.b16 %v114, %v112
    %v145 = vpack.c.b16 %v117, %v115
    %v146 = vpack.c.b16 %v118, %v116
    %v147 = vpack.c.b16 %v121, %v119
    %v148 = vpack.c.b16 %v122, %v120
    %v149 = vpack.c.b16 %v125, %v123
    %v150 = vpack.c.b16 %v126, %v124
    %v151 = vpack.c.b16 %v129, %v127
    %v152 = vpack.c.b16 %v130, %v128
    %v153 = vpack.c.b16 %v133, %v131
    %v154 = vpack.c.b16 %v134, %v132
    %v155 = vpack.c.b16 %v137, %v135
    %v156 = vpack.c.b16 %v138, %v136
    %v157 = vpack.c.b16 %v141, %v139
    %v158 = vpack.c.b16 %v142, %v140
    %v207 = vunpack.c.l.b16 %v56
    %v208 = vunpack.c.l.b16 %v57
    %v209 = vunpack.c.l.b16 %v58
    %v210 = vunpack.c.l.b16 %v59
    %v211 = vunpack.c.l.b16 %v60
    %v212 = vunpack.c.l.b16 %v61
    %v213 = vunpack.c.l.b16 %v62
    %v214 = vunpack.c.l.b16 %v63
    %v215 = vunpack.c.l.b16 %v64
    %v216 = vunpack.c.l.b16 %v65
    %v217 = vunpack.c.l.b16 %v66
    %v218 = vunpack.c.l.b16 %v67
    %v219 = vunpack.c.l.b16 %v68
    %v220 = vunpack.c.l.b16 %v69
    %v221 = vunpack.c.l.b16 %v70
    %v222 = vunpack.c.l.b16 %v71
    %v223 = vunpack.c.l.b16 %v72
    %v224 = vunpack.c.l.b16 %v73
    %v225 = vunpack.c.l.b16 %v74
    %v226 = vunpack.c.l.b16 %v75
    %v227 = vunpack.c.l.b16 %v76
    %v228 = vunpack.c.l.b16 %v77
    %v229 = vunpack.c.l.b16 %v78
    %v230 = vunpack.c.l.b16 %v79
    %v231 = vunpack.c.l.b16 %v80
    %v232 = vunpack.c.l.b16 %v81
    %v233 = vunpack.c.l.b16 %v82
    %v234 = vunpack.c.l.b16 %v83
    %v235 = vunpack.c.l.b16 %v84
    %v236 = vunpack.c.l.b16 %v85
    %v237 = vunpack.c.l.b16 %v86
    %v238 = vunpack.c.l.b16 %v87
    %v239 = vpack.c.b16 %v208, %v207
    %v240 = vpack.c.b16 %v210, %v209
    %v241 = vpack.c.b16 %v212, %v211
    %v242 = vpack.c.b16 %v214, %v213
    %v243 = vpack.c.b16 %v216, %v215
    %v244 = vpack.c.b16 %v218, %v217
    %v245 = vpack.c.b16 %v220, %v219
    %v246 = vpack.c.b16 %v222, %v221
    %v247 = vpack.c.b16 %v224, %v223
    %v248 = vpack.c.b16 %v226, %v225
    %v249 = vpack.c.b16 %v228, %v227
    %v250 = vpack.c.b16 %v230, %v229
    %v251 = vpack.c.b16 %v232, %v231
    %v252 = vpack.c.b16 %v234, %v233
    %v253 = vpack.c.b16 %v236, %v235
    %v254 = vpack.c.b16 %v238, %v237
    %271 = vmatprep.subr.bf16.mxu0 0
    %272 = vmatpush1.bf16.msra.mxu0 %v239
    %273 = vmatprep.subr.bf16.mxu0 0
    %274 = vmatpush1.bf16.msra.mxu0 %v240
    %275 = vmatprep.subr.bf16.mxu0 0
    %276 = vmatpush1.bf16.msra.mxu0 %v241
    %277 = vmatprep.subr.bf16.mxu0 0
    %278 = vmatpush1.bf16.msra.mxu0 %v242
    %279 = vmatprep.subr.bf16.mxu0 0
    %280 = vmatpush1.bf16.msra.mxu0 %v243
    %281 = vmatprep.subr.bf16.mxu0 0
    %282 = vmatpush1.bf16.msra.mxu0 %v244
    %283 = vmatprep.subr.bf16.mxu0 0
    %284 = vmatpush1.bf16.msra.mxu0 %v245
    %285 = vmatprep.subr.bf16.mxu0 0
    %286 = vmatpush1.bf16.msra.mxu0 %v246
    %287 = vmatprep.subr.bf16.mxu0 0
    %288 = vmatpush1.bf16.msra.mxu0 %v247
    %289 = vmatprep.subr.bf16.mxu0 0
    %290 = vmatpush1.bf16.msra.mxu0 %v248
    %291 = vmatprep.subr.bf16.mxu0 0
    %292 = vmatpush1.bf16.msra.mxu0 %v249
    %293 = vmatprep.subr.bf16.mxu0 0
    %294 = vmatpush1.bf16.msra.mxu0 %v250
    %295 = vmatprep.subr.bf16.mxu0 0
    %296 = vmatpush1.bf16.msra.mxu0 %v251
    %297 = vmatprep.subr.bf16.mxu0 0
    %298 = vmatpush1.bf16.msra.mxu0 %v252
    %299 = vmatprep.subr.bf16.mxu0 0
    %300 = vmatpush1.bf16.msra.mxu0 %v253
    %301 = vmatprep.subr.bf16.mxu0 0
    %302 = vmatpush1.bf16.msra.mxu0 %v254
    %303 = vmatprep.mubr.bf16.mxu0 %v144
    %304 = vmatmul.mubr.bf16.gmra.mrb[0].mxu0 %v143
    %v305 = vpop.f32.mrb[0].mxu0
    %v306 = vadd.f32 %v93, %v305
    %v307 = vpop.f32.mrb[0].mxu0
    %v308 = vpop.f32.mrb[0].mxu0
    %v309 = vadd.f32 %v93, %v308
    %v310 = vpop.f32.mrb[0].mxu0
    %311 = vmatprep.mubr.bf16.mxu0 %v146
    %312 = vmatmul.mubr.bf16.gmra.mrb[0].mxu0 %v145
    %v313 = vpop.f32.mrb[0].mxu0
    %v314 = vadd.f32 %v93, %v313
    %v315 = vpop.f32.mrb[0].mxu0
    %v316 = vpop.f32.mrb[0].mxu0
    %v317 = vadd.f32 %v93, %v316
    %v318 = vpop.f32.mrb[0].mxu0
    %319 = vmatprep.mubr.bf16.mxu0 %v148
    %320 = vmatmul.mubr.bf16.gmra.mrb[0].mxu0 %v147
    %v321 = vpop.f32.mrb[0].mxu0
    %v322 = vadd.f32 %v93, %v321
    %v323 = vpop.f32.mrb[0].mxu0
    %v324 = vpop.f32.mrb[0].mxu0
    %v325 = vadd.f32 %v93, %v324
    %v326 = vpop.f32.mrb[0].mxu0
    %327 = vmatprep.mubr.bf16.mxu0 %v150
    %328 = vmatmul.mubr.bf16.gmra.mrb[0].mxu0 %v149
    %v329 = vpop.f32.mrb[0].mxu0
    %v330 = vadd.f32 %v93, %v329
    %v331 = vpop.f32.mrb[0].mxu0
    %v332 = vpop.f32.mrb[0].mxu0
    %v333 = vadd.f32 %v93, %v332
    %v334 = vpop.f32.mrb[0].mxu0
    %335 = vmatprep.mubr.bf16.mxu0 %v152
    %336 = vmatmul.mubr.bf16.gmra.mrb[0].mxu0 %v151
    %v337 = vpop.f32.mrb[0].mxu0
    %v338 = vadd.f32 %v93, %v337
    %v339 = vpop.f32.mrb[0].mxu0
    %v340 = vpop.f32.mrb[0].mxu0
    %v341 = vadd.f32 %v93, %v340
    %v342 = vpop.f32.mrb[0].mxu0
    %343 = vmatprep.mubr.bf16.mxu0 %v154
    %344 = vmatmul.mubr.bf16.gmra.mrb[0].mxu0 %v153
    %v345 = vpop.f32.mrb[0].mxu0
    %v346 = vadd.f32 %v93, %v345
    %v347 = vpop.f32.mrb[0].mxu0
    %v348 = vpop.f32.mrb[0].mxu0
    %v349 = vadd.f32 %v93, %v348
    %v350 = vpop.f32.mrb[0].mxu0
    %351 = vmatprep.mubr.bf16.mxu0 %v156
    %352 = vmatmul.mubr.bf16.gmra.mrb[0].mxu0 %v155
    %v353 = vpop.f32.mrb[0].mxu0
    %v354 = vadd.f32 %v93, %v353
    %v355 = vpop.f32.mrb[0].mxu0
    %v356 = vpop.f32.mrb[0].mxu0
    %v357 = vadd.f32 %v93, %v356
    %v358 = vpop.f32.mrb[0].mxu0
    %359 = vmatprep.mubr.bf16.mxu0 %v158
    %360 = vmatmul.mubr.bf16.gmra.mrb[0].mxu0 %v157
    %v361 = vpop.f32.mrb[0].mxu0
    %v362 = vadd.f32 %v93, %v361
    %v363 = vpop.f32.mrb[0].mxu0
    %v364 = vpop.f32.mrb[0].mxu0
    %v365 = vadd.f32 %v93, %v364
    %v366 = vpop.f32.mrb[0].mxu0
    %367 = vdwg.mxu0
    %v368 = vmax.f32 %v306, 0.0
    %v369 = vmax.f32 %v309, 0.0
    %v370 = vmax.f32 %v314, 0.0
    %v371 = vmax.f32 %v317, 0.0
    %v372 = vmax.f32 %v322, 0.0
    %v373 = vmax.f32 %v325, 0.0
    %v374 = vmax.f32 %v330, 0.0
    %v375 = vmax.f32 %v333, 0.0
    %v376 = vmax.f32 %v338, 0.0
    %v377 = vmax.f32 %v341, 0.0
    %v378 = vmax.f32 %v346, 0.0
    %v379 = vmax.f32 %v349, 0.0
    %v380 = vmax.f32 %v354, 0.0
    %v381 = vmax.f32 %v357, 0.0
    %v382 = vmax.f32 %v362, 0.0
    %v383 = vmax.f32 %v365, 0.0
    %vm384 = vcmask 261120
    %385 = vst.msk [vmem:[#allocation2] sm:$0xff] %vm384, %v368
    %386 = vst.msk [vmem:[#allocation2 + $0x8] sm:$0xff] %vm384, %v369
    %387 = vst.msk [vmem:[#allocation2 + $0x10] sm:$0xff] %vm384, %v370
    %388 = vst.msk [vmem:[#allocation2 + $0x18] sm:$0xff] %vm384, %v371
    %389 = vst.msk [vmem:[#allocation2 + $0x20] sm:$0xff] %vm384, %v372
    %390 = vst.msk [vmem:[#allocation2 + $0x28] sm:$0xff] %vm384, %v373
    %391 = vst.msk [vmem:[#allocation2 + $0x30] sm:$0xff] %vm384, %v374
    %392 = vst.msk [vmem:[#allocation2 + $0x38] sm:$0xff] %vm384, %v375
    %393 = vst.msk [vmem:[#allocation2 + $0x40] sm:$0xff] %vm384, %v376
    %394 = vst.msk [vmem:[#allocation2 + $0x48] sm:$0xff] %vm384, %v377
    %395 = vst.msk [vmem:[#allocation2 + $0x50] sm:$0xff] %vm384, %v378
    %396 = vst.msk [vmem:[#allocation2 + $0x58] sm:$0xff] %vm384, %v379
    %397 = vst.msk [vmem:[#allocation2 + $0x60] sm:$0xff] %vm384, %v380
    %398 = vst.msk [vmem:[#allocation2 + $0x68] sm:$0xff] %vm384, %v381
    %399 = vst.msk [vmem:[#allocation2 + $0x70] sm:$0xff] %vm384, %v382
    %400 = vst.msk [vmem:[#allocation2 + $0x78] sm:$0xff] %vm384, %v383
    %v401 = vld [vmem:[%s3] sm:$0xf]
    %v402 = vld [vmem:[%s3 + $0x4] sm:$0xf]
    %v403 = vld [vmem:[%s3 + $0x8] sm:$0xf]
    %v404 = vld [vmem:[%s3 + $0xc] sm:$0xf]
    %s405 = scalar_lea.vmem %s3, 16
    %v406 = vld [vmem:[%s405] sm:$0xf]
    %v407 = vld [vmem:[%s405 + $0x4] sm:$0xf]
    %v408 = vld [vmem:[%s405 + $0x8] sm:$0xf]
    %v409 = vld [vmem:[%s405 + $0xc] sm:$0xf]
    %s410 = scalar_lea.vmem %s3, 32
    %v411 = vld [vmem:[%s410] sm:$0xf]
    %v412 = vld [vmem:[%s410 + $0x4] sm:$0xf]
    %v413 = vld [vmem:[%s410 + $0x8] sm:$0xf]
    %v414 = vld [vmem:[%s410 + $0xc] sm:$0xf]
    %s415 = scalar_lea.vmem %s3, 48
    %v416 = vld [vmem:[%s415] sm:$0xf]
    %v417 = vld [vmem:[%s415 + $0x4] sm:$0xf]
    %v418 = vld [vmem:[%s415 + $0x8] sm:$0xf]
    %v419 = vld [vmem:[%s415 + $0xc] sm:$0xf]
    %s420 = scalar_lea.vmem %s3, 64
    %v421 = vld [vmem:[%s420] sm:$0xf]
    %v422 = vld [vmem:[%s420 + $0x4] sm:$0xf]
    %v423 = vld [vmem:[%s420 + $0x8] sm:$0xf]
    %v424 = vld [vmem:[%s420 + $0xc] sm:$0xf]
    %s425 = scalar_lea.vmem %s3, 80
    %v426 = vld [vmem:[%s425] sm:$0xf]
    %v427 = vld [vmem:[%s425 + $0x4] sm:$0xf]
    %v428 = vld [vmem:[%s425 + $0x8] sm:$0xf]
    %v429 = vld [vmem:[%s425 + $0xc] sm:$0xf]
    %s430 = scalar_lea.vmem %s3, 96
    %v431 = vld [vmem:[%s430] sm:$0xf]
    %v432 = vld [vmem:[%s430 + $0x4] sm:$0xf]
    %v433 = vld [vmem:[%s430 + $0x8] sm:$0xf]
    %v434 = vld [vmem:[%s430 + $0xc] sm:$0xf]
    %s435 = scalar_lea.vmem %s3, 112
    %v436 = vld [vmem:[%s435] sm:$0xf]
    %v437 = vld [vmem:[%s435 + $0x4] sm:$0xf]
    %v438 = vld [vmem:[%s435 + $0x8] sm:$0xf]
    %v439 = vld [vmem:[%s435 + $0xc] sm:$0xf]
    %s440 = scalar_lea.vmem %s3, 128
    %v441 = vld [vmem:[%s440] sm:$0xf]
    %v442 = vld [vmem:[%s440 + $0x4] sm:$0xf]
    %v443 = vld [vmem:[%s440 + $0x8] sm:$0xf]
    %v444 = vld [vmem:[%s440 + $0xc] sm:$0xf]
    %s445 = scalar_lea.vmem %s3, 144
    %v446 = vld [vmem:[%s445] sm:$0xf]
    %v447 = vld [vmem:[%s445 + $0x4] sm:$0xf]
    %v448 = vld [vmem:[%s445 + $0x8] sm:$0xf]
    %v449 = vld [vmem:[%s445 + $0xc] sm:$0xf]
    %s450 = scalar_lea.vmem %s3, 160
    %v451 = vld [vmem:[%s450] sm:$0xf]
    %v452 = vld [vmem:[%s450 + $0x4] sm:$0xf]
    %v453 = vld [vmem:[%s450 + $0x8] sm:$0xf]
    %v454 = vld [vmem:[%s450 + $0xc] sm:$0xf]
    %s455 = scalar_lea.vmem %s3, 176
    %v456 = vld [vmem:[%s455] sm:$0xf]
    %v457 = vld [vmem:[%s455 + $0x4] sm:$0xf]
    %v458 = vld [vmem:[%s455 + $0x8] sm:$0xf]
    %v459 = vld [vmem:[%s455 + $0xc] sm:$0xf]
    %s460 = scalar_lea.vmem %s3, 192
    %v461 = vld [vmem:[%s460] sm:$0xf]
    %v462 = vld [vmem:[%s460 + $0x4] sm:$0xf]
    %v463 = vld [vmem:[%s460 + $0x8] sm:$0xf]
    %v464 = vld [vmem:[%s460 + $0xc] sm:$0xf]
    %s465 = scalar_lea.vmem %s3, 208
    %v466 = vld [vmem:[%s465] sm:$0xf]
    %v467 = vld [vmem:[%s465 + $0x4] sm:$0xf]
    %v468 = vld [vmem:[%s465 + $0x8] sm:$0xf]
    %v469 = vld [vmem:[%s465 + $0xc] sm:$0xf]
    %s470 = scalar_lea.vmem %s3, 224
    %v471 = vld [vmem:[%s470] sm:$0xf]
    %v472 = vld [vmem:[%s470 + $0x4] sm:$0xf]
    %v473 = vld [vmem:[%s470 + $0x8] sm:$0xf]
    %v474 = vld [vmem:[%s470 + $0xc] sm:$0xf]
    %s475 = scalar_lea.vmem %s3, 240
    %v476 = vld [vmem:[%s475] sm:$0xf]
    %v477 = vld [vmem:[%s475 + $0x4] sm:$0xf]
    %v478 = vld [vmem:[%s475 + $0x8] sm:$0xf]
    %v479 = vld [vmem:[%s475 + $0xc] sm:$0xf]
    %v480 = vld [vmem:[%s4] sm:$0x1]
    %v481 = vld [vmem:[#allocation2] ss:$2 sm:$0x7]
    %v482 = vpack.c.bf16 %v481, %v481
    %s483 = scalar_lea.vmem [#allocation2], 1
    %v484 = vld [vmem:[%s483] ss:$2 sm:$0x7]
    %v485 = vpack.c.bf16 %v484, %v484
    %v490 = vunpack.c.l.b16 %v406
    %v491 = vunpack.c.l.b16 %v407
    %v492 = vunpack.c.l.b16 %v408
    %v493 = vunpack.c.l.b16 %v409
    %v494 = vpack.c.b16 %v491, %v490
    %v495 = vpack.c.b16 %v493, %v492
    %v499 = vsel %vm384, %v485, 0
    %501 = vmatprep.subr.bf16.mxu0 0
    %502 = vmatpush1.bf16.msra.mxu0 %v494
    %503 = vmatprep.subr.bf16.mxu0 0
    %504 = vmatpush1.bf16.msra.mxu0 %v495
    %505 = vmatprep.subr.bf16.mxu0 0
    %506 = vmatpush1.bf16.msra.mxu0 0
    %507 = vmatprep.subr.bf16.mxu0 0
    %508 = vmatpush1.bf16.msra.mxu0 0
    %509 = vmatprep.subr.bf16.mxu0 0
    %510 = vmatpush1.bf16.msra.mxu0 0
    %511 = vmatprep.subr.bf16.mxu0 0
    %512 = vmatpush1.bf16.msra.mxu0 0
    %513 = vmatprep.subr.bf16.mxu0 0
    %514 = vmatpush1.bf16.msra.mxu0 0
    %515 = vmatprep.subr.bf16.mxu0 0
    %516 = vmatpush1.bf16.msra.mxu0 0
    %517 = vmatprep.subr.bf16.mxu0 0
    %518 = vmatpush1.bf16.msra.mxu0 0
    %519 = vmatprep.subr.bf16.mxu0 0
    %520 = vmatpush1.bf16.msra.mxu0 0
    %521 = vmatprep.subr.bf16.mxu0 0
    %522 = vmatpush1.bf16.msra.mxu0 0
    %523 = vmatprep.subr.bf16.mxu0 0
    %524 = vmatpush1.bf16.msra.mxu0 0
    %525 = vmatprep.subr.bf16.mxu0 0
    %526 = vmatpush1.bf16.msra.mxu0 0
    %527 = vmatprep.subr.bf16.mxu0 0
    %528 = vmatpush1.bf16.msra.mxu0 0
    %529 = vmatprep.subr.bf16.mxu0 0
    %530 = vmatpush1.bf16.msra.mxu0 0
    %531 = vmatprep.subr.bf16.mxu0 0
    %532 = vmatpush1.bf16.msra.mxu0 0
    %533 = vmatprep.mubr.bf16.mxu0 0
    %534 = vmatmul.mubr.bf16.gmra.mrb[0].mxu0 %v499
    %v535 = vpop.f32.mrb[0].mxu0
    %v536 = vadd.f32 0.0, %v535
    %v537 = vpop.f32.mrb[0].mxu0
    %v538 = vpop.f32.mrb[0].mxu0
    %v539 = vpop.f32.mrb[0].mxu0
    %540 = vdwg.mxu0
    %v545 = vunpack.c.l.b16 %v401
    %v546 = vunpack.c.l.b16 %v402
    %v547 = vunpack.c.l.b16 %v403
    %v548 = vunpack.c.l.b16 %v404
    %v549 = vpack.c.b16 %v546, %v545
    %v550 = vpack.c.b16 %v548, %v547
    %v554 = vsel %vm384, %v482, 0
    %556 = vmatprep.subr.bf16.mxu0 0
    %557 = vmatpush1.bf16.msra.mxu0 %v549
    %558 = vmatprep.subr.bf16.mxu0 0
    %559 = vmatpush1.bf16.msra.mxu0 %v550
    %560 = vmatprep.subr.bf16.mxu0 0
    %561 = vmatpush1.bf16.msra.mxu0 0
    %562 = vmatprep.subr.bf16.mxu0 0
    %563 = vmatpush1.bf16.msra.mxu0 0
    %564 = vmatprep.subr.bf16.mxu0 0
    %565 = vmatpush1.bf16.msra.mxu0 0
    %566 = vmatprep.subr.bf16.mxu0 0
    %567 = vmatpush1.bf16.msra.mxu0 0
    %568 = vmatprep.subr.bf16.mxu0 0
    %569 = vmatpush1.bf16.msra.mxu0 0
    %570 = vmatprep.subr.bf16.mxu0 0
    %571 = vmatpush1.bf16.msra.mxu0 0
    %572 = vmatprep.subr.bf16.mxu0 0
    %573 = vmatpush1.bf16.msra.mxu0 0
    %574 = vmatprep.subr.bf16.mxu0 0
    %575 = vmatpush1.bf16.msra.mxu0 0
    %576 = vmatprep.subr.bf16.mxu0 0
    %577 = vmatpush1.bf16.msra.mxu0 0
    %578 = vmatprep.subr.bf16.mxu0 0
    %579 = vmatpush1.bf16.msra.mxu0 0
    %580 = vmatprep.subr.bf16.mxu0 0
    %581 = vmatpush1.bf16.msra.mxu0 0
    %582 = vmatprep.subr.bf16.mxu0 0
    %583 = vmatpush1.bf16.msra.mxu0 0
    %584 = vmatprep.subr.bf16.mxu0 0
    %585 = vmatpush1.bf16.msra.mxu0 0
    %586 = vmatprep.subr.bf16.mxu0 0
    %587 = vmatpush1.bf16.msra.mxu0 0
    %588 = vmatprep.mubr.bf16.mxu0 0
    %589 = vmatmul.mubr.bf16.gmra.mrb[0].mxu0 %v554
    %v590 = vpop.f32.mrb[0].mxu0
    %v591 = vadd.f32 %v536, %v590
    %v592 = vpop.f32.mrb[0].mxu0
    %v593 = vpop.f32.mrb[0].mxu0
    %v594 = vpop.f32.mrb[0].mxu0
    %595 = vdwg.mxu0
    %s596 = scalar_lea.vmem [#allocation2], 2
    %v597 = vld [vmem:[%s596] ss:$2 sm:$0x7]
    %v598 = vpack.c.bf16 %v597, %v597
    %v603 = vunpack.c.l.b16 %v411
    %v604 = vunpack.c.l.b16 %v412
    %v605 = vunpack.c.l.b16 %v413
    %v606 = vunpack.c.l.b16 %v414
    %v607 = vpack.c.b16 %v604, %v603
    %v608 = vpack.c.b16 %v606, %v605
    %v612 = vsel %vm384, %v598, 0
    %614 = vmatprep.subr.bf16.mxu0 0
    %615 = vmatpush1.bf16.msra.mxu0 %v607
    %616 = vmatprep.subr.bf16.mxu0 0
    %617 = vmatpush1.bf16.msra.mxu0 %v608
    %618 = vmatprep.subr.bf16.mxu0 0
    %619 = vmatpush1.bf16.msra.mxu0 0
    %620 = vmatprep.subr.bf16.mxu0 0
    %621 = vmatpush1.bf16.msra.mxu0 0
    %622 = vmatprep.subr.bf16.mxu0 0
    %623 = vmatpush1.bf16.msra.mxu0 0
    %624 = vmatprep.subr.bf16.mxu0 0
    %625 = vmatpush1.bf16.msra.mxu0 0
    %626 = vmatprep.subr.bf16.mxu0 0
    %627 = vmatpush1.bf16.msra.mxu0 0
    %628 = vmatprep.subr.bf16.mxu0 0
    %629 = vmatpush1.bf16.msra.mxu0 0
    %630 = vmatprep.subr.bf16.mxu0 0
    %631 = vmatpush1.bf16.msra.mxu0 0
    %632 = vmatprep.subr.bf16.mxu0 0
    %633 = vmatpush1.bf16.msra.mxu0 0
    %634 = vmatprep.subr.bf16.mxu0 0
    %635 = vmatpush1.bf16.msra.mxu0 0
    %636 = vmatprep.subr.bf16.mxu0 0
    %637 = vmatpush1.bf16.msra.mxu0 0
    %638 = vmatprep.subr.bf16.mxu0 0
    %639 = vmatpush1.bf16.msra.mxu0 0
    %640 = vmatprep.subr.bf16.mxu0 0
    %641 = vmatpush1.bf16.msra.mxu0 0
    %642 = vmatprep.subr.bf16.mxu0 0
    %643 = vmatpush1.bf16.msra.mxu0 0
    %644 = vmatprep.subr.bf16.mxu0 0
    %645 = vmatpush1.bf16.msra.mxu0 0
    %646 = vmatprep.mubr.bf16.mxu0 0
    %647 = vmatmul.mubr.bf16.gmra.mrb[0].mxu0 %v612
    %v648 = vpop.f32.mrb[0].mxu0
    %v649 = vadd.f32 0.0, %v648
    %v650 = vpop.f32.mrb[0].mxu0
    %v651 = vpop.f32.mrb[0].mxu0
    %v652 = vpop.f32.mrb[0].mxu0
    %653 = vdwg.mxu0
    %v654 = vadd.f32 %v591, %v649
    %s655 = scalar_lea.vmem [#allocation2], 3
    %v656 = vld [vmem:[%s655] ss:$2 sm:$0x7]
    %v657 = vpack.c.bf16 %v656, %v656
    %v662 = vunpack.c.l.b16 %v416
    %v663 = vunpack.c.l.b16 %v417
    %v664 = vunpack.c.l.b16 %v418
    %v665 = vunpack.c.l.b16 %v419
    %v666 = vpack.c.b16 %v663, %v662
    %v667 = vpack.c.b16 %v665, %v664
    %v671 = vsel %vm384, %v657, 0
    %673 = vmatprep.subr.bf16.mxu0 0
    %674 = vmatpush1.bf16.msra.mxu0 %v666
    %675 = vmatprep.subr.bf16.mxu0 0
    %676 = vmatpush1.bf16.msra.mxu0 %v667
    %677 = vmatprep.subr.bf16.mxu0 0
    %678 = vmatpush1.bf16.msra.mxu0 0
    %679 = vmatprep.subr.bf16.mxu0 0
    %680 = vmatpush1.bf16.msra.mxu0 0
    %681 = vmatprep.subr.bf16.mxu0 0
    %682 = vmatpush1.bf16.msra.mxu0 0
    %683 = vmatprep.subr.bf16.mxu0 0
    %684 = vmatpush1.bf16.msra.mxu0 0
    %685 = vmatprep.subr.bf16.mxu0 0
    %686 = vmatpush1.bf16.msra.mxu0 0
    %687 = vmatprep.subr.bf16.mxu0 0
    %688 = vmatpush1.bf16.msra.mxu0 0
    %689 = vmatprep.subr.bf16.mxu0 0
    %690 = vmatpush1.bf16.msra.mxu0 0
    %691 = vmatprep.subr.bf16.mxu0 0
    %692 = vmatpush1.bf16.msra.mxu0 0
    %693 = vmatprep.subr.bf16.mxu0 0
    %694 = vmatpush1.bf16.msra.mxu0 0
    %695 = vmatprep.subr.bf16.mxu0 0
    %696 = vmatpush1.bf16.msra.mxu0 0
    %697 = vmatprep.subr.bf16.mxu0 0
    %698 = vmatpush1.bf16.msra.mxu0 0
    %699 = vmatprep.subr.bf16.mxu0 0
    %700 = vmatpush1.bf16.msra.mxu0 0
    %701 = vmatprep.subr.bf16.mxu0 0
    %702 = vmatpush1.bf16.msra.mxu0 0
    %703 = vmatprep.subr.bf16.mxu0 0
    %704 = vmatpush1.bf16.msra.mxu0 0
    %705 = vmatprep.mubr.bf16.mxu0 0
    %706 = vmatmul.mubr.bf16.gmra.mrb[0].mxu0 %v671
    %v707 = vpop.f32.mrb[0].mxu0
    %v708 = vadd.f32 0.0, %v707
    %v709 = vpop.f32.mrb[0].mxu0
    %v710 = vpop.f32.mrb[0].mxu0
    %v711 = vpop.f32.mrb[0].mxu0
    %712 = vdwg.mxu0
    %v713 = vadd.f32 %v654, %v708
    %s714 = scalar_lea.vmem [#allocation2], 8
    %v715 = vld [vmem:[%s714] ss:$2 sm:$0x7]
    %v716 = vpack.c.bf16 %v715, %v715
    %v721 = vunpack.c.l.b16 %v421
    %v722 = vunpack.c.l.b16 %v422
    %v723 = vunpack.c.l.b16 %v423
    %v724 = vunpack.c.l.b16 %v424
    %v725 = vpack.c.b16 %v722, %v721
    %v726 = vpack.c.b16 %v724, %v723
    %v730 = vsel %vm384, %v716, 0
    %732 = vmatprep.subr.bf16.mxu0 0
    %733 = vmatpush1.bf16.msra.mxu0 %v725
    %734 = vmatprep.subr.bf16.mxu0 0
    %735 = vmatpush1.bf16.msra.mxu0 %v726
    %736 = vmatprep.subr.bf16.mxu0 0
    %737 = vmatpush1.bf16.msra.mxu0 0
    %738 = vmatprep.subr.bf16.mxu0 0
    %739 = vmatpush1.bf16.msra.mxu0 0
    %740 = vmatprep.subr.bf16.mxu0 0
    %741 = vmatpush1.bf16.msra.mxu0 0
    %742 = vmatprep.subr.bf16.mxu0 0
    %743 = vmatpush1.bf16.msra.mxu0 0
    %744 = vmatprep.subr.bf16.mxu0 0
    %745 = vmatpush1.bf16.msra.mxu0 0
    %746 = vmatprep.subr.bf16.mxu0 0
    %747 = vmatpush1.bf16.msra.mxu0 0
    %748 = vmatprep.subr.bf16.mxu0 0
    %749 = vmatpush1.bf16.msra.mxu0 0
    %750 = vmatprep.subr.bf16.mxu0 0
    %751 = vmatpush1.bf16.msra.mxu0 0
    %752 = vmatprep.subr.bf16.mxu0 0
    %753 = vmatpush1.bf16.msra.mxu0 0
    %754 = vmatprep.subr.bf16.mxu0 0
    %755 = vmatpush1.bf16.msra.mxu0 0
    %756 = vmatprep.subr.bf16.mxu0 0
    %757 = vmatpush1.bf16.msra.mxu0 0
    %758 = vmatprep.subr.bf16.mxu0 0
    %759 = vmatpush1.bf16.msra.mxu0 0
    %760 = vmatprep.subr.bf16.mxu0 0
    %761 = vmatpush1.bf16.msra.mxu0 0
    %762 = vmatprep.subr.bf16.mxu0 0
    %763 = vmatpush1.bf16.msra.mxu0 0
    %764 = vmatprep.mubr.bf16.mxu0 0
    %765 = vmatmul.mubr.bf16.gmra.mrb[0].mxu0 %v730
    %v766 = vpop.f32.mrb[0].mxu0
    %v767 = vadd.f32 0.0, %v766
    %v768 = vpop.f32.mrb[0].mxu0
    %v769 = vpop.f32.mrb[0].mxu0
    %v770 = vpop.f32.mrb[0].mxu0
    %771 = vdwg.mxu0
    %v772 = vadd.f32 %v713, %v767
    %s773 = scalar_lea.vmem [#allocation2], 9
    %v774 = vld [vmem:[%s773] ss:$2 sm:$0x7]
    %v775 = vpack.c.bf16 %v774, %v774
    %v780 = vunpack.c.l.b16 %v426
    %v781 = vunpack.c.l.b16 %v427
    %v782 = vunpack.c.l.b16 %v428
    %v783 = vunpack.c.l.b16 %v429
    %v784 = vpack.c.b16 %v781, %v780
    %v785 = vpack.c.b16 %v783, %v782
    %v789 = vsel %vm384, %v775, 0
    %791 = vmatprep.subr.bf16.mxu0 0
    %792 = vmatpush1.bf16.msra.mxu0 %v784
    %793 = vmatprep.subr.bf16.mxu0 0
    %794 = vmatpush1.bf16.msra.mxu0 %v785
    %795 = vmatprep.subr.bf16.mxu0 0
    %796 = vmatpush1.bf16.msra.mxu0 0
    %797 = vmatprep.subr.bf16.mxu0 0
    %798 = vmatpush1.bf16.msra.mxu0 0
    %799 = vmatprep.subr.bf16.mxu0 0
    %800 = vmatpush1.bf16.msra.mxu0 0
    %801 = vmatprep.subr.bf16.mxu0 0
    %802 = vmatpush1.bf16.msra.mxu0 0
    %803 = vmatprep.subr.bf16.mxu0 0
    %804 = vmatpush1.bf16.msra.mxu0 0
    %805 = vmatprep.subr.bf16.mxu0 0
    %806 = vmatpush1.bf16.msra.mxu0 0
    %807 = vmatprep.subr.bf16.mxu0 0
    %808 = vmatpush1.bf16.msra.mxu0 0
    %809 = vmatprep.subr.bf16.mxu0 0
    %810 = vmatpush1.bf16.msra.mxu0 0
    %811 = vmatprep.subr.bf16.mxu0 0
    %812 = vmatpush1.bf16.msra.mxu0 0
    %813 = vmatprep.subr.bf16.mxu0 0
    %814 = vmatpush1.bf16.msra.mxu0 0
    %815 = vmatprep.subr.bf16.mxu0 0
    %816 = vmatpush1.bf16.msra.mxu0 0
    %817 = vmatprep.subr.bf16.mxu0 0
    %818 = vmatpush1.bf16.msra.mxu0 0
    %819 = vmatprep.subr.bf16.mxu0 0
    %820 = vmatpush1.bf16.msra.mxu0 0
    %821 = vmatprep.subr.bf16.mxu0 0
    %822 = vmatpush1.bf16.msra.mxu0 0
    %823 = vmatprep.mubr.bf16.mxu0 0
    %824 = vmatmul.mubr.bf16.gmra.mrb[0].mxu0 %v789
    %v825 = vpop.f32.mrb[0].mxu0
    %v826 = vadd.f32 0.0, %v825
    %v827 = vpop.f32.mrb[0].mxu0
    %v828 = vpop.f32.mrb[0].mxu0
    %v829 = vpop.f32.mrb[0].mxu0
    %830 = vdwg.mxu0
    %v831 = vadd.f32 %v772, %v826
    %s832 = scalar_lea.vmem [#allocation2], 10
    %v833 = vld [vmem:[%s832] ss:$2 sm:$0x7]
    %v834 = vpack.c.bf16 %v833, %v833
    %v839 = vunpack.c.l.b16 %v431
    %v840 = vunpack.c.l.b16 %v432
    %v841 = vunpack.c.l.b16 %v433
    %v842 = vunpack.c.l.b16 %v434
    %v843 = vpack.c.b16 %v840, %v839
    %v844 = vpack.c.b16 %v842, %v841
    %v848 = vsel %vm384, %v834, 0
    %850 = vmatprep.subr.bf16.mxu0 0
    %851 = vmatpush1.bf16.msra.mxu0 %v843
    %852 = vmatprep.subr.bf16.mxu0 0
    %853 = vmatpush1.bf16.msra.mxu0 %v844
    %854 = vmatprep.subr.bf16.mxu0 0
    %855 = vmatpush1.bf16.msra.mxu0 0
    %856 = vmatprep.subr.bf16.mxu0 0
    %857 = vmatpush1.bf16.msra.mxu0 0
    %858 = vmatprep.subr.bf16.mxu0 0
    %859 = vmatpush1.bf16.msra.mxu0 0
    %860 = vmatprep.subr.bf16.mxu0 0
    %861 = vmatpush1.bf16.msra.mxu0 0
    %862 = vmatprep.subr.bf16.mxu0 0
    %863 = vmatpush1.bf16.msra.mxu0 0
    %864 = vmatprep.subr.bf16.mxu0 0
    %865 = vmatpush1.bf16.msra.mxu0 0
    %866 = vmatprep.subr.bf16.mxu0 0
    %867 = vmatpush1.bf16.msra.mxu0 0
    %868 = vmatprep.subr.bf16.mxu0 0
    %869 = vmatpush1.bf16.msra.mxu0 0
    %870 = vmatprep.subr.bf16.mxu0 0
    %871 = vmatpush1.bf16.msra.mxu0 0
    %872 = vmatprep.subr.bf16.mxu0 0
    %873 = vmatpush1.bf16.msra.mxu0 0
    %874 = vmatprep.subr.bf16.mxu0 0
    %875 = vmatpush1.bf16.msra.mxu0 0
    %876 = vmatprep.subr.bf16.mxu0 0
    %877 = vmatpush1.bf16.msra.mxu0 0
    %878 = vmatprep.subr.bf16.mxu0 0
    %879 = vmatpush1.bf16.msra.mxu0 0
    %880 = vmatprep.subr.bf16.mxu0 0
    %881 = vmatpush1.bf16.msra.mxu0 0
    %882 = vmatprep.mubr.bf16.mxu0 0
    %883 = vmatmul.mubr.bf16.gmra.mrb[0].mxu0 %v848
    %v884 = vpop.f32.mrb[0].mxu0
    %v885 = vadd.f32 0.0, %v884
    %v886 = vpop.f32.mrb[0].mxu0
    %v887 = vpop.f32.mrb[0].mxu0
    %v888 = vpop.f32.mrb[0].mxu0
    %889 = vdwg.mxu0
    %v890 = vadd.f32 %v831, %v885
    %s891 = scalar_lea.vmem [#allocation2], 11
    %v892 = vld [vmem:[%s891] ss:$2 sm:$0x7]
    %v893 = vpack.c.bf16 %v892, %v892
    %v898 = vunpack.c.l.b16 %v436
    %v899 = vunpack.c.l.b16 %v437
    %v900 = vunpack.c.l.b16 %v438
    %v901 = vunpack.c.l.b16 %v439
    %v902 = vpack.c.b16 %v899, %v898
    %v903 = vpack.c.b16 %v901, %v900
    %v907 = vsel %vm384, %v893, 0
    %909 = vmatprep.subr.bf16.mxu0 0
    %910 = vmatpush1.bf16.msra.mxu0 %v902
    %911 = vmatprep.subr.bf16.mxu0 0
    %912 = vmatpush1.bf16.msra.mxu0 %v903
    %913 = vmatprep.subr.bf16.mxu0 0
    %914 = vmatpush1.bf16.msra.mxu0 0
    %915 = vmatprep.subr.bf16.mxu0 0
    %916 = vmatpush1.bf16.msra.mxu0 0
    %917 = vmatprep.subr.bf16.mxu0 0
    %918 = vmatpush1.bf16.msra.mxu0 0
    %919 = vmatprep.subr.bf16.mxu0 0
    %920 = vmatpush1.bf16.msra.mxu0 0
    %921 = vmatprep.subr.bf16.mxu0 0
    %922 = vmatpush1.bf16.msra.mxu0 0
    %923 = vmatprep.subr.bf16.mxu0 0
    %924 = vmatpush1.bf16.msra.mxu0 0
    %925 = vmatprep.subr.bf16.mxu0 0
    %926 = vmatpush1.bf16.msra.mxu0 0
    %927 = vmatprep.subr.bf16.mxu0 0
    %928 = vmatpush1.bf16.msra.mxu0 0
    %929 = vmatprep.subr.bf16.mxu0 0
    %930 = vmatpush1.bf16.msra.mxu0 0
    %931 = vmatprep.subr.bf16.mxu0 0
    %932 = vmatpush1.bf16.msra.mxu0 0
    %933 = vmatprep.subr.bf16.mxu0 0
    %934 = vmatpush1.bf16.msra.mxu0 0
    %935 = vmatprep.subr.bf16.mxu0 0
    %936 = vmatpush1.bf16.msra.mxu0 0
    %937 = vmatprep.subr.bf16.mxu0 0
    %938 = vmatpush1.bf16.msra.mxu0 0
    %939 = vmatprep.subr.bf16.mxu0 0
    %940 = vmatpush1.bf16.msra.mxu0 0
    %941 = vmatprep.mubr.bf16.mxu0 0
    %942 = vmatmul.mubr.bf16.gmra.mrb[0].mxu0 %v907
    %v943 = vpop.f32.mrb[0].mxu0
    %v944 = vadd.f32 0.0, %v943
    %v945 = vpop.f32.mrb[0].mxu0
    %v946 = vpop.f32.mrb[0].mxu0
    %v947 = vpop.f32.mrb[0].mxu0
    %948 = vdwg.mxu0
    %v949 = vadd.f32 %v890, %v944
    %s950 = scalar_lea.vmem [#allocation2], 16
    %v951 = vld [vmem:[%s950] ss:$2 sm:$0x7]
    %v952 = vpack.c.bf16 %v951, %v951
    %v957 = vunpack.c.l.b16 %v441
    %v958 = vunpack.c.l.b16 %v442
    %v959 = vunpack.c.l.b16 %v443
    %v960 = vunpack.c.l.b16 %v444
    %v961 = vpack.c.b16 %v958, %v957
    %v962 = vpack.c.b16 %v960, %v959
    %v966 = vsel %vm384, %v952, 0
    %968 = vmatprep.subr.bf16.mxu0 0
    %969 = vmatpush1.bf16.msra.mxu0 %v961
    %970 = vmatprep.subr.bf16.mxu0 0
    %971 = vmatpush1.bf16.msra.mxu0 %v962
    %972 = vmatprep.subr.bf16.mxu0 0
    %973 = vmatpush1.bf16.msra.mxu0 0
    %974 = vmatprep.subr.bf16.mxu0 0
    %975 = vmatpush1.bf16.msra.mxu0 0
    %976 = vmatprep.subr.bf16.mxu0 0
    %977 = vmatpush1.bf16.msra.mxu0 0
    %978 = vmatprep.subr.bf16.mxu0 0
    %979 = vmatpush1.bf16.msra.mxu0 0
    %980 = vmatprep.subr.bf16.mxu0 0
    %981 = vmatpush1.bf16.msra.mxu0 0
    %982 = vmatprep.subr.bf16.mxu0 0
    %983 = vmatpush1.bf16.msra.mxu0 0
    %984 = vmatprep.subr.bf16.mxu0 0
    %985 = vmatpush1.bf16.msra.mxu0 0
    %986 = vmatprep.subr.bf16.mxu0 0
    %987 = vmatpush1.bf16.msra.mxu0 0
    %988 = vmatprep.subr.bf16.mxu0 0
    %989 = vmatpush1.bf16.msra.mxu0 0
    %990 = vmatprep.subr.bf16.mxu0 0
    %991 = vmatpush1.bf16.msra.mxu0 0
    %992 = vmatprep.subr.bf16.mxu0 0
    %993 = vmatpush1.bf16.msra.mxu0 0
    %994 = vmatprep.subr.bf16.mxu0 0
    %995 = vmatpush1.bf16.msra.mxu0 0
    %996 = vmatprep.subr.bf16.mxu0 0
    %997 = vmatpush1.bf16.msra.mxu0 0
    %998 = vmatprep.subr.bf16.mxu0 0
    %999 = vmatpush1.bf16.msra.mxu0 0
    %1000 = vmatprep.mubr.bf16.mxu0 0
    %1001 = vmatmul.mubr.bf16.gmra.mrb[0].mxu0 %v966
    %v1002 = vpop.f32.mrb[0].mxu0
    %v1003 = vadd.f32 0.0, %v1002
    %v1004 = vpop.f32.mrb[0].mxu0
    %v1005 = vpop.f32.mrb[0].mxu0
    %v1006 = vpop.f32.mrb[0].mxu0
    %1007 = vdwg.mxu0
    %v1008 = vadd.f32 %v949, %v1003
    %s1009 = scalar_lea.vmem [#allocation2], 17
    %v1010 = vld [vmem:[%s1009] ss:$2 sm:$0x7]
    %v1011 = vpack.c.bf16 %v1010, %v1010
    %v1016 = vunpack.c.l.b16 %v446
    %v1017 = vunpack.c.l.b16 %v447
    %v1018 = vunpack.c.l.b16 %v448
    %v1019 = vunpack.c.l.b16 %v449
    %v1020 = vpack.c.b16 %v1017, %v1016
    %v1021 = vpack.c.b16 %v1019, %v1018
    %v1025 = vsel %vm384, %v1011, 0
    %1027 = vmatprep.subr.bf16.mxu0 0
    %1028 = vmatpush1.bf16.msra.mxu0 %v1020
    %1029 = vmatprep.subr.bf16.mxu0 0
    %1030 = vmatpush1.bf16.msra.mxu0 %v1021
    %1031 = vmatprep.subr.bf16.mxu0 0
    %1032 = vmatpush1.bf16.msra.mxu0 0
    %1033 = vmatprep.subr.bf16.mxu0 0
    %1034 = vmatpush1.bf16.msra.mxu0 0
    %1035 = vmatprep.subr.bf16.mxu0 0
    %1036 = vmatpush1.bf16.msra.mxu0 0
    %1037 = vmatprep.subr.bf16.mxu0 0
    %1038 = vmatpush1.bf16.msra.mxu0 0
    %1039 = vmatprep.subr.bf16.mxu0 0
    %1040 = vmatpush1.bf16.msra.mxu0 0
    %1041 = vmatprep.subr.bf16.mxu0 0
    %1042 = vmatpush1.bf16.msra.mxu0 0
    %1043 = vmatprep.subr.bf16.mxu0 0
    %1044 = vmatpush1.bf16.msra.mxu0 0
    %1045 = vmatprep.subr.bf16.mxu0 0
    %1046 = vmatpush1.bf16.msra.mxu0 0
    %1047 = vmatprep.subr.bf16.mxu0 0
    %1048 = vmatpush1.bf16.msra.mxu0 0
    %1049 = vmatprep.subr.bf16.mxu0 0
    %1050 = vmatpush1.bf16.msra.mxu0 0
    %1051 = vmatprep.subr.bf16.mxu0 0
    %1052 = vmatpush1.bf16.msra.mxu0 0
    %1053 = vmatprep.subr.bf16.mxu0 0
    %1054 = vmatpush1.bf16.msra.mxu0 0
    %1055 = vmatprep.subr.bf16.mxu0 0
    %1056 = vmatpush1.bf16.msra.mxu0 0
    %1057 = vmatprep.subr.bf16.mxu0 0
    %1058 = vmatpush1.bf16.msra.mxu0 0
    %1059 = vmatprep.mubr.bf16.mxu0 0
    %1060 = vmatmul.mubr.bf16.gmra.mrb[0].mxu0 %v1025
    %v1061 = vpop.f32.mrb[0].mxu0
    %v1062 = vadd.f32 0.0, %v1061
    %v1063 = vpop.f32.mrb[0].mxu0
    %v1064 = vpop.f32.mrb[0].mxu0
    %v1065 = vpop.f32.mrb[0].mxu0
    %1066 = vdwg.mxu0
    %v1067 = vadd.f32 %v1008, %v1062
    %s1068 = scalar_lea.vmem [#allocation2], 18
    %v1069 = vld [vmem:[%s1068] ss:$2 sm:$0x7]
    %v1070 = vpack.c.bf16 %v1069, %v1069
    %v1075 = vunpack.c.l.b16 %v451
    %v1076 = vunpack.c.l.b16 %v452
    %v1077 = vunpack.c.l.b16 %v453
    %v1078 = vunpack.c.l.b16 %v454
    %v1079 = vpack.c.b16 %v1076, %v1075
    %v1080 = vpack.c.b16 %v1078, %v1077
    %v1084 = vsel %vm384, %v1070, 0
    %1086 = vmatprep.subr.bf16.mxu0 0
    %1087 = vmatpush1.bf16.msra.mxu0 %v1079
    %1088 = vmatprep.subr.bf16.mxu0 0
    %1089 = vmatpush1.bf16.msra.mxu0 %v1080
    %1090 = vmatprep.subr.bf16.mxu0 0
    %1091 = vmatpush1.bf16.msra.mxu0 0
    %1092 = vmatprep.subr.bf16.mxu0 0
    %1093 = vmatpush1.bf16.msra.mxu0 0
    %1094 = vmatprep.subr.bf16.mxu0 0
    %1095 = vmatpush1.bf16.msra.mxu0 0
    %1096 = vmatprep.subr.bf16.mxu0 0
    %1097 = vmatpush1.bf16.msra.mxu0 0
    %1098 = vmatprep.subr.bf16.mxu0 0
    %1099 = vmatpush1.bf16.msra.mxu0 0
    %1100 = vmatprep.subr.bf16.mxu0 0
    %1101 = vmatpush1.bf16.msra.mxu0 0
    %1102 = vmatprep.subr.bf16.mxu0 0
    %1103 = vmatpush1.bf16.msra.mxu0 0
    %1104 = vmatprep.subr.bf16.mxu0 0
    %1105 = vmatpush1.bf16.msra.mxu0 0
    %1106 = vmatprep.subr.bf16.mxu0 0
    %1107 = vmatpush1.bf16.msra.mxu0 0
    %1108 = vmatprep.subr.bf16.mxu0 0
    %1109 = vmatpush1.bf16.msra.mxu0 0
    %1110 = vmatprep.subr.bf16.mxu0 0
    %1111 = vmatpush1.bf16.msra.mxu0 0
    %1112 = vmatprep.subr.bf16.mxu0 0
    %1113 = vmatpush1.bf16.msra.mxu0 0
    %1114 = vmatprep.subr.bf16.mxu0 0
    %1115 = vmatpush1.bf16.msra.mxu0 0
    %1116 = vmatprep.subr.bf16.mxu0 0
    %1117 = vmatpush1.bf16.msra.mxu0 0
    %1118 = vmatprep.mubr.bf16.mxu0 0
    %1119 = vmatmul.mubr.bf16.gmra.mrb[0].mxu0 %v1084
    %v1120 = vpop.f32.mrb[0].mxu0
    %v1121 = vadd.f32 0.0, %v1120
    %v1122 = vpop.f32.mrb[0].mxu0
    %v1123 = vpop.f32.mrb[0].mxu0
    %v1124 = vpop.f32.mrb[0].mxu0
    %1125 = vdwg.mxu0
    %v1126 = vadd.f32 %v1067, %v1121
    %s1127 = scalar_lea.vmem [#allocation2], 19
    %v1128 = vld [vmem:[%s1127] ss:$2 sm:$0x7]
    %v1129 = vpack.c.bf16 %v1128, %v1128
    %v1134 = vunpack.c.l.b16 %v456
    %v1135 = vunpack.c.l.b16 %v457
    %v1136 = vunpack.c.l.b16 %v458
    %v1137 = vunpack.c.l.b16 %v459
    %v1138 = vpack.c.b16 %v1135, %v1134
    %v1139 = vpack.c.b16 %v1137, %v1136
    %v1143 = vsel %vm384, %v1129, 0
    %1145 = vmatprep.subr.bf16.mxu0 0
    %1146 = vmatpush1.bf16.msra.mxu0 %v1138
    %1147 = vmatprep.subr.bf16.mxu0 0
    %1148 = vmatpush1.bf16.msra.mxu0 %v1139
    %1149 = vmatprep.subr.bf16.mxu0 0
    %1150 = vmatpush1.bf16.msra.mxu0 0
    %1151 = vmatprep.subr.bf16.mxu0 0
    %1152 = vmatpush1.bf16.msra.mxu0 0
    %1153 = vmatprep.subr.bf16.mxu0 0
    %1154 = vmatpush1.bf16.msra.mxu0 0
    %1155 = vmatprep.subr.bf16.mxu0 0
    %1156 = vmatpush1.bf16.msra.mxu0 0
    %1157 = vmatprep.subr.bf16.mxu0 0
    %1158 = vmatpush1.bf16.msra.mxu0 0
    %1159 = vmatprep.subr.bf16.mxu0 0
    %1160 = vmatpush1.bf16.msra.mxu0 0
    %1161 = vmatprep.subr.bf16.mxu0 0
    %1162 = vmatpush1.bf16.msra.mxu0 0
    %1163 = vmatprep.subr.bf16.mxu0 0
    %1164 = vmatpush1.bf16.msra.mxu0 0
    %1165 = vmatprep.subr.bf16.mxu0 0
    %1166 = vmatpush1.bf16.msra.mxu0 0
    %1167 = vmatprep.subr.bf16.mxu0 0
    %1168 = vmatpush1.bf16.msra.mxu0 0
    %1169 = vmatprep.subr.bf16.mxu0 0
    %1170 = vmatpush1.bf16.msra.mxu0 0
    %1171 = vmatprep.subr.bf16.mxu0 0
    %1172 = vmatpush1.bf16.msra.mxu0 0
    %1173 = vmatprep.subr.bf16.mxu0 0
    %1174 = vmatpush1.bf16.msra.mxu0 0
    %1175 = vmatprep.subr.bf16.mxu0 0
    %1176 = vmatpush1.bf16.msra.mxu0 0
    %1177 = vmatprep.mubr.bf16.mxu0 0
    %1178 = vmatmul.mubr.bf16.gmra.mrb[0].mxu0 %v1143
    %v1179 = vpop.f32.mrb[0].mxu0
    %v1180 = vadd.f32 0.0, %v1179
    %v1181 = vpop.f32.mrb[0].mxu0
    %v1182 = vpop.f32.mrb[0].mxu0
    %v1183 = vpop.f32.mrb[0].mxu0
    %1184 = vdwg.mxu0
    %v1185 = vadd.f32 %v1126, %v1180
    %s1186 = scalar_lea.vmem [#allocation2], 24
    %v1187 = vld [vmem:[%s1186] ss:$2 sm:$0x7]
    %v1188 = vpack.c.bf16 %v1187, %v1187
    %v1193 = vunpack.c.l.b16 %v461
    %v1194 = vunpack.c.l.b16 %v462
    %v1195 = vunpack.c.l.b16 %v463
    %v1196 = vunpack.c.l.b16 %v464
    %v1197 = vpack.c.b16 %v1194, %v1193
    %v1198 = vpack.c.b16 %v1196, %v1195
    %v1202 = vsel %vm384, %v1188, 0
    %1204 = vmatprep.subr.bf16.mxu0 0
    %1205 = vmatpush1.bf16.msra.mxu0 %v1197
    %1206 = vmatprep.subr.bf16.mxu0 0
    %1207 = vmatpush1.bf16.msra.mxu0 %v1198
    %1208 = vmatprep.subr.bf16.mxu0 0
    %1209 = vmatpush1.bf16.msra.mxu0 0
    %1210 = vmatprep.subr.bf16.mxu0 0
    %1211 = vmatpush1.bf16.msra.mxu0 0
    %1212 = vmatprep.subr.bf16.mxu0 0
    %1213 = vmatpush1.bf16.msra.mxu0 0
    %1214 = vmatprep.subr.bf16.mxu0 0
    %1215 = vmatpush1.bf16.msra.mxu0 0
    %1216 = vmatprep.subr.bf16.mxu0 0
    %1217 = vmatpush1.bf16.msra.mxu0 0
    %1218 = vmatprep.subr.bf16.mxu0 0
    %1219 = vmatpush1.bf16.msra.mxu0 0
    %1220 = vmatprep.subr.bf16.mxu0 0
    %1221 = vmatpush1.bf16.msra.mxu0 0
    %1222 = vmatprep.subr.bf16.mxu0 0
    %1223 = vmatpush1.bf16.msra.mxu0 0
    %1224 = vmatprep.subr.bf16.mxu0 0
    %1225 = vmatpush1.bf16.msra.mxu0 0
    %1226 = vmatprep.subr.bf16.mxu0 0
    %1227 = vmatpush1.bf16.msra.mxu0 0
    %1228 = vmatprep.subr.bf16.mxu0 0
    %1229 = vmatpush1.bf16.msra.mxu0 0
    %1230 = vmatprep.subr.bf16.mxu0 0
    %1231 = vmatpush1.bf16.msra.mxu0 0
    %1232 = vmatprep.subr.bf16.mxu0 0
    %1233 = vmatpush1.bf16.msra.mxu0 0
    %1234 = vmatprep.subr.bf16.mxu0 0
    %1235 = vmatpush1.bf16.msra.mxu0 0
    %1236 = vmatprep.mubr.bf16.mxu0 0
    %1237 = vmatmul.mubr.bf16.gmra.mrb[0].mxu0 %v1202
    %v1238 = vpop.f32.mrb[0].mxu0
    %v1239 = vadd.f32 0.0, %v1238
    %v1240 = vpop.f32.mrb[0].mxu0
    %v1241 = vpop.f32.mrb[0].mxu0
    %v1242 = vpop.f32.mrb[0].mxu0
    %1243 = vdwg.mxu0
    %v1244 = vadd.f32 %v1185, %v1239
    %s1245 = scalar_lea.vmem [#allocation2], 25
    %v1246 = vld [vmem:[%s1245] ss:$2 sm:$0x7]
    %v1247 = vpack.c.bf16 %v1246, %v1246
    %v1252 = vunpack.c.l.b16 %v466
    %v1253 = vunpack.c.l.b16 %v467
    %v1254 = vunpack.c.l.b16 %v468
    %v1255 = vunpack.c.l.b16 %v469
    %v1256 = vpack.c.b16 %v1253, %v1252
    %v1257 = vpack.c.b16 %v1255, %v1254
    %v1261 = vsel %vm384, %v1247, 0
    %1263 = vmatprep.subr.bf16.mxu0 0
    %1264 = vmatpush1.bf16.msra.mxu0 %v1256
    %1265 = vmatprep.subr.bf16.mxu0 0
    %1266 = vmatpush1.bf16.msra.mxu0 %v1257
    %1267 = vmatprep.subr.bf16.mxu0 0
    %1268 = vmatpush1.bf16.msra.mxu0 0
    %1269 = vmatprep.subr.bf16.mxu0 0
    %1270 = vmatpush1.bf16.msra.mxu0 0
    %1271 = vmatprep.subr.bf16.mxu0 0
    %1272 = vmatpush1.bf16.msra.mxu0 0
    %1273 = vmatprep.subr.bf16.mxu0 0
    %1274 = vmatpush1.bf16.msra.mxu0 0
    %1275 = vmatprep.subr.bf16.mxu0 0
    %1276 = vmatpush1.bf16.msra.mxu0 0
    %1277 = vmatprep.subr.bf16.mxu0 0
    %1278 = vmatpush1.bf16.msra.mxu0 0
    %1279 = vmatprep.subr.bf16.mxu0 0
    %1280 = vmatpush1.bf16.msra.mxu0 0
    %1281 = vmatprep.subr.bf16.mxu0 0
    %1282 = vmatpush1.bf16.msra.mxu0 0
    %1283 = vmatprep.subr.bf16.mxu0 0
    %1284 = vmatpush1.bf16.msra.mxu0 0
    %1285 = vmatprep.subr.bf16.mxu0 0
    %1286 = vmatpush1.bf16.msra.mxu0 0
    %1287 = vmatprep.subr.bf16.mxu0 0
    %1288 = vmatpush1.bf16.msra.mxu0 0
    %1289 = vmatprep.subr.bf16.mxu0 0
    %1290 = vmatpush1.bf16.msra.mxu0 0
    %1291 = vmatprep.subr.bf16.mxu0 0
    %1292 = vmatpush1.bf16.msra.mxu0 0
    %1293 = vmatprep.subr.bf16.mxu0 0
    %1294 = vmatpush1.bf16.msra.mxu0 0
    %1295 = vmatprep.mubr.bf16.mxu0 0
    %1296 = vmatmul.mubr.bf16.gmra.mrb[0].mxu0 %v1261
    %v1297 = vpop.f32.mrb[0].mxu0
    %v1298 = vadd.f32 0.0, %v1297
    %v1299 = vpop.f32.mrb[0].mxu0
    %v1300 = vpop.f32.mrb[0].mxu0
    %v1301 = vpop.f32.mrb[0].mxu0
    %1302 = vdwg.mxu0
    %v1303 = vadd.f32 %v1244, %v1298
    %s1304 = scalar_lea.vmem [#allocation2], 26
    %v1305 = vld [vmem:[%s1304] ss:$2 sm:$0x7]
    %v1306 = vpack.c.bf16 %v1305, %v1305
    %v1311 = vunpack.c.l.b16 %v471
    %v1312 = vunpack.c.l.b16 %v472
    %v1313 = vunpack.c.l.b16 %v473
    %v1314 = vunpack.c.l.b16 %v474
    %v1315 = vpack.c.b16 %v1312, %v1311
    %v1316 = vpack.c.b16 %v1314, %v1313
    %v1320 = vsel %vm384, %v1306, 0
    %1322 = vmatprep.subr.bf16.mxu0 0
    %1323 = vmatpush1.bf16.msra.mxu0 %v1315
    %1324 = vmatprep.subr.bf16.mxu0 0
    %1325 = vmatpush1.bf16.msra.mxu0 %v1316
    %1326 = vmatprep.subr.bf16.mxu0 0
    %1327 = vmatpush1.bf16.msra.mxu0 0
    %1328 = vmatprep.subr.bf16.mxu0 0
    %1329 = vmatpush1.bf16.msra.mxu0 0
    %1330 = vmatprep.subr.bf16.mxu0 0
    %1331 = vmatpush1.bf16.msra.mxu0 0
    %1332 = vmatprep.subr.bf16.mxu0 0
    %1333 = vmatpush1.bf16.msra.mxu0 0
    %1334 = vmatprep.subr.bf16.mxu0 0
    %1335 = vmatpush1.bf16.msra.mxu0 0
    %1336 = vmatprep.subr.bf16.mxu0 0
    %1337 = vmatpush1.bf16.msra.mxu0 0
    %1338 = vmatprep.subr.bf16.mxu0 0
    %1339 = vmatpush1.bf16.msra.mxu0 0
    %1340 = vmatprep.subr.bf16.mxu0 0
    %1341 = vmatpush1.bf16.msra.mxu0 0
    %1342 = vmatprep.subr.bf16.mxu0 0
    %1343 = vmatpush1.bf16.msra.mxu0 0
    %1344 = vmatprep.subr.bf16.mxu0 0
    %1345 = vmatpush1.bf16.msra.mxu0 0
    %1346 = vmatprep.subr.bf16.mxu0 0
    %1347 = vmatpush1.bf16.msra.mxu0 0
    %1348 = vmatprep.subr.bf16.mxu0 0
    %1349 = vmatpush1.bf16.msra.mxu0 0
    %1350 = vmatprep.subr.bf16.mxu0 0
    %1351 = vmatpush1.bf16.msra.mxu0 0
    %1352 = vmatprep.subr.bf16.mxu0 0
    %1353 = vmatpush1.bf16.msra.mxu0 0
    %1354 = vmatprep.mubr.bf16.mxu0 0
    %1355 = vmatmul.mubr.bf16.gmra.mrb[0].mxu0 %v1320
    %v1356 = vpop.f32.mrb[0].mxu0
    %v1357 = vadd.f32 0.0, %v1356
    %v1358 = vpop.f32.mrb[0].mxu0
    %v1359 = vpop.f32.mrb[0].mxu0
    %v1360 = vpop.f32.mrb[0].mxu0
    %1361 = vdwg.mxu0
    %v1362 = vadd.f32 %v1303, %v1357
    %s1363 = scalar_lea.vmem [#allocation2], 27
    %v1364 = vld [vmem:[%s1363] ss:$2 sm:$0x7]
    %v1365 = vpack.c.bf16 %v1364, %v1364
    %v1370 = vunpack.c.l.b16 %v476
    %v1371 = vunpack.c.l.b16 %v477
    %v1372 = vunpack.c.l.b16 %v478
    %v1373 = vunpack.c.l.b16 %v479
    %v1374 = vpack.c.b16 %v1371, %v1370
    %v1375 = vpack.c.b16 %v1373, %v1372
    %v1379 = vsel %vm384, %v1365, 0
    %1381 = vmatprep.subr.bf16.mxu0 0
    %1382 = vmatpush1.bf16.msra.mxu0 %v1374
    %1383 = vmatprep.subr.bf16.mxu0 0
    %1384 = vmatpush1.bf16.msra.mxu0 %v1375
    %1385 = vmatprep.subr.bf16.mxu0 0
    %1386 = vmatpush1.bf16.msra.mxu0 0
    %1387 = vmatprep.subr.bf16.mxu0 0
    %1388 = vmatpush1.bf16.msra.mxu0 0
    %1389 = vmatprep.subr.bf16.mxu0 0
    %1390 = vmatpush1.bf16.msra.mxu0 0
    %1391 = vmatprep.subr.bf16.mxu0 0
    %1392 = vmatpush1.bf16.msra.mxu0 0
    %1393 = vmatprep.subr.bf16.mxu0 0
    %1394 = vmatpush1.bf16.msra.mxu0 0
    %1395 = vmatprep.subr.bf16.mxu0 0
    %1396 = vmatpush1.bf16.msra.mxu0 0
    %1397 = vmatprep.subr.bf16.mxu0 0
    %1398 = vmatpush1.bf16.msra.mxu0 0
    %1399 = vmatprep.subr.bf16.mxu0 0
    %1400 = vmatpush1.bf16.msra.mxu0 0
    %1401 = vmatprep.subr.bf16.mxu0 0
    %1402 = vmatpush1.bf16.msra.mxu0 0
    %1403 = vmatprep.subr.bf16.mxu0 0
    %1404 = vmatpush1.bf16.msra.mxu0 0
    %1405 = vmatprep.subr.bf16.mxu0 0
    %1406 = vmatpush1.bf16.msra.mxu0 0
    %1407 = vmatprep.subr.bf16.mxu0 0
    %1408 = vmatpush1.bf16.msra.mxu0 0
    %1409 = vmatprep.subr.bf16.mxu0 0
    %1410 = vmatpush1.bf16.msra.mxu0 0
    %1411 = vmatprep.subr.bf16.mxu0 0
    %1412 = vmatpush1.bf16.msra.mxu0 0
    %1413 = vmatprep.mubr.bf16.mxu0 0
    %1414 = vmatmul.mubr.bf16.gmra.mrb[0].mxu0 %v1379
    %v1415 = vpop.f32.mrb[0].mxu0
    %v1416 = vadd.f32 0.0, %v1415
    %v1417 = vpop.f32.mrb[0].mxu0
    %v1418 = vpop.f32.mrb[0].mxu0
    %v1419 = vpop.f32.mrb[0].mxu0
    %1420 = vdwg.mxu0
    %v1421 = vadd.f32 %v1362, %v1416
    %v1423 = vlaneseq
    %v1424 = vshrl.u32 %v1423, 7
    %v1425 = vsub.s32 0, %v1424
    %v1426 = vrot.slane %v480, %v1425
    %v1428 = vadd.f32 %v1421, %v1426
    %v1429 = vmax.f32 %v1428, 0.0
    %vm1430 = vcmask 518144
    %1431 = vst.msk [vmem:[#allocation3] sm:$0x7] %vm1430, %v1429
    %v1432 = vld [vmem:[%s950] ss:$2 sm:$0x7]
    %v1433 = vpack.c.bf16 %v1432, %v1432
    %v1434 = vld [vmem:[%s1009] ss:$2 sm:$0x7]
    %v1435 = vpack.c.bf16 %v1434, %v1434
    %v1437 = vsel %vm384, %v1435, 0
    %1439 = vmatprep.subr.bf16.mxu0 0
    %1440 = vmatpush1.bf16.msra.mxu0 %v494
    %1441 = vmatprep.subr.bf16.mxu0 0
    %1442 = vmatpush1.bf16.msra.mxu0 %v495
    %1443 = vmatprep.subr.bf16.mxu0 0
    %1444 = vmatpush1.bf16.msra.mxu0 0
    %1445 = vmatprep.subr.bf16.mxu0 0
    %1446 = vmatpush1.bf16.msra.mxu0 0
    %1447 = vmatprep.subr.bf16.mxu0 0
    %1448 = vmatpush1.bf16.msra.mxu0 0
    %1449 = vmatprep.subr.bf16.mxu0 0
    %1450 = vmatpush1.bf16.msra.mxu0 0
    %1451 = vmatprep.subr.bf16.mxu0 0
    %1452 = vmatpush1.bf16.msra.mxu0 0
    %1453 = vmatprep.subr.bf16.mxu0 0
    %1454 = vmatpush1.bf16.msra.mxu0 0
    %1455 = vmatprep.subr.bf16.mxu0 0
    %1456 = vmatpush1.bf16.msra.mxu0 0
    %1457 = vmatprep.subr.bf16.mxu0 0
    %1458 = vmatpush1.bf16.msra.mxu0 0
    %1459 = vmatprep.subr.bf16.mxu0 0
    %1460 = vmatpush1.bf16.msra.mxu0 0
    %1461 = vmatprep.subr.bf16.mxu0 0
    %1462 = vmatpush1.bf16.msra.mxu0 0
    %1463 = vmatprep.subr.bf16.mxu0 0
    %1464 = vmatpush1.bf16.msra.mxu0 0
    %1465 = vmatprep.subr.bf16.mxu0 0
    %1466 = vmatpush1.bf16.msra.mxu0 0
    %1467 = vmatprep.subr.bf16.mxu0 0
    %1468 = vmatpush1.bf16.msra.mxu0 0
    %1469 = vmatprep.subr.bf16.mxu0 0
    %1470 = vmatpush1.bf16.msra.mxu0 0
    %1471 = vmatprep.mubr.bf16.mxu0 0
    %1472 = vmatmul.mubr.bf16.gmra.mrb[0].mxu0 %v1437
    %v1473 = vpop.f32.mrb[0].mxu0
    %v1474 = vadd.f32 0.0, %v1473
    %v1475 = vpop.f32.mrb[0].mxu0
    %v1476 = vpop.f32.mrb[0].mxu0
    %v1477 = vpop.f32.mrb[0].mxu0
    %1478 = vdwg.mxu0
    %v1480 = vsel %vm384, %v1433, 0
    %1482 = vmatprep.subr.bf16.mxu0 0
    %1483 = vmatpush1.bf16.msra.mxu0 %v549
    %1484 = vmatprep.subr.bf16.mxu0 0
    %1485 = vmatpush1.bf16.msra.mxu0 %v550
    %1486 = vmatprep.subr.bf16.mxu0 0
    %1487 = vmatpush1.bf16.msra.mxu0 0
    %1488 = vmatprep.subr.bf16.mxu0 0
    %1489 = vmatpush1.bf16.msra.mxu0 0
    %1490 = vmatprep.subr.bf16.mxu0 0
    %1491 = vmatpush1.bf16.msra.mxu0 0
    %1492 = vmatprep.subr.bf16.mxu0 0
    %1493 = vmatpush1.bf16.msra.mxu0 0
    %1494 = vmatprep.subr.bf16.mxu0 0
    %1495 = vmatpush1.bf16.msra.mxu0 0
    %1496 = vmatprep.subr.bf16.mxu0 0
    %1497 = vmatpush1.bf16.msra.mxu0 0
    %1498 = vmatprep.subr.bf16.mxu0 0
    %1499 = vmatpush1.bf16.msra.mxu0 0
    %1500 = vmatprep.subr.bf16.mxu0 0
    %1501 = vmatpush1.bf16.msra.mxu0 0
    %1502 = vmatprep.subr.bf16.mxu0 0
    %1503 = vmatpush1.bf16.msra.mxu0 0
    %1504 = vmatprep.subr.bf16.mxu0 0
    %1505 = vmatpush1.bf16.msra.mxu0 0
    %1506 = vmatprep.subr.bf16.mxu0 0
    %1507 = vmatpush1.bf16.msra.mxu0 0
    %1508 = vmatprep.subr.bf16.mxu0 0
    %1509 = vmatpush1.bf16.msra.mxu0 0
    %1510 = vmatprep.subr.bf16.mxu0 0
    %1511 = vmatpush1.bf16.msra.mxu0 0
    %1512 = vmatprep.subr.bf16.mxu0 0
    %1513 = vmatpush1.bf16.msra.mxu0 0
    %1514 = vmatprep.mubr.bf16.mxu0 0
    %1515 = vmatmul.mubr.bf16.gmra.mrb[0].mxu0 %v1480
    %v1516 = vpop.f32.mrb[0].mxu0
    %v1517 = vadd.f32 %v1474, %v1516
    %v1518 = vpop.f32.mrb[0].mxu0
    %v1519 = vpop.f32.mrb[0].mxu0
    %v1520 = vpop.f32.mrb[0].mxu0
    %1521 = vdwg.mxu0
    %v1522 = vld [vmem:[%s1068] ss:$2 sm:$0x7]
    %v1523 = vpack.c.bf16 %v1522, %v1522
    %v1525 = vsel %vm384, %v1523, 0
    %1527 = vmatprep.subr.bf16.mxu0 0
    %1528 = vmatpush1.bf16.msra.mxu0 %v607
    %1529 = vmatprep.subr.bf16.mxu0 0
    %1530 = vmatpush1.bf16.msra.mxu0 %v608
    %1531 = vmatprep.subr.bf16.mxu0 0
    %1532 = vmatpush1.bf16.msra.mxu0 0
    %1533 = vmatprep.subr.bf16.mxu0 0
    %1534 = vmatpush1.bf16.msra.mxu0 0
    %1535 = vmatprep.subr.bf16.mxu0 0
    %1536 = vmatpush1.bf16.msra.mxu0 0
    %1537 = vmatprep.subr.bf16.mxu0 0
    %1538 = vmatpush1.bf16.msra.mxu0 0
    %1539 = vmatprep.subr.bf16.mxu0 0
    %1540 = vmatpush1.bf16.msra.mxu0 0
    %1541 = vmatprep.subr.bf16.mxu0 0
    %1542 = vmatpush1.bf16.msra.mxu0 0
    %1543 = vmatprep.subr.bf16.mxu0 0
    %1544 = vmatpush1.bf16.msra.mxu0 0
    %1545 = vmatprep.subr.bf16.mxu0 0
    %1546 = vmatpush1.bf16.msra.mxu0 0
    %1547 = vmatprep.subr.bf16.mxu0 0
    %1548 = vmatpush1.bf16.msra.mxu0 0
    %1549 = vmatprep.subr.bf16.mxu0 0
    %1550 = vmatpush1.bf16.msra.mxu0 0
    %1551 = vmatprep.subr.bf16.mxu0 0
    %1552 = vmatpush1.bf16.msra.mxu0 0
    %1553 = vmatprep.subr.bf16.mxu0 0
    %1554 = vmatpush1.bf16.msra.mxu0 0
    %1555 = vmatprep.subr.bf16.mxu0 0
    %1556 = vmatpush1.bf16.msra.mxu0 0
    %1557 = vmatprep.subr.bf16.mxu0 0
    %1558 = vmatpush1.bf16.msra.mxu0 0
    %1559 = vmatprep.mubr.bf16.mxu0 0
    %1560 = vmatmul.mubr.bf16.gmra.mrb[0].mxu0 %v1525
    %v1561 = vpop.f32.mrb[0].mxu0
    %v1562 = vadd.f32 0.0, %v1561
    %v1563 = vpop.f32.mrb[0].mxu0
    %v1564 = vpop.f32.mrb[0].mxu0
    %v1565 = vpop.f32.mrb[0].mxu0
    %1566 = vdwg.mxu0
    %v1567 = vadd.f32 %v1517, %v1562
    %v1568 = vld [vmem:[%s1127] ss:$2 sm:$0x7]
    %v1569 = vpack.c.bf16 %v1568, %v1568
    %v1571 = vsel %vm384, %v1569, 0
    %1573 = vmatprep.subr.bf16.mxu0 0
    %1574 = vmatpush1.bf16.msra.mxu0 %v666
    %1575 = vmatprep.subr.bf16.mxu0 0
    %1576 = vmatpush1.bf16.msra.mxu0 %v667
    %1577 = vmatprep.subr.bf16.mxu0 0
    %1578 = vmatpush1.bf16.msra.mxu0 0
    %1579 = vmatprep.subr.bf16.mxu0 0
    %1580 = vmatpush1.bf16.msra.mxu0 0
    %1581 = vmatprep.subr.bf16.mxu0 0
    %1582 = vmatpush1.bf16.msra.mxu0 0
    %1583 = vmatprep.subr.bf16.mxu0 0
    %1584 = vmatpush1.bf16.msra.mxu0 0
    %1585 = vmatprep.subr.bf16.mxu0 0
    %1586 = vmatpush1.bf16.msra.mxu0 0
    %1587 = vmatprep.subr.bf16.mxu0 0
    %1588 = vmatpush1.bf16.msra.mxu0 0
    %1589 = vmatprep.subr.bf16.mxu0 0
    %1590 = vmatpush1.bf16.msra.mxu0 0
    %1591 = vmatprep.subr.bf16.mxu0 0
    %1592 = vmatpush1.bf16.msra.mxu0 0
    %1593 = vmatprep.subr.bf16.mxu0 0
    %1594 = vmatpush1.bf16.msra.mxu0 0
    %1595 = vmatprep.subr.bf16.mxu0 0
    %1596 = vmatpush1.bf16.msra.mxu0 0
    %1597 = vmatprep.subr.bf16.mxu0 0
    %1598 = vmatpush1.bf16.msra.mxu0 0
    %1599 = vmatprep.subr.bf16.mxu0 0
    %1600 = vmatpush1.bf16.msra.mxu0 0
    %1601 = vmatprep.subr.bf16.mxu0 0
    %1602 = vmatpush1.bf16.msra.mxu0 0
    %1603 = vmatprep.subr.bf16.mxu0 0
    %1604 = vmatpush1.bf16.msra.mxu0 0
    %1605 = vmatprep.mubr.bf16.mxu0 0
    %1606 = vmatmul.mubr.bf16.gmra.mrb[0].mxu0 %v1571
    %v1607 = vpop.f32.mrb[0].mxu0
    %v1608 = vadd.f32 0.0, %v1607
    %v1609 = vpop.f32.mrb[0].mxu0
    %v1610 = vpop.f32.mrb[0].mxu0
    %v1611 = vpop.f32.mrb[0].mxu0
    %1612 = vdwg.mxu0
    %v1613 = vadd.f32 %v1567, %v1608
    %v1614 = vld [vmem:[%s1186] ss:$2 sm:$0x7]
    %v1615 = vpack.c.bf16 %v1614, %v1614
    %v1617 = vsel %vm384, %v1615, 0
    %1619 = vmatprep.subr.bf16.mxu0 0
    %1620 = vmatpush1.bf16.msra.mxu0 %v725
    %1621 = vmatprep.subr.bf16.mxu0 0
    %1622 = vmatpush1.bf16.msra.mxu0 %v726
    %1623 = vmatprep.subr.bf16.mxu0 0
    %1624 = vmatpush1.bf16.msra.mxu0 0
    %1625 = vmatprep.subr.bf16.mxu0 0
    %1626 = vmatpush1.bf16.msra.mxu0 0
    %1627 = vmatprep.subr.bf16.mxu0 0
    %1628 = vmatpush1.bf16.msra.mxu0 0
    %1629 = vmatprep.subr.bf16.mxu0 0
    %1630 = vmatpush1.bf16.msra.mxu0 0
    %1631 = vmatprep.subr.bf16.mxu0 0
    %1632 = vmatpush1.bf16.msra.mxu0 0
    %1633 = vmatprep.subr.bf16.mxu0 0
    %1634 = vmatpush1.bf16.msra.mxu0 0
    %1635 = vmatprep.subr.bf16.mxu0 0
    %1636 = vmatpush1.bf16.msra.mxu0 0
    %1637 = vmatprep.subr.bf16.mxu0 0
    %1638 = vmatpush1.bf16.msra.mxu0 0
    %1639 = vmatprep.subr.bf16.mxu0 0
    %1640 = vmatpush1.bf16.msra.mxu0 0
    %1641 = vmatprep.subr.bf16.mxu0 0
    %1642 = vmatpush1.bf16.msra.mxu0 0
    %1643 = vmatprep.subr.bf16.mxu0 0
    %1644 = vmatpush1.bf16.msra.mxu0 0
    %1645 = vmatprep.subr.bf16.mxu0 0
    %1646 = vmatpush1.bf16.msra.mxu0 0
    %1647 = vmatprep.subr.bf16.mxu0 0
    %1648 = vmatpush1.bf16.msra.mxu0 0
    %1649 = vmatprep.subr.bf16.mxu0 0
    %1650 = vmatpush1.bf16.msra.mxu0 0
    %1651 = vmatprep.mubr.bf16.mxu0 0
    %1652 = vmatmul.mubr.bf16.gmra.mrb[0].mxu0 %v1617
    %v1653 = vpop.f32.mrb[0].mxu0
    %v1654 = vadd.f32 0.0, %v1653
    %v1655 = vpop.f32.mrb[0].mxu0
    %v1656 = vpop.f32.mrb[0].mxu0
    %v1657 = vpop.f32.mrb[0].mxu0
    %1658 = vdwg.mxu0
    %v1659 = vadd.f32 %v1613, %v1654
    %v1660 = vld [vmem:[%s1245] ss:$2 sm:$0x7]
    %v1661 = vpack.c.bf16 %v1660, %v1660
    %v1663 = vsel %vm384, %v1661, 0
    %1665 = vmatprep.subr.bf16.mxu0 0
    %1666 = vmatpush1.bf16.msra.mxu0 %v784
    %1667 = vmatprep.subr.bf16.mxu0 0
    %1668 = vmatpush1.bf16.msra.mxu0 %v785
    %1669 = vmatprep.subr.bf16.mxu0 0
    %1670 = vmatpush1.bf16.msra.mxu0 0
    %1671 = vmatprep.subr.bf16.mxu0 0
    %1672 = vmatpush1.bf16.msra.mxu0 0
    %1673 = vmatprep.subr.bf16.mxu0 0
    %1674 = vmatpush1.bf16.msra.mxu0 0
    %1675 = vmatprep.subr.bf16.mxu0 0
    %1676 = vmatpush1.bf16.msra.mxu0 0
    %1677 = vmatprep.subr.bf16.mxu0 0
    %1678 = vmatpush1.bf16.msra.mxu0 0
    %1679 = vmatprep.subr.bf16.mxu0 0
    %1680 = vmatpush1.bf16.msra.mxu0 0
    %1681 = vmatprep.subr.bf16.mxu0 0
    %1682 = vmatpush1.bf16.msra.mxu0 0
    %1683 = vmatprep.subr.bf16.mxu0 0
    %1684 = vmatpush1.bf16.msra.mxu0 0
    %1685 = vmatprep.subr.bf16.mxu0 0
    %1686 = vmatpush1.bf16.msra.mxu0 0
    %1687 = vmatprep.subr.bf16.mxu0 0
    %1688 = vmatpush1.bf16.msra.mxu0 0
    %1689 = vmatprep.subr.bf16.mxu0 0
    %1690 = vmatpush1.bf16.msra.mxu0 0
    %1691 = vmatprep.subr.bf16.mxu0 0
    %1692 = vmatpush1.bf16.msra.mxu0 0
    %1693 = vmatprep.subr.bf16.mxu0 0
    %1694 = vmatpush1.bf16.msra.mxu0 0
    %1695 = vmatprep.subr.bf16.mxu0 0
    %1696 = vmatpush1.bf16.msra.mxu0 0
    %1697 = vmatprep.mubr.bf16.mxu0 0
    %1698 = vmatmul.mubr.bf16.gmra.mrb[0].mxu0 %v1663
    %v1699 = vpop.f32.mrb[0].mxu0
    %v1700 = vadd.f32 0.0, %v1699
    %v1701 = vpop.f32.mrb[0].mxu0
    %v1702 = vpop.f32.mrb[0].mxu0
    %v1703 = vpop.f32.mrb[0].mxu0
    %1704 = vdwg.mxu0
    %v1705 = vadd.f32 %v1659, %v1700
    %v1706 = vld [vmem:[%s1304] ss:$2 sm:$0x7]
    %v1707 = vpack.c.bf16 %v1706, %v1706
    %v1709 = vsel %vm384, %v1707, 0
    %1711 = vmatprep.subr.bf16.mxu0 0
    %1712 = vmatpush1.bf16.msra.mxu0 %v843
    %1713 = vmatprep.subr.bf16.mxu0 0
    %1714 = vmatpush1.bf16.msra.mxu0 %v844
    %1715 = vmatprep.subr.bf16.mxu0 0
    %1716 = vmatpush1.bf16.msra.mxu0 0
    %1717 = vmatprep.subr.bf16.mxu0 0
    %1718 = vmatpush1.bf16.msra.mxu0 0
    %1719 = vmatprep.subr.bf16.mxu0 0
    %1720 = vmatpush1.bf16.msra.mxu0 0
    %1721 = vmatprep.subr.bf16.mxu0 0
    %1722 = vmatpush1.bf16.msra.mxu0 0
    %1723 = vmatprep.subr.bf16.mxu0 0
    %1724 = vmatpush1.bf16.msra.mxu0 0
    %1725 = vmatprep.subr.bf16.mxu0 0
    %1726 = vmatpush1.bf16.msra.mxu0 0
    %1727 = vmatprep.subr.bf16.mxu0 0
    %1728 = vmatpush1.bf16.msra.mxu0 0
    %1729 = vmatprep.subr.bf16.mxu0 0
    %1730 = vmatpush1.bf16.msra.mxu0 0
    %1731 = vmatprep.subr.bf16.mxu0 0
    %1732 = vmatpush1.bf16.msra.mxu0 0
    %1733 = vmatprep.subr.bf16.mxu0 0
    %1734 = vmatpush1.bf16.msra.mxu0 0
    %1735 = vmatprep.subr.bf16.mxu0 0
    %1736 = vmatpush1.bf16.msra.mxu0 0
    %1737 = vmatprep.subr.bf16.mxu0 0
    %1738 = vmatpush1.bf16.msra.mxu0 0
    %1739 = vmatprep.subr.bf16.mxu0 0
    %1740 = vmatpush1.bf16.msra.mxu0 0
    %1741 = vmatprep.subr.bf16.mxu0 0
    %1742 = vmatpush1.bf16.msra.mxu0 0
    %1743 = vmatprep.mubr.bf16.mxu0 0
    %1744 = vmatmul.mubr.bf16.gmra.mrb[0].mxu0 %v1709
    %v1745 = vpop.f32.mrb[0].mxu0
    %v1746 = vadd.f32 0.0, %v1745
    %v1747 = vpop.f32.mrb[0].mxu0
    %v1748 = vpop.f32.mrb[0].mxu0
    %v1749 = vpop.f32.mrb[0].mxu0
    %1750 = vdwg.mxu0
    %v1751 = vadd.f32 %v1705, %v1746
    %v1752 = vld [vmem:[%s1363] ss:$2 sm:$0x7]
    %v1753 = vpack.c.bf16 %v1752, %v1752
    %v1755 = vsel %vm384, %v1753, 0
    %1757 = vmatprep.subr.bf16.mxu0 0
    %1758 = vmatpush1.bf16.msra.mxu0 %v902
    %1759 = vmatprep.subr.bf16.mxu0 0
    %1760 = vmatpush1.bf16.msra.mxu0 %v903
    %1761 = vmatprep.subr.bf16.mxu0 0
    %1762 = vmatpush1.bf16.msra.mxu0 0
    %1763 = vmatprep.subr.bf16.mxu0 0
    %1764 = vmatpush1.bf16.msra.mxu0 0
    %1765 = vmatprep.subr.bf16.mxu0 0
    %1766 = vmatpush1.bf16.msra.mxu0 0
    %1767 = vmatprep.subr.bf16.mxu0 0
    %1768 = vmatpush1.bf16.msra.mxu0 0
    %1769 = vmatprep.subr.bf16.mxu0 0
    %1770 = vmatpush1.bf16.msra.mxu0 0
    %1771 = vmatprep.subr.bf16.mxu0 0
    %1772 = vmatpush1.bf16.msra.mxu0 0
    %1773 = vmatprep.subr.bf16.mxu0 0
    %1774 = vmatpush1.bf16.msra.mxu0 0
    %1775 = vmatprep.subr.bf16.mxu0 0
    %1776 = vmatpush1.bf16.msra.mxu0 0
    %1777 = vmatprep.subr.bf16.mxu0 0
    %1778 = vmatpush1.bf16.msra.mxu0 0
    %1779 = vmatprep.subr.bf16.mxu0 0
    %1780 = vmatpush1.bf16.msra.mxu0 0
    %1781 = vmatprep.subr.bf16.mxu0 0
    %1782 = vmatpush1.bf16.msra.mxu0 0
    %1783 = vmatprep.subr.bf16.mxu0 0
    %1784 = vmatpush1.bf16.msra.mxu0 0
    %1785 = vmatprep.subr.bf16.mxu0 0
    %1786 = vmatpush1.bf16.msra.mxu0 0
    %1787 = vmatprep.subr.bf16.mxu0 0
    %1788 = vmatpush1.bf16.msra.mxu0 0
    %1789 = vmatprep.mubr.bf16.mxu0 0
    %1790 = vmatmul.mubr.bf16.gmra.mrb[0].mxu0 %v1755
    %v1791 = vpop.f32.mrb[0].mxu0
    %v1792 = vadd.f32 0.0, %v1791
    %v1793 = vpop.f32.mrb[0].mxu0
    %v1794 = vpop.f32.mrb[0].mxu0
    %v1795 = vpop.f32.mrb[0].mxu0
    %1796 = vdwg.mxu0
    %v1797 = vadd.f32 %v1751, %v1792
    %s1798 = scalar_lea.vmem [#allocation2], 32
    %v1799 = vld [vmem:[%s1798] ss:$2 sm:$0x7]
    %v1800 = vpack.c.bf16 %v1799, %v1799
    %v1802 = vsel %vm384, %v1800, 0
    %1804 = vmatprep.subr.bf16.mxu0 0
    %1805 = vmatpush1.bf16.msra.mxu0 %v961
    %1806 = vmatprep.subr.bf16.mxu0 0
    %1807 = vmatpush1.bf16.msra.mxu0 %v962
    %1808 = vmatprep.subr.bf16.mxu0 0
    %1809 = vmatpush1.bf16.msra.mxu0 0
    %1810 = vmatprep.subr.bf16.mxu0 0
    %1811 = vmatpush1.bf16.msra.mxu0 0
    %1812 = vmatprep.subr.bf16.mxu0 0
    %1813 = vmatpush1.bf16.msra.mxu0 0
    %1814 = vmatprep.subr.bf16.mxu0 0
    %1815 = vmatpush1.bf16.msra.mxu0 0
    %1816 = vmatprep.subr.bf16.mxu0 0
    %1817 = vmatpush1.bf16.msra.mxu0 0
    %1818 = vmatprep.subr.bf16.mxu0 0
    %1819 = vmatpush1.bf16.msra.mxu0 0
    %1820 = vmatprep.subr.bf16.mxu0 0
    %1821 = vmatpush1.bf16.msra.mxu0 0
    %1822 = vmatprep.subr.bf16.mxu0 0
    %1823 = vmatpush1.bf16.msra.mxu0 0
    %1824 = vmatprep.subr.bf16.mxu0 0
    %1825 = vmatpush1.bf16.msra.mxu0 0
    %1826 = vmatprep.subr.bf16.mxu0 0
    %1827 = vmatpush1.bf16.msra.mxu0 0
    %1828 = vmatprep.subr.bf16.mxu0 0
    %1829 = vmatpush1.bf16.msra.mxu0 0
    %1830 = vmatprep.subr.bf16.mxu0 0
    %1831 = vmatpush1.bf16.msra.mxu0 0
    %1832 = vmatprep.subr.bf16.mxu0 0
    %1833 = vmatpush1.bf16.msra.mxu0 0
    %1834 = vmatprep.subr.bf16.mxu0 0
    %1835 = vmatpush1.bf16.msra.mxu0 0
    %1836 = vmatprep.mubr.bf16.mxu0 0
    %1837 = vmatmul.mubr.bf16.gmra.mrb[0].mxu0 %v1802
    %v1838 = vpop.f32.mrb[0].mxu0
    %v1839 = vadd.f32 0.0, %v1838
    %v1840 = vpop.f32.mrb[0].mxu0
    %v1841 = vpop.f32.mrb[0].mxu0
    %v1842 = vpop.f32.mrb[0].mxu0
    %1843 = vdwg.mxu0
    %v1844 = vadd.f32 %v1797, %v1839
    %s1845 = scalar_lea.vmem [#allocation2], 33
    %v1846 = vld [vmem:[%s1845] ss:$2 sm:$0x7]
    %v1847 = vpack.c.bf16 %v1846, %v1846
    %v1849 = vsel %vm384, %v1847, 0
    %1851 = vmatprep.subr.bf16.mxu0 0
    %1852 = vmatpush1.bf16.msra.mxu0 %v1020
    %1853 = vmatprep.subr.bf16.mxu0 0
    %1854 = vmatpush1.bf16.msra.mxu0 %v1021
    %1855 = vmatprep.subr.bf16.mxu0 0
    %1856 = vmatpush1.bf16.msra.mxu0 0
    %1857 = vmatprep.subr.bf16.mxu0 0
    %1858 = vmatpush1.bf16.msra.mxu0 0
    %1859 = vmatprep.subr.bf16.mxu0 0
    %1860 = vmatpush1.bf16.msra.mxu0 0
    %1861 = vmatprep.subr.bf16.mxu0 0
    %1862 = vmatpush1.bf16.msra.mxu0 0
    %1863 = vmatprep.subr.bf16.mxu0 0
    %1864 = vmatpush1.bf16.msra.mxu0 0
    %1865 = vmatprep.subr.bf16.mxu0 0
    %1866 = vmatpush1.bf16.msra.mxu0 0
    %1867 = vmatprep.subr.bf16.mxu0 0
    %1868 = vmatpush1.bf16.msra.mxu0 0
    %1869 = vmatprep.subr.bf16.mxu0 0
    %1870 = vmatpush1.bf16.msra.mxu0 0
    %1871 = vmatprep.subr.bf16.mxu0 0
    %1872 = vmatpush1.bf16.msra.mxu0 0
    %1873 = vmatprep.subr.bf16.mxu0 0
    %1874 = vmatpush1.bf16.msra.mxu0 0
    %1875 = vmatprep.subr.bf16.mxu0 0
    %1876 = vmatpush1.bf16.msra.mxu0 0
    %1877 = vmatprep.subr.bf16.mxu0 0
    %1878 = vmatpush1.bf16.msra.mxu0 0
    %1879 = vmatprep.subr.bf16.mxu0 0
    %1880 = vmatpush1.bf16.msra.mxu0 0
    %1881 = vmatprep.subr.bf16.mxu0 0
    %1882 = vmatpush1.bf16.msra.mxu0 0
    %1883 = vmatprep.mubr.bf16.mxu0 0
    %1884 = vmatmul.mubr.bf16.gmra.mrb[0].mxu0 %v1849
    %v1885 = vpop.f32.mrb[0].mxu0
    %v1886 = vadd.f32 0.0, %v1885
    %v1887 = vpop.f32.mrb[0].mxu0
    %v1888 = vpop.f32.mrb[0].mxu0
    %v1889 = vpop.f32.mrb[0].mxu0
    %1890 = vdwg.mxu0
    %v1891 = vadd.f32 %v1844, %v1886
    %s1892 = scalar_lea.vmem [#allocation2], 34
    %v1893 = vld [vmem:[%s1892] ss:$2 sm:$0x7]
    %v1894 = vpack.c.bf16 %v1893, %v1893
    %v1896 = vsel %vm384, %v1894, 0
    %1898 = vmatprep.subr.bf16.mxu0 0
    %1899 = vmatpush1.bf16.msra.mxu0 %v1079
    %1900 = vmatprep.subr.bf16.mxu0 0
    %1901 = vmatpush1.bf16.msra.mxu0 %v1080
    %1902 = vmatprep.subr.bf16.mxu0 0
    %1903 = vmatpush1.bf16.msra.mxu0 0
    %1904 = vmatprep.subr.bf16.mxu0 0
    %1905 = vmatpush1.bf16.msra.mxu0 0
    %1906 = vmatprep.subr.bf16.mxu0 0
    %1907 = vmatpush1.bf16.msra.mxu0 0
    %1908 = vmatprep.subr.bf16.mxu0 0
    %1909 = vmatpush1.bf16.msra.mxu0 0
    %1910 = vmatprep.subr.bf16.mxu0 0
    %1911 = vmatpush1.bf16.msra.mxu0 0
    %1912 = vmatprep.subr.bf16.mxu0 0
    %1913 = vmatpush1.bf16.msra.mxu0 0
    %1914 = vmatprep.subr.bf16.mxu0 0
    %1915 = vmatpush1.bf16.msra.mxu0 0
    %1916 = vmatprep.subr.bf16.mxu0 0
    %1917 = vmatpush1.bf16.msra.mxu0 0
    %1918 = vmatprep.subr.bf16.mxu0 0
    %1919 = vmatpush1.bf16.msra.mxu0 0
    %1920 = vmatprep.subr.bf16.mxu0 0
    %1921 = vmatpush1.bf16.msra.mxu0 0
    %1922 = vmatprep.subr.bf16.mxu0 0
    %1923 = vmatpush1.bf16.msra.mxu0 0
    %1924 = vmatprep.subr.bf16.mxu0 0
    %1925 = vmatpush1.bf16.msra.mxu0 0
    %1926 = vmatprep.subr.bf16.mxu0 0
    %1927 = vmatpush1.bf16.msra.mxu0 0
    %1928 = vmatprep.subr.bf16.mxu0 0
    %1929 = vmatpush1.bf16.msra.mxu0 0
    %1930 = vmatprep.mubr.bf16.mxu0 0
    %1931 = vmatmul.mubr.bf16.gmra.mrb[0].mxu0 %v1896
    %v1932 = vpop.f32.mrb[0].mxu0
    %v1933 = vadd.f32 0.0, %v1932
    %v1934 = vpop.f32.mrb[0].mxu0
    %v1935 = vpop.f32.mrb[0].mxu0
    %v1936 = vpop.f32.mrb[0].mxu0
    %1937 = vdwg.mxu0
    %v1938 = vadd.f32 %v1891, %v1933
    %s1939 = scalar_lea.vmem [#allocation2], 35
    %v1940 = vld [vmem:[%s1939] ss:$2 sm:$0x7]
    %v1941 = vpack.c.bf16 %v1940, %v1940
    %v1943 = vsel %vm384, %v1941, 0
    %1945 = vmatprep.subr.bf16.mxu0 0
    %1946 = vmatpush1.bf16.msra.mxu0 %v1138
    %1947 = vmatprep.subr.bf16.mxu0 0
    %1948 = vmatpush1.bf16.msra.mxu0 %v1139
    %1949 = vmatprep.subr.bf16.mxu0 0
    %1950 = vmatpush1.bf16.msra.mxu0 0
    %1951 = vmatprep.subr.bf16.mxu0 0
    %1952 = vmatpush1.bf16.msra.mxu0 0
    %1953 = vmatprep.subr.bf16.mxu0 0
    %1954 = vmatpush1.bf16.msra.mxu0 0
    %1955 = vmatprep.subr.bf16.mxu0 0
    %1956 = vmatpush1.bf16.msra.mxu0 0
    %1957 = vmatprep.subr.bf16.mxu0 0
    %1958 = vmatpush1.bf16.msra.mxu0 0
    %1959 = vmatprep.subr.bf16.mxu0 0
    %1960 = vmatpush1.bf16.msra.mxu0 0
    %1961 = vmatprep.subr.bf16.mxu0 0
    %1962 = vmatpush1.bf16.msra.mxu0 0
    %1963 = vmatprep.subr.bf16.mxu0 0
    %1964 = vmatpush1.bf16.msra.mxu0 0
    %1965 = vmatprep.subr.bf16.mxu0 0
    %1966 = vmatpush1.bf16.msra.mxu0 0
    %1967 = vmatprep.subr.bf16.mxu0 0
    %1968 = vmatpush1.bf16.msra.mxu0 0
    %1969 = vmatprep.subr.bf16.mxu0 0
    %1970 = vmatpush1.bf16.msra.mxu0 0
    %1971 = vmatprep.subr.bf16.mxu0 0
    %1972 = vmatpush1.bf16.msra.mxu0 0
    %1973 = vmatprep.subr.bf16.mxu0 0
    %1974 = vmatpush1.bf16.msra.mxu0 0
    %1975 = vmatprep.subr.bf16.mxu0 0
    %1976 = vmatpush1.bf16.msra.mxu0 0
    %1977 = vmatprep.mubr.bf16.mxu0 0
    %1978 = vmatmul.mubr.bf16.gmra.mrb[0].mxu0 %v1943
    %v1979 = vpop.f32.mrb[0].mxu0
    %v1980 = vadd.f32 0.0, %v1979
    %v1981 = vpop.f32.mrb[0].mxu0
    %v1982 = vpop.f32.mrb[0].mxu0
    %v1983 = vpop.f32.mrb[0].mxu0
    %1984 = vdwg.mxu0
    %v1985 = vadd.f32 %v1938, %v1980
    %s1986 = scalar_lea.vmem [#allocation2], 40
    %v1987 = vld [vmem:[%s1986] ss:$2 sm:$0x7]
    %v1988 = vpack.c.bf16 %v1987, %v1987
    %v1990 = vsel %vm384, %v1988, 0
    %1992 = vmatprep.subr.bf16.mxu0 0
    %1993 = vmatpush1.bf16.msra.mxu0 %v1197
    %1994 = vmatprep.subr.bf16.mxu0 0
    %1995 = vmatpush1.bf16.msra.mxu0 %v1198
    %1996 = vmatprep.subr.bf16.mxu0 0
    %1997 = vmatpush1.bf16.msra.mxu0 0
    %1998 = vmatprep.subr.bf16.mxu0 0
    %1999 = vmatpush1.bf16.msra.mxu0 0
    %2000 = vmatprep.subr.bf16.mxu0 0
    %2001 = vmatpush1.bf16.msra.mxu0 0
    %2002 = vmatprep.subr.bf16.mxu0 0
    %2003 = vmatpush1.bf16.msra.mxu0 0
    %2004 = vmatprep.subr.bf16.mxu0 0
    %2005 = vmatpush1.bf16.msra.mxu0 0
    %2006 = vmatprep.subr.bf16.mxu0 0
    %2007 = vmatpush1.bf16.msra.mxu0 0
    %2008 = vmatprep.subr.bf16.mxu0 0
    %2009 = vmatpush1.bf16.msra.mxu0 0
    %2010 = vmatprep.subr.bf16.mxu0 0
    %2011 = vmatpush1.bf16.msra.mxu0 0
    %2012 = vmatprep.subr.bf16.mxu0 0
    %2013 = vmatpush1.bf16.msra.mxu0 0
    %2014 = vmatprep.subr.bf16.mxu0 0
    %2015 = vmatpush1.bf16.msra.mxu0 0
    %2016 = vmatprep.subr.bf16.mxu0 0
    %2017 = vmatpush1.bf16.msra.mxu0 0
    %2018 = vmatprep.subr.bf16.mxu0 0
    %2019 = vmatpush1.bf16.msra.mxu0 0
    %2020 = vmatprep.subr.bf16.mxu0 0
    %2021 = vmatpush1.bf16.msra.mxu0 0
    %2022 = vmatprep.subr.bf16.mxu0 0
    %2023 = vmatpush1.bf16.msra.mxu0 0
    %2024 = vmatprep.mubr.bf16.mxu0 0
    %2025 = vmatmul.mubr.bf16.gmra.mrb[0].mxu0 %v1990
    %v2026 = vpop.f32.mrb[0].mxu0
    %v2027 = vadd.f32 0.0, %v2026
    %v2028 = vpop.f32.mrb[0].mxu0
    %v2029 = vpop.f32.mrb[0].mxu0
    %v2030 = vpop.f32.mrb[0].mxu0
    %2031 = vdwg.mxu0
    %v2032 = vadd.f32 %v1985, %v2027
    %s2033 = scalar_lea.vmem [#allocation2], 41
    %v2034 = vld [vmem:[%s2033] ss:$2 sm:$0x7]
    %v2035 = vpack.c.bf16 %v2034, %v2034
    %v2037 = vsel %vm384, %v2035, 0
    %2039 = vmatprep.subr.bf16.mxu0 0
    %2040 = vmatpush1.bf16.msra.mxu0 %v1256
    %2041 = vmatprep.subr.bf16.mxu0 0
    %2042 = vmatpush1.bf16.msra.mxu0 %v1257
    %2043 = vmatprep.subr.bf16.mxu0 0
    %2044 = vmatpush1.bf16.msra.mxu0 0
    %2045 = vmatprep.subr.bf16.mxu0 0
    %2046 = vmatpush1.bf16.msra.mxu0 0
    %2047 = vmatprep.subr.bf16.mxu0 0
    %2048 = vmatpush1.bf16.msra.mxu0 0
    %2049 = vmatprep.subr.bf16.mxu0 0
    %2050 = vmatpush1.bf16.msra.mxu0 0
    %2051 = vmatprep.subr.bf16.mxu0 0
    %2052 = vmatpush1.bf16.msra.mxu0 0
    %2053 = vmatprep.subr.bf16.mxu0 0
    %2054 = vmatpush1.bf16.msra.mxu0 0
    %2055 = vmatprep.subr.bf16.mxu0 0
    %2056 = vmatpush1.bf16.msra.mxu0 0
    %2057 = vmatprep.subr.bf16.mxu0 0
    %2058 = vmatpush1.bf16.msra.mxu0 0
    %2059 = vmatprep.subr.bf16.mxu0 0
    %2060 = vmatpush1.bf16.msra.mxu0 0
    %2061 = vmatprep.subr.bf16.mxu0 0
    %2062 = vmatpush1.bf16.msra.mxu0 0
    %2063 = vmatprep.subr.bf16.mxu0 0
    %2064 = vmatpush1.bf16.msra.mxu0 0
    %2065 = vmatprep.subr.bf16.mxu0 0
    %2066 = vmatpush1.bf16.msra.mxu0 0
    %2067 = vmatprep.subr.bf16.mxu0 0
    %2068 = vmatpush1.bf16.msra.mxu0 0
    %2069 = vmatprep.subr.bf16.mxu0 0
    %2070 = vmatpush1.bf16.msra.mxu0 0
    %2071 = vmatprep.mubr.bf16.mxu0 0
    %2072 = vmatmul.mubr.bf16.gmra.mrb[0].mxu0 %v2037
    %v2073 = vpop.f32.mrb[0].mxu0
    %v2074 = vadd.f32 0.0, %v2073
    %v2075 = vpop.f32.mrb[0].mxu0
    %v2076 = vpop.f32.mrb[0].mxu0
    %v2077 = vpop.f32.mrb[0].mxu0
    %2078 = vdwg.mxu0
    %v2079 = vadd.f32 %v2032, %v2074
    %s2080 = scalar_lea.vmem [#allocation2], 42
    %v2081 = vld [vmem:[%s2080] ss:$2 sm:$0x7]
    %v2082 = vpack.c.bf16 %v2081, %v2081
    %v2084 = vsel %vm384, %v2082, 0
    %2086 = vmatprep.subr.bf16.mxu0 0
    %2087 = vmatpush1.bf16.msra.mxu0 %v1315
    %2088 = vmatprep.subr.bf16.mxu0 0
    %2089 = vmatpush1.bf16.msra.mxu0 %v1316
    %2090 = vmatprep.subr.bf16.mxu0 0
    %2091 = vmatpush1.bf16.msra.mxu0 0
    %2092 = vmatprep.subr.bf16.mxu0 0
    %2093 = vmatpush1.bf16.msra.mxu0 0
    %2094 = vmatprep.subr.bf16.mxu0 0
    %2095 = vmatpush1.bf16.msra.mxu0 0
    %2096 = vmatprep.subr.bf16.mxu0 0
    %2097 = vmatpush1.bf16.msra.mxu0 0
    %2098 = vmatprep.subr.bf16.mxu0 0
    %2099 = vmatpush1.bf16.msra.mxu0 0
    %2100 = vmatprep.subr.bf16.mxu0 0
    %2101 = vmatpush1.bf16.msra.mxu0 0
    %2102 = vmatprep.subr.bf16.mxu0 0
    %2103 = vmatpush1.bf16.msra.mxu0 0
    %2104 = vmatprep.subr.bf16.mxu0 0
    %2105 = vmatpush1.bf16.msra.mxu0 0
    %2106 = vmatprep.subr.bf16.mxu0 0
    %2107 = vmatpush1.bf16.msra.mxu0 0
    %2108 = vmatprep.subr.bf16.mxu0 0
    %2109 = vmatpush1.bf16.msra.mxu0 0
    %2110 = vmatprep.subr.bf16.mxu0 0
    %2111 = vmatpush1.bf16.msra.mxu0 0
    %2112 = vmatprep.subr.bf16.mxu0 0
    %2113 = vmatpush1.bf16.msra.mxu0 0
    %2114 = vmatprep.subr.bf16.mxu0 0
    %2115 = vmatpush1.bf16.msra.mxu0 0
    %2116 = vmatprep.subr.bf16.mxu0 0
    %2117 = vmatpush1.bf16.msra.mxu0 0
    %2118 = vmatprep.mubr.bf16.mxu0 0
    %2119 = vmatmul.mubr.bf16.gmra.mrb[0].mxu0 %v2084
    %v2120 = vpop.f32.mrb[0].mxu0
    %v2121 = vadd.f32 0.0, %v2120
    %v2122 = vpop.f32.mrb[0].mxu0
    %v2123 = vpop.f32.mrb[0].mxu0
    %v2124 = vpop.f32.mrb[0].mxu0
    %2125 = vdwg.mxu0
    %v2126 = vadd.f32 %v2079, %v2121
    %s2127 = scalar_lea.vmem [#allocation2], 43
    %v2128 = vld [vmem:[%s2127] ss:$2 sm:$0x7]
    %v2129 = vpack.c.bf16 %v2128, %v2128
    %v2131 = vsel %vm384, %v2129, 0
    %2133 = vmatprep.subr.bf16.mxu0 0
    %2134 = vmatpush1.bf16.msra.mxu0 %v1374
    %2135 = vmatprep.subr.bf16.mxu0 0
    %2136 = vmatpush1.bf16.msra.mxu0 %v1375
    %2137 = vmatprep.subr.bf16.mxu0 0
    %2138 = vmatpush1.bf16.msra.mxu0 0
    %2139 = vmatprep.subr.bf16.mxu0 0
    %2140 = vmatpush1.bf16.msra.mxu0 0
    %2141 = vmatprep.subr.bf16.mxu0 0
    %2142 = vmatpush1.bf16.msra.mxu0 0
    %2143 = vmatprep.subr.bf16.mxu0 0
    %2144 = vmatpush1.bf16.msra.mxu0 0
    %2145 = vmatprep.subr.bf16.mxu0 0
    %2146 = vmatpush1.bf16.msra.mxu0 0
    %2147 = vmatprep.subr.bf16.mxu0 0
    %2148 = vmatpush1.bf16.msra.mxu0 0
    %2149 = vmatprep.subr.bf16.mxu0 0
    %2150 = vmatpush1.bf16.msra.mxu0 0
    %2151 = vmatprep.subr.bf16.mxu0 0
    %2152 = vmatpush1.bf16.msra.mxu0 0
    %2153 = vmatprep.subr.bf16.mxu0 0
    %2154 = vmatpush1.bf16.msra.mxu0 0
    %2155 = vmatprep.subr.bf16.mxu0 0
    %2156 = vmatpush1.bf16.msra.mxu0 0
    %2157 = vmatprep.subr.bf16.mxu0 0
    %2158 = vmatpush1.bf16.msra.mxu0 0
    %2159 = vmatprep.subr.bf16.mxu0 0
    %2160 = vmatpush1.bf16.msra.mxu0 0
    %2161 = vmatprep.subr.bf16.mxu0 0
    %2162 = vmatpush1.bf16.msra.mxu0 0
    %2163 = vmatprep.subr.bf16.mxu0 0
    %2164 = vmatpush1.bf16.msra.mxu0 0
    %2165 = vmatprep.mubr.bf16.mxu0 0
    %2166 = vmatmul.mubr.bf16.gmra.mrb[0].mxu0 %v2131
    %v2167 = vpop.f32.mrb[0].mxu0
    %v2168 = vadd.f32 0.0, %v2167
    %v2169 = vpop.f32.mrb[0].mxu0
    %v2170 = vpop.f32.mrb[0].mxu0
    %v2171 = vpop.f32.mrb[0].mxu0
    %2172 = vdwg.mxu0
    %v2173 = vadd.f32 %v2126, %v2168
    %v2174 = vadd.f32 %v2173, %v1426
    %v2175 = vmax.f32 %v2174, 0.0
    %2176 = vst.msk [vmem:[#allocation3 + $0x3] sm:$0x7] %vm1430, %v2175
    %v2177 = vld [vmem:[%s1798] ss:$2 sm:$0x7]
    %v2178 = vpack.c.bf16 %v2177, %v2177
    %v2179 = vld [vmem:[%s1845] ss:$2 sm:$0x7]
    %v2180 = vpack.c.bf16 %v2179, %v2179
    %v2182 = vsel %vm384, %v2180, 0
    %2184 = vmatprep.subr.bf16.mxu0 0
    %2185 = vmatpush1.bf16.msra.mxu0 %v494
    %2186 = vmatprep.subr.bf16.mxu0 0
    %2187 = vmatpush1.bf16.msra.mxu0 %v495
    %2188 = vmatprep.subr.bf16.mxu0 0
    %2189 = vmatpush1.bf16.msra.mxu0 0
    %2190 = vmatprep.subr.bf16.mxu0 0
    %2191 = vmatpush1.bf16.msra.mxu0 0
    %2192 = vmatprep.subr.bf16.mxu0 0
    %2193 = vmatpush1.bf16.msra.mxu0 0
    %2194 = vmatprep.subr.bf16.mxu0 0
    %2195 = vmatpush1.bf16.msra.mxu0 0
    %2196 = vmatprep.subr.bf16.mxu0 0
    %2197 = vmatpush1.bf16.msra.mxu0 0
    %2198 = vmatprep.subr.bf16.mxu0 0
    %2199 = vmatpush1.bf16.msra.mxu0 0
    %2200 = vmatprep.subr.bf16.mxu0 0
    %2201 = vmatpush1.bf16.msra.mxu0 0
    %2202 = vmatprep.subr.bf16.mxu0 0
    %2203 = vmatpush1.bf16.msra.mxu0 0
    %2204 = vmatprep.subr.bf16.mxu0 0
    %2205 = vmatpush1.bf16.msra.mxu0 0
    %2206 = vmatprep.subr.bf16.mxu0 0
    %2207 = vmatpush1.bf16.msra.mxu0 0
    %2208 = vmatprep.subr.bf16.mxu0 0
    %2209 = vmatpush1.bf16.msra.mxu0 0
    %2210 = vmatprep.subr.bf16.mxu0 0
    %2211 = vmatpush1.bf16.msra.mxu0 0
    %2212 = vmatprep.subr.bf16.mxu0 0
    %2213 = vmatpush1.bf16.msra.mxu0 0
    %2214 = vmatprep.subr.bf16.mxu0 0
    %2215 = vmatpush1.bf16.msra.mxu0 0
    %2216 = vmatprep.mubr.bf16.mxu0 0
    %2217 = vmatmul.mubr.bf16.gmra.mrb[0].mxu0 %v2182
    %v2218 = vpop.f32.mrb[0].mxu0
    %v2219 = vadd.f32 0.0, %v2218
    %v2220 = vpop.f32.mrb[0].mxu0
    %v2221 = vpop.f32.mrb[0].mxu0
    %v2222 = vpop.f32.mrb[0].mxu0
    %2223 = vdwg.mxu0
    %v2225 = vsel %vm384, %v2178, 0
    %2227 = vmatprep.subr.bf16.mxu0 0
    %2228 = vmatpush1.bf16.msra.mxu0 %v549
    %2229 = vmatprep.subr.bf16.mxu0 0
    %2230 = vmatpush1.bf16.msra.mxu0 %v550
    %2231 = vmatprep.subr.bf16.mxu0 0
    %2232 = vmatpush1.bf16.msra.mxu0 0
    %2233 = vmatprep.subr.bf16.mxu0 0
    %2234 = vmatpush1.bf16.msra.mxu0 0
    %2235 = vmatprep.subr.bf16.mxu0 0
    %2236 = vmatpush1.bf16.msra.mxu0 0
    %2237 = vmatprep.subr.bf16.mxu0 0
    %2238 = vmatpush1.bf16.msra.mxu0 0
    %2239 = vmatprep.subr.bf16.mxu0 0
    %2240 = vmatpush1.bf16.msra.mxu0 0
    %2241 = vmatprep.subr.bf16.mxu0 0
    %2242 = vmatpush1.bf16.msra.mxu0 0
    %2243 = vmatprep.subr.bf16.mxu0 0
    %2244 = vmatpush1.bf16.msra.mxu0 0
    %2245 = vmatprep.subr.bf16.mxu0 0
    %2246 = vmatpush1.bf16.msra.mxu0 0
    %2247 = vmatprep.subr.bf16.mxu0 0
    %2248 = vmatpush1.bf16.msra.mxu0 0
    %2249 = vmatprep.subr.bf16.mxu0 0
    %2250 = vmatpush1.bf16.msra.mxu0 0
    %2251 = vmatprep.subr.bf16.mxu0 0
    %2252 = vmatpush1.bf16.msra.mxu0 0
    %2253 = vmatprep.subr.bf16.mxu0 0
    %2254 = vmatpush1.bf16.msra.mxu0 0
    %2255 = vmatprep.subr.bf16.mxu0 0
    %2256 = vmatpush1.bf16.msra.mxu0 0
    %2257 = vmatprep.subr.bf16.mxu0 0
    %2258 = vmatpush1.bf16.msra.mxu0 0
    %2259 = vmatprep.mubr.bf16.mxu0 0
    %2260 = vmatmul.mubr.bf16.gmra.mrb[0].mxu0 %v2225
    %v2261 = vpop.f32.mrb[0].mxu0
    %v2262 = vadd.f32 %v2219, %v2261
    %v2263 = vpop.f32.mrb[0].mxu0
    %v2264 = vpop.f32.mrb[0].mxu0
    %v2265 = vpop.f32.mrb[0].mxu0
    %2266 = vdwg.mxu0
    %v2267 = vld [vmem:[%s1892] ss:$2 sm:$0x7]
    %v2268 = vpack.c.bf16 %v2267, %v2267
    %v2270 = vsel %vm384, %v2268, 0
    %2272 = vmatprep.subr.bf16.mxu0 0
    %2273 = vmatpush1.bf16.msra.mxu0 %v607
    %2274 = vmatprep.subr.bf16.mxu0 0
    %2275 = vmatpush1.bf16.msra.mxu0 %v608
    %2276 = vmatprep.subr.bf16.mxu0 0
    %2277 = vmatpush1.bf16.msra.mxu0 0
    %2278 = vmatprep.subr.bf16.mxu0 0
    %2279 = vmatpush1.bf16.msra.mxu0 0
    %2280 = vmatprep.subr.bf16.mxu0 0
    %2281 = vmatpush1.bf16.msra.mxu0 0
    %2282 = vmatprep.subr.bf16.mxu0 0
    %2283 = vmatpush1.bf16.msra.mxu0 0
    %2284 = vmatprep.subr.bf16.mxu0 0
    %2285 = vmatpush1.bf16.msra.mxu0 0
    %2286 = vmatprep.subr.bf16.mxu0 0
    %2287 = vmatpush1.bf16.msra.mxu0 0
    %2288 = vmatprep.subr.bf16.mxu0 0
    %2289 = vmatpush1.bf16.msra.mxu0 0
    %2290 = vmatprep.subr.bf16.mxu0 0
    %2291 = vmatpush1.bf16.msra.mxu0 0
    %2292 = vmatprep.subr.bf16.mxu0 0
    %2293 = vmatpush1.bf16.msra.mxu0 0
    %2294 = vmatprep.subr.bf16.mxu0 0
    %2295 = vmatpush1.bf16.msra.mxu0 0
    %2296 = vmatprep.subr.bf16.mxu0 0
    %2297 = vmatpush1.bf16.msra.mxu0 0
    %2298 = vmatprep.subr.bf16.mxu0 0
    %2299 = vmatpush1.bf16.msra.mxu0 0
    %2300 = vmatprep.subr.bf16.mxu0 0
    %2301 = vmatpush1.bf16.msra.mxu0 0
    %2302 = vmatprep.subr.bf16.mxu0 0
    %2303 = vmatpush1.bf16.msra.mxu0 0
    %2304 = vmatprep.mubr.bf16.mxu0 0
    %2305 = vmatmul.mubr.bf16.gmra.mrb[0].mxu0 %v2270
    %v2306 = vpop.f32.mrb[0].mxu0
    %v2307 = vadd.f32 0.0, %v2306
    %v2308 = vpop.f32.mrb[0].mxu0
    %v2309 = vpop.f32.mrb[0].mxu0
    %v2310 = vpop.f32.mrb[0].mxu0
    %2311 = vdwg.mxu0
    %v2312 = vadd.f32 %v2262, %v2307
    %v2313 = vld [vmem:[%s1939] ss:$2 sm:$0x7]
    %v2314 = vpack.c.bf16 %v2313, %v2313
    %v2316 = vsel %vm384, %v2314, 0
    %2318 = vmatprep.subr.bf16.mxu0 0
    %2319 = vmatpush1.bf16.msra.mxu0 %v666
    %2320 = vmatprep.subr.bf16.mxu0 0
    %2321 = vmatpush1.bf16.msra.mxu0 %v667
    %2322 = vmatprep.subr.bf16.mxu0 0
    %2323 = vmatpush1.bf16.msra.mxu0 0
    %2324 = vmatprep.subr.bf16.mxu0 0
    %2325 = vmatpush1.bf16.msra.mxu0 0
    %2326 = vmatprep.subr.bf16.mxu0 0
    %2327 = vmatpush1.bf16.msra.mxu0 0
    %2328 = vmatprep.subr.bf16.mxu0 0
    %2329 = vmatpush1.bf16.msra.mxu0 0
    %2330 = vmatprep.subr.bf16.mxu0 0
    %2331 = vmatpush1.bf16.msra.mxu0 0
    %2332 = vmatprep.subr.bf16.mxu0 0
    %2333 = vmatpush1.bf16.msra.mxu0 0
    %2334 = vmatprep.subr.bf16.mxu0 0
    %2335 = vmatpush1.bf16.msra.mxu0 0
    %2336 = vmatprep.subr.bf16.mxu0 0
    %2337 = vmatpush1.bf16.msra.mxu0 0
    %2338 = vmatprep.subr.bf16.mxu0 0
    %2339 = vmatpush1.bf16.msra.mxu0 0
    %2340 = vmatprep.subr.bf16.mxu0 0
    %2341 = vmatpush1.bf16.msra.mxu0 0
    %2342 = vmatprep.subr.bf16.mxu0 0
    %2343 = vmatpush1.bf16.msra.mxu0 0
    %2344 = vmatprep.subr.bf16.mxu0 0
    %2345 = vmatpush1.bf16.msra.mxu0 0
    %2346 = vmatprep.subr.bf16.mxu0 0
    %2347 = vmatpush1.bf16.msra.mxu0 0
    %2348 = vmatprep.subr.bf16.mxu0 0
    %2349 = vmatpush1.bf16.msra.mxu0 0
    %2350 = vmatprep.mubr.bf16.mxu0 0
    %2351 = vmatmul.mubr.bf16.gmra.mrb[0].mxu0 %v2316
    %v2352 = vpop.f32.mrb[0].mxu0
    %v2353 = vadd.f32 0.0, %v2352
    %v2354 = vpop.f32.mrb[0].mxu0
    %v2355 = vpop.f32.mrb[0].mxu0
    %v2356 = vpop.f32.mrb[0].mxu0
    %2357 = vdwg.mxu0
    %v2358 = vadd.f32 %v2312, %v2353
    %v2359 = vld [vmem:[%s1986] ss:$2 sm:$0x7]
    %v2360 = vpack.c.bf16 %v2359, %v2359
    %v2362 = vsel %vm384, %v2360, 0
    %2364 = vmatprep.subr.bf16.mxu0 0
    %2365 = vmatpush1.bf16.msra.mxu0 %v725
    %2366 = vmatprep.subr.bf16.mxu0 0
    %2367 = vmatpush1.bf16.msra.mxu0 %v726
    %2368 = vmatprep.subr.bf16.mxu0 0
    %2369 = vmatpush1.bf16.msra.mxu0 0
    %2370 = vmatprep.subr.bf16.mxu0 0
    %2371 = vmatpush1.bf16.msra.mxu0 0
    %2372 = vmatprep.subr.bf16.mxu0 0
    %2373 = vmatpush1.bf16.msra.mxu0 0
    %2374 = vmatprep.subr.bf16.mxu0 0
    %2375 = vmatpush1.bf16.msra.mxu0 0
    %2376 = vmatprep.subr.bf16.mxu0 0
    %2377 = vmatpush1.bf16.msra.mxu0 0
    %2378 = vmatprep.subr.bf16.mxu0 0
    %2379 = vmatpush1.bf16.msra.mxu0 0
    %2380 = vmatprep.subr.bf16.mxu0 0
    %2381 = vmatpush1.bf16.msra.mxu0 0
    %2382 = vmatprep.subr.bf16.mxu0 0
    %2383 = vmatpush1.bf16.msra.mxu0 0
    %2384 = vmatprep.subr.bf16.mxu0 0
    %2385 = vmatpush1.bf16.msra.mxu0 0
    %2386 = vmatprep.subr.bf16.mxu0 0
    %2387 = vmatpush1.bf16.msra.mxu0 0
    %2388 = vmatprep.subr.bf16.mxu0 0
    %2389 = vmatpush1.bf16.msra.mxu0 0
    %2390 = vmatprep.subr.bf16.mxu0 0
    %2391 = vmatpush1.bf16.msra.mxu0 0
    %2392 = vmatprep.subr.bf16.mxu0 0
    %2393 = vmatpush1.bf16.msra.mxu0 0
    %2394 = vmatprep.subr.bf16.mxu0 0
    %2395 = vmatpush1.bf16.msra.mxu0 0
    %2396 = vmatprep.mubr.bf16.mxu0 0
    %2397 = vmatmul.mubr.bf16.gmra.mrb[0].mxu0 %v2362
    %v2398 = vpop.f32.mrb[0].mxu0
    %v2399 = vadd.f32 0.0, %v2398
    %v2400 = vpop.f32.mrb[0].mxu0
    %v2401 = vpop.f32.mrb[0].mxu0
    %v2402 = vpop.f32.mrb[0].mxu0
    %2403 = vdwg.mxu0
    %v2404 = vadd.f32 %v2358, %v2399
    %v2405 = vld [vmem:[%s2033] ss:$2 sm:$0x7]
    %v2406 = vpack.c.bf16 %v2405, %v2405
    %v2408 = vsel %vm384, %v2406, 0
    %2410 = vmatprep.subr.bf16.mxu0 0
    %2411 = vmatpush1.bf16.msra.mxu0 %v784
    %2412 = vmatprep.subr.bf16.mxu0 0
    %2413 = vmatpush1.bf16.msra.mxu0 %v785
    %2414 = vmatprep.subr.bf16.mxu0 0
    %2415 = vmatpush1.bf16.msra.mxu0 0
    %2416 = vmatprep.subr.bf16.mxu0 0
    %2417 = vmatpush1.bf16.msra.mxu0 0
    %2418 = vmatprep.subr.bf16.mxu0 0
    %2419 = vmatpush1.bf16.msra.mxu0 0
    %2420 = vmatprep.subr.bf16.mxu0 0
    %2421 = vmatpush1.bf16.msra.mxu0 0
    %2422 = vmatprep.subr.bf16.mxu0 0
    %2423 = vmatpush1.bf16.msra.mxu0 0
    %2424 = vmatprep.subr.bf16.mxu0 0
    %2425 = vmatpush1.bf16.msra.mxu0 0
    %2426 = vmatprep.subr.bf16.mxu0 0
    %2427 = vmatpush1.bf16.msra.mxu0 0
    %2428 = vmatprep.subr.bf16.mxu0 0
    %2429 = vmatpush1.bf16.msra.mxu0 0
    %2430 = vmatprep.subr.bf16.mxu0 0
    %2431 = vmatpush1.bf16.msra.mxu0 0
    %2432 = vmatprep.subr.bf16.mxu0 0
    %2433 = vmatpush1.bf16.msra.mxu0 0
    %2434 = vmatprep.subr.bf16.mxu0 0
    %2435 = vmatpush1.bf16.msra.mxu0 0
    %2436 = vmatprep.subr.bf16.mxu0 0
    %2437 = vmatpush1.bf16.msra.mxu0 0
    %2438 = vmatprep.subr.bf16.mxu0 0
    %2439 = vmatpush1.bf16.msra.mxu0 0
    %2440 = vmatprep.subr.bf16.mxu0 0
    %2441 = vmatpush1.bf16.msra.mxu0 0
    %2442 = vmatprep.mubr.bf16.mxu0 0
    %2443 = vmatmul.mubr.bf16.gmra.mrb[0].mxu0 %v2408
    %v2444 = vpop.f32.mrb[0].mxu0
    %v2445 = vadd.f32 0.0, %v2444
    %v2446 = vpop.f32.mrb[0].mxu0
    %v2447 = vpop.f32.mrb[0].mxu0
    %v2448 = vpop.f32.mrb[0].mxu0
    %2449 = vdwg.mxu0
    %v2450 = vadd.f32 %v2404, %v2445
    %v2451 = vld [vmem:[%s2080] ss:$2 sm:$0x7]
    %v2452 = vpack.c.bf16 %v2451, %v2451
    %v2454 = vsel %vm384, %v2452, 0
    %2456 = vmatprep.subr.bf16.mxu0 0
    %2457 = vmatpush1.bf16.msra.mxu0 %v843
    %2458 = vmatprep.subr.bf16.mxu0 0
    %2459 = vmatpush1.bf16.msra.mxu0 %v844
    %2460 = vmatprep.subr.bf16.mxu0 0
    %2461 = vmatpush1.bf16.msra.mxu0 0
    %2462 = vmatprep.subr.bf16.mxu0 0
    %2463 = vmatpush1.bf16.msra.mxu0 0
    %2464 = vmatprep.subr.bf16.mxu0 0
    %2465 = vmatpush1.bf16.msra.mxu0 0
    %2466 = vmatprep.subr.bf16.mxu0 0
    %2467 = vmatpush1.bf16.msra.mxu0 0
    %2468 = vmatprep.subr.bf16.mxu0 0
    %2469 = vmatpush1.bf16.msra.mxu0 0
    %2470 = vmatprep.subr.bf16.mxu0 0
    %2471 = vmatpush1.bf16.msra.mxu0 0
    %2472 = vmatprep.subr.bf16.mxu0 0
    %2473 = vmatpush1.bf16.msra.mxu0 0
    %2474 = vmatprep.subr.bf16.mxu0 0
    %2475 = vmatpush1.bf16.msra.mxu0 0
    %2476 = vmatprep.subr.bf16.mxu0 0
    %2477 = vmatpush1.bf16.msra.mxu0 0
    %2478 = vmatprep.subr.bf16.mxu0 0
    %2479 = vmatpush1.bf16.msra.mxu0 0
    %2480 = vmatprep.subr.bf16.mxu0 0
    %2481 = vmatpush1.bf16.msra.mxu0 0
    %2482 = vmatprep.subr.bf16.mxu0 0
    %2483 = vmatpush1.bf16.msra.mxu0 0
    %2484 = vmatprep.subr.bf16.mxu0 0
    %2485 = vmatpush1.bf16.msra.mxu0 0
    %2486 = vmatprep.subr.bf16.mxu0 0
    %2487 = vmatpush1.bf16.msra.mxu0 0
    %2488 = vmatprep.mubr.bf16.mxu0 0
    %2489 = vmatmul.mubr.bf16.gmra.mrb[0].mxu0 %v2454
    %v2490 = vpop.f32.mrb[0].mxu0
    %v2491 = vadd.f32 0.0, %v2490
    %v2492 = vpop.f32.mrb[0].mxu0
    %v2493 = vpop.f32.mrb[0].mxu0
    %v2494 = vpop.f32.mrb[0].mxu0
    %2495 = vdwg.mxu0
    %v2496 = vadd.f32 %v2450, %v2491
    %v2497 = vld [vmem:[%s2127] ss:$2 sm:$0x7]
    %v2498 = vpack.c.bf16 %v2497, %v2497
    %v2500 = vsel %vm384, %v2498, 0
    %2502 = vmatprep.subr.bf16.mxu0 0
    %2503 = vmatpush1.bf16.msra.mxu0 %v902
    %2504 = vmatprep.subr.bf16.mxu0 0
    %2505 = vmatpush1.bf16.msra.mxu0 %v903
    %2506 = vmatprep.subr.bf16.mxu0 0
    %2507 = vmatpush1.bf16.msra.mxu0 0
    %2508 = vmatprep.subr.bf16.mxu0 0
    %2509 = vmatpush1.bf16.msra.mxu0 0
    %2510 = vmatprep.subr.bf16.mxu0 0
    %2511 = vmatpush1.bf16.msra.mxu0 0
    %2512 = vmatprep.subr.bf16.mxu0 0
    %2513 = vmatpush1.bf16.msra.mxu0 0
    %2514 = vmatprep.subr.bf16.mxu0 0
    %2515 = vmatpush1.bf16.msra.mxu0 0
    %2516 = vmatprep.subr.bf16.mxu0 0
    %2517 = vmatpush1.bf16.msra.mxu0 0
    %2518 = vmatprep.subr.bf16.mxu0 0
    %2519 = vmatpush1.bf16.msra.mxu0 0
    %2520 = vmatprep.subr.bf16.mxu0 0
    %2521 = vmatpush1.bf16.msra.mxu0 0
    %2522 = vmatprep.subr.bf16.mxu0 0
    %2523 = vmatpush1.bf16.msra.mxu0 0
    %2524 = vmatprep.subr.bf16.mxu0 0
    %2525 = vmatpush1.bf16.msra.mxu0 0
    %2526 = vmatprep.subr.bf16.mxu0 0
    %2527 = vmatpush1.bf16.msra.mxu0 0
    %2528 = vmatprep.subr.bf16.mxu0 0
    %2529 = vmatpush1.bf16.msra.mxu0 0
    %2530 = vmatprep.subr.bf16.mxu0 0
    %2531 = vmatpush1.bf16.msra.mxu0 0
    %2532 = vmatprep.subr.bf16.mxu0 0
    %2533 = vmatpush1.bf16.msra.mxu0 0
    %2534 = vmatprep.mubr.bf16.mxu0 0
    %2535 = vmatmul.mubr.bf16.gmra.mrb[0].mxu0 %v2500
    %v2536 = vpop.f32.mrb[0].mxu0
    %v2537 = vadd.f32 0.0, %v2536
    %v2538 = vpop.f32.mrb[0].mxu0
    %v2539 = vpop.f32.mrb[0].mxu0
    %v2540 = vpop.f32.mrb[0].mxu0
    %2541 = vdwg.mxu0
    %v2542 = vadd.f32 %v2496, %v2537
    %s2543 = scalar_lea.vmem [#allocation2], 48
    %v2544 = vld [vmem:[%s2543] ss:$2 sm:$0x7]
    %v2545 = vpack.c.bf16 %v2544, %v2544
    %v2547 = vsel %vm384, %v2545, 0
    %2549 = vmatprep.subr.bf16.mxu0 0
    %2550 = vmatpush1.bf16.msra.mxu0 %v961
    %2551 = vmatprep.subr.bf16.mxu0 0
    %2552 = vmatpush1.bf16.msra.mxu0 %v962
    %2553 = vmatprep.subr.bf16.mxu0 0
    %2554 = vmatpush1.bf16.msra.mxu0 0
    %2555 = vmatprep.subr.bf16.mxu0 0
    %2556 = vmatpush1.bf16.msra.mxu0 0
    %2557 = vmatprep.subr.bf16.mxu0 0
    %2558 = vmatpush1.bf16.msra.mxu0 0
    %2559 = vmatprep.subr.bf16.mxu0 0
    %2560 = vmatpush1.bf16.msra.mxu0 0
    %2561 = vmatprep.subr.bf16.mxu0 0
    %2562 = vmatpush1.bf16.msra.mxu0 0
    %2563 = vmatprep.subr.bf16.mxu0 0
    %2564 = vmatpush1.bf16.msra.mxu0 0
    %2565 = vmatprep.subr.bf16.mxu0 0
    %2566 = vmatpush1.bf16.msra.mxu0 0
    %2567 = vmatprep.subr.bf16.mxu0 0
    %2568 = vmatpush1.bf16.msra.mxu0 0
    %2569 = vmatprep.subr.bf16.mxu0 0
    %2570 = vmatpush1.bf16.msra.mxu0 0
    %2571 = vmatprep.subr.bf16.mxu0 0
    %2572 = vmatpush1.bf16.msra.mxu0 0
    %2573 = vmatprep.subr.bf16.mxu0 0
    %2574 = vmatpush1.bf16.msra.mxu0 0
    %2575 = vmatprep.subr.bf16.mxu0 0
    %2576 = vmatpush1.bf16.msra.mxu0 0
    %2577 = vmatprep.subr.bf16.mxu0 0
    %2578 = vmatpush1.bf16.msra.mxu0 0
    %2579 = vmatprep.subr.bf16.mxu0 0
    %2580 = vmatpush1.bf16.msra.mxu0 0
    %2581 = vmatprep.mubr.bf16.mxu0 0
    %2582 = vmatmul.mubr.bf16.gmra.mrb[0].mxu0 %v2547
    %v2583 = vpop.f32.mrb[0].mxu0
    %v2584 = vadd.f32 0.0, %v2583
    %v2585 = vpop.f32.mrb[0].mxu0
    %v2586 = vpop.f32.mrb[0].mxu0
    %v2587 = vpop.f32.mrb[0].mxu0
    %2588 = vdwg.mxu0
    %v2589 = vadd.f32 %v2542, %v2584
    %s2590 = scalar_lea.vmem [#allocation2], 49
    %v2591 = vld [vmem:[%s2590] ss:$2 sm:$0x7]
    %v2592 = vpack.c.bf16 %v2591, %v2591
    %v2594 = vsel %vm384, %v2592, 0
    %2596 = vmatprep.subr.bf16.mxu0 0
    %2597 = vmatpush1.bf16.msra.mxu0 %v1020
    %2598 = vmatprep.subr.bf16.mxu0 0
    %2599 = vmatpush1.bf16.msra.mxu0 %v1021
    %2600 = vmatprep.subr.bf16.mxu0 0
    %2601 = vmatpush1.bf16.msra.mxu0 0
    %2602 = vmatprep.subr.bf16.mxu0 0
    %2603 = vmatpush1.bf16.msra.mxu0 0
    %2604 = vmatprep.subr.bf16.mxu0 0
    %2605 = vmatpush1.bf16.msra.mxu0 0
    %2606 = vmatprep.subr.bf16.mxu0 0
    %2607 = vmatpush1.bf16.msra.mxu0 0
    %2608 = vmatprep.subr.bf16.mxu0 0
    %2609 = vmatpush1.bf16.msra.mxu0 0
    %2610 = vmatprep.subr.bf16.mxu0 0
    %2611 = vmatpush1.bf16.msra.mxu0 0
    %2612 = vmatprep.subr.bf16.mxu0 0
    %2613 = vmatpush1.bf16.msra.mxu0 0
    %2614 = vmatprep.subr.bf16.mxu0 0
    %2615 = vmatpush1.bf16.msra.mxu0 0
    %2616 = vmatprep.subr.bf16.mxu0 0
    %2617 = vmatpush1.bf16.msra.mxu0 0
    %2618 = vmatprep.subr.bf16.mxu0 0
    %2619 = vmatpush1.bf16.msra.mxu0 0
    %2620 = vmatprep.subr.bf16.mxu0 0
    %2621 = vmatpush1.bf16.msra.mxu0 0
    %2622 = vmatprep.subr.bf16.mxu0 0
    %2623 = vmatpush1.bf16.msra.mxu0 0
    %2624 = vmatprep.subr.bf16.mxu0 0
    %2625 = vmatpush1.bf16.msra.mxu0 0
    %2626 = vmatprep.subr.bf16.mxu0 0
    %2627 = vmatpush1.bf16.msra.mxu0 0
    %2628 = vmatprep.mubr.bf16.mxu0 0
    %2629 = vmatmul.mubr.bf16.gmra.mrb[0].mxu0 %v2594
    %v2630 = vpop.f32.mrb[0].mxu0
    %v2631 = vadd.f32 0.0, %v2630
    %v2632 = vpop.f32.mrb[0].mxu0
    %v2633 = vpop.f32.mrb[0].mxu0
    %v2634 = vpop.f32.mrb[0].mxu0
    %2635 = vdwg.mxu0
    %v2636 = vadd.f32 %v2589, %v2631
    %s2637 = scalar_lea.vmem [#allocation2], 50
    %v2638 = vld [vmem:[%s2637] ss:$2 sm:$0x7]
    %v2639 = vpack.c.bf16 %v2638, %v2638
    %v2641 = vsel %vm384, %v2639, 0
    %2643 = vmatprep.subr.bf16.mxu0 0
    %2644 = vmatpush1.bf16.msra.mxu0 %v1079
    %2645 = vmatprep.subr.bf16.mxu0 0
    %2646 = vmatpush1.bf16.msra.mxu0 %v1080
    %2647 = vmatprep.subr.bf16.mxu0 0
    %2648 = vmatpush1.bf16.msra.mxu0 0
    %2649 = vmatprep.subr.bf16.mxu0 0
    %2650 = vmatpush1.bf16.msra.mxu0 0
    %2651 = vmatprep.subr.bf16.mxu0 0
    %2652 = vmatpush1.bf16.msra.mxu0 0
    %2653 = vmatprep.subr.bf16.mxu0 0
    %2654 = vmatpush1.bf16.msra.mxu0 0
    %2655 = vmatprep.subr.bf16.mxu0 0
    %2656 = vmatpush1.bf16.msra.mxu0 0
    %2657 = vmatprep.subr.bf16.mxu0 0
    %2658 = vmatpush1.bf16.msra.mxu0 0
    %2659 = vmatprep.subr.bf16.mxu0 0
    %2660 = vmatpush1.bf16.msra.mxu0 0
    %2661 = vmatprep.subr.bf16.mxu0 0
    %2662 = vmatpush1.bf16.msra.mxu0 0
    %2663 = vmatprep.subr.bf16.mxu0 0
    %2664 = vmatpush1.bf16.msra.mxu0 0
    %2665 = vmatprep.subr.bf16.mxu0 0
    %2666 = vmatpush1.bf16.msra.mxu0 0
    %2667 = vmatprep.subr.bf16.mxu0 0
    %2668 = vmatpush1.bf16.msra.mxu0 0
    %2669 = vmatprep.subr.bf16.mxu0 0
    %2670 = vmatpush1.bf16.msra.mxu0 0
    %2671 = vmatprep.subr.bf16.mxu0 0
    %2672 = vmatpush1.bf16.msra.mxu0 0
    %2673 = vmatprep.subr.bf16.mxu0 0
    %2674 = vmatpush1.bf16.msra.mxu0 0
    %2675 = vmatprep.mubr.bf16.mxu0 0
    %2676 = vmatmul.mubr.bf16.gmra.mrb[0].mxu0 %v2641
    %v2677 = vpop.f32.mrb[0].mxu0
    %v2678 = vadd.f32 0.0, %v2677
    %v2679 = vpop.f32.mrb[0].mxu0
    %v2680 = vpop.f32.mrb[0].mxu0
    %v2681 = vpop.f32.mrb[0].mxu0
    %2682 = vdwg.mxu0
    %v2683 = vadd.f32 %v2636, %v2678
    %s2684 = scalar_lea.vmem [#allocation2], 51
    %v2685 = vld [vmem:[%s2684] ss:$2 sm:$0x7]
    %v2686 = vpack.c.bf16 %v2685, %v2685
    %v2688 = vsel %vm384, %v2686, 0
    %2690 = vmatprep.subr.bf16.mxu0 0
    %2691 = vmatpush1.bf16.msra.mxu0 %v1138
    %2692 = vmatprep.subr.bf16.mxu0 0
    %2693 = vmatpush1.bf16.msra.mxu0 %v1139
    %2694 = vmatprep.subr.bf16.mxu0 0
    %2695 = vmatpush1.bf16.msra.mxu0 0
    %2696 = vmatprep.subr.bf16.mxu0 0
    %2697 = vmatpush1.bf16.msra.mxu0 0
    %2698 = vmatprep.subr.bf16.mxu0 0
    %2699 = vmatpush1.bf16.msra.mxu0 0
    %2700 = vmatprep.subr.bf16.mxu0 0
    %2701 = vmatpush1.bf16.msra.mxu0 0
    %2702 = vmatprep.subr.bf16.mxu0 0
    %2703 = vmatpush1.bf16.msra.mxu0 0
    %2704 = vmatprep.subr.bf16.mxu0 0
    %2705 = vmatpush1.bf16.msra.mxu0 0
    %2706 = vmatprep.subr.bf16.mxu0 0
    %2707 = vmatpush1.bf16.msra.mxu0 0
    %2708 = vmatprep.subr.bf16.mxu0 0
    %2709 = vmatpush1.bf16.msra.mxu0 0
    %2710 = vmatprep.subr.bf16.mxu0 0
    %2711 = vmatpush1.bf16.msra.mxu0 0
    %2712 = vmatprep.subr.bf16.mxu0 0
    %2713 = vmatpush1.bf16.msra.mxu0 0
    %2714 = vmatprep.subr.bf16.mxu0 0
    %2715 = vmatpush1.bf16.msra.mxu0 0
    %2716 = vmatprep.subr.bf16.mxu0 0
    %2717 = vmatpush1.bf16.msra.mxu0 0
    %2718 = vmatprep.subr.bf16.mxu0 0
    %2719 = vmatpush1.bf16.msra.mxu0 0
    %2720 = vmatprep.subr.bf16.mxu0 0
    %2721 = vmatpush1.bf16.msra.mxu0 0
    %2722 = vmatprep.mubr.bf16.mxu0 0
    %2723 = vmatmul.mubr.bf16.gmra.mrb[0].mxu0 %v2688
    %v2724 = vpop.f32.mrb[0].mxu0
    %v2725 = vadd.f32 0.0, %v2724
    %v2726 = vpop.f32.mrb[0].mxu0
    %v2727 = vpop.f32.mrb[0].mxu0
    %v2728 = vpop.f32.mrb[0].mxu0
    %2729 = vdwg.mxu0
    %v2730 = vadd.f32 %v2683, %v2725
    %s2731 = scalar_lea.vmem [#allocation2], 56
    %v2732 = vld [vmem:[%s2731] ss:$2 sm:$0x7]
    %v2733 = vpack.c.bf16 %v2732, %v2732
    %v2735 = vsel %vm384, %v2733, 0
    %2737 = vmatprep.subr.bf16.mxu0 0
    %2738 = vmatpush1.bf16.msra.mxu0 %v1197
    %2739 = vmatprep.subr.bf16.mxu0 0
    %2740 = vmatpush1.bf16.msra.mxu0 %v1198
    %2741 = vmatprep.subr.bf16.mxu0 0
    %2742 = vmatpush1.bf16.msra.mxu0 0
    %2743 = vmatprep.subr.bf16.mxu0 0
    %2744 = vmatpush1.bf16.msra.mxu0 0
    %2745 = vmatprep.subr.bf16.mxu0 0
    %2746 = vmatpush1.bf16.msra.mxu0 0
    %2747 = vmatprep.subr.bf16.mxu0 0
    %2748 = vmatpush1.bf16.msra.mxu0 0
    %2749 = vmatprep.subr.bf16.mxu0 0
    %2750 = vmatpush1.bf16.msra.mxu0 0
    %2751 = vmatprep.subr.bf16.mxu0 0
    %2752 = vmatpush1.bf16.msra.mxu0 0
    %2753 = vmatprep.subr.bf16.mxu0 0
    %2754 = vmatpush1.bf16.msra.mxu0 0
    %2755 = vmatprep.subr.bf16.mxu0 0
    %2756 = vmatpush1.bf16.msra.mxu0 0
    %2757 = vmatprep.subr.bf16.mxu0 0
    %2758 = vmatpush1.bf16.msra.mxu0 0
    %2759 = vmatprep.subr.bf16.mxu0 0
    %2760 = vmatpush1.bf16.msra.mxu0 0
    %2761 = vmatprep.subr.bf16.mxu0 0
    %2762 = vmatpush1.bf16.msra.mxu0 0
    %2763 = vmatprep.subr.bf16.mxu0 0
    %2764 = vmatpush1.bf16.msra.mxu0 0
    %2765 = vmatprep.subr.bf16.mxu0 0
    %2766 = vmatpush1.bf16.msra.mxu0 0
    %2767 = vmatprep.subr.bf16.mxu0 0
    %2768 = vmatpush1.bf16.msra.mxu0 0
    %2769 = vmatprep.mubr.bf16.mxu0 0
    %2770 = vmatmul.mubr.bf16.gmra.mrb[0].mxu0 %v2735
    %v2771 = vpop.f32.mrb[0].mxu0
    %v2772 = vadd.f32 0.0, %v2771
    %v2773 = vpop.f32.mrb[0].mxu0
    %v2774 = vpop.f32.mrb[0].mxu0
    %v2775 = vpop.f32.mrb[0].mxu0
    %2776 = vdwg.mxu0
    %v2777 = vadd.f32 %v2730, %v2772
    %s2778 = scalar_lea.vmem [#allocation2], 57
    %v2779 = vld [vmem:[%s2778] ss:$2 sm:$0x7]
    %v2780 = vpack.c.bf16 %v2779, %v2779
    %v2782 = vsel %vm384, %v2780, 0
    %2784 = vmatprep.subr.bf16.mxu0 0
    %2785 = vmatpush1.bf16.msra.mxu0 %v1256
    %2786 = vmatprep.subr.bf16.mxu0 0
    %2787 = vmatpush1.bf16.msra.mxu0 %v1257
    %2788 = vmatprep.subr.bf16.mxu0 0
    %2789 = vmatpush1.bf16.msra.mxu0 0
    %2790 = vmatprep.subr.bf16.mxu0 0
    %2791 = vmatpush1.bf16.msra.mxu0 0
    %2792 = vmatprep.subr.bf16.mxu0 0
    %2793 = vmatpush1.bf16.msra.mxu0 0
    %2794 = vmatprep.subr.bf16.mxu0 0
    %2795 = vmatpush1.bf16.msra.mxu0 0
    %2796 = vmatprep.subr.bf16.mxu0 0
    %2797 = vmatpush1.bf16.msra.mxu0 0
    %2798 = vmatprep.subr.bf16.mxu0 0
    %2799 = vmatpush1.bf16.msra.mxu0 0
    %2800 = vmatprep.subr.bf16.mxu0 0
    %2801 = vmatpush1.bf16.msra.mxu0 0
    %2802 = vmatprep.subr.bf16.mxu0 0
    %2803 = vmatpush1.bf16.msra.mxu0 0
    %2804 = vmatprep.subr.bf16.mxu0 0
    %2805 = vmatpush1.bf16.msra.mxu0 0
    %2806 = vmatprep.subr.bf16.mxu0 0
    %2807 = vmatpush1.bf16.msra.mxu0 0
    %2808 = vmatprep.subr.bf16.mxu0 0
    %2809 = vmatpush1.bf16.msra.mxu0 0
    %2810 = vmatprep.subr.bf16.mxu0 0
    %2811 = vmatpush1.bf16.msra.mxu0 0
    %2812 = vmatprep.subr.bf16.mxu0 0
    %2813 = vmatpush1.bf16.msra.mxu0 0
    %2814 = vmatprep.subr.bf16.mxu0 0
    %2815 = vmatpush1.bf16.msra.mxu0 0
    %2816 = vmatprep.mubr.bf16.mxu0 0
    %2817 = vmatmul.mubr.bf16.gmra.mrb[0].mxu0 %v2782
    %v2818 = vpop.f32.mrb[0].mxu0
    %v2819 = vadd.f32 0.0, %v2818
    %v2820 = vpop.f32.mrb[0].mxu0
    %v2821 = vpop.f32.mrb[0].mxu0
    %v2822 = vpop.f32.mrb[0].mxu0
    %2823 = vdwg.mxu0
    %v2824 = vadd.f32 %v2777, %v2819
    %s2825 = scalar_lea.vmem [#allocation2], 58
    %v2826 = vld [vmem:[%s2825] ss:$2 sm:$0x7]
    %v2827 = vpack.c.bf16 %v2826, %v2826
    %v2829 = vsel %vm384, %v2827, 0
    %2831 = vmatprep.subr.bf16.mxu0 0
    %2832 = vmatpush1.bf16.msra.mxu0 %v1315
    %2833 = vmatprep.subr.bf16.mxu0 0
    %2834 = vmatpush1.bf16.msra.mxu0 %v1316
    %2835 = vmatprep.subr.bf16.mxu0 0
    %2836 = vmatpush1.bf16.msra.mxu0 0
    %2837 = vmatprep.subr.bf16.mxu0 0
    %2838 = vmatpush1.bf16.msra.mxu0 0
    %2839 = vmatprep.subr.bf16.mxu0 0
    %2840 = vmatpush1.bf16.msra.mxu0 0
    %2841 = vmatprep.subr.bf16.mxu0 0
    %2842 = vmatpush1.bf16.msra.mxu0 0
    %2843 = vmatprep.subr.bf16.mxu0 0
    %2844 = vmatpush1.bf16.msra.mxu0 0
    %2845 = vmatprep.subr.bf16.mxu0 0
    %2846 = vmatpush1.bf16.msra.mxu0 0
    %2847 = vmatprep.subr.bf16.mxu0 0
    %2848 = vmatpush1.bf16.msra.mxu0 0
    %2849 = vmatprep.subr.bf16.mxu0 0
    %2850 = vmatpush1.bf16.msra.mxu0 0
    %2851 = vmatprep.subr.bf16.mxu0 0
    %2852 = vmatpush1.bf16.msra.mxu0 0
    %2853 = vmatprep.subr.bf16.mxu0 0
    %2854 = vmatpush1.bf16.msra.mxu0 0
    %2855 = vmatprep.subr.bf16.mxu0 0
    %2856 = vmatpush1.bf16.msra.mxu0 0
    %2857 = vmatprep.subr.bf16.mxu0 0
    %2858 = vmatpush1.bf16.msra.mxu0 0
    %2859 = vmatprep.subr.bf16.mxu0 0
    %2860 = vmatpush1.bf16.msra.mxu0 0
    %2861 = vmatprep.subr.bf16.mxu0 0
    %2862 = vmatpush1.bf16.msra.mxu0 0
    %2863 = vmatprep.mubr.bf16.mxu0 0
    %2864 = vmatmul.mubr.bf16.gmra.mrb[0].mxu0 %v2829
    %v2865 = vpop.f32.mrb[0].mxu0
    %v2866 = vadd.f32 0.0, %v2865
    %v2867 = vpop.f32.mrb[0].mxu0
    %v2868 = vpop.f32.mrb[0].mxu0
    %v2869 = vpop.f32.mrb[0].mxu0
    %2870 = vdwg.mxu0
    %v2871 = vadd.f32 %v2824, %v2866
    %s2872 = scalar_lea.vmem [#allocation2], 59
    %v2873 = vld [vmem:[%s2872] ss:$2 sm:$0x7]
    %v2874 = vpack.c.bf16 %v2873, %v2873
    %v2876 = vsel %vm384, %v2874, 0
    %2878 = vmatprep.subr.bf16.mxu0 0
    %2879 = vmatpush1.bf16.msra.mxu0 %v1374
    %2880 = vmatprep.subr.bf16.mxu0 0
    %2881 = vmatpush1.bf16.msra.mxu0 %v1375
    %2882 = vmatprep.subr.bf16.mxu0 0
    %2883 = vmatpush1.bf16.msra.mxu0 0
    %2884 = vmatprep.subr.bf16.mxu0 0
    %2885 = vmatpush1.bf16.msra.mxu0 0
    %2886 = vmatprep.subr.bf16.mxu0 0
    %2887 = vmatpush1.bf16.msra.mxu0 0
    %2888 = vmatprep.subr.bf16.mxu0 0
    %2889 = vmatpush1.bf16.msra.mxu0 0
    %2890 = vmatprep.subr.bf16.mxu0 0
    %2891 = vmatpush1.bf16.msra.mxu0 0
    %2892 = vmatprep.subr.bf16.mxu0 0
    %2893 = vmatpush1.bf16.msra.mxu0 0
    %2894 = vmatprep.subr.bf16.mxu0 0
    %2895 = vmatpush1.bf16.msra.mxu0 0
    %2896 = vmatprep.subr.bf16.mxu0 0
    %2897 = vmatpush1.bf16.msra.mxu0 0
    %2898 = vmatprep.subr.bf16.mxu0 0
    %2899 = vmatpush1.bf16.msra.mxu0 0
    %2900 = vmatprep.subr.bf16.mxu0 0
    %2901 = vmatpush1.bf16.msra.mxu0 0
    %2902 = vmatprep.subr.bf16.mxu0 0
    %2903 = vmatpush1.bf16.msra.mxu0 0
    %2904 = vmatprep.subr.bf16.mxu0 0
    %2905 = vmatpush1.bf16.msra.mxu0 0
    %2906 = vmatprep.subr.bf16.mxu0 0
    %2907 = vmatpush1.bf16.msra.mxu0 0
    %2908 = vmatprep.subr.bf16.mxu0 0
    %2909 = vmatpush1.bf16.msra.mxu0 0
    %2910 = vmatprep.mubr.bf16.mxu0 0
    %2911 = vmatmul.mubr.bf16.gmra.mrb[0].mxu0 %v2876
    %v2912 = vpop.f32.mrb[0].mxu0
    %v2913 = vadd.f32 0.0, %v2912
    %v2914 = vpop.f32.mrb[0].mxu0
    %v2915 = vpop.f32.mrb[0].mxu0
    %v2916 = vpop.f32.mrb[0].mxu0
    %2917 = vdwg.mxu0
    %v2918 = vadd.f32 %v2871, %v2913
    %v2919 = vadd.f32 %v2918, %v1426
    %v2920 = vmax.f32 %v2919, 0.0
    %2921 = vst.msk [vmem:[#allocation3 + $0x6] sm:$0x7] %vm1430, %v2920
    %s2922 = scalar_lea.vmem [#allocation2], 64
    %v2923 = vld [vmem:[%s2922] ss:$2 sm:$0x7]
    %v2924 = vpack.c.bf16 %v2923, %v2923
    %s2925 = scalar_lea.vmem [#allocation2], 65
    %v2926 = vld [vmem:[%s2925] ss:$2 sm:$0x7]
    %v2927 = vpack.c.bf16 %v2926, %v2926
    %v2929 = vsel %vm384, %v2927, 0
    %2931 = vmatprep.subr.bf16.mxu0 0
    %2932 = vmatpush1.bf16.msra.mxu0 %v494
    %2933 = vmatprep.subr.bf16.mxu0 0
    %2934 = vmatpush1.bf16.msra.mxu0 %v495
    %2935 = vmatprep.subr.bf16.mxu0 0
    %2936 = vmatpush1.bf16.msra.mxu0 0
    %2937 = vmatprep.subr.bf16.mxu0 0
    %2938 = vmatpush1.bf16.msra.mxu0 0
    %2939 = vmatprep.subr.bf16.mxu0 0
    %2940 = vmatpush1.bf16.msra.mxu0 0
    %2941 = vmatprep.subr.bf16.mxu0 0
    %2942 = vmatpush1.bf16.msra.mxu0 0
    %2943 = vmatprep.subr.bf16.mxu0 0
    %2944 = vmatpush1.bf16.msra.mxu0 0
    %2945 = vmatprep.subr.bf16.mxu0 0
    %2946 = vmatpush1.bf16.msra.mxu0 0
    %2947 = vmatprep.subr.bf16.mxu0 0
    %2948 = vmatpush1.bf16.msra.mxu0 0
    %2949 = vmatprep.subr.bf16.mxu0 0
    %2950 = vmatpush1.bf16.msra.mxu0 0
    %2951 = vmatprep.subr.bf16.mxu0 0
    %2952 = vmatpush1.bf16.msra.mxu0 0
    %2953 = vmatprep.subr.bf16.mxu0 0
    %2954 = vmatpush1.bf16.msra.mxu0 0
    %2955 = vmatprep.subr.bf16.mxu0 0
    %2956 = vmatpush1.bf16.msra.mxu0 0
    %2957 = vmatprep.subr.bf16.mxu0 0
    %2958 = vmatpush1.bf16.msra.mxu0 0
    %2959 = vmatprep.subr.bf16.mxu0 0
    %2960 = vmatpush1.bf16.msra.mxu0 0
    %2961 = vmatprep.subr.bf16.mxu0 0
    %2962 = vmatpush1.bf16.msra.mxu0 0
    %2963 = vmatprep.mubr.bf16.mxu0 0
    %2964 = vmatmul.mubr.bf16.gmra.mrb[0].mxu0 %v2929
    %v2965 = vpop.f32.mrb[0].mxu0
    %v2966 = vadd.f32 0.0, %v2965
    %v2967 = vpop.f32.mrb[0].mxu0
    %v2968 = vpop.f32.mrb[0].mxu0
    %v2969 = vpop.f32.mrb[0].mxu0
    %2970 = vdwg.mxu0
    %v2972 = vsel %vm384, %v2924, 0
    %2974 = vmatprep.subr.bf16.mxu0 0
    %2975 = vmatpush1.bf16.msra.mxu0 %v549
    %2976 = vmatprep.subr.bf16.mxu0 0
    %2977 = vmatpush1.bf16.msra.mxu0 %v550
    %2978 = vmatprep.subr.bf16.mxu0 0
    %2979 = vmatpush1.bf16.msra.mxu0 0
    %2980 = vmatprep.subr.bf16.mxu0 0
    %2981 = vmatpush1.bf16.msra.mxu0 0
    %2982 = vmatprep.subr.bf16.mxu0 0
    %2983 = vmatpush1.bf16.msra.mxu0 0
    %2984 = vmatprep.subr.bf16.mxu0 0
    %2985 = vmatpush1.bf16.msra.mxu0 0
    %2986 = vmatprep.subr.bf16.mxu0 0
    %2987 = vmatpush1.bf16.msra.mxu0 0
    %2988 = vmatprep.subr.bf16.mxu0 0
    %2989 = vmatpush1.bf16.msra.mxu0 0
    %2990 = vmatprep.subr.bf16.mxu0 0
    %2991 = vmatpush1.bf16.msra.mxu0 0
    %2992 = vmatprep.subr.bf16.mxu0 0
    %2993 = vmatpush1.bf16.msra.mxu0 0
    %2994 = vmatprep.subr.bf16.mxu0 0
    %2995 = vmatpush1.bf16.msra.mxu0 0
    %2996 = vmatprep.subr.bf16.mxu0 0
    %2997 = vmatpush1.bf16.msra.mxu0 0
    %2998 = vmatprep.subr.bf16.mxu0 0
    %2999 = vmatpush1.bf16.msra.mxu0 0
    %3000 = vmatprep.subr.bf16.mxu0 0
    %3001 = vmatpush1.bf16.msra.mxu0 0
    %3002 = vmatprep.subr.bf16.mxu0 0
    %3003 = vmatpush1.bf16.msra.mxu0 0
    %3004 = vmatprep.subr.bf16.mxu0 0
    %3005 = vmatpush1.bf16.msra.mxu0 0
    %3006 = vmatprep.mubr.bf16.mxu0 0
    %3007 = vmatmul.mubr.bf16.gmra.mrb[0].mxu0 %v2972
    %v3008 = vpop.f32.mrb[0].mxu0
    %v3009 = vadd.f32 %v2966, %v3008
    %v3010 = vpop.f32.mrb[0].mxu0
    %v3011 = vpop.f32.mrb[0].mxu0
    %v3012 = vpop.f32.mrb[0].mxu0
    %3013 = vdwg.mxu0
    %s3014 = scalar_lea.vmem [#allocation2], 66
    %v3015 = vld [vmem:[%s3014] ss:$2 sm:$0x7]
    %v3016 = vpack.c.bf16 %v3015, %v3015
    %v3018 = vsel %vm384, %v3016, 0
    %3020 = vmatprep.subr.bf16.mxu0 0
    %3021 = vmatpush1.bf16.msra.mxu0 %v607
    %3022 = vmatprep.subr.bf16.mxu0 0
    %3023 = vmatpush1.bf16.msra.mxu0 %v608
    %3024 = vmatprep.subr.bf16.mxu0 0
    %3025 = vmatpush1.bf16.msra.mxu0 0
    %3026 = vmatprep.subr.bf16.mxu0 0
    %3027 = vmatpush1.bf16.msra.mxu0 0
    %3028 = vmatprep.subr.bf16.mxu0 0
    %3029 = vmatpush1.bf16.msra.mxu0 0
    %3030 = vmatprep.subr.bf16.mxu0 0
    %3031 = vmatpush1.bf16.msra.mxu0 0
    %3032 = vmatprep.subr.bf16.mxu0 0
    %3033 = vmatpush1.bf16.msra.mxu0 0
    %3034 = vmatprep.subr.bf16.mxu0 0
    %3035 = vmatpush1.bf16.msra.mxu0 0
    %3036 = vmatprep.subr.bf16.mxu0 0
    %3037 = vmatpush1.bf16.msra.mxu0 0
    %3038 = vmatprep.subr.bf16.mxu0 0
    %3039 = vmatpush1.bf16.msra.mxu0 0
    %3040 = vmatprep.subr.bf16.mxu0 0
    %3041 = vmatpush1.bf16.msra.mxu0 0
    %3042 = vmatprep.subr.bf16.mxu0 0
    %3043 = vmatpush1.bf16.msra.mxu0 0
    %3044 = vmatprep.subr.bf16.mxu0 0
    %3045 = vmatpush1.bf16.msra.mxu0 0
    %3046 = vmatprep.subr.bf16.mxu0 0
    %3047 = vmatpush1.bf16.msra.mxu0 0
    %3048 = vmatprep.subr.bf16.mxu0 0
    %3049 = vmatpush1.bf16.msra.mxu0 0
    %3050 = vmatprep.subr.bf16.mxu0 0
    %3051 = vmatpush1.bf16.msra.mxu0 0
    %3052 = vmatprep.mubr.bf16.mxu0 0
    %3053 = vmatmul.mubr.bf16.gmra.mrb[0].mxu0 %v3018
    %v3054 = vpop.f32.mrb[0].mxu0
    %v3055 = vadd.f32 0.0, %v3054
    %v3056 = vpop.f32.mrb[0].mxu0
    %v3057 = vpop.f32.mrb[0].mxu0
    %v3058 = vpop.f32.mrb[0].mxu0
    %3059 = vdwg.mxu0
    %v3060 = vadd.f32 %v3009, %v3055
    %s3061 = scalar_lea.vmem [#allocation2], 67
    %v3062 = vld [vmem:[%s3061] ss:$2 sm:$0x7]
    %v3063 = vpack.c.bf16 %v3062, %v3062
    %v3065 = vsel %vm384, %v3063, 0
    %3067 = vmatprep.subr.bf16.mxu0 0
    %3068 = vmatpush1.bf16.msra.mxu0 %v666
    %3069 = vmatprep.subr.bf16.mxu0 0
    %3070 = vmatpush1.bf16.msra.mxu0 %v667
    %3071 = vmatprep.subr.bf16.mxu0 0
    %3072 = vmatpush1.bf16.msra.mxu0 0
    %3073 = vmatprep.subr.bf16.mxu0 0
    %3074 = vmatpush1.bf16.msra.mxu0 0
    %3075 = vmatprep.subr.bf16.mxu0 0
    %3076 = vmatpush1.bf16.msra.mxu0 0
    %3077 = vmatprep.subr.bf16.mxu0 0
    %3078 = vmatpush1.bf16.msra.mxu0 0
    %3079 = vmatprep.subr.bf16.mxu0 0
    %3080 = vmatpush1.bf16.msra.mxu0 0
    %3081 = vmatprep.subr.bf16.mxu0 0
    %3082 = vmatpush1.bf16.msra.mxu0 0
    %3083 = vmatprep.subr.bf16.mxu0 0
    %3084 = vmatpush1.bf16.msra.mxu0 0
    %3085 = vmatprep.subr.bf16.mxu0 0
    %3086 = vmatpush1.bf16.msra.mxu0 0
    %3087 = vmatprep.subr.bf16.mxu0 0
    %3088 = vmatpush1.bf16.msra.mxu0 0
    %3089 = vmatprep.subr.bf16.mxu0 0
    %3090 = vmatpush1.bf16.msra.mxu0 0
    %3091 = vmatprep.subr.bf16.mxu0 0
    %3092 = vmatpush1.bf16.msra.mxu0 0
    %3093 = vmatprep.subr.bf16.mxu0 0
    %3094 = vmatpush1.bf16.msra.mxu0 0
    %3095 = vmatprep.subr.bf16.mxu0 0
    %3096 = vmatpush1.bf16.msra.mxu0 0
    %3097 = vmatprep.subr.bf16.mxu0 0
    %3098 = vmatpush1.bf16.msra.mxu0 0
    %3099 = vmatprep.mubr.bf16.mxu0 0
    %3100 = vmatmul.mubr.bf16.gmra.mrb[0].mxu0 %v3065
    %v3101 = vpop.f32.mrb[0].mxu0
    %v3102 = vadd.f32 0.0, %v3101
    %v3103 = vpop.f32.mrb[0].mxu0
    %v3104 = vpop.f32.mrb[0].mxu0
    %v3105 = vpop.f32.mrb[0].mxu0
    %3106 = vdwg.mxu0
    %v3107 = vadd.f32 %v3060, %v3102
    %s3108 = scalar_lea.vmem [#allocation2], 72
    %v3109 = vld [vmem:[%s3108] ss:$2 sm:$0x7]
    %v3110 = vpack.c.bf16 %v3109, %v3109
    %v3112 = vsel %vm384, %v3110, 0
    %3114 = vmatprep.subr.bf16.mxu0 0
    %3115 = vmatpush1.bf16.msra.mxu0 %v725
    %3116 = vmatprep.subr.bf16.mxu0 0
    %3117 = vmatpush1.bf16.msra.mxu0 %v726
    %3118 = vmatprep.subr.bf16.mxu0 0
    %3119 = vmatpush1.bf16.msra.mxu0 0
    %3120 = vmatprep.subr.bf16.mxu0 0
    %3121 = vmatpush1.bf16.msra.mxu0 0
    %3122 = vmatprep.subr.bf16.mxu0 0
    %3123 = vmatpush1.bf16.msra.mxu0 0
    %3124 = vmatprep.subr.bf16.mxu0 0
    %3125 = vmatpush1.bf16.msra.mxu0 0
    %3126 = vmatprep.subr.bf16.mxu0 0
    %3127 = vmatpush1.bf16.msra.mxu0 0
    %3128 = vmatprep.subr.bf16.mxu0 0
    %3129 = vmatpush1.bf16.msra.mxu0 0
    %3130 = vmatprep.subr.bf16.mxu0 0
    %3131 = vmatpush1.bf16.msra.mxu0 0
    %3132 = vmatprep.subr.bf16.mxu0 0
    %3133 = vmatpush1.bf16.msra.mxu0 0
    %3134 = vmatprep.subr.bf16.mxu0 0
    %3135 = vmatpush1.bf16.msra.mxu0 0
    %3136 = vmatprep.subr.bf16.mxu0 0
    %3137 = vmatpush1.bf16.msra.mxu0 0
    %3138 = vmatprep.subr.bf16.mxu0 0
    %3139 = vmatpush1.bf16.msra.mxu0 0
    %3140 = vmatprep.subr.bf16.mxu0 0
    %3141 = vmatpush1.bf16.msra.mxu0 0
    %3142 = vmatprep.subr.bf16.mxu0 0
    %3143 = vmatpush1.bf16.msra.mxu0 0
    %3144 = vmatprep.subr.bf16.mxu0 0
    %3145 = vmatpush1.bf16.msra.mxu0 0
    %3146 = vmatprep.mubr.bf16.mxu0 0
    %3147 = vmatmul.mubr.bf16.gmra.mrb[0].mxu0 %v3112
    %v3148 = vpop.f32.mrb[0].mxu0
    %v3149 = vadd.f32 0.0, %v3148
    %v3150 = vpop.f32.mrb[0].mxu0
    %v3151 = vpop.f32.mrb[0].mxu0
    %v3152 = vpop.f32.mrb[0].mxu0
    %3153 = vdwg.mxu0
    %v3154 = vadd.f32 %v3107, %v3149
    %s3155 = scalar_lea.vmem [#allocation2], 73
    %v3156 = vld [vmem:[%s3155] ss:$2 sm:$0x7]
    %v3157 = vpack.c.bf16 %v3156, %v3156
    %v3159 = vsel %vm384, %v3157, 0
    %3161 = vmatprep.subr.bf16.mxu0 0
    %3162 = vmatpush1.bf16.msra.mxu0 %v784
    %3163 = vmatprep.subr.bf16.mxu0 0
    %3164 = vmatpush1.bf16.msra.mxu0 %v785
    %3165 = vmatprep.subr.bf16.mxu0 0
    %3166 = vmatpush1.bf16.msra.mxu0 0
    %3167 = vmatprep.subr.bf16.mxu0 0
    %3168 = vmatpush1.bf16.msra.mxu0 0
    %3169 = vmatprep.subr.bf16.mxu0 0
    %3170 = vmatpush1.bf16.msra.mxu0 0
    %3171 = vmatprep.subr.bf16.mxu0 0
    %3172 = vmatpush1.bf16.msra.mxu0 0
    %3173 = vmatprep.subr.bf16.mxu0 0
    %3174 = vmatpush1.bf16.msra.mxu0 0
    %3175 = vmatprep.subr.bf16.mxu0 0
    %3176 = vmatpush1.bf16.msra.mxu0 0
    %3177 = vmatprep.subr.bf16.mxu0 0
    %3178 = vmatpush1.bf16.msra.mxu0 0
    %3179 = vmatprep.subr.bf16.mxu0 0
    %3180 = vmatpush1.bf16.msra.mxu0 0
    %3181 = vmatprep.subr.bf16.mxu0 0
    %3182 = vmatpush1.bf16.msra.mxu0 0
    %3183 = vmatprep.subr.bf16.mxu0 0
    %3184 = vmatpush1.bf16.msra.mxu0 0
    %3185 = vmatprep.subr.bf16.mxu0 0
    %3186 = vmatpush1.bf16.msra.mxu0 0
    %3187 = vmatprep.subr.bf16.mxu0 0
    %3188 = vmatpush1.bf16.msra.mxu0 0
    %3189 = vmatprep.subr.bf16.mxu0 0
    %3190 = vmatpush1.bf16.msra.mxu0 0
    %3191 = vmatprep.subr.bf16.mxu0 0
    %3192 = vmatpush1.bf16.msra.mxu0 0
    %3193 = vmatprep.mubr.bf16.mxu0 0
    %3194 = vmatmul.mubr.bf16.gmra.mrb[0].mxu0 %v3159
    %v3195 = vpop.f32.mrb[0].mxu0
    %v3196 = vadd.f32 0.0, %v3195
    %v3197 = vpop.f32.mrb[0].mxu0
    %v3198 = vpop.f32.mrb[0].mxu0
    %v3199 = vpop.f32.mrb[0].mxu0
    %3200 = vdwg.mxu0
    %v3201 = vadd.f32 %v3154, %v3196
    %s3202 = scalar_lea.vmem [#allocation2], 74
    %v3203 = vld [vmem:[%s3202] ss:$2 sm:$0x7]
    %v3204 = vpack.c.bf16 %v3203, %v3203
    %v3206 = vsel %vm384, %v3204, 0
    %3208 = vmatprep.subr.bf16.mxu0 0
    %3209 = vmatpush1.bf16.msra.mxu0 %v843
    %3210 = vmatprep.subr.bf16.mxu0 0
    %3211 = vmatpush1.bf16.msra.mxu0 %v844
    %3212 = vmatprep.subr.bf16.mxu0 0
    %3213 = vmatpush1.bf16.msra.mxu0 0
    %3214 = vmatprep.subr.bf16.mxu0 0
    %3215 = vmatpush1.bf16.msra.mxu0 0
    %3216 = vmatprep.subr.bf16.mxu0 0
    %3217 = vmatpush1.bf16.msra.mxu0 0
    %3218 = vmatprep.subr.bf16.mxu0 0
    %3219 = vmatpush1.bf16.msra.mxu0 0
    %3220 = vmatprep.subr.bf16.mxu0 0
    %3221 = vmatpush1.bf16.msra.mxu0 0
    %3222 = vmatprep.subr.bf16.mxu0 0
    %3223 = vmatpush1.bf16.msra.mxu0 0
    %3224 = vmatprep.subr.bf16.mxu0 0
    %3225 = vmatpush1.bf16.msra.mxu0 0
    %3226 = vmatprep.subr.bf16.mxu0 0
    %3227 = vmatpush1.bf16.msra.mxu0 0
    %3228 = vmatprep.subr.bf16.mxu0 0
    %3229 = vmatpush1.bf16.msra.mxu0 0
    %3230 = vmatprep.subr.bf16.mxu0 0
    %3231 = vmatpush1.bf16.msra.mxu0 0
    %3232 = vmatprep.subr.bf16.mxu0 0
    %3233 = vmatpush1.bf16.msra.mxu0 0
    %3234 = vmatprep.subr.bf16.mxu0 0
    %3235 = vmatpush1.bf16.msra.mxu0 0
    %3236 = vmatprep.subr.bf16.mxu0 0
    %3237 = vmatpush1.bf16.msra.mxu0 0
    %3238 = vmatprep.subr.bf16.mxu0 0
    %3239 = vmatpush1.bf16.msra.mxu0 0
    %3240 = vmatprep.mubr.bf16.mxu0 0
    %3241 = vmatmul.mubr.bf16.gmra.mrb[0].mxu0 %v3206
    %v3242 = vpop.f32.mrb[0].mxu0
    %v3243 = vadd.f32 0.0, %v3242
    %v3244 = vpop.f32.mrb[0].mxu0
    %v3245 = vpop.f32.mrb[0].mxu0
    %v3246 = vpop.f32.mrb[0].mxu0
    %3247 = vdwg.mxu0
    %v3248 = vadd.f32 %v3201, %v3243
    %s3249 = scalar_lea.vmem [#allocation2], 75
    %v3250 = vld [vmem:[%s3249] ss:$2 sm:$0x7]
    %v3251 = vpack.c.bf16 %v3250, %v3250
    %v3253 = vsel %vm384, %v3251, 0
    %3255 = vmatprep.subr.bf16.mxu0 0
    %3256 = vmatpush1.bf16.msra.mxu0 %v902
    %3257 = vmatprep.subr.bf16.mxu0 0
    %3258 = vmatpush1.bf16.msra.mxu0 %v903
    %3259 = vmatprep.subr.bf16.mxu0 0
    %3260 = vmatpush1.bf16.msra.mxu0 0
    %3261 = vmatprep.subr.bf16.mxu0 0
    %3262 = vmatpush1.bf16.msra.mxu0 0
    %3263 = vmatprep.subr.bf16.mxu0 0
    %3264 = vmatpush1.bf16.msra.mxu0 0
    %3265 = vmatprep.subr.bf16.mxu0 0
    %3266 = vmatpush1.bf16.msra.mxu0 0
    %3267 = vmatprep.subr.bf16.mxu0 0
    %3268 = vmatpush1.bf16.msra.mxu0 0
    %3269 = vmatprep.subr.bf16.mxu0 0
    %3270 = vmatpush1.bf16.msra.mxu0 0
    %3271 = vmatprep.subr.bf16.mxu0 0
    %3272 = vmatpush1.bf16.msra.mxu0 0
    %3273 = vmatprep.subr.bf16.mxu0 0
    %3274 = vmatpush1.bf16.msra.mxu0 0
    %3275 = vmatprep.subr.bf16.mxu0 0
    %3276 = vmatpush1.bf16.msra.mxu0 0
    %3277 = vmatprep.subr.bf16.mxu0 0
    %3278 = vmatpush1.bf16.msra.mxu0 0
    %3279 = vmatprep.subr.bf16.mxu0 0
    %3280 = vmatpush1.bf16.msra.mxu0 0
    %3281 = vmatprep.subr.bf16.mxu0 0
    %3282 = vmatpush1.bf16.msra.mxu0 0
    %3283 = vmatprep.subr.bf16.mxu0 0
    %3284 = vmatpush1.bf16.msra.mxu0 0
    %3285 = vmatprep.subr.bf16.mxu0 0
    %3286 = vmatpush1.bf16.msra.mxu0 0
    %3287 = vmatprep.mubr.bf16.mxu0 0
    %3288 = vmatmul.mubr.bf16.gmra.mrb[0].mxu0 %v3253
    %v3289 = vpop.f32.mrb[0].mxu0
    %v3290 = vadd.f32 0.0, %v3289
    %v3291 = vpop.f32.mrb[0].mxu0
    %v3292 = vpop.f32.mrb[0].mxu0
    %v3293 = vpop.f32.mrb[0].mxu0
    %3294 = vdwg.mxu0
    %v3295 = vadd.f32 %v3248, %v3290
    %s3296 = scalar_lea.vmem [#allocation2], 80
    %v3297 = vld [vmem:[%s3296] ss:$2 sm:$0x7]
    %v3298 = vpack.c.bf16 %v3297, %v3297
    %v3300 = vsel %vm384, %v3298, 0
    %3302 = vmatprep.subr.bf16.mxu0 0
    %3303 = vmatpush1.bf16.msra.mxu0 %v961
    %3304 = vmatprep.subr.bf16.mxu0 0
    %3305 = vmatpush1.bf16.msra.mxu0 %v962
    %3306 = vmatprep.subr.bf16.mxu0 0
    %3307 = vmatpush1.bf16.msra.mxu0 0
    %3308 = vmatprep.subr.bf16.mxu0 0
    %3309 = vmatpush1.bf16.msra.mxu0 0
    %3310 = vmatprep.subr.bf16.mxu0 0
    %3311 = vmatpush1.bf16.msra.mxu0 0
    %3312 = vmatprep.subr.bf16.mxu0 0
    %3313 = vmatpush1.bf16.msra.mxu0 0
    %3314 = vmatprep.subr.bf16.mxu0 0
    %3315 = vmatpush1.bf16.msra.mxu0 0
    %3316 = vmatprep.subr.bf16.mxu0 0
    %3317 = vmatpush1.bf16.msra.mxu0 0
    %3318 = vmatprep.subr.bf16.mxu0 0
    %3319 = vmatpush1.bf16.msra.mxu0 0
    %3320 = vmatprep.subr.bf16.mxu0 0
    %3321 = vmatpush1.bf16.msra.mxu0 0
    %3322 = vmatprep.subr.bf16.mxu0 0
    %3323 = vmatpush1.bf16.msra.mxu0 0
    %3324 = vmatprep.subr.bf16.mxu0 0
    %3325 = vmatpush1.bf16.msra.mxu0 0
    %3326 = vmatprep.subr.bf16.mxu0 0
    %3327 = vmatpush1.bf16.msra.mxu0 0
    %3328 = vmatprep.subr.bf16.mxu0 0
    %3329 = vmatpush1.bf16.msra.mxu0 0
    %3330 = vmatprep.subr.bf16.mxu0 0
    %3331 = vmatpush1.bf16.msra.mxu0 0
    %3332 = vmatprep.subr.bf16.mxu0 0
    %3333 = vmatpush1.bf16.msra.mxu0 0
    %3334 = vmatprep.mubr.bf16.mxu0 0
    %3335 = vmatmul.mubr.bf16.gmra.mrb[0].mxu0 %v3300
    %v3336 = vpop.f32.mrb[0].mxu0
    %v3337 = vadd.f32 0.0, %v3336
    %v3338 = vpop.f32.mrb[0].mxu0
    %v3339 = vpop.f32.mrb[0].mxu0
    %v3340 = vpop.f32.mrb[0].mxu0
    %3341 = vdwg.mxu0
    %v3342 = vadd.f32 %v3295, %v3337
    %s3343 = scalar_lea.vmem [#allocation2], 81
    %v3344 = vld [vmem:[%s3343] ss:$2 sm:$0x7]
    %v3345 = vpack.c.bf16 %v3344, %v3344
    %v3347 = vsel %vm384, %v3345, 0
    %3349 = vmatprep.subr.bf16.mxu0 0
    %3350 = vmatpush1.bf16.msra.mxu0 %v1020
    %3351 = vmatprep.subr.bf16.mxu0 0
    %3352 = vmatpush1.bf16.msra.mxu0 %v1021
    %3353 = vmatprep.subr.bf16.mxu0 0
    %3354 = vmatpush1.bf16.msra.mxu0 0
    %3355 = vmatprep.subr.bf16.mxu0 0
    %3356 = vmatpush1.bf16.msra.mxu0 0
    %3357 = vmatprep.subr.bf16.mxu0 0
    %3358 = vmatpush1.bf16.msra.mxu0 0
    %3359 = vmatprep.subr.bf16.mxu0 0
    %3360 = vmatpush1.bf16.msra.mxu0 0
    %3361 = vmatprep.subr.bf16.mxu0 0
    %3362 = vmatpush1.bf16.msra.mxu0 0
    %3363 = vmatprep.subr.bf16.mxu0 0
    %3364 = vmatpush1.bf16.msra.mxu0 0
    %3365 = vmatprep.subr.bf16.mxu0 0
    %3366 = vmatpush1.bf16.msra.mxu0 0
    %3367 = vmatprep.subr.bf16.mxu0 0
    %3368 = vmatpush1.bf16.msra.mxu0 0
    %3369 = vmatprep.subr.bf16.mxu0 0
    %3370 = vmatpush1.bf16.msra.mxu0 0
    %3371 = vmatprep.subr.bf16.mxu0 0
    %3372 = vmatpush1.bf16.msra.mxu0 0
    %3373 = vmatprep.subr.bf16.mxu0 0
    %3374 = vmatpush1.bf16.msra.mxu0 0
    %3375 = vmatprep.subr.bf16.mxu0 0
    %3376 = vmatpush1.bf16.msra.mxu0 0
    %3377 = vmatprep.subr.bf16.mxu0 0
    %3378 = vmatpush1.bf16.msra.mxu0 0
    %3379 = vmatprep.subr.bf16.mxu0 0
    %3380 = vmatpush1.bf16.msra.mxu0 0
    %3381 = vmatprep.mubr.bf16.mxu0 0
    %3382 = vmatmul.mubr.bf16.gmra.mrb[0].mxu0 %v3347
    %v3383 = vpop.f32.mrb[0].mxu0
    %v3384 = vadd.f32 0.0, %v3383
    %v3385 = vpop.f32.mrb[0].mxu0
    %v3386 = vpop.f32.mrb[0].mxu0
    %v3387 = vpop.f32.mrb[0].mxu0
    %3388 = vdwg.mxu0
    %v3389 = vadd.f32 %v3342, %v3384
    %s3390 = scalar_lea.vmem [#allocation2], 82
    %v3391 = vld [vmem:[%s3390] ss:$2 sm:$0x7]
    %v3392 = vpack.c.bf16 %v3391, %v3391
    %v3394 = vsel %vm384, %v3392, 0
    %3396 = vmatprep.subr.bf16.mxu0 0
    %3397 = vmatpush1.bf16.msra.mxu0 %v1079
    %3398 = vmatprep.subr.bf16.mxu0 0
    %3399 = vmatpush1.bf16.msra.mxu0 %v1080
    %3400 = vmatprep.subr.bf16.mxu0 0
    %3401 = vmatpush1.bf16.msra.mxu0 0
    %3402 = vmatprep.subr.bf16.mxu0 0
    %3403 = vmatpush1.bf16.msra.mxu0 0
    %3404 = vmatprep.subr.bf16.mxu0 0
    %3405 = vmatpush1.bf16.msra.mxu0 0
    %3406 = vmatprep.subr.bf16.mxu0 0
    %3407 = vmatpush1.bf16.msra.mxu0 0
    %3408 = vmatprep.subr.bf16.mxu0 0
    %3409 = vmatpush1.bf16.msra.mxu0 0
    %3410 = vmatprep.subr.bf16.mxu0 0
    %3411 = vmatpush1.bf16.msra.mxu0 0
    %3412 = vmatprep.subr.bf16.mxu0 0
    %3413 = vmatpush1.bf16.msra.mxu0 0
    %3414 = vmatprep.subr.bf16.mxu0 0
    %3415 = vmatpush1.bf16.msra.mxu0 0
    %3416 = vmatprep.subr.bf16.mxu0 0
    %3417 = vmatpush1.bf16.msra.mxu0 0
    %3418 = vmatprep.subr.bf16.mxu0 0
    %3419 = vmatpush1.bf16.msra.mxu0 0
    %3420 = vmatprep.subr.bf16.mxu0 0
    %3421 = vmatpush1.bf16.msra.mxu0 0
    %3422 = vmatprep.subr.bf16.mxu0 0
    %3423 = vmatpush1.bf16.msra.mxu0 0
    %3424 = vmatprep.subr.bf16.mxu0 0
    %3425 = vmatpush1.bf16.msra.mxu0 0
    %3426 = vmatprep.subr.bf16.mxu0 0
    %3427 = vmatpush1.bf16.msra.mxu0 0
    %3428 = vmatprep.mubr.bf16.mxu0 0
    %3429 = vmatmul.mubr.bf16.gmra.mrb[0].mxu0 %v3394
    %v3430 = vpop.f32.mrb[0].mxu0
    %v3431 = vadd.f32 0.0, %v3430
    %v3432 = vpop.f32.mrb[0].mxu0
    %v3433 = vpop.f32.mrb[0].mxu0
    %v3434 = vpop.f32.mrb[0].mxu0
    %3435 = vdwg.mxu0
    %v3436 = vadd.f32 %v3389, %v3431
    %s3437 = scalar_lea.vmem [#allocation2], 83
    %v3438 = vld [vmem:[%s3437] ss:$2 sm:$0x7]
    %v3439 = vpack.c.bf16 %v3438, %v3438
    %v3441 = vsel %vm384, %v3439, 0
    %3443 = vmatprep.subr.bf16.mxu0 0
    %3444 = vmatpush1.bf16.msra.mxu0 %v1138
    %3445 = vmatprep.subr.bf16.mxu0 0
    %3446 = vmatpush1.bf16.msra.mxu0 %v1139
    %3447 = vmatprep.subr.bf16.mxu0 0
    %3448 = vmatpush1.bf16.msra.mxu0 0
    %3449 = vmatprep.subr.bf16.mxu0 0
    %3450 = vmatpush1.bf16.msra.mxu0 0
    %3451 = vmatprep.subr.bf16.mxu0 0
    %3452 = vmatpush1.bf16.msra.mxu0 0
    %3453 = vmatprep.subr.bf16.mxu0 0
    %3454 = vmatpush1.bf16.msra.mxu0 0
    %3455 = vmatprep.subr.bf16.mxu0 0
    %3456 = vmatpush1.bf16.msra.mxu0 0
    %3457 = vmatprep.subr.bf16.mxu0 0
    %3458 = vmatpush1.bf16.msra.mxu0 0
    %3459 = vmatprep.subr.bf16.mxu0 0
    %3460 = vmatpush1.bf16.msra.mxu0 0
    %3461 = vmatprep.subr.bf16.mxu0 0
    %3462 = vmatpush1.bf16.msra.mxu0 0
    %3463 = vmatprep.subr.bf16.mxu0 0
    %3464 = vmatpush1.bf16.msra.mxu0 0
    %3465 = vmatprep.subr.bf16.mxu0 0
    %3466 = vmatpush1.bf16.msra.mxu0 0
    %3467 = vmatprep.subr.bf16.mxu0 0
    %3468 = vmatpush1.bf16.msra.mxu0 0
    %3469 = vmatprep.subr.bf16.mxu0 0
    %3470 = vmatpush1.bf16.msra.mxu0 0
    %3471 = vmatprep.subr.bf16.mxu0 0
    %3472 = vmatpush1.bf16.msra.mxu0 0
    %3473 = vmatprep.subr.bf16.mxu0 0
    %3474 = vmatpush1.bf16.msra.mxu0 0
    %3475 = vmatprep.mubr.bf16.mxu0 0
    %3476 = vmatmul.mubr.bf16.gmra.mrb[0].mxu0 %v3441
    %v3477 = vpop.f32.mrb[0].mxu0
    %v3478 = vadd.f32 0.0, %v3477
    %v3479 = vpop.f32.mrb[0].mxu0
    %v3480 = vpop.f32.mrb[0].mxu0
    %v3481 = vpop.f32.mrb[0].mxu0
    %3482 = vdwg.mxu0
    %v3483 = vadd.f32 %v3436, %v3478
    %s3484 = scalar_lea.vmem [#allocation2], 88
    %v3485 = vld [vmem:[%s3484] ss:$2 sm:$0x7]
    %v3486 = vpack.c.bf16 %v3485, %v3485
    %v3488 = vsel %vm384, %v3486, 0
    %3490 = vmatprep.subr.bf16.mxu0 0
    %3491 = vmatpush1.bf16.msra.mxu0 %v1197
    %3492 = vmatprep.subr.bf16.mxu0 0
    %3493 = vmatpush1.bf16.msra.mxu0 %v1198
    %3494 = vmatprep.subr.bf16.mxu0 0
    %3495 = vmatpush1.bf16.msra.mxu0 0
    %3496 = vmatprep.subr.bf16.mxu0 0
    %3497 = vmatpush1.bf16.msra.mxu0 0
    %3498 = vmatprep.subr.bf16.mxu0 0
    %3499 = vmatpush1.bf16.msra.mxu0 0
    %3500 = vmatprep.subr.bf16.mxu0 0
    %3501 = vmatpush1.bf16.msra.mxu0 0
    %3502 = vmatprep.subr.bf16.mxu0 0
    %3503 = vmatpush1.bf16.msra.mxu0 0
    %3504 = vmatprep.subr.bf16.mxu0 0
    %3505 = vmatpush1.bf16.msra.mxu0 0
    %3506 = vmatprep.subr.bf16.mxu0 0
    %3507 = vmatpush1.bf16.msra.mxu0 0
    %3508 = vmatprep.subr.bf16.mxu0 0
    %3509 = vmatpush1.bf16.msra.mxu0 0
    %3510 = vmatprep.subr.bf16.mxu0 0
    %3511 = vmatpush1.bf16.msra.mxu0 0
    %3512 = vmatprep.subr.bf16.mxu0 0
    %3513 = vmatpush1.bf16.msra.mxu0 0
    %3514 = vmatprep.subr.bf16.mxu0 0
    %3515 = vmatpush1.bf16.msra.mxu0 0
    %3516 = vmatprep.subr.bf16.mxu0 0
    %3517 = vmatpush1.bf16.msra.mxu0 0
    %3518 = vmatprep.subr.bf16.mxu0 0
    %3519 = vmatpush1.bf16.msra.mxu0 0
    %3520 = vmatprep.subr.bf16.mxu0 0
    %3521 = vmatpush1.bf16.msra.mxu0 0
    %3522 = vmatprep.mubr.bf16.mxu0 0
    %3523 = vmatmul.mubr.bf16.gmra.mrb[0].mxu0 %v3488
    %v3524 = vpop.f32.mrb[0].mxu0
    %v3525 = vadd.f32 0.0, %v3524
    %v3526 = vpop.f32.mrb[0].mxu0
    %v3527 = vpop.f32.mrb[0].mxu0
    %v3528 = vpop.f32.mrb[0].mxu0
    %3529 = vdwg.mxu0
    %v3530 = vadd.f32 %v3483, %v3525
    %s3531 = scalar_lea.vmem [#allocation2], 89
    %v3532 = vld [vmem:[%s3531] ss:$2 sm:$0x7]
    %v3533 = vpack.c.bf16 %v3532, %v3532
    %v3535 = vsel %vm384, %v3533, 0
    %3537 = vmatprep.subr.bf16.mxu0 0
    %3538 = vmatpush1.bf16.msra.mxu0 %v1256
    %3539 = vmatprep.subr.bf16.mxu0 0
    %3540 = vmatpush1.bf16.msra.mxu0 %v1257
    %3541 = vmatprep.subr.bf16.mxu0 0
    %3542 = vmatpush1.bf16.msra.mxu0 0
    %3543 = vmatprep.subr.bf16.mxu0 0
    %3544 = vmatpush1.bf16.msra.mxu0 0
    %3545 = vmatprep.subr.bf16.mxu0 0
    %3546 = vmatpush1.bf16.msra.mxu0 0
    %3547 = vmatprep.subr.bf16.mxu0 0
    %3548 = vmatpush1.bf16.msra.mxu0 0
    %3549 = vmatprep.subr.bf16.mxu0 0
    %3550 = vmatpush1.bf16.msra.mxu0 0
    %3551 = vmatprep.subr.bf16.mxu0 0
    %3552 = vmatpush1.bf16.msra.mxu0 0
    %3553 = vmatprep.subr.bf16.mxu0 0
    %3554 = vmatpush1.bf16.msra.mxu0 0
    %3555 = vmatprep.subr.bf16.mxu0 0
    %3556 = vmatpush1.bf16.msra.mxu0 0
    %3557 = vmatprep.subr.bf16.mxu0 0
    %3558 = vmatpush1.bf16.msra.mxu0 0
    %3559 = vmatprep.subr.bf16.mxu0 0
    %3560 = vmatpush1.bf16.msra.mxu0 0
    %3561 = vmatprep.subr.bf16.mxu0 0
    %3562 = vmatpush1.bf16.msra.mxu0 0
    %3563 = vmatprep.subr.bf16.mxu0 0
    %3564 = vmatpush1.bf16.msra.mxu0 0
    %3565 = vmatprep.subr.bf16.mxu0 0
    %3566 = vmatpush1.bf16.msra.mxu0 0
    %3567 = vmatprep.subr.bf16.mxu0 0
    %3568 = vmatpush1.bf16.msra.mxu0 0
    %3569 = vmatprep.mubr.bf16.mxu0 0
    %3570 = vmatmul.mubr.bf16.gmra.mrb[0].mxu0 %v3535
    %v3571 = vpop.f32.mrb[0].mxu0
    %v3572 = vadd.f32 0.0, %v3571
    %v3573 = vpop.f32.mrb[0].mxu0
    %v3574 = vpop.f32.mrb[0].mxu0
    %v3575 = vpop.f32.mrb[0].mxu0
    %3576 = vdwg.mxu0
    %v3577 = vadd.f32 %v3530, %v3572
    %s3578 = scalar_lea.vmem [#allocation2], 90
    %v3579 = vld [vmem:[%s3578] ss:$2 sm:$0x7]
    %v3580 = vpack.c.bf16 %v3579, %v3579
    %v3582 = vsel %vm384, %v3580, 0
    %3584 = vmatprep.subr.bf16.mxu0 0
    %3585 = vmatpush1.bf16.msra.mxu0 %v1315
    %3586 = vmatprep.subr.bf16.mxu0 0
    %3587 = vmatpush1.bf16.msra.mxu0 %v1316
    %3588 = vmatprep.subr.bf16.mxu0 0
    %3589 = vmatpush1.bf16.msra.mxu0 0
    %3590 = vmatprep.subr.bf16.mxu0 0
    %3591 = vmatpush1.bf16.msra.mxu0 0
    %3592 = vmatprep.subr.bf16.mxu0 0
    %3593 = vmatpush1.bf16.msra.mxu0 0
    %3594 = vmatprep.subr.bf16.mxu0 0
    %3595 = vmatpush1.bf16.msra.mxu0 0
    %3596 = vmatprep.subr.bf16.mxu0 0
    %3597 = vmatpush1.bf16.msra.mxu0 0
    %3598 = vmatprep.subr.bf16.mxu0 0
    %3599 = vmatpush1.bf16.msra.mxu0 0
    %3600 = vmatprep.subr.bf16.mxu0 0
    %3601 = vmatpush1.bf16.msra.mxu0 0
    %3602 = vmatprep.subr.bf16.mxu0 0
    %3603 = vmatpush1.bf16.msra.mxu0 0
    %3604 = vmatprep.subr.bf16.mxu0 0
    %3605 = vmatpush1.bf16.msra.mxu0 0
    %3606 = vmatprep.subr.bf16.mxu0 0
    %3607 = vmatpush1.bf16.msra.mxu0 0
    %3608 = vmatprep.subr.bf16.mxu0 0
    %3609 = vmatpush1.bf16.msra.mxu0 0
    %3610 = vmatprep.subr.bf16.mxu0 0
    %3611 = vmatpush1.bf16.msra.mxu0 0
    %3612 = vmatprep.subr.bf16.mxu0 0
    %3613 = vmatpush1.bf16.msra.mxu0 0
    %3614 = vmatprep.subr.bf16.mxu0 0
    %3615 = vmatpush1.bf16.msra.mxu0 0
    %3616 = vmatprep.mubr.bf16.mxu0 0
    %3617 = vmatmul.mubr.bf16.gmra.mrb[0].mxu0 %v3582
    %v3618 = vpop.f32.mrb[0].mxu0
    %v3619 = vadd.f32 0.0, %v3618
    %v3620 = vpop.f32.mrb[0].mxu0
    %v3621 = vpop.f32.mrb[0].mxu0
    %v3622 = vpop.f32.mrb[0].mxu0
    %3623 = vdwg.mxu0
    %v3624 = vadd.f32 %v3577, %v3619
    %s3625 = scalar_lea.vmem [#allocation2], 91
    %v3626 = vld [vmem:[%s3625] ss:$2 sm:$0x7]
    %v3627 = vpack.c.bf16 %v3626, %v3626
    %v3629 = vsel %vm384, %v3627, 0
    %3631 = vmatprep.subr.bf16.mxu0 0
    %3632 = vmatpush1.bf16.msra.mxu0 %v1374
    %3633 = vmatprep.subr.bf16.mxu0 0
    %3634 = vmatpush1.bf16.msra.mxu0 %v1375
    %3635 = vmatprep.subr.bf16.mxu0 0
    %3636 = vmatpush1.bf16.msra.mxu0 0
    %3637 = vmatprep.subr.bf16.mxu0 0
    %3638 = vmatpush1.bf16.msra.mxu0 0
    %3639 = vmatprep.subr.bf16.mxu0 0
    %3640 = vmatpush1.bf16.msra.mxu0 0
    %3641 = vmatprep.subr.bf16.mxu0 0
    %3642 = vmatpush1.bf16.msra.mxu0 0
    %3643 = vmatprep.subr.bf16.mxu0 0
    %3644 = vmatpush1.bf16.msra.mxu0 0
    %3645 = vmatprep.subr.bf16.mxu0 0
    %3646 = vmatpush1.bf16.msra.mxu0 0
    %3647 = vmatprep.subr.bf16.mxu0 0
    %3648 = vmatpush1.bf16.msra.mxu0 0
    %3649 = vmatprep.subr.bf16.mxu0 0
    %3650 = vmatpush1.bf16.msra.mxu0 0
    %3651 = vmatprep.subr.bf16.mxu0 0
    %3652 = vmatpush1.bf16.msra.mxu0 0
    %3653 = vmatprep.subr.bf16.mxu0 0
    %3654 = vmatpush1.bf16.msra.mxu0 0
    %3655 = vmatprep.subr.bf16.mxu0 0
    %3656 = vmatpush1.bf16.msra.mxu0 0
    %3657 = vmatprep.subr.bf16.mxu0 0
    %3658 = vmatpush1.bf16.msra.mxu0 0
    %3659 = vmatprep.subr.bf16.mxu0 0
    %3660 = vmatpush1.bf16.msra.mxu0 0
    %3661 = vmatprep.subr.bf16.mxu0 0
    %3662 = vmatpush1.bf16.msra.mxu0 0
    %3663 = vmatprep.mubr.bf16.mxu0 0
    %3664 = vmatmul.mubr.bf16.gmra.mrb[0].mxu0 %v3629
    %v3665 = vpop.f32.mrb[0].mxu0
    %v3666 = vadd.f32 0.0, %v3665
    %v3667 = vpop.f32.mrb[0].mxu0
    %v3668 = vpop.f32.mrb[0].mxu0
    %v3669 = vpop.f32.mrb[0].mxu0
    %3670 = vdwg.mxu0
    %v3671 = vadd.f32 %v3624, %v3666
    %v3672 = vadd.f32 %v3671, %v1426
    %v3673 = vmax.f32 %v3672, 0.0
    %3674 = vst.msk [vmem:[#allocation3 + $0x9] sm:$0x7] %vm1430, %v3673
    %v3675 = vld [vmem:[%s3296] ss:$2 sm:$0x7]
    %v3676 = vpack.c.bf16 %v3675, %v3675
    %v3677 = vld [vmem:[%s3343] ss:$2 sm:$0x7]
    %v3678 = vpack.c.bf16 %v3677, %v3677
    %v3680 = vsel %vm384, %v3678, 0
    %3682 = vmatprep.subr.bf16.mxu0 0
    %3683 = vmatpush1.bf16.msra.mxu0 %v494
    %3684 = vmatprep.subr.bf16.mxu0 0
    %3685 = vmatpush1.bf16.msra.mxu0 %v495
    %3686 = vmatprep.subr.bf16.mxu0 0
    %3687 = vmatpush1.bf16.msra.mxu0 0
    %3688 = vmatprep.subr.bf16.mxu0 0
    %3689 = vmatpush1.bf16.msra.mxu0 0
    %3690 = vmatprep.subr.bf16.mxu0 0
    %3691 = vmatpush1.bf16.msra.mxu0 0
    %3692 = vmatprep.subr.bf16.mxu0 0
    %3693 = vmatpush1.bf16.msra.mxu0 0
    %3694 = vmatprep.subr.bf16.mxu0 0
    %3695 = vmatpush1.bf16.msra.mxu0 0
    %3696 = vmatprep.subr.bf16.mxu0 0
    %3697 = vmatpush1.bf16.msra.mxu0 0
    %3698 = vmatprep.subr.bf16.mxu0 0
    %3699 = vmatpush1.bf16.msra.mxu0 0
    %3700 = vmatprep.subr.bf16.mxu0 0
    %3701 = vmatpush1.bf16.msra.mxu0 0
    %3702 = vmatprep.subr.bf16.mxu0 0
    %3703 = vmatpush1.bf16.msra.mxu0 0
    %3704 = vmatprep.subr.bf16.mxu0 0
    %3705 = vmatpush1.bf16.msra.mxu0 0
    %3706 = vmatprep.subr.bf16.mxu0 0
    %3707 = vmatpush1.bf16.msra.mxu0 0
    %3708 = vmatprep.subr.bf16.mxu0 0
    %3709 = vmatpush1.bf16.msra.mxu0 0
    %3710 = vmatprep.subr.bf16.mxu0 0
    %3711 = vmatpush1.bf16.msra.mxu0 0
    %3712 = vmatprep.subr.bf16.mxu0 0
    %3713 = vmatpush1.bf16.msra.mxu0 0
    %3714 = vmatprep.mubr.bf16.mxu0 0
    %3715 = vmatmul.mubr.bf16.gmra.mrb[0].mxu0 %v3680
    %v3716 = vpop.f32.mrb[0].mxu0
    %v3717 = vadd.f32 0.0, %v3716
    %v3718 = vpop.f32.mrb[0].mxu0
    %v3719 = vpop.f32.mrb[0].mxu0
    %v3720 = vpop.f32.mrb[0].mxu0
    %3721 = vdwg.mxu0
    %v3723 = vsel %vm384, %v3676, 0
    %3725 = vmatprep.subr.bf16.mxu0 0
    %3726 = vmatpush1.bf16.msra.mxu0 %v549
    %3727 = vmatprep.subr.bf16.mxu0 0
    %3728 = vmatpush1.bf16.msra.mxu0 %v550
    %3729 = vmatprep.subr.bf16.mxu0 0
    %3730 = vmatpush1.bf16.msra.mxu0 0
    %3731 = vmatprep.subr.bf16.mxu0 0
    %3732 = vmatpush1.bf16.msra.mxu0 0
    %3733 = vmatprep.subr.bf16.mxu0 0
    %3734 = vmatpush1.bf16.msra.mxu0 0
    %3735 = vmatprep.subr.bf16.mxu0 0
    %3736 = vmatpush1.bf16.msra.mxu0 0
    %3737 = vmatprep.subr.bf16.mxu0 0
    %3738 = vmatpush1.bf16.msra.mxu0 0
    %3739 = vmatprep.subr.bf16.mxu0 0
    %3740 = vmatpush1.bf16.msra.mxu0 0
    %3741 = vmatprep.subr.bf16.mxu0 0
    %3742 = vmatpush1.bf16.msra.mxu0 0
    %3743 = vmatprep.subr.bf16.mxu0 0
    %3744 = vmatpush1.bf16.msra.mxu0 0
    %3745 = vmatprep.subr.bf16.mxu0 0
    %3746 = vmatpush1.bf16.msra.mxu0 0
    %3747 = vmatprep.subr.bf16.mxu0 0
    %3748 = vmatpush1.bf16.msra.mxu0 0
    %3749 = vmatprep.subr.bf16.mxu0 0
    %3750 = vmatpush1.bf16.msra.mxu0 0
    %3751 = vmatprep.subr.bf16.mxu0 0
    %3752 = vmatpush1.bf16.msra.mxu0 0
    %3753 = vmatprep.subr.bf16.mxu0 0
    %3754 = vmatpush1.bf16.msra.mxu0 0
    %3755 = vmatprep.subr.bf16.mxu0 0
    %3756 = vmatpush1.bf16.msra.mxu0 0
    %3757 = vmatprep.mubr.bf16.mxu0 0
    %3758 = vmatmul.mubr.bf16.gmra.mrb[0].mxu0 %v3723
    %v3759 = vpop.f32.mrb[0].mxu0
    %v3760 = vadd.f32 %v3717, %v3759
    %v3761 = vpop.f32.mrb[0].mxu0
    %v3762 = vpop.f32.mrb[0].mxu0
    %v3763 = vpop.f32.mrb[0].mxu0
    %3764 = vdwg.mxu0
    %v3765 = vld [vmem:[%s3390] ss:$2 sm:$0x7]
    %v3766 = vpack.c.bf16 %v3765, %v3765
    %v3768 = vsel %vm384, %v3766, 0
    %3770 = vmatprep.subr.bf16.mxu0 0
    %3771 = vmatpush1.bf16.msra.mxu0 %v607
    %3772 = vmatprep.subr.bf16.mxu0 0
    %3773 = vmatpush1.bf16.msra.mxu0 %v608
    %3774 = vmatprep.subr.bf16.mxu0 0
    %3775 = vmatpush1.bf16.msra.mxu0 0
    %3776 = vmatprep.subr.bf16.mxu0 0
    %3777 = vmatpush1.bf16.msra.mxu0 0
    %3778 = vmatprep.subr.bf16.mxu0 0
    %3779 = vmatpush1.bf16.msra.mxu0 0
    %3780 = vmatprep.subr.bf16.mxu0 0
    %3781 = vmatpush1.bf16.msra.mxu0 0
    %3782 = vmatprep.subr.bf16.mxu0 0
    %3783 = vmatpush1.bf16.msra.mxu0 0
    %3784 = vmatprep.subr.bf16.mxu0 0
    %3785 = vmatpush1.bf16.msra.mxu0 0
    %3786 = vmatprep.subr.bf16.mxu0 0
    %3787 = vmatpush1.bf16.msra.mxu0 0
    %3788 = vmatprep.subr.bf16.mxu0 0
    %3789 = vmatpush1.bf16.msra.mxu0 0
    %3790 = vmatprep.subr.bf16.mxu0 0
    %3791 = vmatpush1.bf16.msra.mxu0 0
    %3792 = vmatprep.subr.bf16.mxu0 0
    %3793 = vmatpush1.bf16.msra.mxu0 0
    %3794 = vmatprep.subr.bf16.mxu0 0
    %3795 = vmatpush1.bf16.msra.mxu0 0
    %3796 = vmatprep.subr.bf16.mxu0 0
    %3797 = vmatpush1.bf16.msra.mxu0 0
    %3798 = vmatprep.subr.bf16.mxu0 0
    %3799 = vmatpush1.bf16.msra.mxu0 0
    %3800 = vmatprep.subr.bf16.mxu0 0
    %3801 = vmatpush1.bf16.msra.mxu0 0
    %3802 = vmatprep.mubr.bf16.mxu0 0
    %3803 = vmatmul.mubr.bf16.gmra.mrb[0].mxu0 %v3768
    %v3804 = vpop.f32.mrb[0].mxu0
    %v3805 = vadd.f32 0.0, %v3804
    %v3806 = vpop.f32.mrb[0].mxu0
    %v3807 = vpop.f32.mrb[0].mxu0
    %v3808 = vpop.f32.mrb[0].mxu0
    %3809 = vdwg.mxu0
    %v3810 = vadd.f32 %v3760, %v3805
    %v3811 = vld [vmem:[%s3437] ss:$2 sm:$0x7]
    %v3812 = vpack.c.bf16 %v3811, %v3811
    %v3814 = vsel %vm384, %v3812, 0
    %3816 = vmatprep.subr.bf16.mxu0 0
    %3817 = vmatpush1.bf16.msra.mxu0 %v666
    %3818 = vmatprep.subr.bf16.mxu0 0
    %3819 = vmatpush1.bf16.msra.mxu0 %v667
    %3820 = vmatprep.subr.bf16.mxu0 0
    %3821 = vmatpush1.bf16.msra.mxu0 0
    %3822 = vmatprep.subr.bf16.mxu0 0
    %3823 = vmatpush1.bf16.msra.mxu0 0
    %3824 = vmatprep.subr.bf16.mxu0 0
    %3825 = vmatpush1.bf16.msra.mxu0 0
    %3826 = vmatprep.subr.bf16.mxu0 0
    %3827 = vmatpush1.bf16.msra.mxu0 0
    %3828 = vmatprep.subr.bf16.mxu0 0
    %3829 = vmatpush1.bf16.msra.mxu0 0
    %3830 = vmatprep.subr.bf16.mxu0 0
    %3831 = vmatpush1.bf16.msra.mxu0 0
    %3832 = vmatprep.subr.bf16.mxu0 0
    %3833 = vmatpush1.bf16.msra.mxu0 0
    %3834 = vmatprep.subr.bf16.mxu0 0
    %3835 = vmatpush1.bf16.msra.mxu0 0
    %3836 = vmatprep.subr.bf16.mxu0 0
    %3837 = vmatpush1.bf16.msra.mxu0 0
    %3838 = vmatprep.subr.bf16.mxu0 0
    %3839 = vmatpush1.bf16.msra.mxu0 0
    %3840 = vmatprep.subr.bf16.mxu0 0
    %3841 = vmatpush1.bf16.msra.mxu0 0
    %3842 = vmatprep.subr.bf16.mxu0 0
    %3843 = vmatpush1.bf16.msra.mxu0 0
    %3844 = vmatprep.subr.bf16.mxu0 0
    %3845 = vmatpush1.bf16.msra.mxu0 0
    %3846 = vmatprep.subr.bf16.mxu0 0
    %3847 = vmatpush1.bf16.msra.mxu0 0
    %3848 = vmatprep.mubr.bf16.mxu0 0
    %3849 = vmatmul.mubr.bf16.gmra.mrb[0].mxu0 %v3814
    %v3850 = vpop.f32.mrb[0].mxu0
    %v3851 = vadd.f32 0.0, %v3850
    %v3852 = vpop.f32.mrb[0].mxu0
    %v3853 = vpop.f32.mrb[0].mxu0
    %v3854 = vpop.f32.mrb[0].mxu0
    %3855 = vdwg.mxu0
    %v3856 = vadd.f32 %v3810, %v3851
    %v3857 = vld [vmem:[%s3484] ss:$2 sm:$0x7]
    %v3858 = vpack.c.bf16 %v3857, %v3857
    %v3860 = vsel %vm384, %v3858, 0
    %3862 = vmatprep.subr.bf16.mxu0 0
    %3863 = vmatpush1.bf16.msra.mxu0 %v725
    %3864 = vmatprep.subr.bf16.mxu0 0
    %3865 = vmatpush1.bf16.msra.mxu0 %v726
    %3866 = vmatprep.subr.bf16.mxu0 0
    %3867 = vmatpush1.bf16.msra.mxu0 0
    %3868 = vmatprep.subr.bf16.mxu0 0
    %3869 = vmatpush1.bf16.msra.mxu0 0
    %3870 = vmatprep.subr.bf16.mxu0 0
    %3871 = vmatpush1.bf16.msra.mxu0 0
    %3872 = vmatprep.subr.bf16.mxu0 0
    %3873 = vmatpush1.bf16.msra.mxu0 0
    %3874 = vmatprep.subr.bf16.mxu0 0
    %3875 = vmatpush1.bf16.msra.mxu0 0
    %3876 = vmatprep.subr.bf16.mxu0 0
    %3877 = vmatpush1.bf16.msra.mxu0 0
    %3878 = vmatprep.subr.bf16.mxu0 0
    %3879 = vmatpush1.bf16.msra.mxu0 0
    %3880 = vmatprep.subr.bf16.mxu0 0
    %3881 = vmatpush1.bf16.msra.mxu0 0
    %3882 = vmatprep.subr.bf16.mxu0 0
    %3883 = vmatpush1.bf16.msra.mxu0 0
    %3884 = vmatprep.subr.bf16.mxu0 0
    %3885 = vmatpush1.bf16.msra.mxu0 0
    %3886 = vmatprep.subr.bf16.mxu0 0
    %3887 = vmatpush1.bf16.msra.mxu0 0
    %3888 = vmatprep.subr.bf16.mxu0 0
    %3889 = vmatpush1.bf16.msra.mxu0 0
    %3890 = vmatprep.subr.bf16.mxu0 0
    %3891 = vmatpush1.bf16.msra.mxu0 0
    %3892 = vmatprep.subr.bf16.mxu0 0
    %3893 = vmatpush1.bf16.msra.mxu0 0
    %3894 = vmatprep.mubr.bf16.mxu0 0
    %3895 = vmatmul.mubr.bf16.gmra.mrb[0].mxu0 %v3860
    %v3896 = vpop.f32.mrb[0].mxu0
    %v3897 = vadd.f32 0.0, %v3896
    %v3898 = vpop.f32.mrb[0].mxu0
    %v3899 = vpop.f32.mrb[0].mxu0
    %v3900 = vpop.f32.mrb[0].mxu0
    %3901 = vdwg.mxu0
    %v3902 = vadd.f32 %v3856, %v3897
    %v3903 = vld [vmem:[%s3531] ss:$2 sm:$0x7]
    %v3904 = vpack.c.bf16 %v3903, %v3903
    %v3906 = vsel %vm384, %v3904, 0
    %3908 = vmatprep.subr.bf16.mxu0 0
    %3909 = vmatpush1.bf16.msra.mxu0 %v784
    %3910 = vmatprep.subr.bf16.mxu0 0
    %3911 = vmatpush1.bf16.msra.mxu0 %v785
    %3912 = vmatprep.subr.bf16.mxu0 0
    %3913 = vmatpush1.bf16.msra.mxu0 0
    %3914 = vmatprep.subr.bf16.mxu0 0
    %3915 = vmatpush1.bf16.msra.mxu0 0
    %3916 = vmatprep.subr.bf16.mxu0 0
    %3917 = vmatpush1.bf16.msra.mxu0 0
    %3918 = vmatprep.subr.bf16.mxu0 0
    %3919 = vmatpush1.bf16.msra.mxu0 0
    %3920 = vmatprep.subr.bf16.mxu0 0
    %3921 = vmatpush1.bf16.msra.mxu0 0
    %3922 = vmatprep.subr.bf16.mxu0 0
    %3923 = vmatpush1.bf16.msra.mxu0 0
    %3924 = vmatprep.subr.bf16.mxu0 0
    %3925 = vmatpush1.bf16.msra.mxu0 0
    %3926 = vmatprep.subr.bf16.mxu0 0
    %3927 = vmatpush1.bf16.msra.mxu0 0
    %3928 = vmatprep.subr.bf16.mxu0 0
    %3929 = vmatpush1.bf16.msra.mxu0 0
    %3930 = vmatprep.subr.bf16.mxu0 0
    %3931 = vmatpush1.bf16.msra.mxu0 0
    %3932 = vmatprep.subr.bf16.mxu0 0
    %3933 = vmatpush1.bf16.msra.mxu0 0
    %3934 = vmatprep.subr.bf16.mxu0 0
    %3935 = vmatpush1.bf16.msra.mxu0 0
    %3936 = vmatprep.subr.bf16.mxu0 0
    %3937 = vmatpush1.bf16.msra.mxu0 0
    %3938 = vmatprep.subr.bf16.mxu0 0
    %3939 = vmatpush1.bf16.msra.mxu0 0
    %3940 = vmatprep.mubr.bf16.mxu0 0
    %3941 = vmatmul.mubr.bf16.gmra.mrb[0].mxu0 %v3906
    %v3942 = vpop.f32.mrb[0].mxu0
    %v3943 = vadd.f32 0.0, %v3942
    %v3944 = vpop.f32.mrb[0].mxu0
    %v3945 = vpop.f32.mrb[0].mxu0
    %v3946 = vpop.f32.mrb[0].mxu0
    %3947 = vdwg.mxu0
    %v3948 = vadd.f32 %v3902, %v3943
    %v3949 = vld [vmem:[%s3578] ss:$2 sm:$0x7]
    %v3950 = vpack.c.bf16 %v3949, %v3949
    %v3952 = vsel %vm384, %v3950, 0
    %3954 = vmatprep.subr.bf16.mxu0 0
    %3955 = vmatpush1.bf16.msra.mxu0 %v843
    %3956 = vmatprep.subr.bf16.mxu0 0
    %3957 = vmatpush1.bf16.msra.mxu0 %v844
    %3958 = vmatprep.subr.bf16.mxu0 0
    %3959 = vmatpush1.bf16.msra.mxu0 0
    %3960 = vmatprep.subr.bf16.mxu0 0
    %3961 = vmatpush1.bf16.msra.mxu0 0
    %3962 = vmatprep.subr.bf16.mxu0 0
    %3963 = vmatpush1.bf16.msra.mxu0 0
    %3964 = vmatprep.subr.bf16.mxu0 0
    %3965 = vmatpush1.bf16.msra.mxu0 0
    %3966 = vmatprep.subr.bf16.mxu0 0
    %3967 = vmatpush1.bf16.msra.mxu0 0
    %3968 = vmatprep.subr.bf16.mxu0 0
    %3969 = vmatpush1.bf16.msra.mxu0 0
    %3970 = vmatprep.subr.bf16.mxu0 0
    %3971 = vmatpush1.bf16.msra.mxu0 0
    %3972 = vmatprep.subr.bf16.mxu0 0
    %3973 = vmatpush1.bf16.msra.mxu0 0
    %3974 = vmatprep.subr.bf16.mxu0 0
    %3975 = vmatpush1.bf16.msra.mxu0 0
    %3976 = vmatprep.subr.bf16.mxu0 0
    %3977 = vmatpush1.bf16.msra.mxu0 0
    %3978 = vmatprep.subr.bf16.mxu0 0
    %3979 = vmatpush1.bf16.msra.mxu0 0
    %3980 = vmatprep.subr.bf16.mxu0 0
    %3981 = vmatpush1.bf16.msra.mxu0 0
    %3982 = vmatprep.subr.bf16.mxu0 0
    %3983 = vmatpush1.bf16.msra.mxu0 0
    %3984 = vmatprep.subr.bf16.mxu0 0
    %3985 = vmatpush1.bf16.msra.mxu0 0
    %3986 = vmatprep.mubr.bf16.mxu0 0
    %3987 = vmatmul.mubr.bf16.gmra.mrb[0].mxu0 %v3952
    %v3988 = vpop.f32.mrb[0].mxu0
    %v3989 = vadd.f32 0.0, %v3988
    %v3990 = vpop.f32.mrb[0].mxu0
    %v3991 = vpop.f32.mrb[0].mxu0
    %v3992 = vpop.f32.mrb[0].mxu0
    %3993 = vdwg.mxu0
    %v3994 = vadd.f32 %v3948, %v3989
    %v3995 = vld [vmem:[%s3625] ss:$2 sm:$0x7]
    %v3996 = vpack.c.bf16 %v3995, %v3995
    %v3998 = vsel %vm384, %v3996, 0
    %4000 = vmatprep.subr.bf16.mxu0 0
    %4001 = vmatpush1.bf16.msra.mxu0 %v902
    %4002 = vmatprep.subr.bf16.mxu0 0
    %4003 = vmatpush1.bf16.msra.mxu0 %v903
    %4004 = vmatprep.subr.bf16.mxu0 0
    %4005 = vmatpush1.bf16.msra.mxu0 0
    %4006 = vmatprep.subr.bf16.mxu0 0
    %4007 = vmatpush1.bf16.msra.mxu0 0
    %4008 = vmatprep.subr.bf16.mxu0 0
    %4009 = vmatpush1.bf16.msra.mxu0 0
    %4010 = vmatprep.subr.bf16.mxu0 0
    %4011 = vmatpush1.bf16.msra.mxu0 0
    %4012 = vmatprep.subr.bf16.mxu0 0
    %4013 = vmatpush1.bf16.msra.mxu0 0
    %4014 = vmatprep.subr.bf16.mxu0 0
    %4015 = vmatpush1.bf16.msra.mxu0 0
    %4016 = vmatprep.subr.bf16.mxu0 0
    %4017 = vmatpush1.bf16.msra.mxu0 0
    %4018 = vmatprep.subr.bf16.mxu0 0
    %4019 = vmatpush1.bf16.msra.mxu0 0
    %4020 = vmatprep.subr.bf16.mxu0 0
    %4021 = vmatpush1.bf16.msra.mxu0 0
    %4022 = vmatprep.subr.bf16.mxu0 0
    %4023 = vmatpush1.bf16.msra.mxu0 0
    %4024 = vmatprep.subr.bf16.mxu0 0
    %4025 = vmatpush1.bf16.msra.mxu0 0
    %4026 = vmatprep.subr.bf16.mxu0 0
    %4027 = vmatpush1.bf16.msra.mxu0 0
    %4028 = vmatprep.subr.bf16.mxu0 0
    %4029 = vmatpush1.bf16.msra.mxu0 0
    %4030 = vmatprep.subr.bf16.mxu0 0
    %4031 = vmatpush1.bf16.msra.mxu0 0
    %4032 = vmatprep.mubr.bf16.mxu0 0
    %4033 = vmatmul.mubr.bf16.gmra.mrb[0].mxu0 %v3998
    %v4034 = vpop.f32.mrb[0].mxu0
    %v4035 = vadd.f32 0.0, %v4034
    %v4036 = vpop.f32.mrb[0].mxu0
    %v4037 = vpop.f32.mrb[0].mxu0
    %v4038 = vpop.f32.mrb[0].mxu0
    %4039 = vdwg.mxu0
    %v4040 = vadd.f32 %v3994, %v4035
    %s4041 = scalar_lea.vmem [#allocation2], 96
    %v4042 = vld [vmem:[%s4041] ss:$2 sm:$0x7]
    %v4043 = vpack.c.bf16 %v4042, %v4042
    %v4045 = vsel %vm384, %v4043, 0
    %4047 = vmatprep.subr.bf16.mxu0 0
    %4048 = vmatpush1.bf16.msra.mxu0 %v961
    %4049 = vmatprep.subr.bf16.mxu0 0
    %4050 = vmatpush1.bf16.msra.mxu0 %v962
    %4051 = vmatprep.subr.bf16.mxu0 0
    %4052 = vmatpush1.bf16.msra.mxu0 0
    %4053 = vmatprep.subr.bf16.mxu0 0
    %4054 = vmatpush1.bf16.msra.mxu0 0
    %4055 = vmatprep.subr.bf16.mxu0 0
    %4056 = vmatpush1.bf16.msra.mxu0 0
    %4057 = vmatprep.subr.bf16.mxu0 0
    %4058 = vmatpush1.bf16.msra.mxu0 0
    %4059 = vmatprep.subr.bf16.mxu0 0
    %4060 = vmatpush1.bf16.msra.mxu0 0
    %4061 = vmatprep.subr.bf16.mxu0 0
    %4062 = vmatpush1.bf16.msra.mxu0 0
    %4063 = vmatprep.subr.bf16.mxu0 0
    %4064 = vmatpush1.bf16.msra.mxu0 0
    %4065 = vmatprep.subr.bf16.mxu0 0
    %4066 = vmatpush1.bf16.msra.mxu0 0
    %4067 = vmatprep.subr.bf16.mxu0 0
    %4068 = vmatpush1.bf16.msra.mxu0 0
    %4069 = vmatprep.subr.bf16.mxu0 0
    %4070 = vmatpush1.bf16.msra.mxu0 0
    %4071 = vmatprep.subr.bf16.mxu0 0
    %4072 = vmatpush1.bf16.msra.mxu0 0
    %4073 = vmatprep.subr.bf16.mxu0 0
    %4074 = vmatpush1.bf16.msra.mxu0 0
    %4075 = vmatprep.subr.bf16.mxu0 0
    %4076 = vmatpush1.bf16.msra.mxu0 0
    %4077 = vmatprep.subr.bf16.mxu0 0
    %4078 = vmatpush1.bf16.msra.mxu0 0
    %4079 = vmatprep.mubr.bf16.mxu0 0
    %4080 = vmatmul.mubr.bf16.gmra.mrb[0].mxu0 %v4045
    %v4081 = vpop.f32.mrb[0].mxu0
    %v4082 = vadd.f32 0.0, %v4081
    %v4083 = vpop.f32.mrb[0].mxu0
    %v4084 = vpop.f32.mrb[0].mxu0
    %v4085 = vpop.f32.mrb[0].mxu0
    %4086 = vdwg.mxu0
    %v4087 = vadd.f32 %v4040, %v4082
    %s4088 = scalar_lea.vmem [#allocation2], 97
    %v4089 = vld [vmem:[%s4088] ss:$2 sm:$0x7]
    %v4090 = vpack.c.bf16 %v4089, %v4089
    %v4092 = vsel %vm384, %v4090, 0
    %4094 = vmatprep.subr.bf16.mxu0 0
    %4095 = vmatpush1.bf16.msra.mxu0 %v1020
    %4096 = vmatprep.subr.bf16.mxu0 0
    %4097 = vmatpush1.bf16.msra.mxu0 %v1021
    %4098 = vmatprep.subr.bf16.mxu0 0
    %4099 = vmatpush1.bf16.msra.mxu0 0
    %4100 = vmatprep.subr.bf16.mxu0 0
    %4101 = vmatpush1.bf16.msra.mxu0 0
    %4102 = vmatprep.subr.bf16.mxu0 0
    %4103 = vmatpush1.bf16.msra.mxu0 0
    %4104 = vmatprep.subr.bf16.mxu0 0
    %4105 = vmatpush1.bf16.msra.mxu0 0
    %4106 = vmatprep.subr.bf16.mxu0 0
    %4107 = vmatpush1.bf16.msra.mxu0 0
    %4108 = vmatprep.subr.bf16.mxu0 0
    %4109 = vmatpush1.bf16.msra.mxu0 0
    %4110 = vmatprep.subr.bf16.mxu0 0
    %4111 = vmatpush1.bf16.msra.mxu0 0
    %4112 = vmatprep.subr.bf16.mxu0 0
    %4113 = vmatpush1.bf16.msra.mxu0 0
    %4114 = vmatprep.subr.bf16.mxu0 0
    %4115 = vmatpush1.bf16.msra.mxu0 0
    %4116 = vmatprep.subr.bf16.mxu0 0
    %4117 = vmatpush1.bf16.msra.mxu0 0
    %4118 = vmatprep.subr.bf16.mxu0 0
    %4119 = vmatpush1.bf16.msra.mxu0 0
    %4120 = vmatprep.subr.bf16.mxu0 0
    %4121 = vmatpush1.bf16.msra.mxu0 0
    %4122 = vmatprep.subr.bf16.mxu0 0
    %4123 = vmatpush1.bf16.msra.mxu0 0
    %4124 = vmatprep.subr.bf16.mxu0 0
    %4125 = vmatpush1.bf16.msra.mxu0 0
    %4126 = vmatprep.mubr.bf16.mxu0 0
    %4127 = vmatmul.mubr.bf16.gmra.mrb[0].mxu0 %v4092
    %v4128 = vpop.f32.mrb[0].mxu0
    %v4129 = vadd.f32 0.0, %v4128
    %v4130 = vpop.f32.mrb[0].mxu0
    %v4131 = vpop.f32.mrb[0].mxu0
    %v4132 = vpop.f32.mrb[0].mxu0
    %4133 = vdwg.mxu0
    %v4134 = vadd.f32 %v4087, %v4129
    %s4135 = scalar_lea.vmem [#allocation2], 98
    %v4136 = vld [vmem:[%s4135] ss:$2 sm:$0x7]
    %v4137 = vpack.c.bf16 %v4136, %v4136
    %v4139 = vsel %vm384, %v4137, 0
    %4141 = vmatprep.subr.bf16.mxu0 0
    %4142 = vmatpush1.bf16.msra.mxu0 %v1079
    %4143 = vmatprep.subr.bf16.mxu0 0
    %4144 = vmatpush1.bf16.msra.mxu0 %v1080
    %4145 = vmatprep.subr.bf16.mxu0 0
    %4146 = vmatpush1.bf16.msra.mxu0 0
    %4147 = vmatprep.subr.bf16.mxu0 0
    %4148 = vmatpush1.bf16.msra.mxu0 0
    %4149 = vmatprep.subr.bf16.mxu0 0
    %4150 = vmatpush1.bf16.msra.mxu0 0
    %4151 = vmatprep.subr.bf16.mxu0 0
    %4152 = vmatpush1.bf16.msra.mxu0 0
    %4153 = vmatprep.subr.bf16.mxu0 0
    %4154 = vmatpush1.bf16.msra.mxu0 0
    %4155 = vmatprep.subr.bf16.mxu0 0
    %4156 = vmatpush1.bf16.msra.mxu0 0
    %4157 = vmatprep.subr.bf16.mxu0 0
    %4158 = vmatpush1.bf16.msra.mxu0 0
    %4159 = vmatprep.subr.bf16.mxu0 0
    %4160 = vmatpush1.bf16.msra.mxu0 0
    %4161 = vmatprep.subr.bf16.mxu0 0
    %4162 = vmatpush1.bf16.msra.mxu0 0
    %4163 = vmatprep.subr.bf16.mxu0 0
    %4164 = vmatpush1.bf16.msra.mxu0 0
    %4165 = vmatprep.subr.bf16.mxu0 0
    %4166 = vmatpush1.bf16.msra.mxu0 0
    %4167 = vmatprep.subr.bf16.mxu0 0
    %4168 = vmatpush1.bf16.msra.mxu0 0
    %4169 = vmatprep.subr.bf16.mxu0 0
    %4170 = vmatpush1.bf16.msra.mxu0 0
    %4171 = vmatprep.subr.bf16.mxu0 0
    %4172 = vmatpush1.bf16.msra.mxu0 0
    %4173 = vmatprep.mubr.bf16.mxu0 0
    %4174 = vmatmul.mubr.bf16.gmra.mrb[0].mxu0 %v4139
    %v4175 = vpop.f32.mrb[0].mxu0
    %v4176 = vadd.f32 0.0, %v4175
    %v4177 = vpop.f32.mrb[0].mxu0
    %v4178 = vpop.f32.mrb[0].mxu0
    %v4179 = vpop.f32.mrb[0].mxu0
    %4180 = vdwg.mxu0
    %v4181 = vadd.f32 %v4134, %v4176
    %s4182 = scalar_lea.vmem [#allocation2], 99
    %v4183 = vld [vmem:[%s4182] ss:$2 sm:$0x7]
    %v4184 = vpack.c.bf16 %v4183, %v4183
    %v4186 = vsel %vm384, %v4184, 0
    %4188 = vmatprep.subr.bf16.mxu0 0
    %4189 = vmatpush1.bf16.msra.mxu0 %v1138
    %4190 = vmatprep.subr.bf16.mxu0 0
    %4191 = vmatpush1.bf16.msra.mxu0 %v1139
    %4192 = vmatprep.subr.bf16.mxu0 0
    %4193 = vmatpush1.bf16.msra.mxu0 0
    %4194 = vmatprep.subr.bf16.mxu0 0
    %4195 = vmatpush1.bf16.msra.mxu0 0
    %4196 = vmatprep.subr.bf16.mxu0 0
    %4197 = vmatpush1.bf16.msra.mxu0 0
    %4198 = vmatprep.subr.bf16.mxu0 0
    %4199 = vmatpush1.bf16.msra.mxu0 0
    %4200 = vmatprep.subr.bf16.mxu0 0
    %4201 = vmatpush1.bf16.msra.mxu0 0
    %4202 = vmatprep.subr.bf16.mxu0 0
    %4203 = vmatpush1.bf16.msra.mxu0 0
    %4204 = vmatprep.subr.bf16.mxu0 0
    %4205 = vmatpush1.bf16.msra.mxu0 0
    %4206 = vmatprep.subr.bf16.mxu0 0
    %4207 = vmatpush1.bf16.msra.mxu0 0
    %4208 = vmatprep.subr.bf16.mxu0 0
    %4209 = vmatpush1.bf16.msra.mxu0 0
    %4210 = vmatprep.subr.bf16.mxu0 0
    %4211 = vmatpush1.bf16.msra.mxu0 0
    %4212 = vmatprep.subr.bf16.mxu0 0
    %4213 = vmatpush1.bf16.msra.mxu0 0
    %4214 = vmatprep.subr.bf16.mxu0 0
    %4215 = vmatpush1.bf16.msra.mxu0 0
    %4216 = vmatprep.subr.bf16.mxu0 0
    %4217 = vmatpush1.bf16.msra.mxu0 0
    %4218 = vmatprep.subr.bf16.mxu0 0
    %4219 = vmatpush1.bf16.msra.mxu0 0
    %4220 = vmatprep.mubr.bf16.mxu0 0
    %4221 = vmatmul.mubr.bf16.gmra.mrb[0].mxu0 %v4186
    %v4222 = vpop.f32.mrb[0].mxu0
    %v4223 = vadd.f32 0.0, %v4222
    %v4224 = vpop.f32.mrb[0].mxu0
    %v4225 = vpop.f32.mrb[0].mxu0
    %v4226 = vpop.f32.mrb[0].mxu0
    %4227 = vdwg.mxu0
    %v4228 = vadd.f32 %v4181, %v4223
    %s4229 = scalar_lea.vmem [#allocation2], 104
    %v4230 = vld [vmem:[%s4229] ss:$2 sm:$0x7]
    %v4231 = vpack.c.bf16 %v4230, %v4230
    %v4233 = vsel %vm384, %v4231, 0
    %4235 = vmatprep.subr.bf16.mxu0 0
    %4236 = vmatpush1.bf16.msra.mxu0 %v1197
    %4237 = vmatprep.subr.bf16.mxu0 0
    %4238 = vmatpush1.bf16.msra.mxu0 %v1198
    %4239 = vmatprep.subr.bf16.mxu0 0
    %4240 = vmatpush1.bf16.msra.mxu0 0
    %4241 = vmatprep.subr.bf16.mxu0 0
    %4242 = vmatpush1.bf16.msra.mxu0 0
    %4243 = vmatprep.subr.bf16.mxu0 0
    %4244 = vmatpush1.bf16.msra.mxu0 0
    %4245 = vmatprep.subr.bf16.mxu0 0
    %4246 = vmatpush1.bf16.msra.mxu0 0
    %4247 = vmatprep.subr.bf16.mxu0 0
    %4248 = vmatpush1.bf16.msra.mxu0 0
    %4249 = vmatprep.subr.bf16.mxu0 0
    %4250 = vmatpush1.bf16.msra.mxu0 0
    %4251 = vmatprep.subr.bf16.mxu0 0
    %4252 = vmatpush1.bf16.msra.mxu0 0
    %4253 = vmatprep.subr.bf16.mxu0 0
    %4254 = vmatpush1.bf16.msra.mxu0 0
    %4255 = vmatprep.subr.bf16.mxu0 0
    %4256 = vmatpush1.bf16.msra.mxu0 0
    %4257 = vmatprep.subr.bf16.mxu0 0
    %4258 = vmatpush1.bf16.msra.mxu0 0
    %4259 = vmatprep.subr.bf16.mxu0 0
    %4260 = vmatpush1.bf16.msra.mxu0 0
    %4261 = vmatprep.subr.bf16.mxu0 0
    %4262 = vmatpush1.bf16.msra.mxu0 0
    %4263 = vmatprep.subr.bf16.mxu0 0
    %4264 = vmatpush1.bf16.msra.mxu0 0
    %4265 = vmatprep.subr.bf16.mxu0 0
    %4266 = vmatpush1.bf16.msra.mxu0 0
    %4267 = vmatprep.mubr.bf16.mxu0 0
    %4268 = vmatmul.mubr.bf16.gmra.mrb[0].mxu0 %v4233
    %v4269 = vpop.f32.mrb[0].mxu0
    %v4270 = vadd.f32 0.0, %v4269
    %v4271 = vpop.f32.mrb[0].mxu0
    %v4272 = vpop.f32.mrb[0].mxu0
    %v4273 = vpop.f32.mrb[0].mxu0
    %4274 = vdwg.mxu0
    %v4275 = vadd.f32 %v4228, %v4270
    %s4276 = scalar_lea.vmem [#allocation2], 105
    %v4277 = vld [vmem:[%s4276] ss:$2 sm:$0x7]
    %v4278 = vpack.c.bf16 %v4277, %v4277
    %v4280 = vsel %vm384, %v4278, 0
    %4282 = vmatprep.subr.bf16.mxu0 0
    %4283 = vmatpush1.bf16.msra.mxu0 %v1256
    %4284 = vmatprep.subr.bf16.mxu0 0
    %4285 = vmatpush1.bf16.msra.mxu0 %v1257
    %4286 = vmatprep.subr.bf16.mxu0 0
    %4287 = vmatpush1.bf16.msra.mxu0 0
    %4288 = vmatprep.subr.bf16.mxu0 0
    %4289 = vmatpush1.bf16.msra.mxu0 0
    %4290 = vmatprep.subr.bf16.mxu0 0
    %4291 = vmatpush1.bf16.msra.mxu0 0
    %4292 = vmatprep.subr.bf16.mxu0 0
    %4293 = vmatpush1.bf16.msra.mxu0 0
    %4294 = vmatprep.subr.bf16.mxu0 0
    %4295 = vmatpush1.bf16.msra.mxu0 0
    %4296 = vmatprep.subr.bf16.mxu0 0
    %4297 = vmatpush1.bf16.msra.mxu0 0
    %4298 = vmatprep.subr.bf16.mxu0 0
    %4299 = vmatpush1.bf16.msra.mxu0 0
    %4300 = vmatprep.subr.bf16.mxu0 0
    %4301 = vmatpush1.bf16.msra.mxu0 0
    %4302 = vmatprep.subr.bf16.mxu0 0
    %4303 = vmatpush1.bf16.msra.mxu0 0
    %4304 = vmatprep.subr.bf16.mxu0 0
    %4305 = vmatpush1.bf16.msra.mxu0 0
    %4306 = vmatprep.subr.bf16.mxu0 0
    %4307 = vmatpush1.bf16.msra.mxu0 0
    %4308 = vmatprep.subr.bf16.mxu0 0
    %4309 = vmatpush1.bf16.msra.mxu0 0
    %4310 = vmatprep.subr.bf16.mxu0 0
    %4311 = vmatpush1.bf16.msra.mxu0 0
    %4312 = vmatprep.subr.bf16.mxu0 0
    %4313 = vmatpush1.bf16.msra.mxu0 0
    %4314 = vmatprep.mubr.bf16.mxu0 0
    %4315 = vmatmul.mubr.bf16.gmra.mrb[0].mxu0 %v4280
    %v4316 = vpop.f32.mrb[0].mxu0
    %v4317 = vadd.f32 0.0, %v4316
    %v4318 = vpop.f32.mrb[0].mxu0
    %v4319 = vpop.f32.mrb[0].mxu0
    %v4320 = vpop.f32.mrb[0].mxu0
    %4321 = vdwg.mxu0
    %v4322 = vadd.f32 %v4275, %v4317
    %s4323 = scalar_lea.vmem [#allocation2], 106
    %v4324 = vld [vmem:[%s4323] ss:$2 sm:$0x7]
    %v4325 = vpack.c.bf16 %v4324, %v4324
    %v4327 = vsel %vm384, %v4325, 0
    %4329 = vmatprep.subr.bf16.mxu0 0
    %4330 = vmatpush1.bf16.msra.mxu0 %v1315
    %4331 = vmatprep.subr.bf16.mxu0 0
    %4332 = vmatpush1.bf16.msra.mxu0 %v1316
    %4333 = vmatprep.subr.bf16.mxu0 0
    %4334 = vmatpush1.bf16.msra.mxu0 0
    %4335 = vmatprep.subr.bf16.mxu0 0
    %4336 = vmatpush1.bf16.msra.mxu0 0
    %4337 = vmatprep.subr.bf16.mxu0 0
    %4338 = vmatpush1.bf16.msra.mxu0 0
    %4339 = vmatprep.subr.bf16.mxu0 0
    %4340 = vmatpush1.bf16.msra.mxu0 0
    %4341 = vmatprep.subr.bf16.mxu0 0
    %4342 = vmatpush1.bf16.msra.mxu0 0
    %4343 = vmatprep.subr.bf16.mxu0 0
    %4344 = vmatpush1.bf16.msra.mxu0 0
    %4345 = vmatprep.subr.bf16.mxu0 0
    %4346 = vmatpush1.bf16.msra.mxu0 0
    %4347 = vmatprep.subr.bf16.mxu0 0
    %4348 = vmatpush1.bf16.msra.mxu0 0
    %4349 = vmatprep.subr.bf16.mxu0 0
    %4350 = vmatpush1.bf16.msra.mxu0 0
    %4351 = vmatprep.subr.bf16.mxu0 0
    %4352 = vmatpush1.bf16.msra.mxu0 0
    %4353 = vmatprep.subr.bf16.mxu0 0
    %4354 = vmatpush1.bf16.msra.mxu0 0
    %4355 = vmatprep.subr.bf16.mxu0 0
    %4356 = vmatpush1.bf16.msra.mxu0 0
    %4357 = vmatprep.subr.bf16.mxu0 0
    %4358 = vmatpush1.bf16.msra.mxu0 0
    %4359 = vmatprep.subr.bf16.mxu0 0
    %4360 = vmatpush1.bf16.msra.mxu0 0
    %4361 = vmatprep.mubr.bf16.mxu0 0
    %4362 = vmatmul.mubr.bf16.gmra.mrb[0].mxu0 %v4327
    %v4363 = vpop.f32.mrb[0].mxu0
    %v4364 = vadd.f32 0.0, %v4363
    %v4365 = vpop.f32.mrb[0].mxu0
    %v4366 = vpop.f32.mrb[0].mxu0
    %v4367 = vpop.f32.mrb[0].mxu0
    %4368 = vdwg.mxu0
    %v4369 = vadd.f32 %v4322, %v4364
    %s4370 = scalar_lea.vmem [#allocation2], 107
    %v4371 = vld [vmem:[%s4370] ss:$2 sm:$0x7]
    %v4372 = vpack.c.bf16 %v4371, %v4371
    %v4374 = vsel %vm384, %v4372, 0
    %4376 = vmatprep.subr.bf16.mxu0 0
    %4377 = vmatpush1.bf16.msra.mxu0 %v1374
    %4378 = vmatprep.subr.bf16.mxu0 0
    %4379 = vmatpush1.bf16.msra.mxu0 %v1375
    %4380 = vmatprep.subr.bf16.mxu0 0
    %4381 = vmatpush1.bf16.msra.mxu0 0
    %4382 = vmatprep.subr.bf16.mxu0 0
    %4383 = vmatpush1.bf16.msra.mxu0 0
    %4384 = vmatprep.subr.bf16.mxu0 0
    %4385 = vmatpush1.bf16.msra.mxu0 0
    %4386 = vmatprep.subr.bf16.mxu0 0
    %4387 = vmatpush1.bf16.msra.mxu0 0
    %4388 = vmatprep.subr.bf16.mxu0 0
    %4389 = vmatpush1.bf16.msra.mxu0 0
    %4390 = vmatprep.subr.bf16.mxu0 0
    %4391 = vmatpush1.bf16.msra.mxu0 0
    %4392 = vmatprep.subr.bf16.mxu0 0
    %4393 = vmatpush1.bf16.msra.mxu0 0
    %4394 = vmatprep.subr.bf16.mxu0 0
    %4395 = vmatpush1.bf16.msra.mxu0 0
    %4396 = vmatprep.subr.bf16.mxu0 0
    %4397 = vmatpush1.bf16.msra.mxu0 0
    %4398 = vmatprep.subr.bf16.mxu0 0
    %4399 = vmatpush1.bf16.msra.mxu0 0
    %4400 = vmatprep.subr.bf16.mxu0 0
    %4401 = vmatpush1.bf16.msra.mxu0 0
    %4402 = vmatprep.subr.bf16.mxu0 0
    %4403 = vmatpush1.bf16.msra.mxu0 0
    %4404 = vmatprep.subr.bf16.mxu0 0
    %4405 = vmatpush1.bf16.msra.mxu0 0
    %4406 = vmatprep.subr.bf16.mxu0 0
    %4407 = vmatpush1.bf16.msra.mxu0 0
    %4408 = vmatprep.mubr.bf16.mxu0 0
    %4409 = vmatmul.mubr.bf16.gmra.mrb[0].mxu0 %v4374
    %v4410 = vpop.f32.mrb[0].mxu0
    %v4411 = vadd.f32 0.0, %v4410
    %v4412 = vpop.f32.mrb[0].mxu0
    %v4413 = vpop.f32.mrb[0].mxu0
    %v4414 = vpop.f32.mrb[0].mxu0
    %4415 = vdwg.mxu0
    %v4416 = vadd.f32 %v4369, %v4411
    %v4417 = vadd.f32 %v4416, %v1426
    %v4418 = vmax.f32 %v4417, 0.0
    %4419 = vst.msk [vmem:[#allocation3 + $0xc] sm:$0x7] %vm1430, %v4418
    %v4420 = vld [vmem:[%s4041] ss:$2 sm:$0x7]
    %v4421 = vpack.c.bf16 %v4420, %v4420
    %v4422 = vld [vmem:[%s4088] ss:$2 sm:$0x7]
    %v4423 = vpack.c.bf16 %v4422, %v4422
    %v4425 = vsel %vm384, %v4423, 0
    %4427 = vmatprep.subr.bf16.mxu0 0
    %4428 = vmatpush1.bf16.msra.mxu0 %v494
    %4429 = vmatprep.subr.bf16.mxu0 0
    %4430 = vmatpush1.bf16.msra.mxu0 %v495
    %4431 = vmatprep.subr.bf16.mxu0 0
    %4432 = vmatpush1.bf16.msra.mxu0 0
    %4433 = vmatprep.subr.bf16.mxu0 0
    %4434 = vmatpush1.bf16.msra.mxu0 0
    %4435 = vmatprep.subr.bf16.mxu0 0
    %4436 = vmatpush1.bf16.msra.mxu0 0
    %4437 = vmatprep.subr.bf16.mxu0 0
    %4438 = vmatpush1.bf16.msra.mxu0 0
    %4439 = vmatprep.subr.bf16.mxu0 0
    %4440 = vmatpush1.bf16.msra.mxu0 0
    %4441 = vmatprep.subr.bf16.mxu0 0
    %4442 = vmatpush1.bf16.msra.mxu0 0
    %4443 = vmatprep.subr.bf16.mxu0 0
    %4444 = vmatpush1.bf16.msra.mxu0 0
    %4445 = vmatprep.subr.bf16.mxu0 0
    %4446 = vmatpush1.bf16.msra.mxu0 0
    %4447 = vmatprep.subr.bf16.mxu0 0
    %4448 = vmatpush1.bf16.msra.mxu0 0
    %4449 = vmatprep.subr.bf16.mxu0 0
    %4450 = vmatpush1.bf16.msra.mxu0 0
    %4451 = vmatprep.subr.bf16.mxu0 0
    %4452 = vmatpush1.bf16.msra.mxu0 0
    %4453 = vmatprep.subr.bf16.mxu0 0
    %4454 = vmatpush1.bf16.msra.mxu0 0
    %4455 = vmatprep.subr.bf16.mxu0 0
    %4456 = vmatpush1.bf16.msra.mxu0 0
    %4457 = vmatprep.subr.bf16.mxu0 0
    %4458 = vmatpush1.bf16.msra.mxu0 0
    %4459 = vmatprep.mubr.bf16.mxu0 0
    %4460 = vmatmul.mubr.bf16.gmra.mrb[0].mxu0 %v4425
    %v4461 = vpop.f32.mrb[0].mxu0
    %v4462 = vadd.f32 0.0, %v4461
    %v4463 = vpop.f32.mrb[0].mxu0
    %v4464 = vpop.f32.mrb[0].mxu0
    %v4465 = vpop.f32.mrb[0].mxu0
    %4466 = vdwg.mxu0
    %v4468 = vsel %vm384, %v4421, 0
    %4470 = vmatprep.subr.bf16.mxu0 0
    %4471 = vmatpush1.bf16.msra.mxu0 %v549
    %4472 = vmatprep.subr.bf16.mxu0 0
    %4473 = vmatpush1.bf16.msra.mxu0 %v550
    %4474 = vmatprep.subr.bf16.mxu0 0
    %4475 = vmatpush1.bf16.msra.mxu0 0
    %4476 = vmatprep.subr.bf16.mxu0 0
    %4477 = vmatpush1.bf16.msra.mxu0 0
    %4478 = vmatprep.subr.bf16.mxu0 0
    %4479 = vmatpush1.bf16.msra.mxu0 0
    %4480 = vmatprep.subr.bf16.mxu0 0
    %4481 = vmatpush1.bf16.msra.mxu0 0
    %4482 = vmatprep.subr.bf16.mxu0 0
    %4483 = vmatpush1.bf16.msra.mxu0 0
    %4484 = vmatprep.subr.bf16.mxu0 0
    %4485 = vmatpush1.bf16.msra.mxu0 0
    %4486 = vmatprep.subr.bf16.mxu0 0
    %4487 = vmatpush1.bf16.msra.mxu0 0
    %4488 = vmatprep.subr.bf16.mxu0 0
    %4489 = vmatpush1.bf16.msra.mxu0 0
    %4490 = vmatprep.subr.bf16.mxu0 0
    %4491 = vmatpush1.bf16.msra.mxu0 0
    %4492 = vmatprep.subr.bf16.mxu0 0
    %4493 = vmatpush1.bf16.msra.mxu0 0
    %4494 = vmatprep.subr.bf16.mxu0 0
    %4495 = vmatpush1.bf16.msra.mxu0 0
    %4496 = vmatprep.subr.bf16.mxu0 0
    %4497 = vmatpush1.bf16.msra.mxu0 0
    %4498 = vmatprep.subr.bf16.mxu0 0
    %4499 = vmatpush1.bf16.msra.mxu0 0
    %4500 = vmatprep.subr.bf16.mxu0 0
    %4501 = vmatpush1.bf16.msra.mxu0 0
    %4502 = vmatprep.mubr.bf16.mxu0 0
    %4503 = vmatmul.mubr.bf16.gmra.mrb[0].mxu0 %v4468
    %v4504 = vpop.f32.mrb[0].mxu0
    %v4505 = vadd.f32 %v4462, %v4504
    %v4506 = vpop.f32.mrb[0].mxu0
    %v4507 = vpop.f32.mrb[0].mxu0
    %v4508 = vpop.f32.mrb[0].mxu0
    %4509 = vdwg.mxu0
    %v4510 = vld [vmem:[%s4135] ss:$2 sm:$0x7]
    %v4511 = vpack.c.bf16 %v4510, %v4510
    %v4513 = vsel %vm384, %v4511, 0
    %4515 = vmatprep.subr.bf16.mxu0 0
    %4516 = vmatpush1.bf16.msra.mxu0 %v607
    %4517 = vmatprep.subr.bf16.mxu0 0
    %4518 = vmatpush1.bf16.msra.mxu0 %v608
    %4519 = vmatprep.subr.bf16.mxu0 0
    %4520 = vmatpush1.bf16.msra.mxu0 0
    %4521 = vmatprep.subr.bf16.mxu0 0
    %4522 = vmatpush1.bf16.msra.mxu0 0
    %4523 = vmatprep.subr.bf16.mxu0 0
    %4524 = vmatpush1.bf16.msra.mxu0 0
    %4525 = vmatprep.subr.bf16.mxu0 0
    %4526 = vmatpush1.bf16.msra.mxu0 0
    %4527 = vmatprep.subr.bf16.mxu0 0
    %4528 = vmatpush1.bf16.msra.mxu0 0
    %4529 = vmatprep.subr.bf16.mxu0 0
    %4530 = vmatpush1.bf16.msra.mxu0 0
    %4531 = vmatprep.subr.bf16.mxu0 0
    %4532 = vmatpush1.bf16.msra.mxu0 0
    %4533 = vmatprep.subr.bf16.mxu0 0
    %4534 = vmatpush1.bf16.msra.mxu0 0
    %4535 = vmatprep.subr.bf16.mxu0 0
    %4536 = vmatpush1.bf16.msra.mxu0 0
    %4537 = vmatprep.subr.bf16.mxu0 0
    %4538 = vmatpush1.bf16.msra.mxu0 0
    %4539 = vmatprep.subr.bf16.mxu0 0
    %4540 = vmatpush1.bf16.msra.mxu0 0
    %4541 = vmatprep.subr.bf16.mxu0 0
    %4542 = vmatpush1.bf16.msra.mxu0 0
    %4543 = vmatprep.subr.bf16.mxu0 0
    %4544 = vmatpush1.bf16.msra.mxu0 0
    %4545 = vmatprep.subr.bf16.mxu0 0
    %4546 = vmatpush1.bf16.msra.mxu0 0
    %4547 = vmatprep.mubr.bf16.mxu0 0
    %4548 = vmatmul.mubr.bf16.gmra.mrb[0].mxu0 %v4513
    %v4549 = vpop.f32.mrb[0].mxu0
    %v4550 = vadd.f32 0.0, %v4549
    %v4551 = vpop.f32.mrb[0].mxu0
    %v4552 = vpop.f32.mrb[0].mxu0
    %v4553 = vpop.f32.mrb[0].mxu0
    %4554 = vdwg.mxu0
    %v4555 = vadd.f32 %v4505, %v4550
    %v4556 = vld [vmem:[%s4182] ss:$2 sm:$0x7]
    %v4557 = vpack.c.bf16 %v4556, %v4556
    %v4559 = vsel %vm384, %v4557, 0
    %4561 = vmatprep.subr.bf16.mxu0 0
    %4562 = vmatpush1.bf16.msra.mxu0 %v666
    %4563 = vmatprep.subr.bf16.mxu0 0
    %4564 = vmatpush1.bf16.msra.mxu0 %v667
    %4565 = vmatprep.subr.bf16.mxu0 0
    %4566 = vmatpush1.bf16.msra.mxu0 0
    %4567 = vmatprep.subr.bf16.mxu0 0
    %4568 = vmatpush1.bf16.msra.mxu0 0
    %4569 = vmatprep.subr.bf16.mxu0 0
    %4570 = vmatpush1.bf16.msra.mxu0 0
    %4571 = vmatprep.subr.bf16.mxu0 0
    %4572 = vmatpush1.bf16.msra.mxu0 0
    %4573 = vmatprep.subr.bf16.mxu0 0
    %4574 = vmatpush1.bf16.msra.mxu0 0
    %4575 = vmatprep.subr.bf16.mxu0 0
    %4576 = vmatpush1.bf16.msra.mxu0 0
    %4577 = vmatprep.subr.bf16.mxu0 0
    %4578 = vmatpush1.bf16.msra.mxu0 0
    %4579 = vmatprep.subr.bf16.mxu0 0
    %4580 = vmatpush1.bf16.msra.mxu0 0
    %4581 = vmatprep.subr.bf16.mxu0 0
    %4582 = vmatpush1.bf16.msra.mxu0 0
    %4583 = vmatprep.subr.bf16.mxu0 0
    %4584 = vmatpush1.bf16.msra.mxu0 0
    %4585 = vmatprep.subr.bf16.mxu0 0
    %4586 = vmatpush1.bf16.msra.mxu0 0
    %4587 = vmatprep.subr.bf16.mxu0 0
    %4588 = vmatpush1.bf16.msra.mxu0 0
    %4589 = vmatprep.subr.bf16.mxu0 0
    %4590 = vmatpush1.bf16.msra.mxu0 0
    %4591 = vmatprep.subr.bf16.mxu0 0
    %4592 = vmatpush1.bf16.msra.mxu0 0
    %4593 = vmatprep.mubr.bf16.mxu0 0
    %4594 = vmatmul.mubr.bf16.gmra.mrb[0].mxu0 %v4559
    %v4595 = vpop.f32.mrb[0].mxu0
    %v4596 = vadd.f32 0.0, %v4595
    %v4597 = vpop.f32.mrb[0].mxu0
    %v4598 = vpop.f32.mrb[0].mxu0
    %v4599 = vpop.f32.mrb[0].mxu0
    %4600 = vdwg.mxu0
    %v4601 = vadd.f32 %v4555, %v4596
    %v4602 = vld [vmem:[%s4229] ss:$2 sm:$0x7]
    %v4603 = vpack.c.bf16 %v4602, %v4602
    %v4605 = vsel %vm384, %v4603, 0
    %4607 = vmatprep.subr.bf16.mxu0 0
    %4608 = vmatpush1.bf16.msra.mxu0 %v725
    %4609 = vmatprep.subr.bf16.mxu0 0
    %4610 = vmatpush1.bf16.msra.mxu0 %v726
    %4611 = vmatprep.subr.bf16.mxu0 0
    %4612 = vmatpush1.bf16.msra.mxu0 0
    %4613 = vmatprep.subr.bf16.mxu0 0
    %4614 = vmatpush1.bf16.msra.mxu0 0
    %4615 = vmatprep.subr.bf16.mxu0 0
    %4616 = vmatpush1.bf16.msra.mxu0 0
    %4617 = vmatprep.subr.bf16.mxu0 0
    %4618 = vmatpush1.bf16.msra.mxu0 0
    %4619 = vmatprep.subr.bf16.mxu0 0
    %4620 = vmatpush1.bf16.msra.mxu0 0
    %4621 = vmatprep.subr.bf16.mxu0 0
    %4622 = vmatpush1.bf16.msra.mxu0 0
    %4623 = vmatprep.subr.bf16.mxu0 0
    %4624 = vmatpush1.bf16.msra.mxu0 0
    %4625 = vmatprep.subr.bf16.mxu0 0
    %4626 = vmatpush1.bf16.msra.mxu0 0
    %4627 = vmatprep.subr.bf16.mxu0 0
    %4628 = vmatpush1.bf16.msra.mxu0 0
    %4629 = vmatprep.subr.bf16.mxu0 0
    %4630 = vmatpush1.bf16.msra.mxu0 0
    %4631 = vmatprep.subr.bf16.mxu0 0
    %4632 = vmatpush1.bf16.msra.mxu0 0
    %4633 = vmatprep.subr.bf16.mxu0 0
    %4634 = vmatpush1.bf16.msra.mxu0 0
    %4635 = vmatprep.subr.bf16.mxu0 0
    %4636 = vmatpush1.bf16.msra.mxu0 0
    %4637 = vmatprep.subr.bf16.mxu0 0
    %4638 = vmatpush1.bf16.msra.mxu0 0
    %4639 = vmatprep.mubr.bf16.mxu0 0
    %4640 = vmatmul.mubr.bf16.gmra.mrb[0].mxu0 %v4605
    %v4641 = vpop.f32.mrb[0].mxu0
    %v4642 = vadd.f32 0.0, %v4641
    %v4643 = vpop.f32.mrb[0].mxu0
    %v4644 = vpop.f32.mrb[0].mxu0
    %v4645 = vpop.f32.mrb[0].mxu0
    %4646 = vdwg.mxu0
    %v4647 = vadd.f32 %v4601, %v4642
    %v4648 = vld [vmem:[%s4276] ss:$2 sm:$0x7]
    %v4649 = vpack.c.bf16 %v4648, %v4648
    %v4651 = vsel %vm384, %v4649, 0
    %4653 = vmatprep.subr.bf16.mxu0 0
    %4654 = vmatpush1.bf16.msra.mxu0 %v784
    %4655 = vmatprep.subr.bf16.mxu0 0
    %4656 = vmatpush1.bf16.msra.mxu0 %v785
    %4657 = vmatprep.subr.bf16.mxu0 0
    %4658 = vmatpush1.bf16.msra.mxu0 0
    %4659 = vmatprep.subr.bf16.mxu0 0
    %4660 = vmatpush1.bf16.msra.mxu0 0
    %4661 = vmatprep.subr.bf16.mxu0 0
    %4662 = vmatpush1.bf16.msra.mxu0 0
    %4663 = vmatprep.subr.bf16.mxu0 0
    %4664 = vmatpush1.bf16.msra.mxu0 0
    %4665 = vmatprep.subr.bf16.mxu0 0
    %4666 = vmatpush1.bf16.msra.mxu0 0
    %4667 = vmatprep.subr.bf16.mxu0 0
    %4668 = vmatpush1.bf16.msra.mxu0 0
    %4669 = vmatprep.subr.bf16.mxu0 0
    %4670 = vmatpush1.bf16.msra.mxu0 0
    %4671 = vmatprep.subr.bf16.mxu0 0
    %4672 = vmatpush1.bf16.msra.mxu0 0
    %4673 = vmatprep.subr.bf16.mxu0 0
    %4674 = vmatpush1.bf16.msra.mxu0 0
    %4675 = vmatprep.subr.bf16.mxu0 0
    %4676 = vmatpush1.bf16.msra.mxu0 0
    %4677 = vmatprep.subr.bf16.mxu0 0
    %4678 = vmatpush1.bf16.msra.mxu0 0
    %4679 = vmatprep.subr.bf16.mxu0 0
    %4680 = vmatpush1.bf16.msra.mxu0 0
    %4681 = vmatprep.subr.bf16.mxu0 0
    %4682 = vmatpush1.bf16.msra.mxu0 0
    %4683 = vmatprep.subr.bf16.mxu0 0
    %4684 = vmatpush1.bf16.msra.mxu0 0
    %4685 = vmatprep.mubr.bf16.mxu0 0
    %4686 = vmatmul.mubr.bf16.gmra.mrb[0].mxu0 %v4651
    %v4687 = vpop.f32.mrb[0].mxu0
    %v4688 = vadd.f32 0.0, %v4687
    %v4689 = vpop.f32.mrb[0].mxu0
    %v4690 = vpop.f32.mrb[0].mxu0
    %v4691 = vpop.f32.mrb[0].mxu0
    %4692 = vdwg.mxu0
    %v4693 = vadd.f32 %v4647, %v4688
    %v4694 = vld [vmem:[%s4323] ss:$2 sm:$0x7]
    %v4695 = vpack.c.bf16 %v4694, %v4694
    %v4697 = vsel %vm384, %v4695, 0
    %4699 = vmatprep.subr.bf16.mxu0 0
    %4700 = vmatpush1.bf16.msra.mxu0 %v843
    %4701 = vmatprep.subr.bf16.mxu0 0
    %4702 = vmatpush1.bf16.msra.mxu0 %v844
    %4703 = vmatprep.subr.bf16.mxu0 0
    %4704 = vmatpush1.bf16.msra.mxu0 0
    %4705 = vmatprep.subr.bf16.mxu0 0
    %4706 = vmatpush1.bf16.msra.mxu0 0
    %4707 = vmatprep.subr.bf16.mxu0 0
    %4708 = vmatpush1.bf16.msra.mxu0 0
    %4709 = vmatprep.subr.bf16.mxu0 0
    %4710 = vmatpush1.bf16.msra.mxu0 0
    %4711 = vmatprep.subr.bf16.mxu0 0
    %4712 = vmatpush1.bf16.msra.mxu0 0
    %4713 = vmatprep.subr.bf16.mxu0 0
    %4714 = vmatpush1.bf16.msra.mxu0 0
    %4715 = vmatprep.subr.bf16.mxu0 0
    %4716 = vmatpush1.bf16.msra.mxu0 0
    %4717 = vmatprep.subr.bf16.mxu0 0
    %4718 = vmatpush1.bf16.msra.mxu0 0
    %4719 = vmatprep.subr.bf16.mxu0 0
    %4720 = vmatpush1.bf16.msra.mxu0 0
    %4721 = vmatprep.subr.bf16.mxu0 0
    %4722 = vmatpush1.bf16.msra.mxu0 0
    %4723 = vmatprep.subr.bf16.mxu0 0
    %4724 = vmatpush1.bf16.msra.mxu0 0
    %4725 = vmatprep.subr.bf16.mxu0 0
    %4726 = vmatpush1.bf16.msra.mxu0 0
    %4727 = vmatprep.subr.bf16.mxu0 0
    %4728 = vmatpush1.bf16.msra.mxu0 0
    %4729 = vmatprep.subr.bf16.mxu0 0
    %4730 = vmatpush1.bf16.msra.mxu0 0
    %4731 = vmatprep.mubr.bf16.mxu0 0
    %4732 = vmatmul.mubr.bf16.gmra.mrb[0].mxu0 %v4697
    %v4733 = vpop.f32.mrb[0].mxu0
    %v4734 = vadd.f32 0.0, %v4733
    %v4735 = vpop.f32.mrb[0].mxu0
    %v4736 = vpop.f32.mrb[0].mxu0
    %v4737 = vpop.f32.mrb[0].mxu0
    %4738 = vdwg.mxu0
    %v4739 = vadd.f32 %v4693, %v4734
    %v4740 = vld [vmem:[%s4370] ss:$2 sm:$0x7]
    %v4741 = vpack.c.bf16 %v4740, %v4740
    %v4743 = vsel %vm384, %v4741, 0
    %4745 = vmatprep.subr.bf16.mxu0 0
    %4746 = vmatpush1.bf16.msra.mxu0 %v902
    %4747 = vmatprep.subr.bf16.mxu0 0
    %4748 = vmatpush1.bf16.msra.mxu0 %v903
    %4749 = vmatprep.subr.bf16.mxu0 0
    %4750 = vmatpush1.bf16.msra.mxu0 0
    %4751 = vmatprep.subr.bf16.mxu0 0
    %4752 = vmatpush1.bf16.msra.mxu0 0
    %4753 = vmatprep.subr.bf16.mxu0 0
    %4754 = vmatpush1.bf16.msra.mxu0 0
    %4755 = vmatprep.subr.bf16.mxu0 0
    %4756 = vmatpush1.bf16.msra.mxu0 0
    %4757 = vmatprep.subr.bf16.mxu0 0
    %4758 = vmatpush1.bf16.msra.mxu0 0
    %4759 = vmatprep.subr.bf16.mxu0 0
    %4760 = vmatpush1.bf16.msra.mxu0 0
    %4761 = vmatprep.subr.bf16.mxu0 0
    %4762 = vmatpush1.bf16.msra.mxu0 0
    %4763 = vmatprep.subr.bf16.mxu0 0
    %4764 = vmatpush1.bf16.msra.mxu0 0
    %4765 = vmatprep.subr.bf16.mxu0 0
    %4766 = vmatpush1.bf16.msra.mxu0 0
    %4767 = vmatprep.subr.bf16.mxu0 0
    %4768 = vmatpush1.bf16.msra.mxu0 0
    %4769 = vmatprep.subr.bf16.mxu0 0
    %4770 = vmatpush1.bf16.msra.mxu0 0
    %4771 = vmatprep.subr.bf16.mxu0 0
    %4772 = vmatpush1.bf16.msra.mxu0 0
    %4773 = vmatprep.subr.bf16.mxu0 0
    %4774 = vmatpush1.bf16.msra.mxu0 0
    %4775 = vmatprep.subr.bf16.mxu0 0
    %4776 = vmatpush1.bf16.msra.mxu0 0
    %4777 = vmatprep.mubr.bf16.mxu0 0
    %4778 = vmatmul.mubr.bf16.gmra.mrb[0].mxu0 %v4743
    %v4779 = vpop.f32.mrb[0].mxu0
    %v4780 = vadd.f32 0.0, %v4779
    %v4781 = vpop.f32.mrb[0].mxu0
    %v4782 = vpop.f32.mrb[0].mxu0
    %v4783 = vpop.f32.mrb[0].mxu0
    %4784 = vdwg.mxu0
    %v4785 = vadd.f32 %v4739, %v4780
    %s4786 = scalar_lea.vmem [#allocation2], 112
    %v4787 = vld [vmem:[%s4786] ss:$2 sm:$0x7]
    %v4788 = vpack.c.bf16 %v4787, %v4787
    %v4790 = vsel %vm384, %v4788, 0
    %4792 = vmatprep.subr.bf16.mxu0 0
    %4793 = vmatpush1.bf16.msra.mxu0 %v961
    %4794 = vmatprep.subr.bf16.mxu0 0
    %4795 = vmatpush1.bf16.msra.mxu0 %v962
    %4796 = vmatprep.subr.bf16.mxu0 0
    %4797 = vmatpush1.bf16.msra.mxu0 0
    %4798 = vmatprep.subr.bf16.mxu0 0
    %4799 = vmatpush1.bf16.msra.mxu0 0
    %4800 = vmatprep.subr.bf16.mxu0 0
    %4801 = vmatpush1.bf16.msra.mxu0 0
    %4802 = vmatprep.subr.bf16.mxu0 0
    %4803 = vmatpush1.bf16.msra.mxu0 0
    %4804 = vmatprep.subr.bf16.mxu0 0
    %4805 = vmatpush1.bf16.msra.mxu0 0
    %4806 = vmatprep.subr.bf16.mxu0 0
    %4807 = vmatpush1.bf16.msra.mxu0 0
    %4808 = vmatprep.subr.bf16.mxu0 0
    %4809 = vmatpush1.bf16.msra.mxu0 0
    %4810 = vmatprep.subr.bf16.mxu0 0
    %4811 = vmatpush1.bf16.msra.mxu0 0
    %4812 = vmatprep.subr.bf16.mxu0 0
    %4813 = vmatpush1.bf16.msra.mxu0 0
    %4814 = vmatprep.subr.bf16.mxu0 0
    %4815 = vmatpush1.bf16.msra.mxu0 0
    %4816 = vmatprep.subr.bf16.mxu0 0
    %4817 = vmatpush1.bf16.msra.mxu0 0
    %4818 = vmatprep.subr.bf16.mxu0 0
    %4819 = vmatpush1.bf16.msra.mxu0 0
    %4820 = vmatprep.subr.bf16.mxu0 0
    %4821 = vmatpush1.bf16.msra.mxu0 0
    %4822 = vmatprep.subr.bf16.mxu0 0
    %4823 = vmatpush1.bf16.msra.mxu0 0
    %4824 = vmatprep.mubr.bf16.mxu0 0
    %4825 = vmatmul.mubr.bf16.gmra.mrb[0].mxu0 %v4790
    %v4826 = vpop.f32.mrb[0].mxu0
    %v4827 = vadd.f32 0.0, %v4826
    %v4828 = vpop.f32.mrb[0].mxu0
    %v4829 = vpop.f32.mrb[0].mxu0
    %v4830 = vpop.f32.mrb[0].mxu0
    %4831 = vdwg.mxu0
    %v4832 = vadd.f32 %v4785, %v4827
    %s4833 = scalar_lea.vmem [#allocation2], 113
    %v4834 = vld [vmem:[%s4833] ss:$2 sm:$0x7]
    %v4835 = vpack.c.bf16 %v4834, %v4834
    %v4837 = vsel %vm384, %v4835, 0
    %4839 = vmatprep.subr.bf16.mxu0 0
    %4840 = vmatpush1.bf16.msra.mxu0 %v1020
    %4841 = vmatprep.subr.bf16.mxu0 0
    %4842 = vmatpush1.bf16.msra.mxu0 %v1021
    %4843 = vmatprep.subr.bf16.mxu0 0
    %4844 = vmatpush1.bf16.msra.mxu0 0
    %4845 = vmatprep.subr.bf16.mxu0 0
    %4846 = vmatpush1.bf16.msra.mxu0 0
    %4847 = vmatprep.subr.bf16.mxu0 0
    %4848 = vmatpush1.bf16.msra.mxu0 0
    %4849 = vmatprep.subr.bf16.mxu0 0
    %4850 = vmatpush1.bf16.msra.mxu0 0
    %4851 = vmatprep.subr.bf16.mxu0 0
    %4852 = vmatpush1.bf16.msra.mxu0 0
    %4853 = vmatprep.subr.bf16.mxu0 0
    %4854 = vmatpush1.bf16.msra.mxu0 0
    %4855 = vmatprep.subr.bf16.mxu0 0
    %4856 = vmatpush1.bf16.msra.mxu0 0
    %4857 = vmatprep.subr.bf16.mxu0 0
    %4858 = vmatpush1.bf16.msra.mxu0 0
    %4859 = vmatprep.subr.bf16.mxu0 0
    %4860 = vmatpush1.bf16.msra.mxu0 0
    %4861 = vmatprep.subr.bf16.mxu0 0
    %4862 = vmatpush1.bf16.msra.mxu0 0
    %4863 = vmatprep.subr.bf16.mxu0 0
    %4864 = vmatpush1.bf16.msra.mxu0 0
    %4865 = vmatprep.subr.bf16.mxu0 0
    %4866 = vmatpush1.bf16.msra.mxu0 0
    %4867 = vmatprep.subr.bf16.mxu0 0
    %4868 = vmatpush1.bf16.msra.mxu0 0
    %4869 = vmatprep.subr.bf16.mxu0 0
    %4870 = vmatpush1.bf16.msra.mxu0 0
    %4871 = vmatprep.mubr.bf16.mxu0 0
    %4872 = vmatmul.mubr.bf16.gmra.mrb[0].mxu0 %v4837
    %v4873 = vpop.f32.mrb[0].mxu0
    %v4874 = vadd.f32 0.0, %v4873
    %v4875 = vpop.f32.mrb[0].mxu0
    %v4876 = vpop.f32.mrb[0].mxu0
    %v4877 = vpop.f32.mrb[0].mxu0
    %4878 = vdwg.mxu0
    %v4879 = vadd.f32 %v4832, %v4874
    %s4880 = scalar_lea.vmem [#allocation2], 114
    %v4881 = vld [vmem:[%s4880] ss:$2 sm:$0x7]
    %v4882 = vpack.c.bf16 %v4881, %v4881
    %v4884 = vsel %vm384, %v4882, 0
    %4886 = vmatprep.subr.bf16.mxu0 0
    %4887 = vmatpush1.bf16.msra.mxu0 %v1079
    %4888 = vmatprep.subr.bf16.mxu0 0
    %4889 = vmatpush1.bf16.msra.mxu0 %v1080
    %4890 = vmatprep.subr.bf16.mxu0 0
    %4891 = vmatpush1.bf16.msra.mxu0 0
    %4892 = vmatprep.subr.bf16.mxu0 0
    %4893 = vmatpush1.bf16.msra.mxu0 0
    %4894 = vmatprep.subr.bf16.mxu0 0
    %4895 = vmatpush1.bf16.msra.mxu0 0
    %4896 = vmatprep.subr.bf16.mxu0 0
    %4897 = vmatpush1.bf16.msra.mxu0 0
    %4898 = vmatprep.subr.bf16.mxu0 0
    %4899 = vmatpush1.bf16.msra.mxu0 0
    %4900 = vmatprep.subr.bf16.mxu0 0
    %4901 = vmatpush1.bf16.msra.mxu0 0
    %4902 = vmatprep.subr.bf16.mxu0 0
    %4903 = vmatpush1.bf16.msra.mxu0 0
    %4904 = vmatprep.subr.bf16.mxu0 0
    %4905 = vmatpush1.bf16.msra.mxu0 0
    %4906 = vmatprep.subr.bf16.mxu0 0
    %4907 = vmatpush1.bf16.msra.mxu0 0
    %4908 = vmatprep.subr.bf16.mxu0 0
    %4909 = vmatpush1.bf16.msra.mxu0 0
    %4910 = vmatprep.subr.bf16.mxu0 0
    %4911 = vmatpush1.bf16.msra.mxu0 0
    %4912 = vmatprep.subr.bf16.mxu0 0
    %4913 = vmatpush1.bf16.msra.mxu0 0
    %4914 = vmatprep.subr.bf16.mxu0 0
    %4915 = vmatpush1.bf16.msra.mxu0 0
    %4916 = vmatprep.subr.bf16.mxu0 0
    %4917 = vmatpush1.bf16.msra.mxu0 0
    %4918 = vmatprep.mubr.bf16.mxu0 0
    %4919 = vmatmul.mubr.bf16.gmra.mrb[0].mxu0 %v4884
    %v4920 = vpop.f32.mrb[0].mxu0
    %v4921 = vadd.f32 0.0, %v4920
    %v4922 = vpop.f32.mrb[0].mxu0
    %v4923 = vpop.f32.mrb[0].mxu0
    %v4924 = vpop.f32.mrb[0].mxu0
    %4925 = vdwg.mxu0
    %v4926 = vadd.f32 %v4879, %v4921
    %s4927 = scalar_lea.vmem [#allocation2], 115
    %v4928 = vld [vmem:[%s4927] ss:$2 sm:$0x7]
    %v4929 = vpack.c.bf16 %v4928, %v4928
    %v4931 = vsel %vm384, %v4929, 0
    %4933 = vmatprep.subr.bf16.mxu0 0
    %4934 = vmatpush1.bf16.msra.mxu0 %v1138
    %4935 = vmatprep.subr.bf16.mxu0 0
    %4936 = vmatpush1.bf16.msra.mxu0 %v1139
    %4937 = vmatprep.subr.bf16.mxu0 0
    %4938 = vmatpush1.bf16.msra.mxu0 0
    %4939 = vmatprep.subr.bf16.mxu0 0
    %4940 = vmatpush1.bf16.msra.mxu0 0
    %4941 = vmatprep.subr.bf16.mxu0 0
    %4942 = vmatpush1.bf16.msra.mxu0 0
    %4943 = vmatprep.subr.bf16.mxu0 0
    %4944 = vmatpush1.bf16.msra.mxu0 0
    %4945 = vmatprep.subr.bf16.mxu0 0
    %4946 = vmatpush1.bf16.msra.mxu0 0
    %4947 = vmatprep.subr.bf16.mxu0 0
    %4948 = vmatpush1.bf16.msra.mxu0 0
    %4949 = vmatprep.subr.bf16.mxu0 0
    %4950 = vmatpush1.bf16.msra.mxu0 0
    %4951 = vmatprep.subr.bf16.mxu0 0
    %4952 = vmatpush1.bf16.msra.mxu0 0
    %4953 = vmatprep.subr.bf16.mxu0 0
    %4954 = vmatpush1.bf16.msra.mxu0 0
    %4955 = vmatprep.subr.bf16.mxu0 0
    %4956 = vmatpush1.bf16.msra.mxu0 0
    %4957 = vmatprep.subr.bf16.mxu0 0
    %4958 = vmatpush1.bf16.msra.mxu0 0
    %4959 = vmatprep.subr.bf16.mxu0 0
    %4960 = vmatpush1.bf16.msra.mxu0 0
    %4961 = vmatprep.subr.bf16.mxu0 0
    %4962 = vmatpush1.bf16.msra.mxu0 0
    %4963 = vmatprep.subr.bf16.mxu0 0
    %4964 = vmatpush1.bf16.msra.mxu0 0
    %4965 = vmatprep.mubr.bf16.mxu0 0
    %4966 = vmatmul.mubr.bf16.gmra.mrb[0].mxu0 %v4931
    %v4967 = vpop.f32.mrb[0].mxu0
    %v4968 = vadd.f32 0.0, %v4967
    %v4969 = vpop.f32.mrb[0].mxu0
    %v4970 = vpop.f32.mrb[0].mxu0
    %v4971 = vpop.f32.mrb[0].mxu0
    %4972 = vdwg.mxu0
    %v4973 = vadd.f32 %v4926, %v4968
    %s4974 = scalar_lea.vmem [#allocation2], 120
    %v4975 = vld [vmem:[%s4974] ss:$2 sm:$0x7]
    %v4976 = vpack.c.bf16 %v4975, %v4975
    %v4978 = vsel %vm384, %v4976, 0
    %4980 = vmatprep.subr.bf16.mxu0 0
    %4981 = vmatpush1.bf16.msra.mxu0 %v1197
    %4982 = vmatprep.subr.bf16.mxu0 0
    %4983 = vmatpush1.bf16.msra.mxu0 %v1198
    %4984 = vmatprep.subr.bf16.mxu0 0
    %4985 = vmatpush1.bf16.msra.mxu0 0
    %4986 = vmatprep.subr.bf16.mxu0 0
    %4987 = vmatpush1.bf16.msra.mxu0 0
    %4988 = vmatprep.subr.bf16.mxu0 0
    %4989 = vmatpush1.bf16.msra.mxu0 0
    %4990 = vmatprep.subr.bf16.mxu0 0
    %4991 = vmatpush1.bf16.msra.mxu0 0
    %4992 = vmatprep.subr.bf16.mxu0 0
    %4993 = vmatpush1.bf16.msra.mxu0 0
    %4994 = vmatprep.subr.bf16.mxu0 0
    %4995 = vmatpush1.bf16.msra.mxu0 0
    %4996 = vmatprep.subr.bf16.mxu0 0
    %4997 = vmatpush1.bf16.msra.mxu0 0
    %4998 = vmatprep.subr.bf16.mxu0 0
    %4999 = vmatpush1.bf16.msra.mxu0 0
    %5000 = vmatprep.subr.bf16.mxu0 0
    %5001 = vmatpush1.bf16.msra.mxu0 0
    %5002 = vmatprep.subr.bf16.mxu0 0
    %5003 = vmatpush1.bf16.msra.mxu0 0
    %5004 = vmatprep.subr.bf16.mxu0 0
    %5005 = vmatpush1.bf16.msra.mxu0 0
    %5006 = vmatprep.subr.bf16.mxu0 0
    %5007 = vmatpush1.bf16.msra.mxu0 0
    %5008 = vmatprep.subr.bf16.mxu0 0
    %5009 = vmatpush1.bf16.msra.mxu0 0
    %5010 = vmatprep.subr.bf16.mxu0 0
    %5011 = vmatpush1.bf16.msra.mxu0 0
    %5012 = vmatprep.mubr.bf16.mxu0 0
    %5013 = vmatmul.mubr.bf16.gmra.mrb[0].mxu0 %v4978
    %v5014 = vpop.f32.mrb[0].mxu0
    %v5015 = vadd.f32 0.0, %v5014
    %v5016 = vpop.f32.mrb[0].mxu0
    %v5017 = vpop.f32.mrb[0].mxu0
    %v5018 = vpop.f32.mrb[0].mxu0
    %5019 = vdwg.mxu0
    %v5020 = vadd.f32 %v4973, %v5015
    %s5021 = scalar_lea.vmem [#allocation2], 121
    %v5022 = vld [vmem:[%s5021] ss:$2 sm:$0x7]
    %v5023 = vpack.c.bf16 %v5022, %v5022
    %v5025 = vsel %vm384, %v5023, 0
    %5027 = vmatprep.subr.bf16.mxu0 0
    %5028 = vmatpush1.bf16.msra.mxu0 %v1256
    %5029 = vmatprep.subr.bf16.mxu0 0
    %5030 = vmatpush1.bf16.msra.mxu0 %v1257
    %5031 = vmatprep.subr.bf16.mxu0 0
    %5032 = vmatpush1.bf16.msra.mxu0 0
    %5033 = vmatprep.subr.bf16.mxu0 0
    %5034 = vmatpush1.bf16.msra.mxu0 0
    %5035 = vmatprep.subr.bf16.mxu0 0
    %5036 = vmatpush1.bf16.msra.mxu0 0
    %5037 = vmatprep.subr.bf16.mxu0 0
    %5038 = vmatpush1.bf16.msra.mxu0 0
    %5039 = vmatprep.subr.bf16.mxu0 0
    %5040 = vmatpush1.bf16.msra.mxu0 0
    %5041 = vmatprep.subr.bf16.mxu0 0
    %5042 = vmatpush1.bf16.msra.mxu0 0
    %5043 = vmatprep.subr.bf16.mxu0 0
    %5044 = vmatpush1.bf16.msra.mxu0 0
    %5045 = vmatprep.subr.bf16.mxu0 0
    %5046 = vmatpush1.bf16.msra.mxu0 0
    %5047 = vmatprep.subr.bf16.mxu0 0
    %5048 = vmatpush1.bf16.msra.mxu0 0
    %5049 = vmatprep.subr.bf16.mxu0 0
    %5050 = vmatpush1.bf16.msra.mxu0 0
    %5051 = vmatprep.subr.bf16.mxu0 0
    %5052 = vmatpush1.bf16.msra.mxu0 0
    %5053 = vmatprep.subr.bf16.mxu0 0
    %5054 = vmatpush1.bf16.msra.mxu0 0
    %5055 = vmatprep.subr.bf16.mxu0 0
    %5056 = vmatpush1.bf16.msra.mxu0 0
    %5057 = vmatprep.subr.bf16.mxu0 0
    %5058 = vmatpush1.bf16.msra.mxu0 0
    %5059 = vmatprep.mubr.bf16.mxu0 0
    %5060 = vmatmul.mubr.bf16.gmra.mrb[0].mxu0 %v5025
    %v5061 = vpop.f32.mrb[0].mxu0
    %v5062 = vadd.f32 0.0, %v5061
    %v5063 = vpop.f32.mrb[0].mxu0
    %v5064 = vpop.f32.mrb[0].mxu0
    %v5065 = vpop.f32.mrb[0].mxu0
    %5066 = vdwg.mxu0
    %v5067 = vadd.f32 %v5020, %v5062
    %s5068 = scalar_lea.vmem [#allocation2], 122
    %v5069 = vld [vmem:[%s5068] ss:$2 sm:$0x7]
    %v5070 = vpack.c.bf16 %v5069, %v5069
    %v5072 = vsel %vm384, %v5070, 0
    %5074 = vmatprep.subr.bf16.mxu0 0
    %5075 = vmatpush1.bf16.msra.mxu0 %v1315
    %5076 = vmatprep.subr.bf16.mxu0 0
    %5077 = vmatpush1.bf16.msra.mxu0 %v1316
    %5078 = vmatprep.subr.bf16.mxu0 0
    %5079 = vmatpush1.bf16.msra.mxu0 0
    %5080 = vmatprep.subr.bf16.mxu0 0
    %5081 = vmatpush1.bf16.msra.mxu0 0
    %5082 = vmatprep.subr.bf16.mxu0 0
    %5083 = vmatpush1.bf16.msra.mxu0 0
    %5084 = vmatprep.subr.bf16.mxu0 0
    %5085 = vmatpush1.bf16.msra.mxu0 0
    %5086 = vmatprep.subr.bf16.mxu0 0
    %5087 = vmatpush1.bf16.msra.mxu0 0
    %5088 = vmatprep.subr.bf16.mxu0 0
    %5089 = vmatpush1.bf16.msra.mxu0 0
    %5090 = vmatprep.subr.bf16.mxu0 0
    %5091 = vmatpush1.bf16.msra.mxu0 0
    %5092 = vmatprep.subr.bf16.mxu0 0
    %5093 = vmatpush1.bf16.msra.mxu0 0
    %5094 = vmatprep.subr.bf16.mxu0 0
    %5095 = vmatpush1.bf16.msra.mxu0 0
    %5096 = vmatprep.subr.bf16.mxu0 0
    %5097 = vmatpush1.bf16.msra.mxu0 0
    %5098 = vmatprep.subr.bf16.mxu0 0
    %5099 = vmatpush1.bf16.msra.mxu0 0
    %5100 = vmatprep.subr.bf16.mxu0 0
    %5101 = vmatpush1.bf16.msra.mxu0 0
    %5102 = vmatprep.subr.bf16.mxu0 0
    %5103 = vmatpush1.bf16.msra.mxu0 0
    %5104 = vmatprep.subr.bf16.mxu0 0
    %5105 = vmatpush1.bf16.msra.mxu0 0
    %5106 = vmatprep.mubr.bf16.mxu0 0
    %5107 = vmatmul.mubr.bf16.gmra.mrb[0].mxu0 %v5072
    %v5108 = vpop.f32.mrb[0].mxu0
    %v5109 = vadd.f32 0.0, %v5108
    %v5110 = vpop.f32.mrb[0].mxu0
    %v5111 = vpop.f32.mrb[0].mxu0
    %v5112 = vpop.f32.mrb[0].mxu0
    %5113 = vdwg.mxu0
    %v5114 = vadd.f32 %v5067, %v5109
    %s5115 = scalar_lea.vmem [#allocation2], 123
    %v5116 = vld [vmem:[%s5115] ss:$2 sm:$0x7]
    %v5117 = vpack.c.bf16 %v5116, %v5116
    %v5119 = vsel %vm384, %v5117, 0
    %5121 = vmatprep.subr.bf16.mxu0 0
    %5122 = vmatpush1.bf16.msra.mxu0 %v1374
    %5123 = vmatprep.subr.bf16.mxu0 0
    %5124 = vmatpush1.bf16.msra.mxu0 %v1375
    %5125 = vmatprep.subr.bf16.mxu0 0
    %5126 = vmatpush1.bf16.msra.mxu0 0
    %5127 = vmatprep.subr.bf16.mxu0 0
    %5128 = vmatpush1.bf16.msra.mxu0 0
    %5129 = vmatprep.subr.bf16.mxu0 0
    %5130 = vmatpush1.bf16.msra.mxu0 0
    %5131 = vmatprep.subr.bf16.mxu0 0
    %5132 = vmatpush1.bf16.msra.mxu0 0
    %5133 = vmatprep.subr.bf16.mxu0 0
    %5134 = vmatpush1.bf16.msra.mxu0 0
    %5135 = vmatprep.subr.bf16.mxu0 0
    %5136 = vmatpush1.bf16.msra.mxu0 0
    %5137 = vmatprep.subr.bf16.mxu0 0
    %5138 = vmatpush1.bf16.msra.mxu0 0
    %5139 = vmatprep.subr.bf16.mxu0 0
    %5140 = vmatpush1.bf16.msra.mxu0 0
    %5141 = vmatprep.subr.bf16.mxu0 0
    %5142 = vmatpush1.bf16.msra.mxu0 0
    %5143 = vmatprep.subr.bf16.mxu0 0
    %5144 = vmatpush1.bf16.msra.mxu0 0
    %5145 = vmatprep.subr.bf16.mxu0 0
    %5146 = vmatpush1.bf16.msra.mxu0 0
    %5147 = vmatprep.subr.bf16.mxu0 0
    %5148 = vmatpush1.bf16.msra.mxu0 0
    %5149 = vmatprep.subr.bf16.mxu0 0
    %5150 = vmatpush1.bf16.msra.mxu0 0
    %5151 = vmatprep.subr.bf16.mxu0 0
    %5152 = vmatpush1.bf16.msra.mxu0 0
    %5153 = vmatprep.mubr.bf16.mxu0 0
    %5154 = vmatmul.mubr.bf16.gmra.mrb[0].mxu0 %v5119
    %v5155 = vpop.f32.mrb[0].mxu0
    %v5156 = vadd.f32 0.0, %v5155
    %v5157 = vpop.f32.mrb[0].mxu0
    %v5158 = vpop.f32.mrb[0].mxu0
    %v5159 = vpop.f32.mrb[0].mxu0
    %5160 = vdwg.mxu0
    %v5161 = vadd.f32 %v5114, %v5156
    %v5162 = vadd.f32 %v5161, %v1426
    %v5163 = vmax.f32 %v5162, 0.0
    %5164 = vst.msk [vmem:[#allocation3 + $0xf] sm:$0x7] %vm1430, %v5163
    %v5165 = vld [vmem:[%s5] sm:$0xf]
    %v5166 = vld [vmem:[%s5 + $0x4] sm:$0xf]
    %v5167 = vld [vmem:[%s5 + $0x8] sm:$0xf]
    %v5168 = vld [vmem:[%s5 + $0xc] sm:$0xf]
    %v5169 = vld [vmem:[%s5 + $0x10] sm:$0xf]
    %v5170 = vld [vmem:[%s5 + $0x14] sm:$0xf]
    %v5171 = vld [vmem:[%s5 + $0x18] sm:$0xf]
    %v5172 = vld [vmem:[%s5 + $0x1c] sm:$0xf]
    %s5173 = scalar_lea.vmem %s5, 32
    %v5174 = vld [vmem:[%s5173] sm:$0xf]
    %v5175 = vld [vmem:[%s5173 + $0x4] sm:$0xf]
    %v5176 = vld [vmem:[%s5173 + $0x8] sm:$0xf]
    %v5177 = vld [vmem:[%s5173 + $0xc] sm:$0xf]
    %v5178 = vld [vmem:[%s5173 + $0x10] sm:$0xf]
    %v5179 = vld [vmem:[%s5173 + $0x14] sm:$0xf]
    %v5180 = vld [vmem:[%s5173 + $0x18] sm:$0xf]
    %v5181 = vld [vmem:[%s5173 + $0x1c] sm:$0xf]
    %s5182 = scalar_lea.vmem %s5, 64
    %v5183 = vld [vmem:[%s5182] sm:$0xf]
    %v5184 = vld [vmem:[%s5182 + $0x4] sm:$0xf]
    %v5185 = vld [vmem:[%s5182 + $0x8] sm:$0xf]
    %v5186 = vld [vmem:[%s5182 + $0xc] sm:$0xf]
    %v5187 = vld [vmem:[%s5182 + $0x10] sm:$0xf]
    %v5188 = vld [vmem:[%s5182 + $0x14] sm:$0xf]
    %v5189 = vld [vmem:[%s5182 + $0x18] sm:$0xf]
    %v5190 = vld [vmem:[%s5182 + $0x1c] sm:$0xf]
    %s5191 = scalar_lea.vmem %s5, 96
    %v5192 = vld [vmem:[%s5191] sm:$0xf]
    %v5193 = vld [vmem:[%s5191 + $0x4] sm:$0xf]
    %v5194 = vld [vmem:[%s5191 + $0x8] sm:$0xf]
    %v5195 = vld [vmem:[%s5191 + $0xc] sm:$0xf]
    %v5196 = vld [vmem:[%s5191 + $0x10] sm:$0xf]
    %v5197 = vld [vmem:[%s5191 + $0x14] sm:$0xf]
    %v5198 = vld [vmem:[%s5191 + $0x18] sm:$0xf]
    %v5199 = vld [vmem:[%s5191 + $0x1c] sm:$0xf]
    %s5200 = scalar_lea.vmem %s5, 128
    %v5201 = vld [vmem:[%s5200] sm:$0xf]
    %v5202 = vld [vmem:[%s5200 + $0x4] sm:$0xf]
    %v5203 = vld [vmem:[%s5200 + $0x8] sm:$0xf]
    %v5204 = vld [vmem:[%s5200 + $0xc] sm:$0xf]
    %v5205 = vld [vmem:[%s5200 + $0x10] sm:$0xf]
    %v5206 = vld [vmem:[%s5200 + $0x14] sm:$0xf]
    %v5207 = vld [vmem:[%s5200 + $0x18] sm:$0xf]
    %v5208 = vld [vmem:[%s5200 + $0x1c] sm:$0xf]
    %s5209 = scalar_lea.vmem %s5, 160
    %v5210 = vld [vmem:[%s5209] sm:$0xf]
    %v5211 = vld [vmem:[%s5209 + $0x4] sm:$0xf]
    %v5212 = vld [vmem:[%s5209 + $0x8] sm:$0xf]
    %v5213 = vld [vmem:[%s5209 + $0xc] sm:$0xf]
    %v5214 = vld [vmem:[%s5209 + $0x10] sm:$0xf]
    %v5215 = vld [vmem:[%s5209 + $0x14] sm:$0xf]
    %v5216 = vld [vmem:[%s5209 + $0x18] sm:$0xf]
    %v5217 = vld [vmem:[%s5209 + $0x1c] sm:$0xf]
    %s5218 = scalar_lea.vmem %s5, 192
    %v5219 = vld [vmem:[%s5218] sm:$0xf]
    %v5220 = vld [vmem:[%s5218 + $0x4] sm:$0xf]
    %v5221 = vld [vmem:[%s5218 + $0x8] sm:$0xf]
    %v5222 = vld [vmem:[%s5218 + $0xc] sm:$0xf]
    %v5223 = vld [vmem:[%s5218 + $0x10] sm:$0xf]
    %v5224 = vld [vmem:[%s5218 + $0x14] sm:$0xf]
    %v5225 = vld [vmem:[%s5218 + $0x18] sm:$0xf]
    %v5226 = vld [vmem:[%s5218 + $0x1c] sm:$0xf]
    %s5227 = scalar_lea.vmem %s5, 224
    %v5228 = vld [vmem:[%s5227] sm:$0xf]
    %v5229 = vld [vmem:[%s5227 + $0x4] sm:$0xf]
    %v5230 = vld [vmem:[%s5227 + $0x8] sm:$0xf]
    %v5231 = vld [vmem:[%s5227 + $0xc] sm:$0xf]
    %v5232 = vld [vmem:[%s5227 + $0x10] sm:$0xf]
    %v5233 = vld [vmem:[%s5227 + $0x14] sm:$0xf]
    %v5234 = vld [vmem:[%s5227 + $0x18] sm:$0xf]
    %v5235 = vld [vmem:[%s5227 + $0x1c] sm:$0xf]
    %s5236 = scalar_lea.vmem %s5, 256
    %v5237 = vld [vmem:[%s5236] sm:$0xf]
    %v5238 = vld [vmem:[%s5236 + $0x4] sm:$0xf]
    %v5239 = vld [vmem:[%s5236 + $0x8] sm:$0xf]
    %v5240 = vld [vmem:[%s5236 + $0xc] sm:$0xf]
    %v5241 = vld [vmem:[%s5236 + $0x10] sm:$0xf]
    %v5242 = vld [vmem:[%s5236 + $0x14] sm:$0xf]
    %v5243 = vld [vmem:[%s5236 + $0x18] sm:$0xf]
    %v5244 = vld [vmem:[%s5236 + $0x1c] sm:$0xf]
    %v5245 = vld [vmem:[%s6] sm:$0x1]
    %v5246 = vld [vmem:[#allocation3] sm:$0x1]
    %v5247 = vpack.c.bf16 %v5246, %v5246
    %v5248 = vld [vmem:[#allocation3 + $0x1] sm:$0x1]
    %v5249 = vpack.c.bf16 %v5248, %v5248
    %v5258 = vunpack.c.l.b16 %v5174
    %v5259 = vunpack.c.l.b16 %v5175
    %v5260 = vunpack.c.l.b16 %v5176
    %v5261 = vunpack.c.l.b16 %v5177
    %v5262 = vunpack.c.l.b16 %v5178
    %v5263 = vunpack.c.l.b16 %v5179
    %v5264 = vunpack.c.l.b16 %v5180
    %v5265 = vunpack.c.l.b16 %v5181
    %v5266 = vpack.c.b16 %v5259, %v5258
    %v5267 = vpack.c.b16 %v5261, %v5260
    %v5268 = vpack.c.b16 %v5263, %v5262
    %v5269 = vpack.c.b16 %v5265, %v5264
    %vm5274 = vcmask 523264
    %v5276 = vsel %vm5274, %v5249, 0
    %5278 = vmatprep.subr.bf16.mxu0 0
    %5279 = vmatpush1.bf16.msra.mxu0 %v5266
    %5280 = vmatprep.subr.bf16.mxu0 0
    %5281 = vmatpush1.bf16.msra.mxu0 %v5267
    %5282 = vmatprep.subr.bf16.mxu0 0
    %5283 = vmatpush1.bf16.msra.mxu0 %v5268
    %5284 = vmatprep.subr.bf16.mxu0 0
    %5285 = vmatpush1.bf16.msra.mxu0 %v5269
    %5286 = vmatprep.subr.bf16.mxu0 0
    %5287 = vmatpush1.bf16.msra.mxu0 0
    %5288 = vmatprep.subr.bf16.mxu0 0
    %5289 = vmatpush1.bf16.msra.mxu0 0
    %5290 = vmatprep.subr.bf16.mxu0 0
    %5291 = vmatpush1.bf16.msra.mxu0 0
    %5292 = vmatprep.subr.bf16.mxu0 0
    %5293 = vmatpush1.bf16.msra.mxu0 0
    %5294 = vmatprep.subr.bf16.mxu0 0
    %5295 = vmatpush1.bf16.msra.mxu0 0
    %5296 = vmatprep.subr.bf16.mxu0 0
    %5297 = vmatpush1.bf16.msra.mxu0 0
    %5298 = vmatprep.subr.bf16.mxu0 0
    %5299 = vmatpush1.bf16.msra.mxu0 0
    %5300 = vmatprep.subr.bf16.mxu0 0
    %5301 = vmatpush1.bf16.msra.mxu0 0
    %5302 = vmatprep.subr.bf16.mxu0 0
    %5303 = vmatpush1.bf16.msra.mxu0 0
    %5304 = vmatprep.subr.bf16.mxu0 0
    %5305 = vmatpush1.bf16.msra.mxu0 0
    %5306 = vmatprep.subr.bf16.mxu0 0
    %5307 = vmatpush1.bf16.msra.mxu0 0
    %5308 = vmatprep.subr.bf16.mxu0 0
    %5309 = vmatpush1.bf16.msra.mxu0 0
    %5310 = vmatprep.mubr.bf16.mxu0 0
    %5311 = vmatmul.mubr.bf16.gmra.mrb[0].mxu0 %v5276
    %v5312 = vpop.f32.mrb[0].mxu0
    %v5313 = vadd.f32 0.0, %v5312
    %v5314 = vpop.f32.mrb[0].mxu0
    %v5315 = vpop.f32.mrb[0].mxu0
    %v5316 = vpop.f32.mrb[0].mxu0
    %5317 = vdwg.mxu0
    %v5326 = vunpack.c.l.b16 %v5165
    %v5327 = vunpack.c.l.b16 %v5166
    %v5328 = vunpack.c.l.b16 %v5167
    %v5329 = vunpack.c.l.b16 %v5168
    %v5330 = vunpack.c.l.b16 %v5169
    %v5331 = vunpack.c.l.b16 %v5170
    %v5332 = vunpack.c.l.b16 %v5171
    %v5333 = vunpack.c.l.b16 %v5172
    %v5334 = vpack.c.b16 %v5327, %v5326
    %v5335 = vpack.c.b16 %v5329, %v5328
    %v5336 = vpack.c.b16 %v5331, %v5330
    %v5337 = vpack.c.b16 %v5333, %v5332
    %v5343 = vsel %vm5274, %v5247, 0
    %5345 = vmatprep.subr.bf16.mxu0 0
    %5346 = vmatpush1.bf16.msra.mxu0 %v5334
    %5347 = vmatprep.subr.bf16.mxu0 0
    %5348 = vmatpush1.bf16.msra.mxu0 %v5335
    %5349 = vmatprep.subr.bf16.mxu0 0
    %5350 = vmatpush1.bf16.msra.mxu0 %v5336
    %5351 = vmatprep.subr.bf16.mxu0 0
    %5352 = vmatpush1.bf16.msra.mxu0 %v5337
    %5353 = vmatprep.subr.bf16.mxu0 0
    %5354 = vmatpush1.bf16.msra.mxu0 0
    %5355 = vmatprep.subr.bf16.mxu0 0
    %5356 = vmatpush1.bf16.msra.mxu0 0
    %5357 = vmatprep.subr.bf16.mxu0 0
    %5358 = vmatpush1.bf16.msra.mxu0 0
    %5359 = vmatprep.subr.bf16.mxu0 0
    %5360 = vmatpush1.bf16.msra.mxu0 0
    %5361 = vmatprep.subr.bf16.mxu0 0
    %5362 = vmatpush1.bf16.msra.mxu0 0
    %5363 = vmatprep.subr.bf16.mxu0 0
    %5364 = vmatpush1.bf16.msra.mxu0 0
    %5365 = vmatprep.subr.bf16.mxu0 0
    %5366 = vmatpush1.bf16.msra.mxu0 0
    %5367 = vmatprep.subr.bf16.mxu0 0
    %5368 = vmatpush1.bf16.msra.mxu0 0
    %5369 = vmatprep.subr.bf16.mxu0 0
    %5370 = vmatpush1.bf16.msra.mxu0 0
    %5371 = vmatprep.subr.bf16.mxu0 0
    %5372 = vmatpush1.bf16.msra.mxu0 0
    %5373 = vmatprep.subr.bf16.mxu0 0
    %5374 = vmatpush1.bf16.msra.mxu0 0
    %5375 = vmatprep.subr.bf16.mxu0 0
    %5376 = vmatpush1.bf16.msra.mxu0 0
    %5377 = vmatprep.mubr.bf16.mxu0 0
    %5378 = vmatmul.mubr.bf16.gmra.mrb[0].mxu0 %v5343
    %v5379 = vpop.f32.mrb[0].mxu0
    %v5380 = vadd.f32 %v5313, %v5379
    %v5381 = vpop.f32.mrb[0].mxu0
    %v5382 = vpop.f32.mrb[0].mxu0
    %v5383 = vpop.f32.mrb[0].mxu0
    %5384 = vdwg.mxu0
    %v5385 = vld [vmem:[#allocation3 + $0x2] sm:$0x1]
    %v5386 = vpack.c.bf16 %v5385, %v5385
    %v5395 = vunpack.c.l.b16 %v5183
    %v5396 = vunpack.c.l.b16 %v5184
    %v5397 = vunpack.c.l.b16 %v5185
    %v5398 = vunpack.c.l.b16 %v5186
    %v5399 = vunpack.c.l.b16 %v5187
    %v5400 = vunpack.c.l.b16 %v5188
    %v5401 = vunpack.c.l.b16 %v5189
    %v5402 = vunpack.c.l.b16 %v5190
    %v5403 = vpack.c.b16 %v5396, %v5395
    %v5404 = vpack.c.b16 %v5398, %v5397
    %v5405 = vpack.c.b16 %v5400, %v5399
    %v5406 = vpack.c.b16 %v5402, %v5401
    %v5412 = vsel %vm5274, %v5386, 0
    %5414 = vmatprep.subr.bf16.mxu0 0
    %5415 = vmatpush1.bf16.msra.mxu0 %v5403
    %5416 = vmatprep.subr.bf16.mxu0 0
    %5417 = vmatpush1.bf16.msra.mxu0 %v5404
    %5418 = vmatprep.subr.bf16.mxu0 0
    %5419 = vmatpush1.bf16.msra.mxu0 %v5405
    %5420 = vmatprep.subr.bf16.mxu0 0
    %5421 = vmatpush1.bf16.msra.mxu0 %v5406
    %5422 = vmatprep.subr.bf16.mxu0 0
    %5423 = vmatpush1.bf16.msra.mxu0 0
    %5424 = vmatprep.subr.bf16.mxu0 0
    %5425 = vmatpush1.bf16.msra.mxu0 0
    %5426 = vmatprep.subr.bf16.mxu0 0
    %5427 = vmatpush1.bf16.msra.mxu0 0
    %5428 = vmatprep.subr.bf16.mxu0 0
    %5429 = vmatpush1.bf16.msra.mxu0 0
    %5430 = vmatprep.subr.bf16.mxu0 0
    %5431 = vmatpush1.bf16.msra.mxu0 0
    %5432 = vmatprep.subr.bf16.mxu0 0
    %5433 = vmatpush1.bf16.msra.mxu0 0
    %5434 = vmatprep.subr.bf16.mxu0 0
    %5435 = vmatpush1.bf16.msra.mxu0 0
    %5436 = vmatprep.subr.bf16.mxu0 0
    %5437 = vmatpush1.bf16.msra.mxu0 0
    %5438 = vmatprep.subr.bf16.mxu0 0
    %5439 = vmatpush1.bf16.msra.mxu0 0
    %5440 = vmatprep.subr.bf16.mxu0 0
    %5441 = vmatpush1.bf16.msra.mxu0 0
    %5442 = vmatprep.subr.bf16.mxu0 0
    %5443 = vmatpush1.bf16.msra.mxu0 0
    %5444 = vmatprep.subr.bf16.mxu0 0
    %5445 = vmatpush1.bf16.msra.mxu0 0
    %5446 = vmatprep.mubr.bf16.mxu0 0
    %5447 = vmatmul.mubr.bf16.gmra.mrb[0].mxu0 %v5412
    %v5448 = vpop.f32.mrb[0].mxu0
    %v5449 = vadd.f32 0.0, %v5448
    %v5450 = vpop.f32.mrb[0].mxu0
    %v5451 = vpop.f32.mrb[0].mxu0
    %v5452 = vpop.f32.mrb[0].mxu0
    %5453 = vdwg.mxu0
    %v5454 = vadd.f32 %v5380, %v5449
    %v5455 = vld [vmem:[#allocation3 + $0x3] sm:$0x1]
    %v5456 = vpack.c.bf16 %v5455, %v5455
    %v5465 = vunpack.c.l.b16 %v5192
    %v5466 = vunpack.c.l.b16 %v5193
    %v5467 = vunpack.c.l.b16 %v5194
    %v5468 = vunpack.c.l.b16 %v5195
    %v5469 = vunpack.c.l.b16 %v5196
    %v5470 = vunpack.c.l.b16 %v5197
    %v5471 = vunpack.c.l.b16 %v5198
    %v5472 = vunpack.c.l.b16 %v5199
    %v5473 = vpack.c.b16 %v5466, %v5465
    %v5474 = vpack.c.b16 %v5468, %v5467
    %v5475 = vpack.c.b16 %v5470, %v5469
    %v5476 = vpack.c.b16 %v5472, %v5471
    %v5482 = vsel %vm5274, %v5456, 0
    %5484 = vmatprep.subr.bf16.mxu0 0
    %5485 = vmatpush1.bf16.msra.mxu0 %v5473
    %5486 = vmatprep.subr.bf16.mxu0 0
    %5487 = vmatpush1.bf16.msra.mxu0 %v5474
    %5488 = vmatprep.subr.bf16.mxu0 0
    %5489 = vmatpush1.bf16.msra.mxu0 %v5475
    %5490 = vmatprep.subr.bf16.mxu0 0
    %5491 = vmatpush1.bf16.msra.mxu0 %v5476
    %5492 = vmatprep.subr.bf16.mxu0 0
    %5493 = vmatpush1.bf16.msra.mxu0 0
    %5494 = vmatprep.subr.bf16.mxu0 0
    %5495 = vmatpush1.bf16.msra.mxu0 0
    %5496 = vmatprep.subr.bf16.mxu0 0
    %5497 = vmatpush1.bf16.msra.mxu0 0
    %5498 = vmatprep.subr.bf16.mxu0 0
    %5499 = vmatpush1.bf16.msra.mxu0 0
    %5500 = vmatprep.subr.bf16.mxu0 0
    %5501 = vmatpush1.bf16.msra.mxu0 0
    %5502 = vmatprep.subr.bf16.mxu0 0
    %5503 = vmatpush1.bf16.msra.mxu0 0
    %5504 = vmatprep.subr.bf16.mxu0 0
    %5505 = vmatpush1.bf16.msra.mxu0 0
    %5506 = vmatprep.subr.bf16.mxu0 0
    %5507 = vmatpush1.bf16.msra.mxu0 0
    %5508 = vmatprep.subr.bf16.mxu0 0
    %5509 = vmatpush1.bf16.msra.mxu0 0
    %5510 = vmatprep.subr.bf16.mxu0 0
    %5511 = vmatpush1.bf16.msra.mxu0 0
    %5512 = vmatprep.subr.bf16.mxu0 0
    %5513 = vmatpush1.bf16.msra.mxu0 0
    %5514 = vmatprep.subr.bf16.mxu0 0
    %5515 = vmatpush1.bf16.msra.mxu0 0
    %5516 = vmatprep.mubr.bf16.mxu0 0
    %5517 = vmatmul.mubr.bf16.gmra.mrb[0].mxu0 %v5482
    %v5518 = vpop.f32.mrb[0].mxu0
    %v5519 = vadd.f32 0.0, %v5518
    %v5520 = vpop.f32.mrb[0].mxu0
    %v5521 = vpop.f32.mrb[0].mxu0
    %v5522 = vpop.f32.mrb[0].mxu0
    %5523 = vdwg.mxu0
    %v5524 = vadd.f32 %v5454, %v5519
    %v5525 = vld [vmem:[#allocation3 + $0x4] sm:$0x1]
    %v5526 = vpack.c.bf16 %v5525, %v5525
    %v5535 = vunpack.c.l.b16 %v5201
    %v5536 = vunpack.c.l.b16 %v5202
    %v5537 = vunpack.c.l.b16 %v5203
    %v5538 = vunpack.c.l.b16 %v5204
    %v5539 = vunpack.c.l.b16 %v5205
    %v5540 = vunpack.c.l.b16 %v5206
    %v5541 = vunpack.c.l.b16 %v5207
    %v5542 = vunpack.c.l.b16 %v5208
    %v5543 = vpack.c.b16 %v5536, %v5535
    %v5544 = vpack.c.b16 %v5538, %v5537
    %v5545 = vpack.c.b16 %v5540, %v5539
    %v5546 = vpack.c.b16 %v5542, %v5541
    %v5552 = vsel %vm5274, %v5526, 0
    %5554 = vmatprep.subr.bf16.mxu0 0
    %5555 = vmatpush1.bf16.msra.mxu0 %v5543
    %5556 = vmatprep.subr.bf16.mxu0 0
    %5557 = vmatpush1.bf16.msra.mxu0 %v5544
    %5558 = vmatprep.subr.bf16.mxu0 0
    %5559 = vmatpush1.bf16.msra.mxu0 %v5545
    %5560 = vmatprep.subr.bf16.mxu0 0
    %5561 = vmatpush1.bf16.msra.mxu0 %v5546
    %5562 = vmatprep.subr.bf16.mxu0 0
    %5563 = vmatpush1.bf16.msra.mxu0 0
    %5564 = vmatprep.subr.bf16.mxu0 0
    %5565 = vmatpush1.bf16.msra.mxu0 0
    %5566 = vmatprep.subr.bf16.mxu0 0
    %5567 = vmatpush1.bf16.msra.mxu0 0
    %5568 = vmatprep.subr.bf16.mxu0 0
    %5569 = vmatpush1.bf16.msra.mxu0 0
    %5570 = vmatprep.subr.bf16.mxu0 0
    %5571 = vmatpush1.bf16.msra.mxu0 0
    %5572 = vmatprep.subr.bf16.mxu0 0
    %5573 = vmatpush1.bf16.msra.mxu0 0
    %5574 = vmatprep.subr.bf16.mxu0 0
    %5575 = vmatpush1.bf16.msra.mxu0 0
    %5576 = vmatprep.subr.bf16.mxu0 0
    %5577 = vmatpush1.bf16.msra.mxu0 0
    %5578 = vmatprep.subr.bf16.mxu0 0
    %5579 = vmatpush1.bf16.msra.mxu0 0
    %5580 = vmatprep.subr.bf16.mxu0 0
    %5581 = vmatpush1.bf16.msra.mxu0 0
    %5582 = vmatprep.subr.bf16.mxu0 0
    %5583 = vmatpush1.bf16.msra.mxu0 0
    %5584 = vmatprep.subr.bf16.mxu0 0
    %5585 = vmatpush1.bf16.msra.mxu0 0
    %5586 = vmatprep.mubr.bf16.mxu0 0
    %5587 = vmatmul.mubr.bf16.gmra.mrb[0].mxu0 %v5552
    %v5588 = vpop.f32.mrb[0].mxu0
    %v5589 = vadd.f32 0.0, %v5588
    %v5590 = vpop.f32.mrb[0].mxu0
    %v5591 = vpop.f32.mrb[0].mxu0
    %v5592 = vpop.f32.mrb[0].mxu0
    %5593 = vdwg.mxu0
    %v5594 = vadd.f32 %v5524, %v5589
    %v5595 = vld [vmem:[#allocation3 + $0x5] sm:$0x1]
    %v5596 = vpack.c.bf16 %v5595, %v5595
    %v5605 = vunpack.c.l.b16 %v5210
    %v5606 = vunpack.c.l.b16 %v5211
    %v5607 = vunpack.c.l.b16 %v5212
    %v5608 = vunpack.c.l.b16 %v5213
    %v5609 = vunpack.c.l.b16 %v5214
    %v5610 = vunpack.c.l.b16 %v5215
    %v5611 = vunpack.c.l.b16 %v5216
    %v5612 = vunpack.c.l.b16 %v5217
    %v5613 = vpack.c.b16 %v5606, %v5605
    %v5614 = vpack.c.b16 %v5608, %v5607
    %v5615 = vpack.c.b16 %v5610, %v5609
    %v5616 = vpack.c.b16 %v5612, %v5611
    %v5622 = vsel %vm5274, %v5596, 0
    %5624 = vmatprep.subr.bf16.mxu0 0
    %5625 = vmatpush1.bf16.msra.mxu0 %v5613
    %5626 = vmatprep.subr.bf16.mxu0 0
    %5627 = vmatpush1.bf16.msra.mxu0 %v5614
    %5628 = vmatprep.subr.bf16.mxu0 0
    %5629 = vmatpush1.bf16.msra.mxu0 %v5615
    %5630 = vmatprep.subr.bf16.mxu0 0
    %5631 = vmatpush1.bf16.msra.mxu0 %v5616
    %5632 = vmatprep.subr.bf16.mxu0 0
    %5633 = vmatpush1.bf16.msra.mxu0 0
    %5634 = vmatprep.subr.bf16.mxu0 0
    %5635 = vmatpush1.bf16.msra.mxu0 0
    %5636 = vmatprep.subr.bf16.mxu0 0
    %5637 = vmatpush1.bf16.msra.mxu0 0
    %5638 = vmatprep.subr.bf16.mxu0 0
    %5639 = vmatpush1.bf16.msra.mxu0 0
    %5640 = vmatprep.subr.bf16.mxu0 0
    %5641 = vmatpush1.bf16.msra.mxu0 0
    %5642 = vmatprep.subr.bf16.mxu0 0
    %5643 = vmatpush1.bf16.msra.mxu0 0
    %5644 = vmatprep.subr.bf16.mxu0 0
    %5645 = vmatpush1.bf16.msra.mxu0 0
    %5646 = vmatprep.subr.bf16.mxu0 0
    %5647 = vmatpush1.bf16.msra.mxu0 0
    %5648 = vmatprep.subr.bf16.mxu0 0
    %5649 = vmatpush1.bf16.msra.mxu0 0
    %5650 = vmatprep.subr.bf16.mxu0 0
    %5651 = vmatpush1.bf16.msra.mxu0 0
    %5652 = vmatprep.subr.bf16.mxu0 0
    %5653 = vmatpush1.bf16.msra.mxu0 0
    %5654 = vmatprep.subr.bf16.mxu0 0
    %5655 = vmatpush1.bf16.msra.mxu0 0
    %5656 = vmatprep.mubr.bf16.mxu0 0
    %5657 = vmatmul.mubr.bf16.gmra.mrb[0].mxu0 %v5622
    %v5658 = vpop.f32.mrb[0].mxu0
    %v5659 = vadd.f32 0.0, %v5658
    %v5660 = vpop.f32.mrb[0].mxu0
    %v5661 = vpop.f32.mrb[0].mxu0
    %v5662 = vpop.f32.mrb[0].mxu0
    %5663 = vdwg.mxu0
    %v5664 = vadd.f32 %v5594, %v5659
    %v5665 = vld [vmem:[#allocation3 + $0x6] sm:$0x1]
    %v5666 = vpack.c.bf16 %v5665, %v5665
    %v5675 = vunpack.c.l.b16 %v5219
    %v5676 = vunpack.c.l.b16 %v5220
    %v5677 = vunpack.c.l.b16 %v5221
    %v5678 = vunpack.c.l.b16 %v5222
    %v5679 = vunpack.c.l.b16 %v5223
    %v5680 = vunpack.c.l.b16 %v5224
    %v5681 = vunpack.c.l.b16 %v5225
    %v5682 = vunpack.c.l.b16 %v5226
    %v5683 = vpack.c.b16 %v5676, %v5675
    %v5684 = vpack.c.b16 %v5678, %v5677
    %v5685 = vpack.c.b16 %v5680, %v5679
    %v5686 = vpack.c.b16 %v5682, %v5681
    %v5692 = vsel %vm5274, %v5666, 0
    %5694 = vmatprep.subr.bf16.mxu0 0
    %5695 = vmatpush1.bf16.msra.mxu0 %v5683
    %5696 = vmatprep.subr.bf16.mxu0 0
    %5697 = vmatpush1.bf16.msra.mxu0 %v5684
    %5698 = vmatprep.subr.bf16.mxu0 0
    %5699 = vmatpush1.bf16.msra.mxu0 %v5685
    %5700 = vmatprep.subr.bf16.mxu0 0
    %5701 = vmatpush1.bf16.msra.mxu0 %v5686
    %5702 = vmatprep.subr.bf16.mxu0 0
    %5703 = vmatpush1.bf16.msra.mxu0 0
    %5704 = vmatprep.subr.bf16.mxu0 0
    %5705 = vmatpush1.bf16.msra.mxu0 0
    %5706 = vmatprep.subr.bf16.mxu0 0
    %5707 = vmatpush1.bf16.msra.mxu0 0
    %5708 = vmatprep.subr.bf16.mxu0 0
    %5709 = vmatpush1.bf16.msra.mxu0 0
    %5710 = vmatprep.subr.bf16.mxu0 0
    %5711 = vmatpush1.bf16.msra.mxu0 0
    %5712 = vmatprep.subr.bf16.mxu0 0
    %5713 = vmatpush1.bf16.msra.mxu0 0
    %5714 = vmatprep.subr.bf16.mxu0 0
    %5715 = vmatpush1.bf16.msra.mxu0 0
    %5716 = vmatprep.subr.bf16.mxu0 0
    %5717 = vmatpush1.bf16.msra.mxu0 0
    %5718 = vmatprep.subr.bf16.mxu0 0
    %5719 = vmatpush1.bf16.msra.mxu0 0
    %5720 = vmatprep.subr.bf16.mxu0 0
    %5721 = vmatpush1.bf16.msra.mxu0 0
    %5722 = vmatprep.subr.bf16.mxu0 0
    %5723 = vmatpush1.bf16.msra.mxu0 0
    %5724 = vmatprep.subr.bf16.mxu0 0
    %5725 = vmatpush1.bf16.msra.mxu0 0
    %5726 = vmatprep.mubr.bf16.mxu0 0
    %5727 = vmatmul.mubr.bf16.gmra.mrb[0].mxu0 %v5692
    %v5728 = vpop.f32.mrb[0].mxu0
    %v5729 = vadd.f32 0.0, %v5728
    %v5730 = vpop.f32.mrb[0].mxu0
    %v5731 = vpop.f32.mrb[0].mxu0
    %v5732 = vpop.f32.mrb[0].mxu0
    %5733 = vdwg.mxu0
    %v5734 = vadd.f32 %v5664, %v5729
    %v5735 = vld [vmem:[#allocation3 + $0x7] sm:$0x1]
    %v5736 = vpack.c.bf16 %v5735, %v5735
    %v5745 = vunpack.c.l.b16 %v5228
    %v5746 = vunpack.c.l.b16 %v5229
    %v5747 = vunpack.c.l.b16 %v5230
    %v5748 = vunpack.c.l.b16 %v5231
    %v5749 = vunpack.c.l.b16 %v5232
    %v5750 = vunpack.c.l.b16 %v5233
    %v5751 = vunpack.c.l.b16 %v5234
    %v5752 = vunpack.c.l.b16 %v5235
    %v5753 = vpack.c.b16 %v5746, %v5745
    %v5754 = vpack.c.b16 %v5748, %v5747
    %v5755 = vpack.c.b16 %v5750, %v5749
    %v5756 = vpack.c.b16 %v5752, %v5751
    %v5762 = vsel %vm5274, %v5736, 0
    %5764 = vmatprep.subr.bf16.mxu0 0
    %5765 = vmatpush1.bf16.msra.mxu0 %v5753
    %5766 = vmatprep.subr.bf16.mxu0 0
    %5767 = vmatpush1.bf16.msra.mxu0 %v5754
    %5768 = vmatprep.subr.bf16.mxu0 0
    %5769 = vmatpush1.bf16.msra.mxu0 %v5755
    %5770 = vmatprep.subr.bf16.mxu0 0
    %5771 = vmatpush1.bf16.msra.mxu0 %v5756
    %5772 = vmatprep.subr.bf16.mxu0 0
    %5773 = vmatpush1.bf16.msra.mxu0 0
    %5774 = vmatprep.subr.bf16.mxu0 0
    %5775 = vmatpush1.bf16.msra.mxu0 0
    %5776 = vmatprep.subr.bf16.mxu0 0
    %5777 = vmatpush1.bf16.msra.mxu0 0
    %5778 = vmatprep.subr.bf16.mxu0 0
    %5779 = vmatpush1.bf16.msra.mxu0 0
    %5780 = vmatprep.subr.bf16.mxu0 0
    %5781 = vmatpush1.bf16.msra.mxu0 0
    %5782 = vmatprep.subr.bf16.mxu0 0
    %5783 = vmatpush1.bf16.msra.mxu0 0
    %5784 = vmatprep.subr.bf16.mxu0 0
    %5785 = vmatpush1.bf16.msra.mxu0 0
    %5786 = vmatprep.subr.bf16.mxu0 0
    %5787 = vmatpush1.bf16.msra.mxu0 0
    %5788 = vmatprep.subr.bf16.mxu0 0
    %5789 = vmatpush1.bf16.msra.mxu0 0
    %5790 = vmatprep.subr.bf16.mxu0 0
    %5791 = vmatpush1.bf16.msra.mxu0 0
    %5792 = vmatprep.subr.bf16.mxu0 0
    %5793 = vmatpush1.bf16.msra.mxu0 0
    %5794 = vmatprep.subr.bf16.mxu0 0
    %5795 = vmatpush1.bf16.msra.mxu0 0
    %5796 = vmatprep.mubr.bf16.mxu0 0
    %5797 = vmatmul.mubr.bf16.gmra.mrb[0].mxu0 %v5762
    %v5798 = vpop.f32.mrb[0].mxu0
    %v5799 = vadd.f32 0.0, %v5798
    %v5800 = vpop.f32.mrb[0].mxu0
    %v5801 = vpop.f32.mrb[0].mxu0
    %v5802 = vpop.f32.mrb[0].mxu0
    %5803 = vdwg.mxu0
    %v5804 = vadd.f32 %v5734, %v5799
    %v5805 = vld [vmem:[#allocation3 + $0x8] sm:$0x1]
    %v5806 = vpack.c.bf16 %v5805, %v5805
    %v5815 = vunpack.c.l.b16 %v5237
    %v5816 = vunpack.c.l.b16 %v5238
    %v5817 = vunpack.c.l.b16 %v5239
    %v5818 = vunpack.c.l.b16 %v5240
    %v5819 = vunpack.c.l.b16 %v5241
    %v5820 = vunpack.c.l.b16 %v5242
    %v5821 = vunpack.c.l.b16 %v5243
    %v5822 = vunpack.c.l.b16 %v5244
    %v5823 = vpack.c.b16 %v5816, %v5815
    %v5824 = vpack.c.b16 %v5818, %v5817
    %v5825 = vpack.c.b16 %v5820, %v5819
    %v5826 = vpack.c.b16 %v5822, %v5821
    %v5832 = vsel %vm5274, %v5806, 0
    %5834 = vmatprep.subr.bf16.mxu0 0
    %5835 = vmatpush1.bf16.msra.mxu0 %v5823
    %5836 = vmatprep.subr.bf16.mxu0 0
    %5837 = vmatpush1.bf16.msra.mxu0 %v5824
    %5838 = vmatprep.subr.bf16.mxu0 0
    %5839 = vmatpush1.bf16.msra.mxu0 %v5825
    %5840 = vmatprep.subr.bf16.mxu0 0
    %5841 = vmatpush1.bf16.msra.mxu0 %v5826
    %5842 = vmatprep.subr.bf16.mxu0 0
    %5843 = vmatpush1.bf16.msra.mxu0 0
    %5844 = vmatprep.subr.bf16.mxu0 0
    %5845 = vmatpush1.bf16.msra.mxu0 0
    %5846 = vmatprep.subr.bf16.mxu0 0
    %5847 = vmatpush1.bf16.msra.mxu0 0
    %5848 = vmatprep.subr.bf16.mxu0 0
    %5849 = vmatpush1.bf16.msra.mxu0 0
    %5850 = vmatprep.subr.bf16.mxu0 0
    %5851 = vmatpush1.bf16.msra.mxu0 0
    %5852 = vmatprep.subr.bf16.mxu0 0
    %5853 = vmatpush1.bf16.msra.mxu0 0
    %5854 = vmatprep.subr.bf16.mxu0 0
    %5855 = vmatpush1.bf16.msra.mxu0 0
    %5856 = vmatprep.subr.bf16.mxu0 0
    %5857 = vmatpush1.bf16.msra.mxu0 0
    %5858 = vmatprep.subr.bf16.mxu0 0
    %5859 = vmatpush1.bf16.msra.mxu0 0
    %5860 = vmatprep.subr.bf16.mxu0 0
    %5861 = vmatpush1.bf16.msra.mxu0 0
    %5862 = vmatprep.subr.bf16.mxu0 0
    %5863 = vmatpush1.bf16.msra.mxu0 0
    %5864 = vmatprep.subr.bf16.mxu0 0
    %5865 = vmatpush1.bf16.msra.mxu0 0
    %5866 = vmatprep.mubr.bf16.mxu0 0
    %5867 = vmatmul.mubr.bf16.gmra.mrb[0].mxu0 %v5832
    %v5868 = vpop.f32.mrb[0].mxu0
    %v5869 = vadd.f32 0.0, %v5868
    %v5870 = vpop.f32.mrb[0].mxu0
    %v5871 = vpop.f32.mrb[0].mxu0
    %v5872 = vpop.f32.mrb[0].mxu0
    %5873 = vdwg.mxu0
    %v5874 = vadd.f32 %v5804, %v5869
    %v5875 = vadd.f32 %v5874, %v5245
    %v5876 = vmax.f32 %v5875, 0.0
    %vm5877 = vcmask 516096
    %5878 = vst.msk [vmem:[#allocation4] sm:$0x1] %vm5877, %v5876
    %v5879 = vld [vmem:[#allocation3 + $0x9] sm:$0x1]
    %v5880 = vpack.c.bf16 %v5879, %v5879
    %v5881 = vld [vmem:[#allocation3 + $0xa] sm:$0x1]
    %v5882 = vpack.c.bf16 %v5881, %v5881
    %v5884 = vsel %vm5274, %v5882, 0
    %5886 = vmatprep.subr.bf16.mxu0 0
    %5887 = vmatpush1.bf16.msra.mxu0 %v5266
    %5888 = vmatprep.subr.bf16.mxu0 0
    %5889 = vmatpush1.bf16.msra.mxu0 %v5267
    %5890 = vmatprep.subr.bf16.mxu0 0
    %5891 = vmatpush1.bf16.msra.mxu0 %v5268
    %5892 = vmatprep.subr.bf16.mxu0 0
    %5893 = vmatpush1.bf16.msra.mxu0 %v5269
    %5894 = vmatprep.subr.bf16.mxu0 0
    %5895 = vmatpush1.bf16.msra.mxu0 0
    %5896 = vmatprep.subr.bf16.mxu0 0
    %5897 = vmatpush1.bf16.msra.mxu0 0
    %5898 = vmatprep.subr.bf16.mxu0 0
    %5899 = vmatpush1.bf16.msra.mxu0 0
    %5900 = vmatprep.subr.bf16.mxu0 0
    %5901 = vmatpush1.bf16.msra.mxu0 0
    %5902 = vmatprep.subr.bf16.mxu0 0
    %5903 = vmatpush1.bf16.msra.mxu0 0
    %5904 = vmatprep.subr.bf16.mxu0 0
    %5905 = vmatpush1.bf16.msra.mxu0 0
    %5906 = vmatprep.subr.bf16.mxu0 0
    %5907 = vmatpush1.bf16.msra.mxu0 0
    %5908 = vmatprep.subr.bf16.mxu0 0
    %5909 = vmatpush1.bf16.msra.mxu0 0
    %5910 = vmatprep.subr.bf16.mxu0 0
    %5911 = vmatpush1.bf16.msra.mxu0 0
    %5912 = vmatprep.subr.bf16.mxu0 0
    %5913 = vmatpush1.bf16.msra.mxu0 0
    %5914 = vmatprep.subr.bf16.mxu0 0
    %5915 = vmatpush1.bf16.msra.mxu0 0
    %5916 = vmatprep.subr.bf16.mxu0 0
    %5917 = vmatpush1.bf16.msra.mxu0 0
    %5918 = vmatprep.mubr.bf16.mxu0 0
    %5919 = vmatmul.mubr.bf16.gmra.mrb[0].mxu0 %v5884
    %v5920 = vpop.f32.mrb[0].mxu0
    %v5921 = vadd.f32 0.0, %v5920
    %v5922 = vpop.f32.mrb[0].mxu0
    %v5923 = vpop.f32.mrb[0].mxu0
    %v5924 = vpop.f32.mrb[0].mxu0
    %5925 = vdwg.mxu0
    %v5927 = vsel %vm5274, %v5880, 0
    %5929 = vmatprep.subr.bf16.mxu0 0
    %5930 = vmatpush1.bf16.msra.mxu0 %v5334
    %5931 = vmatprep.subr.bf16.mxu0 0
    %5932 = vmatpush1.bf16.msra.mxu0 %v5335
    %5933 = vmatprep.subr.bf16.mxu0 0
    %5934 = vmatpush1.bf16.msra.mxu0 %v5336
    %5935 = vmatprep.subr.bf16.mxu0 0
    %5936 = vmatpush1.bf16.msra.mxu0 %v5337
    %5937 = vmatprep.subr.bf16.mxu0 0
    %5938 = vmatpush1.bf16.msra.mxu0 0
    %5939 = vmatprep.subr.bf16.mxu0 0
    %5940 = vmatpush1.bf16.msra.mxu0 0
    %5941 = vmatprep.subr.bf16.mxu0 0
    %5942 = vmatpush1.bf16.msra.mxu0 0
    %5943 = vmatprep.subr.bf16.mxu0 0
    %5944 = vmatpush1.bf16.msra.mxu0 0
    %5945 = vmatprep.subr.bf16.mxu0 0
    %5946 = vmatpush1.bf16.msra.mxu0 0
    %5947 = vmatprep.subr.bf16.mxu0 0
    %5948 = vmatpush1.bf16.msra.mxu0 0
    %5949 = vmatprep.subr.bf16.mxu0 0
    %5950 = vmatpush1.bf16.msra.mxu0 0
    %5951 = vmatprep.subr.bf16.mxu0 0
    %5952 = vmatpush1.bf16.msra.mxu0 0
    %5953 = vmatprep.subr.bf16.mxu0 0
    %5954 = vmatpush1.bf16.msra.mxu0 0
    %5955 = vmatprep.subr.bf16.mxu0 0
    %5956 = vmatpush1.bf16.msra.mxu0 0
    %5957 = vmatprep.subr.bf16.mxu0 0
    %5958 = vmatpush1.bf16.msra.mxu0 0
    %5959 = vmatprep.subr.bf16.mxu0 0
    %5960 = vmatpush1.bf16.msra.mxu0 0
    %5961 = vmatprep.mubr.bf16.mxu0 0
    %5962 = vmatmul.mubr.bf16.gmra.mrb[0].mxu0 %v5927
    %v5963 = vpop.f32.mrb[0].mxu0
    %v5964 = vadd.f32 %v5921, %v5963
    %v5965 = vpop.f32.mrb[0].mxu0
    %v5966 = vpop.f32.mrb[0].mxu0
    %v5967 = vpop.f32.mrb[0].mxu0
    %5968 = vdwg.mxu0
    %v5969 = vld [vmem:[#allocation3 + $0xb] sm:$0x1]
    %v5970 = vpack.c.bf16 %v5969, %v5969
    %v5972 = vsel %vm5274, %v5970, 0
    %5974 = vmatprep.subr.bf16.mxu0 0
    %5975 = vmatpush1.bf16.msra.mxu0 %v5403
    %5976 = vmatprep.subr.bf16.mxu0 0
    %5977 = vmatpush1.bf16.msra.mxu0 %v5404
    %5978 = vmatprep.subr.bf16.mxu0 0
    %5979 = vmatpush1.bf16.msra.mxu0 %v5405
    %5980 = vmatprep.subr.bf16.mxu0 0
    %5981 = vmatpush1.bf16.msra.mxu0 %v5406
    %5982 = vmatprep.subr.bf16.mxu0 0
    %5983 = vmatpush1.bf16.msra.mxu0 0
    %5984 = vmatprep.subr.bf16.mxu0 0
    %5985 = vmatpush1.bf16.msra.mxu0 0
    %5986 = vmatprep.subr.bf16.mxu0 0
    %5987 = vmatpush1.bf16.msra.mxu0 0
    %5988 = vmatprep.subr.bf16.mxu0 0
    %5989 = vmatpush1.bf16.msra.mxu0 0
    %5990 = vmatprep.subr.bf16.mxu0 0
    %5991 = vmatpush1.bf16.msra.mxu0 0
    %5992 = vmatprep.subr.bf16.mxu0 0
    %5993 = vmatpush1.bf16.msra.mxu0 0
    %5994 = vmatprep.subr.bf16.mxu0 0
    %5995 = vmatpush1.bf16.msra.mxu0 0
    %5996 = vmatprep.subr.bf16.mxu0 0
    %5997 = vmatpush1.bf16.msra.mxu0 0
    %5998 = vmatprep.subr.bf16.mxu0 0
    %5999 = vmatpush1.bf16.msra.mxu0 0
    %6000 = vmatprep.subr.bf16.mxu0 0
    %6001 = vmatpush1.bf16.msra.mxu0 0
    %6002 = vmatprep.subr.bf16.mxu0 0
    %6003 = vmatpush1.bf16.msra.mxu0 0
    %6004 = vmatprep.subr.bf16.mxu0 0
    %6005 = vmatpush1.bf16.msra.mxu0 0
    %6006 = vmatprep.mubr.bf16.mxu0 0
    %6007 = vmatmul.mubr.bf16.gmra.mrb[0].mxu0 %v5972
    %v6008 = vpop.f32.mrb[0].mxu0
    %v6009 = vadd.f32 0.0, %v6008
    %v6010 = vpop.f32.mrb[0].mxu0
    %v6011 = vpop.f32.mrb[0].mxu0
    %v6012 = vpop.f32.mrb[0].mxu0
    %6013 = vdwg.mxu0
    %v6014 = vadd.f32 %v5964, %v6009
    %v6015 = vld [vmem:[#allocation3 + $0xc] sm:$0x1]
    %v6016 = vpack.c.bf16 %v6015, %v6015
    %v6018 = vsel %vm5274, %v6016, 0
    %6020 = vmatprep.subr.bf16.mxu0 0
    %6021 = vmatpush1.bf16.msra.mxu0 %v5473
    %6022 = vmatprep.subr.bf16.mxu0 0
    %6023 = vmatpush1.bf16.msra.mxu0 %v5474
    %6024 = vmatprep.subr.bf16.mxu0 0
    %6025 = vmatpush1.bf16.msra.mxu0 %v5475
    %6026 = vmatprep.subr.bf16.mxu0 0
    %6027 = vmatpush1.bf16.msra.mxu0 %v5476
    %6028 = vmatprep.subr.bf16.mxu0 0
    %6029 = vmatpush1.bf16.msra.mxu0 0
    %6030 = vmatprep.subr.bf16.mxu0 0
    %6031 = vmatpush1.bf16.msra.mxu0 0
    %6032 = vmatprep.subr.bf16.mxu0 0
    %6033 = vmatpush1.bf16.msra.mxu0 0
    %6034 = vmatprep.subr.bf16.mxu0 0
    %6035 = vmatpush1.bf16.msra.mxu0 0
    %6036 = vmatprep.subr.bf16.mxu0 0
    %6037 = vmatpush1.bf16.msra.mxu0 0
    %6038 = vmatprep.subr.bf16.mxu0 0
    %6039 = vmatpush1.bf16.msra.mxu0 0
    %6040 = vmatprep.subr.bf16.mxu0 0
    %6041 = vmatpush1.bf16.msra.mxu0 0
    %6042 = vmatprep.subr.bf16.mxu0 0
    %6043 = vmatpush1.bf16.msra.mxu0 0
    %6044 = vmatprep.subr.bf16.mxu0 0
    %6045 = vmatpush1.bf16.msra.mxu0 0
    %6046 = vmatprep.subr.bf16.mxu0 0
    %6047 = vmatpush1.bf16.msra.mxu0 0
    %6048 = vmatprep.subr.bf16.mxu0 0
    %6049 = vmatpush1.bf16.msra.mxu0 0
    %6050 = vmatprep.subr.bf16.mxu0 0
    %6051 = vmatpush1.bf16.msra.mxu0 0
    %6052 = vmatprep.mubr.bf16.mxu0 0
    %6053 = vmatmul.mubr.bf16.gmra.mrb[0].mxu0 %v6018
    %v6054 = vpop.f32.mrb[0].mxu0
    %v6055 = vadd.f32 0.0, %v6054
    %v6056 = vpop.f32.mrb[0].mxu0
    %v6057 = vpop.f32.mrb[0].mxu0
    %v6058 = vpop.f32.mrb[0].mxu0
    %6059 = vdwg.mxu0
    %v6060 = vadd.f32 %v6014, %v6055
    %v6061 = vld [vmem:[#allocation3 + $0xd] sm:$0x1]
    %v6062 = vpack.c.bf16 %v6061, %v6061
    %v6064 = vsel %vm5274, %v6062, 0
    %6066 = vmatprep.subr.bf16.mxu0 0
    %6067 = vmatpush1.bf16.msra.mxu0 %v5543
    %6068 = vmatprep.subr.bf16.mxu0 0
    %6069 = vmatpush1.bf16.msra.mxu0 %v5544
    %6070 = vmatprep.subr.bf16.mxu0 0
    %6071 = vmatpush1.bf16.msra.mxu0 %v5545
    %6072 = vmatprep.subr.bf16.mxu0 0
    %6073 = vmatpush1.bf16.msra.mxu0 %v5546
    %6074 = vmatprep.subr.bf16.mxu0 0
    %6075 = vmatpush1.bf16.msra.mxu0 0
    %6076 = vmatprep.subr.bf16.mxu0 0
    %6077 = vmatpush1.bf16.msra.mxu0 0
    %6078 = vmatprep.subr.bf16.mxu0 0
    %6079 = vmatpush1.bf16.msra.mxu0 0
    %6080 = vmatprep.subr.bf16.mxu0 0
    %6081 = vmatpush1.bf16.msra.mxu0 0
    %6082 = vmatprep.subr.bf16.mxu0 0
    %6083 = vmatpush1.bf16.msra.mxu0 0
    %6084 = vmatprep.subr.bf16.mxu0 0
    %6085 = vmatpush1.bf16.msra.mxu0 0
    %6086 = vmatprep.subr.bf16.mxu0 0
    %6087 = vmatpush1.bf16.msra.mxu0 0
    %6088 = vmatprep.subr.bf16.mxu0 0
    %6089 = vmatpush1.bf16.msra.mxu0 0
    %6090 = vmatprep.subr.bf16.mxu0 0
    %6091 = vmatpush1.bf16.msra.mxu0 0
    %6092 = vmatprep.subr.bf16.mxu0 0
    %6093 = vmatpush1.bf16.msra.mxu0 0
    %6094 = vmatprep.subr.bf16.mxu0 0
    %6095 = vmatpush1.bf16.msra.mxu0 0
    %6096 = vmatprep.subr.bf16.mxu0 0
    %6097 = vmatpush1.bf16.msra.mxu0 0
    %6098 = vmatprep.mubr.bf16.mxu0 0
    %6099 = vmatmul.mubr.bf16.gmra.mrb[0].mxu0 %v6064
    %v6100 = vpop.f32.mrb[0].mxu0
    %v6101 = vadd.f32 0.0, %v6100
    %v6102 = vpop.f32.mrb[0].mxu0
    %v6103 = vpop.f32.mrb[0].mxu0
    %v6104 = vpop.f32.mrb[0].mxu0
    %6105 = vdwg.mxu0
    %v6106 = vadd.f32 %v6060, %v6101
    %v6107 = vld [vmem:[#allocation3 + $0xe] sm:$0x1]
    %v6108 = vpack.c.bf16 %v6107, %v6107
    %v6110 = vsel %vm5274, %v6108, 0
    %6112 = vmatprep.subr.bf16.mxu0 0
    %6113 = vmatpush1.bf16.msra.mxu0 %v5613
    %6114 = vmatprep.subr.bf16.mxu0 0
    %6115 = vmatpush1.bf16.msra.mxu0 %v5614
    %6116 = vmatprep.subr.bf16.mxu0 0
    %6117 = vmatpush1.bf16.msra.mxu0 %v5615
    %6118 = vmatprep.subr.bf16.mxu0 0
    %6119 = vmatpush1.bf16.msra.mxu0 %v5616
    %6120 = vmatprep.subr.bf16.mxu0 0
    %6121 = vmatpush1.bf16.msra.mxu0 0
    %6122 = vmatprep.subr.bf16.mxu0 0
    %6123 = vmatpush1.bf16.msra.mxu0 0
    %6124 = vmatprep.subr.bf16.mxu0 0
    %6125 = vmatpush1.bf16.msra.mxu0 0
    %6126 = vmatprep.subr.bf16.mxu0 0
    %6127 = vmatpush1.bf16.msra.mxu0 0
    %6128 = vmatprep.subr.bf16.mxu0 0
    %6129 = vmatpush1.bf16.msra.mxu0 0
    %6130 = vmatprep.subr.bf16.mxu0 0
    %6131 = vmatpush1.bf16.msra.mxu0 0
    %6132 = vmatprep.subr.bf16.mxu0 0
    %6133 = vmatpush1.bf16.msra.mxu0 0
    %6134 = vmatprep.subr.bf16.mxu0 0
    %6135 = vmatpush1.bf16.msra.mxu0 0
    %6136 = vmatprep.subr.bf16.mxu0 0
    %6137 = vmatpush1.bf16.msra.mxu0 0
    %6138 = vmatprep.subr.bf16.mxu0 0
    %6139 = vmatpush1.bf16.msra.mxu0 0
    %6140 = vmatprep.subr.bf16.mxu0 0
    %6141 = vmatpush1.bf16.msra.mxu0 0
    %6142 = vmatprep.subr.bf16.mxu0 0
    %6143 = vmatpush1.bf16.msra.mxu0 0
    %6144 = vmatprep.mubr.bf16.mxu0 0
    %6145 = vmatmul.mubr.bf16.gmra.mrb[0].mxu0 %v6110
    %v6146 = vpop.f32.mrb[0].mxu0
    %v6147 = vadd.f32 0.0, %v6146
    %v6148 = vpop.f32.mrb[0].mxu0
    %v6149 = vpop.f32.mrb[0].mxu0
    %v6150 = vpop.f32.mrb[0].mxu0
    %6151 = vdwg.mxu0
    %v6152 = vadd.f32 %v6106, %v6147
    %v6153 = vld [vmem:[#allocation3 + $0xf] sm:$0x1]
    %v6154 = vpack.c.bf16 %v6153, %v6153
    %v6156 = vsel %vm5274, %v6154, 0
    %6158 = vmatprep.subr.bf16.mxu0 0
    %6159 = vmatpush1.bf16.msra.mxu0 %v5683
    %6160 = vmatprep.subr.bf16.mxu0 0
    %6161 = vmatpush1.bf16.msra.mxu0 %v5684
    %6162 = vmatprep.subr.bf16.mxu0 0
    %6163 = vmatpush1.bf16.msra.mxu0 %v5685
    %6164 = vmatprep.subr.bf16.mxu0 0
    %6165 = vmatpush1.bf16.msra.mxu0 %v5686
    %6166 = vmatprep.subr.bf16.mxu0 0
    %6167 = vmatpush1.bf16.msra.mxu0 0
    %6168 = vmatprep.subr.bf16.mxu0 0
    %6169 = vmatpush1.bf16.msra.mxu0 0
    %6170 = vmatprep.subr.bf16.mxu0 0
    %6171 = vmatpush1.bf16.msra.mxu0 0
    %6172 = vmatprep.subr.bf16.mxu0 0
    %6173 = vmatpush1.bf16.msra.mxu0 0
    %6174 = vmatprep.subr.bf16.mxu0 0
    %6175 = vmatpush1.bf16.msra.mxu0 0
    %6176 = vmatprep.subr.bf16.mxu0 0
    %6177 = vmatpush1.bf16.msra.mxu0 0
    %6178 = vmatprep.subr.bf16.mxu0 0
    %6179 = vmatpush1.bf16.msra.mxu0 0
    %6180 = vmatprep.subr.bf16.mxu0 0
    %6181 = vmatpush1.bf16.msra.mxu0 0
    %6182 = vmatprep.subr.bf16.mxu0 0
    %6183 = vmatpush1.bf16.msra.mxu0 0
    %6184 = vmatprep.subr.bf16.mxu0 0
    %6185 = vmatpush1.bf16.msra.mxu0 0
    %6186 = vmatprep.subr.bf16.mxu0 0
    %6187 = vmatpush1.bf16.msra.mxu0 0
    %6188 = vmatprep.subr.bf16.mxu0 0
    %6189 = vmatpush1.bf16.msra.mxu0 0
    %6190 = vmatprep.mubr.bf16.mxu0 0
    %6191 = vmatmul.mubr.bf16.gmra.mrb[0].mxu0 %v6156
    %v6192 = vpop.f32.mrb[0].mxu0
    %v6193 = vadd.f32 0.0, %v6192
    %v6194 = vpop.f32.mrb[0].mxu0
    %v6195 = vpop.f32.mrb[0].mxu0
    %v6196 = vpop.f32.mrb[0].mxu0
    %6197 = vdwg.mxu0
    %v6198 = vadd.f32 %v6152, %v6193
    %v6199 = vld [vmem:[#allocation3 + $0x10] sm:$0x1]
    %v6200 = vpack.c.bf16 %v6199, %v6199
    %v6202 = vsel %vm5274, %v6200, 0
    %6204 = vmatprep.subr.bf16.mxu0 0
    %6205 = vmatpush1.bf16.msra.mxu0 %v5753
    %6206 = vmatprep.subr.bf16.mxu0 0
    %6207 = vmatpush1.bf16.msra.mxu0 %v5754
    %6208 = vmatprep.subr.bf16.mxu0 0
    %6209 = vmatpush1.bf16.msra.mxu0 %v5755
    %6210 = vmatprep.subr.bf16.mxu0 0
    %6211 = vmatpush1.bf16.msra.mxu0 %v5756
    %6212 = vmatprep.subr.bf16.mxu0 0
    %6213 = vmatpush1.bf16.msra.mxu0 0
    %6214 = vmatprep.subr.bf16.mxu0 0
    %6215 = vmatpush1.bf16.msra.mxu0 0
    %6216 = vmatprep.subr.bf16.mxu0 0
    %6217 = vmatpush1.bf16.msra.mxu0 0
    %6218 = vmatprep.subr.bf16.mxu0 0
    %6219 = vmatpush1.bf16.msra.mxu0 0
    %6220 = vmatprep.subr.bf16.mxu0 0
    %6221 = vmatpush1.bf16.msra.mxu0 0
    %6222 = vmatprep.subr.bf16.mxu0 0
    %6223 = vmatpush1.bf16.msra.mxu0 0
    %6224 = vmatprep.subr.bf16.mxu0 0
    %6225 = vmatpush1.bf16.msra.mxu0 0
    %6226 = vmatprep.subr.bf16.mxu0 0
    %6227 = vmatpush1.bf16.msra.mxu0 0
    %6228 = vmatprep.subr.bf16.mxu0 0
    %6229 = vmatpush1.bf16.msra.mxu0 0
    %6230 = vmatprep.subr.bf16.mxu0 0
    %6231 = vmatpush1.bf16.msra.mxu0 0
    %6232 = vmatprep.subr.bf16.mxu0 0
    %6233 = vmatpush1.bf16.msra.mxu0 0
    %6234 = vmatprep.subr.bf16.mxu0 0
    %6235 = vmatpush1.bf16.msra.mxu0 0
    %6236 = vmatprep.mubr.bf16.mxu0 0
    %6237 = vmatmul.mubr.bf16.gmra.mrb[0].mxu0 %v6202
    %v6238 = vpop.f32.mrb[0].mxu0
    %v6239 = vadd.f32 0.0, %v6238
    %v6240 = vpop.f32.mrb[0].mxu0
    %v6241 = vpop.f32.mrb[0].mxu0
    %v6242 = vpop.f32.mrb[0].mxu0
    %6243 = vdwg.mxu0
    %v6244 = vadd.f32 %v6198, %v6239
    %v6245 = vld [vmem:[#allocation3 + $0x11] sm:$0x1]
    %v6246 = vpack.c.bf16 %v6245, %v6245
    %v6248 = vsel %vm5274, %v6246, 0
    %6250 = vmatprep.subr.bf16.mxu0 0
    %6251 = vmatpush1.bf16.msra.mxu0 %v5823
    %6252 = vmatprep.subr.bf16.mxu0 0
    %6253 = vmatpush1.bf16.msra.mxu0 %v5824
    %6254 = vmatprep.subr.bf16.mxu0 0
    %6255 = vmatpush1.bf16.msra.mxu0 %v5825
    %6256 = vmatprep.subr.bf16.mxu0 0
    %6257 = vmatpush1.bf16.msra.mxu0 %v5826
    %6258 = vmatprep.subr.bf16.mxu0 0
    %6259 = vmatpush1.bf16.msra.mxu0 0
    %6260 = vmatprep.subr.bf16.mxu0 0
    %6261 = vmatpush1.bf16.msra.mxu0 0
    %6262 = vmatprep.subr.bf16.mxu0 0
    %6263 = vmatpush1.bf16.msra.mxu0 0
    %6264 = vmatprep.subr.bf16.mxu0 0
    %6265 = vmatpush1.bf16.msra.mxu0 0
    %6266 = vmatprep.subr.bf16.mxu0 0
    %6267 = vmatpush1.bf16.msra.mxu0 0
    %6268 = vmatprep.subr.bf16.mxu0 0
    %6269 = vmatpush1.bf16.msra.mxu0 0
    %6270 = vmatprep.subr.bf16.mxu0 0
    %6271 = vmatpush1.bf16.msra.mxu0 0
    %6272 = vmatprep.subr.bf16.mxu0 0
    %6273 = vmatpush1.bf16.msra.mxu0 0
    %6274 = vmatprep.subr.bf16.mxu0 0
    %6275 = vmatpush1.bf16.msra.mxu0 0
    %6276 = vmatprep.subr.bf16.mxu0 0
    %6277 = vmatpush1.bf16.msra.mxu0 0
    %6278 = vmatprep.subr.bf16.mxu0 0
    %6279 = vmatpush1.bf16.msra.mxu0 0
    %6280 = vmatprep.subr.bf16.mxu0 0
    %6281 = vmatpush1.bf16.msra.mxu0 0
    %6282 = vmatprep.mubr.bf16.mxu0 0
    %6283 = vmatmul.mubr.bf16.gmra.mrb[0].mxu0 %v6248
    %v6284 = vpop.f32.mrb[0].mxu0
    %v6285 = vadd.f32 0.0, %v6284
    %v6286 = vpop.f32.mrb[0].mxu0
    %v6287 = vpop.f32.mrb[0].mxu0
    %v6288 = vpop.f32.mrb[0].mxu0
    %6289 = vdwg.mxu0
    %v6290 = vadd.f32 %v6244, %v6285
    %v6291 = vadd.f32 %v6290, %v5245
    %v6292 = vmax.f32 %v6291, 0.0
    %6293 = vst.msk [vmem:[#allocation4 + $0x1] sm:$0x1] %vm5877, %v6292
    %v6294 = vld [vmem:[#allocation4] sm:$0x3]
    %v6295 = vpack.c.bf16 %v6294, %v6294
    %v6296 = vld [vmem:[%s7] sm:$0xff]
    %v6297 = vld [vmem:[%s7 + $0x8] sm:$0xff]
    %v6298 = vld [vmem:[%s7 + $0x10] sm:$0xff]
    %v6299 = vld [vmem:[%s7 + $0x18] sm:$0xff]
    %v6300 = vld [vmem:[%s7 + $0x20] sm:$0xff]
    %v6301 = vld [vmem:[%s7 + $0x28] sm:$0xff]
    %v6302 = vld [vmem:[%s7 + $0x30] sm:$0xff]
    %v6303 = vld [vmem:[%s7 + $0x38] sm:$0xff]
    %v6304 = vld [vmem:[%s7 + $0x40] sm:$0xff]
    %v6305 = vld [vmem:[%s7 + $0x48] sm:$0xff]
    %v6306 = vld [vmem:[%s7 + $0x50] sm:$0xff]
    %v6307 = vld [vmem:[%s7 + $0x58] sm:$0xff]
    %v6308 = vld [vmem:[%s7 + $0x60] sm:$0xff]
    %v6309 = vld [vmem:[%s7 + $0x68] sm:$0xff]
    %v6310 = vld [vmem:[%s7 + $0x70] sm:$0xff]
    %v6311 = vld [vmem:[%s7 + $0x78] sm:$0xff]
    %v6312 = vld [vmem:[%s8] sm:$0xf]
    %v6314 = vlaneseq
    %v6315 = vshrl.u32 %v6314, 7
    %v6316 = vsub.s32 0, %v6315
    %v6317 = vrot.slane %v6312, %v6316
    %v6318 = vlaneseq
    %v6319 = vshrl.u32 %v6318, 7
    %v6320 = vsub.s32 1, %v6319
    %v6321 = vrot.slane %v6312, %v6320
    %v6322 = vlaneseq
    %v6323 = vshrl.u32 %v6322, 7
    %v6324 = vsub.s32 2, %v6323
    %v6325 = vrot.slane %v6312, %v6324
    %v6326 = vlaneseq
    %v6327 = vshrl.u32 %v6326, 7
    %v6328 = vsub.s32 3, %v6327
    %v6329 = vrot.slane %v6312, %v6328
    %v6350 = vunpack.c.l.b16 %v6296
    %v6351 = vunpack.c.h.b16 %v6296
    %v6352 = vunpack.c.l.b16 %v6297
    %v6353 = vunpack.c.h.b16 %v6297
    %v6354 = vunpack.c.l.b16 %v6298
    %v6355 = vunpack.c.h.b16 %v6298
    %v6356 = vunpack.c.l.b16 %v6299
    %v6357 = vunpack.c.h.b16 %v6299
    %v6358 = vunpack.c.l.b16 %v6300
    %v6359 = vunpack.c.h.b16 %v6300
    %v6360 = vunpack.c.l.b16 %v6301
    %v6361 = vunpack.c.h.b16 %v6301
    %v6362 = vunpack.c.l.b16 %v6302
    %v6363 = vunpack.c.h.b16 %v6302
    %v6364 = vunpack.c.l.b16 %v6303
    %v6365 = vunpack.c.h.b16 %v6303
    %v6366 = vunpack.c.l.b16 %v6304
    %v6367 = vunpack.c.h.b16 %v6304
    %v6368 = vunpack.c.l.b16 %v6305
    %v6369 = vunpack.c.h.b16 %v6305
    %v6370 = vunpack.c.l.b16 %v6306
    %v6371 = vunpack.c.h.b16 %v6306
    %v6372 = vunpack.c.l.b16 %v6307
    %v6373 = vunpack.c.h.b16 %v6307
    %v6374 = vunpack.c.l.b16 %v6308
    %v6375 = vunpack.c.h.b16 %v6308
    %v6376 = vunpack.c.l.b16 %v6309
    %v6377 = vunpack.c.h.b16 %v6309
    %v6378 = vunpack.c.l.b16 %v6310
    %v6379 = vunpack.c.h.b16 %v6310
    %v6380 = vunpack.c.l.b16 %v6311
    %v6381 = vunpack.c.h.b16 %v6311
    %v6382 = vpack.c.b16 %v6354, %v6350
    %v6383 = vpack.c.b16 %v6355, %v6351
    %v6384 = vpack.c.b16 %v6356, %v6352
    %v6385 = vpack.c.b16 %v6357, %v6353
    %v6386 = vpack.c.b16 %v6362, %v6358
    %v6387 = vpack.c.b16 %v6363, %v6359
    %v6388 = vpack.c.b16 %v6364, %v6360
    %v6389 = vpack.c.b16 %v6365, %v6361
    %v6390 = vpack.c.b16 %v6370, %v6366
    %v6391 = vpack.c.b16 %v6371, %v6367
    %v6392 = vpack.c.b16 %v6372, %v6368
    %v6393 = vpack.c.b16 %v6373, %v6369
    %v6394 = vpack.c.b16 %v6378, %v6374
    %v6395 = vpack.c.b16 %v6379, %v6375
    %v6396 = vpack.c.b16 %v6380, %v6376
    %v6397 = vpack.c.b16 %v6381, %v6377
    %v6415 = vsel %vm5274, %v6295, 0
    %6417 = vmatprep.subr.bf16.mxu0 %v6383
    %6418 = vmatpush1.bf16.msra.mxu0 %v6382
    %6419 = vmatprep.subr.bf16.mxu0 %v6387
    %6420 = vmatpush1.bf16.msra.mxu0 %v6386
    %6421 = vmatprep.subr.bf16.mxu0 %v6391
    %6422 = vmatpush1.bf16.msra.mxu0 %v6390
    %6423 = vmatprep.subr.bf16.mxu0 %v6395
    %6424 = vmatpush1.bf16.msra.mxu0 %v6394
    %6425 = vmatprep.subr.bf16.mxu0 0
    %6426 = vmatpush1.bf16.msra.mxu0 0
    %6427 = vmatprep.subr.bf16.mxu0 0
    %6428 = vmatpush1.bf16.msra.mxu0 0
    %6429 = vmatprep.subr.bf16.mxu0 0
    %6430 = vmatpush1.bf16.msra.mxu0 0
    %6431 = vmatprep.subr.bf16.mxu0 0
    %6432 = vmatpush1.bf16.msra.mxu0 0
    %6433 = vmatprep.subr.bf16.mxu0 0
    %6434 = vmatpush1.bf16.msra.mxu0 0
    %6435 = vmatprep.subr.bf16.mxu0 0
    %6436 = vmatpush1.bf16.msra.mxu0 0
    %6437 = vmatprep.subr.bf16.mxu0 0
    %6438 = vmatpush1.bf16.msra.mxu0 0
    %6439 = vmatprep.subr.bf16.mxu0 0
    %6440 = vmatpush1.bf16.msra.mxu0 0
    %6441 = vmatprep.subr.bf16.mxu0 0
    %6442 = vmatpush1.bf16.msra.mxu0 0
    %6443 = vmatprep.subr.bf16.mxu0 0
    %6444 = vmatpush1.bf16.msra.mxu0 0
    %6445 = vmatprep.subr.bf16.mxu0 0
    %6446 = vmatpush1.bf16.msra.mxu0 0
    %6447 = vmatprep.subr.bf16.mxu0 0
    %6448 = vmatpush1.bf16.msra.mxu0 0
    %6449 = vmatprep.mubr.bf16.mxu0 0
    %6450 = vmatmul.mubr.bf16.gmra.mrb[0].mxu0 %v6415
    %v6451 = vpop.f32.mrb[0].mxu0
    %v6452 = vadd.f32 %v6317, %v6451
    %v6453 = vpop.f32.mrb[0].mxu0
    %v6454 = vadd.f32 %v6321, %v6453
    %v6455 = vpop.f32.mrb[0].mxu0
    %v6456 = vpop.f32.mrb[0].mxu0
    %6457 = vdwg.mxu0
    %6458 = vmatprep.subr.bf16.mxu0 %v6385
    %6459 = vmatpush1.bf16.msra.mxu0 %v6384
    %6460 = vmatprep.subr.bf16.mxu0 %v6389
    %6461 = vmatpush1.bf16.msra.mxu0 %v6388
    %6462 = vmatprep.subr.bf16.mxu0 %v6393
    %6463 = vmatpush1.bf16.msra.mxu0 %v6392
    %6464 = vmatprep.subr.bf16.mxu0 %v6397
    %6465 = vmatpush1.bf16.msra.mxu0 %v6396
    %6466 = vmatprep.subr.bf16.mxu0 0
    %6467 = vmatpush1.bf16.msra.mxu0 0
    %6468 = vmatprep.subr.bf16.mxu0 0
    %6469 = vmatpush1.bf16.msra.mxu0 0
    %6470 = vmatprep.subr.bf16.mxu0 0
    %6471 = vmatpush1.bf16.msra.mxu0 0
    %6472 = vmatprep.subr.bf16.mxu0 0
    %6473 = vmatpush1.bf16.msra.mxu0 0
    %6474 = vmatprep.subr.bf16.mxu0 0
    %6475 = vmatpush1.bf16.msra.mxu0 0
    %6476 = vmatprep.subr.bf16.mxu0 0
    %6477 = vmatpush1.bf16.msra.mxu0 0
    %6478 = vmatprep.subr.bf16.mxu0 0
    %6479 = vmatpush1.bf16.msra.mxu0 0
    %6480 = vmatprep.subr.bf16.mxu0 0
    %6481 = vmatpush1.bf16.msra.mxu0 0
    %6482 = vmatprep.subr.bf16.mxu0 0
    %6483 = vmatpush1.bf16.msra.mxu0 0
    %6484 = vmatprep.subr.bf16.mxu0 0
    %6485 = vmatpush1.bf16.msra.mxu0 0
    %6486 = vmatprep.subr.bf16.mxu0 0
    %6487 = vmatpush1.bf16.msra.mxu0 0
    %6488 = vmatprep.subr.bf16.mxu0 0
    %6489 = vmatpush1.bf16.msra.mxu0 0
    %6490 = vmatprep.mubr.bf16.mxu0 0
    %6491 = vmatmul.mubr.bf16.gmra.mrb[0].mxu0 %v6415
    %v6492 = vpop.f32.mrb[0].mxu0
    %v6493 = vadd.f32 %v6325, %v6492
    %v6494 = vpop.f32.mrb[0].mxu0
    %v6495 = vadd.f32 %v6329, %v6494
    %v6496 = vpop.f32.mrb[0].mxu0
    %v6497 = vpop.f32.mrb[0].mxu0
    %6498 = vdwg.mxu0
    %v6499 = vmax.f32 %v6452, 0.0
    %v6500 = vmax.f32 %v6454, 0.0
    %v6501 = vmax.f32 %v6493, 0.0
    %v6502 = vmax.f32 %v6495, 0.0
    %v6503 = vpack.c.bf16 %v6499, %v6499
    %v6504 = vpack.c.bf16 %v6500, %v6500
    %v6505 = vpack.c.bf16 %v6501, %v6501
    %v6506 = vpack.c.bf16 %v6502, %v6502
    %v6507 = vld [vmem:[%s9] sm:$0xf]
    %v6508 = vld [vmem:[%s9 + $0x4] sm:$0xf]
    %v6509 = vld [vmem:[%s9 + $0x8] sm:$0xf]
    %v6510 = vld [vmem:[%s9 + $0xc] sm:$0xf]
    %v6511 = vld [vmem:[%s9 + $0x10] sm:$0xf]
    %v6512 = vld [vmem:[%s9 + $0x14] sm:$0xf]
    %v6513 = vld [vmem:[%s9 + $0x18] sm:$0xf]
    %v6514 = vld [vmem:[%s9 + $0x1c] sm:$0xf]
    %v6515 = vld [vmem:[%s9 + $0x20] sm:$0xf]
    %v6516 = vld [vmem:[%s9 + $0x24] sm:$0xf]
    %v6517 = vld [vmem:[%s9 + $0x28] sm:$0xf]
    %v6518 = vld [vmem:[%s9 + $0x2c] sm:$0xf]
    %v6519 = vld [vmem:[%s9 + $0x30] sm:$0xf]
    %v6520 = vld [vmem:[%s9 + $0x34] sm:$0xf]
    %v6521 = vld [vmem:[%s9 + $0x38] sm:$0xf]
    %v6522 = vld [vmem:[%s9 + $0x3c] sm:$0xf]
    %v6523 = vld [vmem:[%s9 + $0x40] sm:$0xf]
    %v6524 = vld [vmem:[%s9 + $0x44] sm:$0xf]
    %v6525 = vld [vmem:[%s9 + $0x48] sm:$0xf]
    %v6526 = vld [vmem:[%s9 + $0x4c] sm:$0xf]
    %v6527 = vld [vmem:[%s9 + $0x50] sm:$0xf]
    %v6528 = vld [vmem:[%s9 + $0x54] sm:$0xf]
    %v6529 = vld [vmem:[%s9 + $0x58] sm:$0xf]
    %v6530 = vld [vmem:[%s9 + $0x5c] sm:$0xf]
    %v6531 = vld [vmem:[%s9 + $0x60] sm:$0xf]
    %v6532 = vld [vmem:[%s9 + $0x64] sm:$0xf]
    %v6533 = vld [vmem:[%s9 + $0x68] sm:$0xf]
    %v6534 = vld [vmem:[%s9 + $0x6c] sm:$0xf]
    %v6535 = vld [vmem:[%s9 + $0x70] sm:$0xf]
    %v6536 = vld [vmem:[%s9 + $0x74] sm:$0xf]
    %v6537 = vld [vmem:[%s9 + $0x78] sm:$0xf]
    %v6538 = vld [vmem:[%s9 + $0x7c] sm:$0xf]
    %v6539 = vld [vmem:[%s9 + $0x80] sm:$0xf]
    %v6540 = vld [vmem:[%s9 + $0x84] sm:$0xf]
    %v6541 = vld [vmem:[%s9 + $0x88] sm:$0xf]
    %v6542 = vld [vmem:[%s9 + $0x8c] sm:$0xf]
    %v6543 = vld [vmem:[%s9 + $0x90] sm:$0xf]
    %v6544 = vld [vmem:[%s9 + $0x94] sm:$0xf]
    %v6545 = vld [vmem:[%s9 + $0x98] sm:$0xf]
    %v6546 = vld [vmem:[%s9 + $0x9c] sm:$0xf]
    %v6547 = vld [vmem:[%s9 + $0xa0] sm:$0xf]
    %v6548 = vld [vmem:[%s9 + $0xa4] sm:$0xf]
    %v6549 = vld [vmem:[%s9 + $0xa8] sm:$0xf]
    %v6550 = vld [vmem:[%s9 + $0xac] sm:$0xf]
    %v6551 = vld [vmem:[%s9 + $0xb0] sm:$0xf]
    %v6552 = vld [vmem:[%s9 + $0xb4] sm:$0xf]
    %v6553 = vld [vmem:[%s9 + $0xb8] sm:$0xf]
    %v6554 = vld [vmem:[%s9 + $0xbc] sm:$0xf]
    %v6555 = vld [vmem:[%s9 + $0xc0] sm:$0xf]
    %v6556 = vld [vmem:[%s9 + $0xc4] sm:$0xf]
    %v6557 = vld [vmem:[%s9 + $0xc8] sm:$0xf]
    %v6558 = vld [vmem:[%s9 + $0xcc] sm:$0xf]
    %v6559 = vld [vmem:[%s9 + $0xd0] sm:$0xf]
    %v6560 = vld [vmem:[%s9 + $0xd4] sm:$0xf]
    %v6561 = vld [vmem:[%s9 + $0xd8] sm:$0xf]
    %v6562 = vld [vmem:[%s9 + $0xdc] sm:$0xf]
    %v6563 = vld [vmem:[%s9 + $0xe0] sm:$0xf]
    %v6564 = vld [vmem:[%s9 + $0xe4] sm:$0xf]
    %v6565 = vld [vmem:[%s9 + $0xe8] sm:$0xf]
    %v6566 = vld [vmem:[%s9 + $0xec] sm:$0xf]
    %v6567 = vld [vmem:[%s9 + $0xf0] sm:$0xf]
    %v6568 = vld [vmem:[%s9 + $0xf4] sm:$0xf]
    %v6569 = vld [vmem:[%s9 + $0xf8] sm:$0xf]
    %v6570 = vld [vmem:[%s9 + $0xfc] sm:$0xf]
    %v6571 = vld [vmem:[%s10] sm:$0x1]
    %v6573 = vlaneseq
    %v6574 = vshrl.u32 %v6573, 7
    %v6575 = vsub.s32 0, %v6574
    %v6576 = vrot.slane %v6571, %v6575
    %v6642 = vunpack.c.l.b16 %v6507
    %v6643 = vunpack.c.l.b16 %v6508
    %v6644 = vunpack.c.l.b16 %v6509
    %v6645 = vunpack.c.l.b16 %v6510
    %v6646 = vunpack.c.l.b16 %v6511
    %v6647 = vunpack.c.l.b16 %v6512
    %v6648 = vunpack.c.l.b16 %v6513
    %v6649 = vunpack.c.l.b16 %v6514
    %v6650 = vunpack.c.l.b16 %v6515
    %v6651 = vunpack.c.l.b16 %v6516
    %v6652 = vunpack.c.l.b16 %v6517
    %v6653 = vunpack.c.l.b16 %v6518
    %v6654 = vunpack.c.l.b16 %v6519
    %v6655 = vunpack.c.l.b16 %v6520
    %v6656 = vunpack.c.l.b16 %v6521
    %v6657 = vunpack.c.l.b16 %v6522
    %v6658 = vunpack.c.l.b16 %v6523
    %v6659 = vunpack.c.l.b16 %v6524
    %v6660 = vunpack.c.l.b16 %v6525
    %v6661 = vunpack.c.l.b16 %v6526
    %v6662 = vunpack.c.l.b16 %v6527
    %v6663 = vunpack.c.l.b16 %v6528
    %v6664 = vunpack.c.l.b16 %v6529
    %v6665 = vunpack.c.l.b16 %v6530
    %v6666 = vunpack.c.l.b16 %v6531
    %v6667 = vunpack.c.l.b16 %v6532
    %v6668 = vunpack.c.l.b16 %v6533
    %v6669 = vunpack.c.l.b16 %v6534
    %v6670 = vunpack.c.l.b16 %v6535
    %v6671 = vunpack.c.l.b16 %v6536
    %v6672 = vunpack.c.l.b16 %v6537
    %v6673 = vunpack.c.l.b16 %v6538
    %v6674 = vunpack.c.l.b16 %v6539
    %v6675 = vunpack.c.l.b16 %v6540
    %v6676 = vunpack.c.l.b16 %v6541
    %v6677 = vunpack.c.l.b16 %v6542
    %v6678 = vunpack.c.l.b16 %v6543
    %v6679 = vunpack.c.l.b16 %v6544
    %v6680 = vunpack.c.l.b16 %v6545
    %v6681 = vunpack.c.l.b16 %v6546
    %v6682 = vunpack.c.l.b16 %v6547
    %v6683 = vunpack.c.l.b16 %v6548
    %v6684 = vunpack.c.l.b16 %v6549
    %v6685 = vunpack.c.l.b16 %v6550
    %v6686 = vunpack.c.l.b16 %v6551
    %v6687 = vunpack.c.l.b16 %v6552
    %v6688 = vunpack.c.l.b16 %v6553
    %v6689 = vunpack.c.l.b16 %v6554
    %v6690 = vunpack.c.l.b16 %v6555
    %v6691 = vunpack.c.l.b16 %v6556
    %v6692 = vunpack.c.l.b16 %v6557
    %v6693 = vunpack.c.l.b16 %v6558
    %v6694 = vunpack.c.l.b16 %v6559
    %v6695 = vunpack.c.l.b16 %v6560
    %v6696 = vunpack.c.l.b16 %v6561
    %v6697 = vunpack.c.l.b16 %v6562
    %v6698 = vunpack.c.l.b16 %v6563
    %v6699 = vunpack.c.l.b16 %v6564
    %v6700 = vunpack.c.l.b16 %v6565
    %v6701 = vunpack.c.l.b16 %v6566
    %v6702 = vunpack.c.l.b16 %v6567
    %v6703 = vunpack.c.l.b16 %v6568
    %v6704 = vunpack.c.l.b16 %v6569
    %v6705 = vunpack.c.l.b16 %v6570
    %v6706 = vpack.c.b16 %v6643, %v6642
    %v6707 = vpack.c.b16 %v6645, %v6644
    %v6708 = vpack.c.b16 %v6647, %v6646
    %v6709 = vpack.c.b16 %v6649, %v6648
    %v6710 = vpack.c.b16 %v6651, %v6650
    %v6711 = vpack.c.b16 %v6653, %v6652
    %v6712 = vpack.c.b16 %v6655, %v6654
    %v6713 = vpack.c.b16 %v6657, %v6656
    %v6714 = vpack.c.b16 %v6659, %v6658
    %v6715 = vpack.c.b16 %v6661, %v6660
    %v6716 = vpack.c.b16 %v6663, %v6662
    %v6717 = vpack.c.b16 %v6665, %v6664
    %v6718 = vpack.c.b16 %v6667, %v6666
    %v6719 = vpack.c.b16 %v6669, %v6668
    %v6720 = vpack.c.b16 %v6671, %v6670
    %v6721 = vpack.c.b16 %v6673, %v6672
    %v6722 = vpack.c.b16 %v6675, %v6674
    %v6723 = vpack.c.b16 %v6677, %v6676
    %v6724 = vpack.c.b16 %v6679, %v6678
    %v6725 = vpack.c.b16 %v6681, %v6680
    %v6726 = vpack.c.b16 %v6683, %v6682
    %v6727 = vpack.c.b16 %v6685, %v6684
    %v6728 = vpack.c.b16 %v6687, %v6686
    %v6729 = vpack.c.b16 %v6689, %v6688
    %v6730 = vpack.c.b16 %v6691, %v6690
    %v6731 = vpack.c.b16 %v6693, %v6692
    %v6732 = vpack.c.b16 %v6695, %v6694
    %v6733 = vpack.c.b16 %v6697, %v6696
    %v6734 = vpack.c.b16 %v6699, %v6698
    %v6735 = vpack.c.b16 %v6701, %v6700
    %v6736 = vpack.c.b16 %v6703, %v6702
    %v6737 = vpack.c.b16 %v6705, %v6704
    %6770 = vmatprep.subr.bf16.mxu0 0
    %6771 = vmatpush1.bf16.msra.mxu0 %v6706
    %6772 = vmatprep.subr.bf16.mxu0 0
    %6773 = vmatpush1.bf16.msra.mxu0 %v6707
    %6774 = vmatprep.subr.bf16.mxu0 0
    %6775 = vmatpush1.bf16.msra.mxu0 %v6708
    %6776 = vmatprep.subr.bf16.mxu0 0
    %6777 = vmatpush1.bf16.msra.mxu0 %v6709
    %6778 = vmatprep.subr.bf16.mxu0 0
    %6779 = vmatpush1.bf16.msra.mxu0 %v6710
    %6780 = vmatprep.subr.bf16.mxu0 0
    %6781 = vmatpush1.bf16.msra.mxu0 %v6711
    %6782 = vmatprep.subr.bf16.mxu0 0
    %6783 = vmatpush1.bf16.msra.mxu0 %v6712
    %6784 = vmatprep.subr.bf16.mxu0 0
    %6785 = vmatpush1.bf16.msra.mxu0 %v6713
    %6786 = vmatprep.subr.bf16.mxu0 0
    %6787 = vmatpush1.bf16.msra.mxu0 %v6714
    %6788 = vmatprep.subr.bf16.mxu0 0
    %6789 = vmatpush1.bf16.msra.mxu0 %v6715
    %6790 = vmatprep.subr.bf16.mxu0 0
    %6791 = vmatpush1.bf16.msra.mxu0 %v6716
    %6792 = vmatprep.subr.bf16.mxu0 0
    %6793 = vmatpush1.bf16.msra.mxu0 %v6717
    %6794 = vmatprep.subr.bf16.mxu0 0
    %6795 = vmatpush1.bf16.msra.mxu0 %v6718
    %6796 = vmatprep.subr.bf16.mxu0 0
    %6797 = vmatpush1.bf16.msra.mxu0 %v6719
    %6798 = vmatprep.subr.bf16.mxu0 0
    %6799 = vmatpush1.bf16.msra.mxu0 %v6720
    %6800 = vmatprep.subr.bf16.mxu0 0
    %6801 = vmatpush1.bf16.msra.mxu0 %v6721
    %6802 = vmatprep.mubr.bf16.mxu0 %v6504
    %6803 = vmatmul.mubr.bf16.gmra.mrb[0].mxu0 %v6503
    %v6804 = vpop.f32.mrb[0].mxu0
    %v6805 = vadd.f32 %v6576, %v6804
    %v6806 = vpop.f32.mrb[0].mxu0
    %v6807 = vpop.f32.mrb[0].mxu0
    %v6808 = vpop.f32.mrb[0].mxu0
    %6809 = vdwg.mxu0
    %6810 = vmatprep.subr.bf16.mxu0 0
    %6811 = vmatpush1.bf16.msra.mxu0 %v6722
    %6812 = vmatprep.subr.bf16.mxu0 0
    %6813 = vmatpush1.bf16.msra.mxu0 %v6723
    %6814 = vmatprep.subr.bf16.mxu0 0
    %6815 = vmatpush1.bf16.msra.mxu0 %v6724
    %6816 = vmatprep.subr.bf16.mxu0 0
    %6817 = vmatpush1.bf16.msra.mxu0 %v6725
    %6818 = vmatprep.subr.bf16.mxu0 0
    %6819 = vmatpush1.bf16.msra.mxu0 %v6726
    %6820 = vmatprep.subr.bf16.mxu0 0
    %6821 = vmatpush1.bf16.msra.mxu0 %v6727
    %6822 = vmatprep.subr.bf16.mxu0 0
    %6823 = vmatpush1.bf16.msra.mxu0 %v6728
    %6824 = vmatprep.subr.bf16.mxu0 0
    %6825 = vmatpush1.bf16.msra.mxu0 %v6729
    %6826 = vmatprep.subr.bf16.mxu0 0
    %6827 = vmatpush1.bf16.msra.mxu0 %v6730
    %6828 = vmatprep.subr.bf16.mxu0 0
    %6829 = vmatpush1.bf16.msra.mxu0 %v6731
    %6830 = vmatprep.subr.bf16.mxu0 0
    %6831 = vmatpush1.bf16.msra.mxu0 %v6732
    %6832 = vmatprep.subr.bf16.mxu0 0
    %6833 = vmatpush1.bf16.msra.mxu0 %v6733
    %6834 = vmatprep.subr.bf16.mxu0 0
    %6835 = vmatpush1.bf16.msra.mxu0 %v6734
    %6836 = vmatprep.subr.bf16.mxu0 0
    %6837 = vmatpush1.bf16.msra.mxu0 %v6735
    %6838 = vmatprep.subr.bf16.mxu0 0
    %6839 = vmatpush1.bf16.msra.mxu0 %v6736
    %6840 = vmatprep.subr.bf16.mxu0 0
    %6841 = vmatpush1.bf16.msra.mxu0 %v6737
    %6842 = vmatprep.mubr.bf16.mxu0 %v6506
    %6843 = vmatmul.mubr.bf16.gmra.mrb[0].mxu0 %v6505
    %v6844 = vpop.f32.mrb[0].mxu0
    %v6845 = vadd.f32 %v6805, %v6844
    %v6846 = vpop.f32.mrb[0].mxu0
    %v6847 = vpop.f32.mrb[0].mxu0
    %v6848 = vpop.f32.mrb[0].mxu0
    %6849 = vdwg.mxu0
    %6850 = vst [vmem:[#allocation5] sm:$0x3] %v6845
    // Predicated region
    $region46: #{dqn_forward.1} parent=1 // pred_check
      _
    $region47: #{dqn_forward.1} parent=1 // pred_check_branch
      %6852 = sbr.rel (0) target = $region49
    $region48: #{dqn_forward.1} parent=1 // pred_region
      %s6854 = ssub.s32 32, 32
      %6855 = vsyncadd [#allocation6], %s6854
      %s6857 = sshll.u32 [#allocation5], 4
      %s6858 = int_to_ptr.vmem [resolvable:$true] %s6857
      %6860 = dma.vmem_to_hbm [thread:$0]  %s6858, 32, %s11, [#allocation6]
    $region49: #{dqn_forward.1} parent=1 // pred_fallthru
      _
    // Predicated region
    $region50: #{dqn_forward.1} parent=1 // pred_check
      _
    $region51: #{dqn_forward.1} parent=1 // pred_check_branch
      %6862 = sbr.rel (0) target = $region53
    $region52: #{dqn_forward.1} parent=1 // pred_region
      %6863 = dma.done [#allocation6], 32
    $region53: #{dqn_forward.1} parent=1 // pred_fallthru
      _
    %6864 = vsyncpa [#allocation6], 1

</llo_original>
